<compile_context>
chip_gen: v6e
topology: v6e:2x2x1
jax: 0.10.0
libtpu: 0.0.40
codegen_flags: <defaults>
</compile_context>

<pallas_src>
import functools

import numpy as np
import jax
import jax.numpy as jnp
from jax.experimental import pallas as pl
from jax.experimental.pallas import tpu as pltpu


def _pick_tile(extent, target):
    t = max(1, min(target, extent))
    while extent % t != 0:
        t -= 1
    return t


# ---------------------------------------------------------------------------
# Kernel 1: bilinear 2x upsample (align_corners=False), separable matmuls.
# ---------------------------------------------------------------------------
def _upsample2x_kernel(H, x_ref, uwt_ref, uh_ref, o_ref):
    """x_ref: (1, C*H, W)   uwt: (W, 2W)   uh: (2H, H)   o_ref: (1, C, 2H, 2W)."""
    C = o_ref.shape[1]
    # width interpolation for all channels at once: (C*H, W) @ (W, 2W)
    xw = jnp.dot(x_ref[0], uwt_ref[...], preferred_element_type=jnp.float32)
    for c in range(C):                                   # small static loop (C = a)
        o_ref[0, c] = jnp.dot(uh_ref[...], xw[c * H:(c + 1) * H, :],
                              preferred_element_type=jnp.float32)


def upsample2x_bilinear(x_nchw, uh, uwt):
    N, C, H, W = x_nchw.shape
    H2, W2 = uh.shape[0], uwt.shape[1]
    x_flat = x_nchw.reshape(N, C * H, W)
    return pl.pallas_call(
        functools.partial(_upsample2x_kernel, H),
        out_shape=jax.ShapeDtypeStruct((N, C, H2, W2), jnp.float32),
        grid=(N,),
        in_specs=[
            pl.BlockSpec((1, C * H, W), lambda n: (n, 0, 0)),
            pl.BlockSpec((W, W2), lambda n: (0, 0)),
            pl.BlockSpec((H2, H), lambda n: (0, 0)),
        ],
        out_specs=pl.BlockSpec((1, C, H2, W2), lambda n: (n, 0, 0, 0)),
        compiler_params=pltpu.CompilerParams(dimension_semantics=("parallel",)),
    )(x_flat, uwt, uh)


# ---------------------------------------------------------------------------
# Kernel 2: fused 3x3 'same' conv (+bias, +LeakyReLU, +concat-y / +residual).
# ---------------------------------------------------------------------------
def _conv3x3_fused_kernel(Cin, TH, W2, Cc, apply_lrelu, residual,
                          xc_ref, xp_ref, xn_ref, ex_ref, w_ref, b_ref,
                          o_ref, band_ref, col_ref):
    """
    xc/xp/xn : (1, TH, W2, Cin) current / previous / next row bands (f32)
    ex       : (1, TH, W2, Ce)  y band (concat mode) or x1 band (residual mode)
    w        : (9*Cin, Cout)    bf16, row = (dy*3+dx)*Cin + cin
    b        : (1, Cout)        f32
    o        : (1, TH, W2, Cout)
    band     : (TH+2, W2+2, Cin) bf16 scratch  (zero-padded input band)
    col      : (TH, W2, 9*Cin)   bf16 scratch  (im2col slab)
    """
    t = pl.program_id(1)
    nt = pl.num_programs(1)
    bf = jnp.bfloat16

    # ---- zero-padded input band in VMEM (fuses the 'same' padding) ----------
    band_ref[...] = jnp.zeros((TH + 2, W2 + 2, Cin), bf)
    band_ref[1:TH + 1, 1:W2 + 1, :] = xc_ref[0].astype(bf)

    @pl.when(t > 0)
    def _():                                      # top halo row from prev band
        band_ref[0, 1:W2 + 1, :] = xp_ref[0, TH - 1, :, :].astype(bf)

    @pl.when(t < nt - 1)
    def _():                                      # bottom halo row from next band
        band_ref[TH + 1, 1:W2 + 1, :] = xn_ref[0, 0, :, :].astype(bf)

    # ---- im2col: fold all 9 taps into the contraction dimension -------------
    for dy in range(3):
        for dx in range(3):
            tap = dy * 3 + dx
            col_ref[:, :, tap * Cin:(tap + 1) * Cin] = \
                band_ref[dy:dy + TH, dx:dx + W2, :]

    # ---- single MXU matmul per band: (TH*W2, 9*Cin) x (9*Cin, Cout) ---------
    lhs = col_ref[...].reshape(TH * W2, 9 * Cin)
    acc = jnp.dot(lhs, w_ref[...], preferred_element_type=jnp.float32)
    z = acc + b_ref[...]
    if apply_lrelu:
        z = jnp.where(z >= 0, z, 0.2 * z)                  # LeakyReLU(0.2)
    z3 = z.reshape(TH, W2, z.shape[-1])

    if residual:
        o_ref[0] = (z3 + ex_ref[0]).astype(o_ref.dtype)    # fused `+ x1`
    else:
        o_ref[0] = z3.astype(o_ref.dtype)
        o_ref[0, :, :, Cc:] = ex_ref[0].astype(o_ref.dtype)  # fused cat(.., y)


def conv3x3_fused(x_nhwc, extra_nhwc, w_flat, bias, *, apply_lrelu, residual,
                  block_h=8):
    N, H2, W2, Cin = x_nhwc.shape
    Cout = w_flat.shape[1]
    Ce = extra_nhwc.shape[-1]
    Cc = Cout if residual else Cout - Ce          # real conv channels
    th = _pick_tile(H2, block_h)
    nt = H2 // th

    kern = functools.partial(_conv3x3_fused_kernel, Cin, th, W2, Cc,
                             apply_lrelu, residual)

    def act_spec(index_map):
        return pl.BlockSpec((1, th, W2, Cin), index_map)

    return pl.pallas_call(
        kern,
        out_shape=jax.ShapeDtypeStruct((N, H2, W2, Cout), jnp.float32),
        grid=(N, nt),
        in_specs=[
            act_spec(lambda n, t: (n, t, 0, 0)),                           # center band
            act_spec(lambda n, t: (n, jnp.maximum(t - 1, 0), 0, 0)),       # prev (halo)
            act_spec(lambda n, t: (n, jnp.minimum(t + 1, nt - 1), 0, 0)),  # next (halo)
            pl.BlockSpec((1, th, W2, Ce), lambda n, t: (n, t, 0, 0)),      # y / x1 band
            pl.BlockSpec((9 * Cin, Cout), lambda n, t: (0, 0)),            # weights
            pl.BlockSpec((1, Cout), lambda n, t: (0, 0)),                  # bias
        ],
        out_specs=pl.BlockSpec((1, th, W2, Cout), lambda n, t: (n, t, 0, 0)),
        scratch_shapes=[
            pltpu.VMEM((th + 2, W2 + 2, Cin), jnp.bfloat16),   # padded input band
            pltpu.VMEM((th, W2, 9 * Cin), jnp.bfloat16),       # im2col slab
        ],
        compiler_params=pltpu.CompilerParams(
            dimension_semantics=("parallel", "arbitrary")),
    )(x_nhwc, x_nhwc, x_nhwc, extra_nhwc, w_flat, bias)


# ---------------------------------------------------------------------------
# Forward pass (NCHW in -> NCHW out, like the PyTorch module)
# ---------------------------------------------------------------------------
def cnnf_forward(params, x_nchw, y_nchw, block_h=8):
    x_nchw = x_nchw.astype(jnp.float32)
    y_nhwc = jnp.transpose(y_nchw, (0, 2, 3, 1)).astype(jnp.float32)

    x1_nchw = upsample2x_bilinear(x_nchw, params["Uh"], params["UwT"])
    x1 = jnp.transpose(x1_nchw, (0, 2, 3, 1))                # (N, 2H, 2W, a)

    h = jnp.concatenate([x1, y_nhwc], axis=-1)               # (N, 2H, 2W, a+b)
    h = conv3x3_fused(h, y_nhwc, params["w1"], params["b1"],
                      apply_lrelu=True, residual=False, block_h=block_h)
    h = conv3x3_fused(h, y_nhwc, params["w2"], params["b2"],
                      apply_lrelu=True, residual=False, block_h=block_h)
    h = conv3x3_fused(h, y_nhwc, params["w3"], params["b3"],
                      apply_lrelu=True, residual=False, block_h=block_h)
    out = conv3x3_fused(h, x1, params["w4"], params["b4"],
                        apply_lrelu=False, residual=True, block_h=block_h)
    return jnp.transpose(out, (0, 3, 1, 2))                  # back to NCHW


# ---------------------------------------------------------------------------
# Parameter / interpolation-matrix construction (deterministic)
# ---------------------------------------------------------------------------
def _bilinear_matrix_2x(n_in):
    """(2*n_in, n_in) matrix reproducing PyTorch bilinear, align_corners=False."""
    n_out = 2 * n_in
    U = np.zeros((n_out, n_in), np.float32)
    for j in range(n_out):
        src = (j + 0.5) / 2.0 - 0.5
        src = max(src, 0.0)                       # PyTorch clamps negative src
        i0 = min(int(np.floor(src)), n_in - 1)
        i1 = min(i0 + 1, n_in - 1)
        frac = src - i0
        U[j, i0] += 1.0 - frac
        U[j, i1] += frac
    return U


def init_params(key, a, b, H, W):
    chans = [(a + b, 64 - b), (64, 64 - b), (64, 64 - b), (64, a)]
    params = {}
    for i, (cin, cout) in enumerate(chans, start=1):
        key, kw, kb = jax.random.split(key, 3)
        w_hwio = (jax.random.normal(kw, (3, 3, cin, cout), jnp.float32)
                  / np.sqrt(9.0 * cin))
        bias = 0.01 * jax.random.normal(kb, (1, cout), jnp.float32)
        params[f"w{i}_hwio"] = w_hwio
        params[f"b{i}_raw"] = bias
        w_flat = w_hwio.reshape(9 * cin, cout)    # row = (dy*3+dx)*Cin + cin
        if i < 4:
            # pad conv channels to the fused 64-ch output (last b cols are zero;
            # the kernel overwrites them with the concatenated y channels)
            w_flat = jnp.pad(w_flat, ((0, 0), (0, b)))
            bias = jnp.pad(bias, ((0, 0), (0, b)))
        params[f"w{i}"] = w_flat.astype(jnp.bfloat16)        # MXU operand dtype
        params[f"b{i}"] = bias.astype(jnp.float32)
    Uh = _bilinear_matrix_2x(H)
    Uw = _bilinear_matrix_2x(W)
    params["Uh"] = jnp.asarray(Uh)                           # (2H, H)
    params["UwT"] = jnp.asarray(np.ascontiguousarray(Uw.T))  # (W, 2W)
    return params


# ---------------------------------------------------------------------------
# Pure-JAX reference (no Pallas) for correctness checking
# ---------------------------------------------------------------------------
def reference_forward(params, x_nchw, y_nchw):
    xh = jnp.transpose(x_nchw, (0, 2, 3, 1)).astype(jnp.float32)
    yh = jnp.transpose(y_nchw, (0, 2, 3, 1)).astype(jnp.float32)
    Uh = params["Uh"]
    Uw = jnp.transpose(params["UwT"])
    t = jnp.einsum("jh,nhwc->njwc", Uh, xh)
    x1 = jnp.einsum("kw,njwc->njkc", Uw, t)

    def conv(h, w_hwio, bias, lrelu):
        # round the matmul operands to bf16 exactly like the kernel does
        hb = h.astype(jnp.bfloat16).astype(jnp.float32)
        wb = w_hwio.astype(jnp.bfloat16).astype(jnp.float32)
        o = jax.lax.conv_general_dilated(
            hb, wb, (1, 1), "SAME",
            dimension_numbers=("NHWC", "HWIO", "NHWC"),
            precision=jax.lax.Precision.HIGHEST)
        o = o + bias.reshape(1, 1, 1, -1)
        if lrelu:
            o = jnp.where(o >= 0, o, 0.2 * o)
        return o

    h = jnp.concatenate([x1, yh], axis=-1)
    h = jnp.concatenate([conv(h, params["w1_hwio"], params["b1_raw"], True), yh], axis=-1)
    h = jnp.concatenate([conv(h, params["w2_hwio"], params["b2_raw"], True), yh], axis=-1)
    h = jnp.concatenate([conv(h, params["w3_hwio"], params["b3_raw"], True), yh], axis=-1)
    x3 = conv(h, params["w4_hwio"], params["b4_raw"], False)
    return jnp.transpose(x3 + x1, (0, 3, 1, 2))


# ---------------------------------------------------------------------------
if __name__ == "__main__":
    a, b = 4, 4                       # CNNF(a=4, b=4)
    N, H, W = 2, 8, 8                 # x is low-res; y is at 2x resolution
    key = jax.random.PRNGKey(0)
    kx, ky, kp = jax.random.split(key, 3)
    x = jax.random.normal(kx, (N, a, H, W), jnp.float32)            # NCHW
    y = jax.random.normal(ky, (N, b, 2 * H, 2 * W), jnp.float32)    # NCHW
    params = init_params(kp, a, b, H, W)

    fwd = jax.jit(cnnf_forward)
    out = jax.block_until_ready(fwd(params, x, y))
    assert out.shape == (N, a, 2 * H, 2 * W), out.shape

    ref = jax.block_until_ready(reference_forward(params, x, y))
    np.testing.assert_allclose(np.asarray(out), np.asarray(ref),
                               rtol=1e-2, atol=1e-2)
    print("KERNEL_OK")
</pallas_src>

<mosaic_0001>
module attributes {stable_mosaic.version = 11 : i64} {
  func.func @_upsample2x_kernel(%arg0: i32, %arg1: memref<1x32x8xf32, #tpu.memory_space<vmem>>, %arg2: memref<8x16xf32, #tpu.memory_space<vmem>>, %arg3: memref<16x8xf32, #tpu.memory_space<vmem>>, %arg4: memref<1x4x16x16xf32, #tpu.memory_space<vmem>>) attributes {dimension_semantics = [#tpu.dimension_semantics<parallel>], iteration_bounds = array<i64: 2>, scalar_prefetch = 0 : i64, scratch_operands = 0 : i64, tpu.core_type = #tpu.core_type<tc>, window_params = [{transform_indices = @transform_0, window_bounds = array<i64: 1, 32, 8>}, {pipeline_mode = #tpu.pipeline_mode<synchronous>, transform_indices = @transform_1, window_bounds = array<i64: 8, 16>}, {pipeline_mode = #tpu.pipeline_mode<synchronous>, transform_indices = @transform_2, window_bounds = array<i64: 16, 8>}, {transform_indices = @transform_3, window_bounds = array<i64: 1, 4, 16, 16>}]} {
    %c0 = arith.constant 0 : index
    %c0_0 = arith.constant 0 : index
    %c0_1 = arith.constant 0 : index
    %0 = vector.load %arg1[%c0, %c0_0, %c0_1] : memref<1x32x8xf32, #tpu.memory_space<vmem>>, vector<1x32x8xf32>
    %1 = vector.shape_cast %0 : vector<1x32x8xf32> to vector<32x8xf32>
    %c0_2 = arith.constant 0 : index
    %c0_3 = arith.constant 0 : index
    %2 = vector.load %arg2[%c0_2, %c0_3] : memref<8x16xf32, #tpu.memory_space<vmem>>, vector<8x16xf32>
    %cst = arith.constant dense<0.000000e+00> : vector<32x16xf32>
    %3 = tpu.matmul %1, %2, %cst {dimension_numbers = #tpu.dot_dimension_numbers<[1], [0], [0], [1], [0, 0, 1, 1], [], []>} : vector<32x8xf32>, vector<8x16xf32>, vector<32x16xf32> -> vector<32x16xf32>
    %c0_4 = arith.constant 0 : index
    %c0_5 = arith.constant 0 : index
    %4 = vector.load %arg3[%c0_4, %c0_5] : memref<16x8xf32, #tpu.memory_space<vmem>>, vector<16x8xf32>
    %5 = vector.extract_strided_slice %3 {offsets = [0, 0], sizes = [8, 16], strides = [1, 1]} : vector<32x16xf32> to vector<8x16xf32>
    %cst_6 = arith.constant dense<0.000000e+00> : vector<16x16xf32>
    %6 = tpu.matmul %4, %5, %cst_6 {dimension_numbers = #tpu.dot_dimension_numbers<[1], [0], [0], [1], [0, 0, 1, 1], [], []>} : vector<16x8xf32>, vector<8x16xf32>, vector<16x16xf32> -> vector<16x16xf32>
    %c0_7 = arith.constant 0 : index
    %c0_8 = arith.constant 0 : index
    %c0_9 = arith.constant 0 : index
    %c0_10 = arith.constant 0 : index
    %7 = vector.load %arg4[%c0_7, %c0_8, %c0_9, %c0_10] : memref<1x4x16x16xf32, #tpu.memory_space<vmem>>, vector<1x1x16x16xf32>
    %8 = vector.shape_cast %7 : vector<1x1x16x16xf32> to vector<16x16xf32>
    %9 = vector.shape_cast %6 : vector<16x16xf32> to vector<1x1x16x16xf32>
    tpu.vector_store %arg4[%c0_7, %c0_8, %c0_9, %c0_10], %9 {strides = array<i32>} : memref<1x4x16x16xf32, #tpu.memory_space<vmem>>, vector<1x1x16x16xf32>,
    %c0_11 = arith.constant 0 : index
    %c0_12 = arith.constant 0 : index
    %10 = vector.load %arg3[%c0_11, %c0_12] : memref<16x8xf32, #tpu.memory_space<vmem>>, vector<16x8xf32>
    %11 = vector.extract_strided_slice %3 {offsets = [8, 0], sizes = [8, 16], strides = [1, 1]} : vector<32x16xf32> to vector<8x16xf32>
    %cst_13 = arith.constant dense<0.000000e+00> : vector<16x16xf32>
    %12 = tpu.matmul %10, %11, %cst_13 {dimension_numbers = #tpu.dot_dimension_numbers<[1], [0], [0], [1], [0, 0, 1, 1], [], []>} : vector<16x8xf32>, vector<8x16xf32>, vector<16x16xf32> -> vector<16x16xf32>
    %c0_14 = arith.constant 0 : index
    %c1 = arith.constant 1 : index
    %c0_15 = arith.constant 0 : index
    %c0_16 = arith.constant 0 : index
    %13 = vector.load %arg4[%c0_14, %c1, %c0_15, %c0_16] : memref<1x4x16x16xf32, #tpu.memory_space<vmem>>, vector<1x1x16x16xf32>
    %14 = vector.shape_cast %13 : vector<1x1x16x16xf32> to vector<16x16xf32>
    %15 = vector.shape_cast %12 : vector<16x16xf32> to vector<1x1x16x16xf32>
    tpu.vector_store %arg4[%c0_14, %c1, %c0_15, %c0_16], %15 {strides = array<i32>} : memref<1x4x16x16xf32, #tpu.memory_space<vmem>>, vector<1x1x16x16xf32>,
    %c0_17 = arith.constant 0 : index
    %c0_18 = arith.constant 0 : index
    %16 = vector.load %arg3[%c0_17, %c0_18] : memref<16x8xf32, #tpu.memory_space<vmem>>, vector<16x8xf32>
    %17 = vector.extract_strided_slice %3 {offsets = [16, 0], sizes = [8, 16], strides = [1, 1]} : vector<32x16xf32> to vector<8x16xf32>
    %cst_19 = arith.constant dense<0.000000e+00> : vector<16x16xf32>
    %18 = tpu.matmul %16, %17, %cst_19 {dimension_numbers = #tpu.dot_dimension_numbers<[1], [0], [0], [1], [0, 0, 1, 1], [], []>} : vector<16x8xf32>, vector<8x16xf32>, vector<16x16xf32> -> vector<16x16xf32>
    %c0_20 = arith.constant 0 : index
    %c2 = arith.constant 2 : index
    %c0_21 = arith.constant 0 : index
    %c0_22 = arith.constant 0 : index
    %19 = vector.load %arg4[%c0_20, %c2, %c0_21, %c0_22] : memref<1x4x16x16xf32, #tpu.memory_space<vmem>>, vector<1x1x16x16xf32>
    %20 = vector.shape_cast %19 : vector<1x1x16x16xf32> to vector<16x16xf32>
    %21 = vector.shape_cast %18 : vector<16x16xf32> to vector<1x1x16x16xf32>
    tpu.vector_store %arg4[%c0_20, %c2, %c0_21, %c0_22], %21 {strides = array<i32>} : memref<1x4x16x16xf32, #tpu.memory_space<vmem>>, vector<1x1x16x16xf32>,
    %c0_23 = arith.constant 0 : index
    %c0_24 = arith.constant 0 : index
    %22 = vector.load %arg3[%c0_23, %c0_24] : memref<16x8xf32, #tpu.memory_space<vmem>>, vector<16x8xf32>
    %23 = vector.extract_strided_slice %3 {offsets = [24, 0], sizes = [8, 16], strides = [1, 1]} : vector<32x16xf32> to vector<8x16xf32>
    %cst_25 = arith.constant dense<0.000000e+00> : vector<16x16xf32>
    %24 = tpu.matmul %22, %23, %cst_25 {dimension_numbers = #tpu.dot_dimension_numbers<[1], [0], [0], [1], [0, 0, 1, 1], [], []>} : vector<16x8xf32>, vector<8x16xf32>, vector<16x16xf32> -> vector<16x16xf32>
    %c0_26 = arith.constant 0 : index
    %c3 = arith.constant 3 : index
    %c0_27 = arith.constant 0 : index
    %c0_28 = arith.constant 0 : index
    %25 = vector.load %arg4[%c0_26, %c3, %c0_27, %c0_28] : memref<1x4x16x16xf32, #tpu.memory_space<vmem>>, vector<1x1x16x16xf32>
    %26 = vector.shape_cast %25 : vector<1x1x16x16xf32> to vector<16x16xf32>
    %27 = vector.shape_cast %24 : vector<16x16xf32> to vector<1x1x16x16xf32>
    tpu.vector_store %arg4[%c0_26, %c3, %c0_27, %c0_28], %27 {strides = array<i32>} : memref<1x4x16x16xf32, #tpu.memory_space<vmem>>, vector<1x1x16x16xf32>,
    return
  }
  func.func @transform_0(%arg0: i32) -> (i32, i32, i32) {
    %c0_i32 = arith.constant 0 : i32
    %c0_i32_0 = arith.constant 0 : i32
    %c0_i32_1 = arith.constant 0 : i32
    return %arg0, %c0_i32, %c0_i32_0 : i32, i32, i32
  }
  func.func @transform_1(%arg0: i32) -> (i32, i32) {
    %c0_i32 = arith.constant 0 : i32
    %c0_i32_0 = arith.constant 0 : i32
    %c0_i32_1 = arith.constant 0 : i32
    return %c0_i32, %c0_i32_0 : i32, i32
  }
  func.func @transform_2(%arg0: i32) -> (i32, i32) {
    %c0_i32 = arith.constant 0 : i32
    %c0_i32_0 = arith.constant 0 : i32
    %c0_i32_1 = arith.constant 0 : i32
    return %c0_i32, %c0_i32_0 : i32, i32
  }
  func.func @transform_3(%arg0: i32) -> (i32, i32, i32, i32) {
    %c0_i32 = arith.constant 0 : i32
    %c0_i32_0 = arith.constant 0 : i32
    %c0_i32_1 = arith.constant 0 : i32
    %c0_i32_2 = arith.constant 0 : i32
    return %arg0, %c0_i32, %c0_i32_0, %c0_i32_1 : i32, i32, i32, i32
  }
}

module attributes {stable_mosaic.version = 11 : i64} {
  func.func @_conv3x3_fused_kernel(%arg0: i32, %arg1: i32, %arg2: memref<1x8x16x8xf32, #tpu.memory_space<vmem>>, %arg3: memref<1x8x16x8xf32, #tpu.memory_space<vmem>>, %arg4: memref<1x8x16x8xf32, #tpu.memory_space<vmem>>, %arg5: memref<1x8x16x4xf32, #tpu.memory_space<vmem>>, %arg6: memref<72x64xbf16, #tpu.memory_space<vmem>>, %arg7: memref<1x64xf32, #tpu.memory_space<vmem>>, %arg8: memref<1x8x16x64xf32, #tpu.memory_space<vmem>>, %arg9: memref<10x18x8xbf16, #tpu.memory_space<vmem>>, %arg10: memref<8x16x72xbf16, #tpu.memory_space<vmem>>) attributes {dimension_semantics = [#tpu.dimension_semantics<parallel>, #tpu.dimension_semantics<arbitrary>], iteration_bounds = array<i64: 2, 2>, scalar_prefetch = 0 : i64, scratch_operands = 2 : i64, tpu.core_type = #tpu.core_type<tc>, window_params = [{transform_indices = @transform_0, window_bounds = array<i64: 1, 8, 16, 8>}, {transform_indices = @transform_1, window_bounds = array<i64: 1, 8, 16, 8>}, {transform_indices = @transform_2, window_bounds = array<i64: 1, 8, 16, 8>}, {transform_indices = @transform_3, window_bounds = array<i64: 1, 8, 16, 4>}, {pipeline_mode = #tpu.pipeline_mode<synchronous>, transform_indices = @transform_4, window_bounds = array<i64: 72, 64>}, {pipeline_mode = #tpu.pipeline_mode<synchronous>, transform_indices = @transform_5, window_bounds = array<i64: 1, 64>}, {transform_indices = @transform_6, window_bounds = array<i64: 1, 8, 16, 64>}]} {
    %cst = arith.constant 0.000000e+00 : bf16
    %0 = vector.broadcast %cst : bf16 to vector<10x18x8xbf16>
    %c0 = arith.constant 0 : index
    %c0_0 = arith.constant 0 : index
    %c0_1 = arith.constant 0 : index
    %1 = vector.load %arg9[%c0, %c0_0, %c0_1] : memref<10x18x8xbf16, #tpu.memory_space<vmem>>, vector<10x18x8xbf16>
    tpu.vector_store %arg9[%c0, %c0_0, %c0_1], %0 {strides = array<i32>} : memref<10x18x8xbf16, #tpu.memory_space<vmem>>, vector<10x18x8xbf16>,
    %c0_2 = arith.constant 0 : index
    %c0_3 = arith.constant 0 : index
    %c0_4 = arith.constant 0 : index
    %c0_5 = arith.constant 0 : index
    %2 = vector.load %arg2[%c0_2, %c0_3, %c0_4, %c0_5] : memref<1x8x16x8xf32, #tpu.memory_space<vmem>>, vector<1x8x16x8xf32>
    %3 = vector.shape_cast %2 : vector<1x8x16x8xf32> to vector<8x16x8xf32>
    %4 = arith.truncf %3 : vector<8x16x8xf32> to vector<8x16x8xbf16>
    %c1 = arith.constant 1 : index
    %c1_6 = arith.constant 1 : index
    %c0_7 = arith.constant 0 : index
    %5 = vector.load %arg9[%c1, %c1_6, %c0_7] : memref<10x18x8xbf16, #tpu.memory_space<vmem>>, vector<8x16x8xbf16>
    tpu.vector_store %arg9[%c1, %c1_6, %c0_7], %4 {strides = array<i32>} : memref<10x18x8xbf16, #tpu.memory_space<vmem>>, vector<8x16x8xbf16>,
    %c0_i32 = arith.constant 0 : i32
    %6 = arith.cmpi sgt, %arg1, %c0_i32 : i32
    %7 = arith.extui %6 : i1 to i32
    %c0_i32_8 = arith.constant 0 : i32
    %8 = arith.cmpi ne, %7, %c0_i32_8 : i32
    scf.if %8 {
      %c0_76 = arith.constant 0 : index
      %c7 = arith.constant 7 : index
      %c0_77 = arith.constant 0 : index
      %c0_78 = arith.constant 0 : index
      %51 = vector.load %arg3[%c0_76, %c7, %c0_77, %c0_78] : memref<1x8x16x8xf32, #tpu.memory_space<vmem>>, vector<1x1x16x8xf32>
      %52 = vector.shape_cast %51 : vector<1x1x16x8xf32> to vector<16x8xf32>
      %53 = arith.truncf %52 : vector<16x8xf32> to vector<16x8xbf16>
      %c0_79 = arith.constant 0 : index
      %c1_80 = arith.constant 1 : index
      %c0_81 = arith.constant 0 : index
      %54 = vector.load %arg9[%c0_79, %c1_80, %c0_81] : memref<10x18x8xbf16, #tpu.memory_space<vmem>>, vector<1x16x8xbf16>
      %55 = vector.shape_cast %54 : vector<1x16x8xbf16> to vector<16x8xbf16>
      %56 = vector.shape_cast %53 : vector<16x8xbf16> to vector<1x16x8xbf16>
      tpu.vector_store %arg9[%c0_79, %c1_80, %c0_81], %56 {strides = array<i32>} : memref<10x18x8xbf16, #tpu.memory_space<vmem>>, vector<1x16x8xbf16>,
    } else {
    }
    %c1_i32 = arith.constant 1 : i32
    %9 = arith.cmpi slt, %arg1, %c1_i32 : i32
    %10 = arith.extui %9 : i1 to i32
    %c0_i32_9 = arith.constant 0 : i32
    %11 = arith.cmpi ne, %10, %c0_i32_9 : i32
    scf.if %11 {
      %c0_76 = arith.constant 0 : index
      %c0_77 = arith.constant 0 : index
      %c0_78 = arith.constant 0 : index
      %c0_79 = arith.constant 0 : index
      %51 = vector.load %arg4[%c0_76, %c0_77, %c0_78, %c0_79] : memref<1x8x16x8xf32, #tpu.memory_space<vmem>>, vector<1x1x16x8xf32>
      %52 = vector.shape_cast %51 : vector<1x1x16x8xf32> to vector<16x8xf32>
      %53 = arith.truncf %52 : vector<16x8xf32> to vector<16x8xbf16>
      %c9 = arith.constant 9 : index
      %c1_80 = arith.constant 1 : index
      %c0_81 = arith.constant 0 : index
      %54 = vector.load %arg9[%c9, %c1_80, %c0_81] : memref<10x18x8xbf16, #tpu.memory_space<vmem>>, vector<1x16x8xbf16>
      %55 = vector.shape_cast %54 : vector<1x16x8xbf16> to vector<16x8xbf16>
      %56 = vector.shape_cast %53 : vector<16x8xbf16> to vector<1x16x8xbf16>
      tpu.vector_store %arg9[%c9, %c1_80, %c0_81], %56 {strides = array<i32>} : memref<10x18x8xbf16, #tpu.memory_space<vmem>>, vector<1x16x8xbf16>,
    } else {
    }
    %c0_10 = arith.constant 0 : index
    %c0_11 = arith.constant 0 : index
    %c0_12 = arith.constant 0 : index
    %12 = vector.load %arg9[%c0_10, %c0_11, %c0_12] : memref<10x18x8xbf16, #tpu.memory_space<vmem>>, vector<8x16x8xbf16>
    %c0_13 = arith.constant 0 : index
    %c0_14 = arith.constant 0 : index
    %c0_15 = arith.constant 0 : index
    %13 = vector.load %arg10[%c0_13, %c0_14, %c0_15] : memref<8x16x72xbf16, #tpu.memory_space<vmem>>, vector<8x16x8xbf16>
    tpu.vector_store %arg10[%c0_13, %c0_14, %c0_15], %12 {strides = array<i32>} : memref<8x16x72xbf16, #tpu.memory_space<vmem>>, vector<8x16x8xbf16>,
    %c0_16 = arith.constant 0 : index
    %c1_17 = arith.constant 1 : index
    %c0_18 = arith.constant 0 : index
    %14 = vector.load %arg9[%c0_16, %c1_17, %c0_18] : memref<10x18x8xbf16, #tpu.memory_space<vmem>>, vector<8x16x8xbf16>
    %c0_19 = arith.constant 0 : index
    %c0_20 = arith.constant 0 : index
    %c8 = arith.constant 8 : index
    %15 = vector.load %arg10[%c0_19, %c0_20, %c8] : memref<8x16x72xbf16, #tpu.memory_space<vmem>>, vector<8x16x8xbf16>
    tpu.vector_store %arg10[%c0_19, %c0_20, %c8], %14 {strides = array<i32>} : memref<8x16x72xbf16, #tpu.memory_space<vmem>>, vector<8x16x8xbf16>,
    %c0_21 = arith.constant 0 : index
    %c2 = arith.constant 2 : index
    %c0_22 = arith.constant 0 : index
    %16 = vector.load %arg9[%c0_21, %c2, %c0_22] : memref<10x18x8xbf16, #tpu.memory_space<vmem>>, vector<8x16x8xbf16>
    %c0_23 = arith.constant 0 : index
    %c0_24 = arith.constant 0 : index
    %c16 = arith.constant 16 : index
    %17 = vector.load %arg10[%c0_23, %c0_24, %c16] : memref<8x16x72xbf16, #tpu.memory_space<vmem>>, vector<8x16x8xbf16>
    tpu.vector_store %arg10[%c0_23, %c0_24, %c16], %16 {strides = array<i32>} : memref<8x16x72xbf16, #tpu.memory_space<vmem>>, vector<8x16x8xbf16>,
    %c1_25 = arith.constant 1 : index
    %c0_26 = arith.constant 0 : index
    %c0_27 = arith.constant 0 : index
    %18 = vector.load %arg9[%c1_25, %c0_26, %c0_27] : memref<10x18x8xbf16, #tpu.memory_space<vmem>>, vector<8x16x8xbf16>
    %c0_28 = arith.constant 0 : index
    %c0_29 = arith.constant 0 : index
    %c24 = arith.constant 24 : index
    %19 = vector.load %arg10[%c0_28, %c0_29, %c24] : memref<8x16x72xbf16, #tpu.memory_space<vmem>>, vector<8x16x8xbf16>
    tpu.vector_store %arg10[%c0_28, %c0_29, %c24], %18 {strides = array<i32>} : memref<8x16x72xbf16, #tpu.memory_space<vmem>>, vector<8x16x8xbf16>,
    %c1_30 = arith.constant 1 : index
    %c1_31 = arith.constant 1 : index
    %c0_32 = arith.constant 0 : index
    %20 = vector.load %arg9[%c1_30, %c1_31, %c0_32] : memref<10x18x8xbf16, #tpu.memory_space<vmem>>, vector<8x16x8xbf16>
    %c0_33 = arith.constant 0 : index
    %c0_34 = arith.constant 0 : index
    %c32 = arith.constant 32 : index
    %21 = vector.load %arg10[%c0_33, %c0_34, %c32] : memref<8x16x72xbf16, #tpu.memory_space<vmem>>, vector<8x16x8xbf16>
    tpu.vector_store %arg10[%c0_33, %c0_34, %c32], %20 {strides = array<i32>} : memref<8x16x72xbf16, #tpu.memory_space<vmem>>, vector<8x16x8xbf16>,
    %c1_35 = arith.constant 1 : index
    %c2_36 = arith.constant 2 : index
    %c0_37 = arith.constant 0 : index
    %22 = vector.load %arg9[%c1_35, %c2_36, %c0_37] : memref<10x18x8xbf16, #tpu.memory_space<vmem>>, vector<8x16x8xbf16>
    %c0_38 = arith.constant 0 : index
    %c0_39 = arith.constant 0 : index
    %c40 = arith.constant 40 : index
    %23 = vector.load %arg10[%c0_38, %c0_39, %c40] : memref<8x16x72xbf16, #tpu.memory_space<vmem>>, vector<8x16x8xbf16>
    tpu.vector_store %arg10[%c0_38, %c0_39, %c40], %22 {strides = array<i32>} : memref<8x16x72xbf16, #tpu.memory_space<vmem>>, vector<8x16x8xbf16>,
    %c2_40 = arith.constant 2 : index
    %c0_41 = arith.constant 0 : index
    %c0_42 = arith.constant 0 : index
    %24 = vector.load %arg9[%c2_40, %c0_41, %c0_42] : memref<10x18x8xbf16, #tpu.memory_space<vmem>>, vector<8x16x8xbf16>
    %c0_43 = arith.constant 0 : index
    %c0_44 = arith.constant 0 : index
    %c48 = arith.constant 48 : index
    %25 = vector.load %arg10[%c0_43, %c0_44, %c48] : memref<8x16x72xbf16, #tpu.memory_space<vmem>>, vector<8x16x8xbf16>
    tpu.vector_store %arg10[%c0_43, %c0_44, %c48], %24 {strides = array<i32>} : memref<8x16x72xbf16, #tpu.memory_space<vmem>>, vector<8x16x8xbf16>,
    %c2_45 = arith.constant 2 : index
    %c1_46 = arith.constant 1 : index
    %c0_47 = arith.constant 0 : index
    %26 = vector.load %arg9[%c2_45, %c1_46, %c0_47] : memref<10x18x8xbf16, #tpu.memory_space<vmem>>, vector<8x16x8xbf16>
    %c0_48 = arith.constant 0 : index
    %c0_49 = arith.constant 0 : index
    %c56 = arith.constant 56 : index
    %27 = vector.load %arg10[%c0_48, %c0_49, %c56] : memref<8x16x72xbf16, #tpu.memory_space<vmem>>, vector<8x16x8xbf16>
    tpu.vector_store %arg10[%c0_48, %c0_49, %c56], %26 {strides = array<i32>} : memref<8x16x72xbf16, #tpu.memory_space<vmem>>, vector<8x16x8xbf16>,
    %c2_50 = arith.constant 2 : index
    %c2_51 = arith.constant 2 : index
    %c0_52 = arith.constant 0 : index
    %28 = vector.load %arg9[%c2_50, %c2_51, %c0_52] : memref<10x18x8xbf16, #tpu.memory_space<vmem>>, vector<8x16x8xbf16>
    %c0_53 = arith.constant 0 : index
    %c0_54 = arith.constant 0 : index
    %c64 = arith.constant 64 : index
    %29 = vector.load %arg10[%c0_53, %c0_54, %c64] : memref<8x16x72xbf16, #tpu.memory_space<vmem>>, vector<8x16x8xbf16>
    tpu.vector_store %arg10[%c0_53, %c0_54, %c64], %28 {strides = array<i32>} : memref<8x16x72xbf16, #tpu.memory_space<vmem>>, vector<8x16x8xbf16>,
    %c0_55 = arith.constant 0 : index
    %c0_56 = arith.constant 0 : index
    %c0_57 = arith.constant 0 : index
    %30 = vector.load %arg10[%c0_55, %c0_56, %c0_57] : memref<8x16x72xbf16, #tpu.memory_space<vmem>>, vector<8x16x72xbf16>
    %31 = vector.shape_cast %30 : vector<8x16x72xbf16> to vector<128x72xbf16>
    %c0_58 = arith.constant 0 : index
    %c0_59 = arith.constant 0 : index
    %32 = vector.load %arg6[%c0_58, %c0_59] : memref<72x64xbf16, #tpu.memory_space<vmem>>, vector<72x64xbf16>
    %cst_60 = arith.constant dense<0.000000e+00> : vector<128x64xf32>
    %33 = tpu.matmul %31, %32, %cst_60 {dimension_numbers = #tpu.dot_dimension_numbers<[1], [0], [0], [1], [0, 0, 1, 1], [], []>} : vector<128x72xbf16>, vector<72x64xbf16>, vector<128x64xf32> -> vector<128x64xf32>
    %c0_61 = arith.constant 0 : index
    %c0_62 = arith.constant 0 : index
    %34 = vector.load %arg7[%c0_61, %c0_62] : memref<1x64xf32, #tpu.memory_space<vmem>>, vector<1x64xf32>
    %35 = vector.broadcast %34 : vector<1x64xf32> to vector<128x64xf32>
    %36 = arith.addf %33, %35 : vector<128x64xf32>
    %cst_63 = arith.constant 0.000000e+00 : f32
    %37 = vector.broadcast %cst_63 : f32 to vector<128x64xf32>
    %38 = arith.cmpf oge, %36, %37 : vector<128x64xf32>
    %cst_64 = arith.constant 2.000000e-01 : f32
    %39 = vector.broadcast %cst_64 : f32 to vector<128x64xf32>
    %40 = arith.mulf %39, %36 : vector<128x64xf32>
    %41 = arith.select %38, %36, %40 : vector<128x64xi1>, vector<128x64xf32>
    %42 = vector.shape_cast %41 : vector<128x64xf32> to vector<8x16x64xf32>
    %c0_65 = arith.constant 0 : index
    %c0_66 = arith.constant 0 : index
    %c0_67 = arith.constant 0 : index
    %c0_68 = arith.constant 0 : index
    %43 = vector.load %arg8[%c0_65, %c0_66, %c0_67, %c0_68] : memref<1x8x16x64xf32, #tpu.memory_space<vmem>>, vector<1x8x16x64xf32>
    %44 = vector.shape_cast %43 : vector<1x8x16x64xf32> to vector<8x16x64xf32>
    %45 = vector.shape_cast %42 : vector<8x16x64xf32> to vector<1x8x16x64xf32>
    tpu.vector_store %arg8[%c0_65, %c0_66, %c0_67, %c0_68], %45 {strides = array<i32>} : memref<1x8x16x64xf32, #tpu.memory_space<vmem>>, vector<1x8x16x64xf32>,
    %c0_69 = arith.constant 0 : index
    %c0_70 = arith.constant 0 : index
    %c0_71 = arith.constant 0 : index
    %c0_72 = arith.constant 0 : index
    %46 = vector.load %arg5[%c0_69, %c0_70, %c0_71, %c0_72] : memref<1x8x16x4xf32, #tpu.memory_space<vmem>>, vector<1x8x16x4xf32>
    %47 = vector.shape_cast %46 : vector<1x8x16x4xf32> to vector<8x16x4xf32>
    %c0_73 = arith.constant 0 : index
    %c0_74 = arith.constant 0 : index
    %c0_75 = arith.constant 0 : index
    %c60 = arith.constant 60 : index
    %48 = vector.load %arg8[%c0_73, %c0_74, %c0_75, %c60] : memref<1x8x16x64xf32, #tpu.memory_space<vmem>>, vector<1x8x16x4xf32>
    %49 = vector.shape_cast %48 : vector<1x8x16x4xf32> to vector<8x16x4xf32>
    %50 = vector.shape_cast %47 : vector<8x16x4xf32> to vector<1x8x16x4xf32>
    tpu.vector_store %arg8[%c0_73, %c0_74, %c0_75, %c60], %50 {strides = array<i32>} : memref<1x8x16x64xf32, #tpu.memory_space<vmem>>, vector<1x8x16x4xf32>,
    return
  }
  func.func @transform_0(%arg0: i32, %arg1: i32) -> (i32, i32, i32, i32) {
    %c0_i32 = arith.constant 0 : i32
    %c0_i32_0 = arith.constant 0 : i32
    %c0_i32_1 = arith.constant 0 : i32
    return %arg0, %arg1, %c0_i32, %c0_i32_0 : i32, i32, i32, i32
  }
  func.func @transform_1(%arg0: i32, %arg1: i32) -> (i32, i32, i32, i32) {
    %c1_i32 = arith.constant 1 : i32
    %0 = arith.subi %arg1, %c1_i32 : i32
    %c0_i32 = arith.constant 0 : i32
    %1 = arith.maxsi %0, %c0_i32 : i32
    %c0_i32_0 = arith.constant 0 : i32
    %c0_i32_1 = arith.constant 0 : i32
    %c0_i32_2 = arith.constant 0 : i32
    return %arg0, %1, %c0_i32_0, %c0_i32_1 : i32, i32, i32, i32
  }
  func.func @transform_2(%arg0: i32, %arg1: i32) -> (i32, i32, i32, i32) {
    %c1_i32 = arith.constant 1 : i32
    %0 = arith.addi %arg1, %c1_i32 : i32
    %c1_i32_0 = arith.constant 1 : i32
    %1 = arith.minsi %0, %c1_i32_0 : i32
    %c0_i32 = arith.constant 0 : i32
    %c0_i32_1 = arith.constant 0 : i32
    %c0_i32_2 = arith.constant 0 : i32
    return %arg0, %1, %c0_i32, %c0_i32_1 : i32, i32, i32, i32
  }
  func.func @transform_3(%arg0: i32, %arg1: i32) -> (i32, i32, i32, i32) {
    %c0_i32 = arith.constant 0 : i32
    %c0_i32_0 = arith.constant 0 : i32
    %c0_i32_1 = arith.constant 0 : i32
    return %arg0, %arg1, %c0_i32, %c0_i32_0 : i32, i32, i32, i32
  }
  func.func @transform_4(%arg0: i32, %arg1: i32) -> (i32, i32) {
    %c0_i32 = arith.constant 0 : i32
    %c0_i32_0 = arith.constant 0 : i32
    %c0_i32_1 = arith.constant 0 : i32
    return %c0_i32, %c0_i32_0 : i32, i32
  }
  func.func @transform_5(%arg0: i32, %arg1: i32) -> (i32, i32) {
    %c0_i32 = arith.constant 0 : i32
    %c0_i32_0 = arith.constant 0 : i32
    %c0_i32_1 = arith.constant 0 : i32
    return %c0_i32, %c0_i32_0 : i32, i32
  }
  func.func @transform_6(%arg0: i32, %arg1: i32) -> (i32, i32, i32, i32) {
    %c0_i32 = arith.constant 0 : i32
    %c0_i32_0 = arith.constant 0 : i32
    %c0_i32_1 = arith.constant 0 : i32
    return %arg0, %arg1, %c0_i32, %c0_i32_0 : i32, i32, i32, i32
  }
}

module attributes {stable_mosaic.version = 11 : i64} {
  func.func @_conv3x3_fused_kernel(%arg0: i32, %arg1: i32, %arg2: memref<1x8x16x64xf32, #tpu.memory_space<vmem>>, %arg3: memref<1x8x16x64xf32, #tpu.memory_space<vmem>>, %arg4: memref<1x8x16x64xf32, #tpu.memory_space<vmem>>, %arg5: memref<1x8x16x4xf32, #tpu.memory_space<vmem>>, %arg6: memref<576x64xbf16, #tpu.memory_space<vmem>>, %arg7: memref<1x64xf32, #tpu.memory_space<vmem>>, %arg8: memref<1x8x16x64xf32, #tpu.memory_space<vmem>>, %arg9: memref<10x18x64xbf16, #tpu.memory_space<vmem>>, %arg10: memref<8x16x576xbf16, #tpu.memory_space<vmem>>) attributes {dimension_semantics = [#tpu.dimension_semantics<parallel>, #tpu.dimension_semantics<arbitrary>], iteration_bounds = array<i64: 2, 2>, scalar_prefetch = 0 : i64, scratch_operands = 2 : i64, tpu.core_type = #tpu.core_type<tc>, window_params = [{transform_indices = @transform_0, window_bounds = array<i64: 1, 8, 16, 64>}, {transform_indices = @transform_1, window_bounds = array<i64: 1, 8, 16, 64>}, {transform_indices = @transform_2, window_bounds = array<i64: 1, 8, 16, 64>}, {transform_indices = @transform_3, window_bounds = array<i64: 1, 8, 16, 4>}, {pipeline_mode = #tpu.pipeline_mode<synchronous>, transform_indices = @transform_4, window_bounds = array<i64: 576, 64>}, {pipeline_mode = #tpu.pipeline_mode<synchronous>, transform_indices = @transform_5, window_bounds = array<i64: 1, 64>}, {transform_indices = @transform_6, window_bounds = array<i64: 1, 8, 16, 64>}]} {
    %cst = arith.constant 0.000000e+00 : bf16
    %0 = vector.broadcast %cst : bf16 to vector<10x18x64xbf16>
    %c0 = arith.constant 0 : index
    %c0_0 = arith.constant 0 : index
    %c0_1 = arith.constant 0 : index
    %1 = vector.load %arg9[%c0, %c0_0, %c0_1] : memref<10x18x64xbf16, #tpu.memory_space<vmem>>, vector<10x18x64xbf16>
    tpu.vector_store %arg9[%c0, %c0_0, %c0_1], %0 {strides = array<i32>} : memref<10x18x64xbf16, #tpu.memory_space<vmem>>, vector<10x18x64xbf16>,
    %c0_2 = arith.constant 0 : index
    %c0_3 = arith.constant 0 : index
    %c0_4 = arith.constant 0 : index
    %c0_5 = arith.constant 0 : index
    %2 = vector.load %arg2[%c0_2, %c0_3, %c0_4, %c0_5] : memref<1x8x16x64xf32, #tpu.memory_space<vmem>>, vector<1x8x16x64xf32>
    %3 = vector.shape_cast %2 : vector<1x8x16x64xf32> to vector<8x16x64xf32>
    %4 = arith.truncf %3 : vector<8x16x64xf32> to vector<8x16x64xbf16>
    %c1 = arith.constant 1 : index
    %c1_6 = arith.constant 1 : index
    %c0_7 = arith.constant 0 : index
    %5 = vector.load %arg9[%c1, %c1_6, %c0_7] : memref<10x18x64xbf16, #tpu.memory_space<vmem>>, vector<8x16x64xbf16>
    tpu.vector_store %arg9[%c1, %c1_6, %c0_7], %4 {strides = array<i32>} : memref<10x18x64xbf16, #tpu.memory_space<vmem>>, vector<8x16x64xbf16>,
    %c0_i32 = arith.constant 0 : i32
    %6 = arith.cmpi sgt, %arg1, %c0_i32 : i32
    %7 = arith.extui %6 : i1 to i32
    %c0_i32_8 = arith.constant 0 : i32
    %8 = arith.cmpi ne, %7, %c0_i32_8 : i32
    scf.if %8 {
      %c0_76 = arith.constant 0 : index
      %c7 = arith.constant 7 : index
      %c0_77 = arith.constant 0 : index
      %c0_78 = arith.constant 0 : index
      %51 = vector.load %arg3[%c0_76, %c7, %c0_77, %c0_78] : memref<1x8x16x64xf32, #tpu.memory_space<vmem>>, vector<1x1x16x64xf32>
      %52 = vector.shape_cast %51 : vector<1x1x16x64xf32> to vector<16x64xf32>
      %53 = arith.truncf %52 : vector<16x64xf32> to vector<16x64xbf16>
      %c0_79 = arith.constant 0 : index
      %c1_80 = arith.constant 1 : index
      %c0_81 = arith.constant 0 : index
      %54 = vector.load %arg9[%c0_79, %c1_80, %c0_81] : memref<10x18x64xbf16, #tpu.memory_space<vmem>>, vector<1x16x64xbf16>
      %55 = vector.shape_cast %54 : vector<1x16x64xbf16> to vector<16x64xbf16>
      %56 = vector.shape_cast %53 : vector<16x64xbf16> to vector<1x16x64xbf16>
      tpu.vector_store %arg9[%c0_79, %c1_80, %c0_81], %56 {strides = array<i32>} : memref<10x18x64xbf16, #tpu.memory_space<vmem>>, vector<1x16x64xbf16>,
    } else {
    }
    %c1_i32 = arith.constant 1 : i32
    %9 = arith.cmpi slt, %arg1, %c1_i32 : i32
    %10 = arith.extui %9 : i1 to i32
    %c0_i32_9 = arith.constant 0 : i32
    %11 = arith.cmpi ne, %10, %c0_i32_9 : i32
    scf.if %11 {
      %c0_76 = arith.constant 0 : index
      %c0_77 = arith.constant 0 : index
      %c0_78 = arith.constant 0 : index
      %c0_79 = arith.constant 0 : index
      %51 = vector.load %arg4[%c0_76, %c0_77, %c0_78, %c0_79] : memref<1x8x16x64xf32, #tpu.memory_space<vmem>>, vector<1x1x16x64xf32>
      %52 = vector.shape_cast %51 : vector<1x1x16x64xf32> to vector<16x64xf32>
      %53 = arith.truncf %52 : vector<16x64xf32> to vector<16x64xbf16>
      %c9 = arith.constant 9 : index
      %c1_80 = arith.constant 1 : index
      %c0_81 = arith.constant 0 : index
      %54 = vector.load %arg9[%c9, %c1_80, %c0_81] : memref<10x18x64xbf16, #tpu.memory_space<vmem>>, vector<1x16x64xbf16>
      %55 = vector.shape_cast %54 : vector<1x16x64xbf16> to vector<16x64xbf16>
      %56 = vector.shape_cast %53 : vector<16x64xbf16> to vector<1x16x64xbf16>
      tpu.vector_store %arg9[%c9, %c1_80, %c0_81], %56 {strides = array<i32>} : memref<10x18x64xbf16, #tpu.memory_space<vmem>>, vector<1x16x64xbf16>,
    } else {
    }
    %c0_10 = arith.constant 0 : index
    %c0_11 = arith.constant 0 : index
    %c0_12 = arith.constant 0 : index
    %12 = vector.load %arg9[%c0_10, %c0_11, %c0_12] : memref<10x18x64xbf16, #tpu.memory_space<vmem>>, vector<8x16x64xbf16>
    %c0_13 = arith.constant 0 : index
    %c0_14 = arith.constant 0 : index
    %c0_15 = arith.constant 0 : index
    %13 = vector.load %arg10[%c0_13, %c0_14, %c0_15] : memref<8x16x576xbf16, #tpu.memory_space<vmem>>, vector<8x16x64xbf16>
    tpu.vector_store %arg10[%c0_13, %c0_14, %c0_15], %12 {strides = array<i32>} : memref<8x16x576xbf16, #tpu.memory_space<vmem>>, vector<8x16x64xbf16>,
    %c0_16 = arith.constant 0 : index
    %c1_17 = arith.constant 1 : index
    %c0_18 = arith.constant 0 : index
    %14 = vector.load %arg9[%c0_16, %c1_17, %c0_18] : memref<10x18x64xbf16, #tpu.memory_space<vmem>>, vector<8x16x64xbf16>
    %c0_19 = arith.constant 0 : index
    %c0_20 = arith.constant 0 : index
    %c64 = arith.constant 64 : index
    %15 = vector.load %arg10[%c0_19, %c0_20, %c64] : memref<8x16x576xbf16, #tpu.memory_space<vmem>>, vector<8x16x64xbf16>
    tpu.vector_store %arg10[%c0_19, %c0_20, %c64], %14 {strides = array<i32>} : memref<8x16x576xbf16, #tpu.memory_space<vmem>>, vector<8x16x64xbf16>,
    %c0_21 = arith.constant 0 : index
    %c2 = arith.constant 2 : index
    %c0_22 = arith.constant 0 : index
    %16 = vector.load %arg9[%c0_21, %c2, %c0_22] : memref<10x18x64xbf16, #tpu.memory_space<vmem>>, vector<8x16x64xbf16>
    %c0_23 = arith.constant 0 : index
    %c0_24 = arith.constant 0 : index
    %c128 = arith.constant 128 : index
    %17 = vector.load %arg10[%c0_23, %c0_24, %c128] : memref<8x16x576xbf16, #tpu.memory_space<vmem>>, vector<8x16x64xbf16>
    tpu.vector_store %arg10[%c0_23, %c0_24, %c128], %16 {strides = array<i32>} : memref<8x16x576xbf16, #tpu.memory_space<vmem>>, vector<8x16x64xbf16>,
    %c1_25 = arith.constant 1 : index
    %c0_26 = arith.constant 0 : index
    %c0_27 = arith.constant 0 : index
    %18 = vector.load %arg9[%c1_25, %c0_26, %c0_27] : memref<10x18x64xbf16, #tpu.memory_space<vmem>>, vector<8x16x64xbf16>
    %c0_28 = arith.constant 0 : index
    %c0_29 = arith.constant 0 : index
    %c192 = arith.constant 192 : index
    %19 = vector.load %arg10[%c0_28, %c0_29, %c192] : memref<8x16x576xbf16, #tpu.memory_space<vmem>>, vector<8x16x64xbf16>
    tpu.vector_store %arg10[%c0_28, %c0_29, %c192], %18 {strides = array<i32>} : memref<8x16x576xbf16, #tpu.memory_space<vmem>>, vector<8x16x64xbf16>,
    %c1_30 = arith.constant 1 : index
    %c1_31 = arith.constant 1 : index
    %c0_32 = arith.constant 0 : index
    %20 = vector.load %arg9[%c1_30, %c1_31, %c0_32] : memref<10x18x64xbf16, #tpu.memory_space<vmem>>, vector<8x16x64xbf16>
    %c0_33 = arith.constant 0 : index
    %c0_34 = arith.constant 0 : index
    %c256 = arith.constant 256 : index
    %21 = vector.load %arg10[%c0_33, %c0_34, %c256] : memref<8x16x576xbf16, #tpu.memory_space<vmem>>, vector<8x16x64xbf16>
    tpu.vector_store %arg10[%c0_33, %c0_34, %c256], %20 {strides = array<i32>} : memref<8x16x576xbf16, #tpu.memory_space<vmem>>, vector<8x16x64xbf16>,
    %c1_35 = arith.constant 1 : index
    %c2_36 = arith.constant 2 : index
    %c0_37 = arith.constant 0 : index
    %22 = vector.load %arg9[%c1_35, %c2_36, %c0_37] : memref<10x18x64xbf16, #tpu.memory_space<vmem>>, vector<8x16x64xbf16>
    %c0_38 = arith.constant 0 : index
    %c0_39 = arith.constant 0 : index
    %c320 = arith.constant 320 : index
    %23 = vector.load %arg10[%c0_38, %c0_39, %c320] : memref<8x16x576xbf16, #tpu.memory_space<vmem>>, vector<8x16x64xbf16>
    tpu.vector_store %arg10[%c0_38, %c0_39, %c320], %22 {strides = array<i32>} : memref<8x16x576xbf16, #tpu.memory_space<vmem>>, vector<8x16x64xbf16>,
    %c2_40 = arith.constant 2 : index
    %c0_41 = arith.constant 0 : index
    %c0_42 = arith.constant 0 : index
    %24 = vector.load %arg9[%c2_40, %c0_41, %c0_42] : memref<10x18x64xbf16, #tpu.memory_space<vmem>>, vector<8x16x64xbf16>
    %c0_43 = arith.constant 0 : index
    %c0_44 = arith.constant 0 : index
    %c384 = arith.constant 384 : index
    %25 = vector.load %arg10[%c0_43, %c0_44, %c384] : memref<8x16x576xbf16, #tpu.memory_space<vmem>>, vector<8x16x64xbf16>
    tpu.vector_store %arg10[%c0_43, %c0_44, %c384], %24 {strides = array<i32>} : memref<8x16x576xbf16, #tpu.memory_space<vmem>>, vector<8x16x64xbf16>,
    %c2_45 = arith.constant 2 : index
    %c1_46 = arith.constant 1 : index
    %c0_47 = arith.constant 0 : index
    %26 = vector.load %arg9[%c2_45, %c1_46, %c0_47] : memref<10x18x64xbf16, #tpu.memory_space<vmem>>, vector<8x16x64xbf16>
    %c0_48 = arith.constant 0 : index
    %c0_49 = arith.constant 0 : index
    %c448 = arith.constant 448 : index
    %27 = vector.load %arg10[%c0_48, %c0_49, %c448] : memref<8x16x576xbf16, #tpu.memory_space<vmem>>, vector<8x16x64xbf16>
    tpu.vector_store %arg10[%c0_48, %c0_49, %c448], %26 {strides = array<i32>} : memref<8x16x576xbf16, #tpu.memory_space<vmem>>, vector<8x16x64xbf16>,
    %c2_50 = arith.constant 2 : index
    %c2_51 = arith.constant 2 : index
    %c0_52 = arith.constant 0 : index
    %28 = vector.load %arg9[%c2_50, %c2_51, %c0_52] : memref<10x18x64xbf16, #tpu.memory_space<vmem>>, vector<8x16x64xbf16>
    %c0_53 = arith.constant 0 : index
    %c0_54 = arith.constant 0 : index
    %c512 = arith.constant 512 : index
    %29 = vector.load %arg10[%c0_53, %c0_54, %c512] : memref<8x16x576xbf16, #tpu.memory_space<vmem>>, vector<8x16x64xbf16>
    tpu.vector_store %arg10[%c0_53, %c0_54, %c512], %28 {strides = array<i32>} : memref<8x16x576xbf16, #tpu.memory_space<vmem>>, vector<8x16x64xbf16>,
    %c0_55 = arith.constant 0 : index
    %c0_56 = arith.constant 0 : index
    %c0_57 = arith.constant 0 : index
    %30 = vector.load %arg10[%c0_55, %c0_56, %c0_57] : memref<8x16x576xbf16, #tpu.memory_space<vmem>>, vector<8x16x576xbf16>
    %31 = vector.shape_cast %30 : vector<8x16x576xbf16> to vector<128x576xbf16>
    %c0_58 = arith.constant 0 : index
    %c0_59 = arith.constant 0 : index
    %32 = vector.load %arg6[%c0_58, %c0_59] : memref<576x64xbf16, #tpu.memory_space<vmem>>, vector<576x64xbf16>
    %cst_60 = arith.constant dense<0.000000e+00> : vector<128x64xf32>
    %33 = tpu.matmul %31, %32, %cst_60 {dimension_numbers = #tpu.dot_dimension_numbers<[1], [0], [0], [1], [0, 0, 1, 1], [], []>} : vector<128x576xbf16>, vector<576x64xbf16>, vector<128x64xf32> -> vector<128x64xf32>
    %c0_61 = arith.constant 0 : index
    %c0_62 = arith.constant 0 : index
    %34 = vector.load %arg7[%c0_61, %c0_62] : memref<1x64xf32, #tpu.memory_space<vmem>>, vector<1x64xf32>
    %35 = vector.broadcast %34 : vector<1x64xf32> to vector<128x64xf32>
    %36 = arith.addf %33, %35 : vector<128x64xf32>
    %cst_63 = arith.constant 0.000000e+00 : f32
    %37 = vector.broadcast %cst_63 : f32 to vector<128x64xf32>
    %38 = arith.cmpf oge, %36, %37 : vector<128x64xf32>
    %cst_64 = arith.constant 2.000000e-01 : f32
    %39 = vector.broadcast %cst_64 : f32 to vector<128x64xf32>
    %40 = arith.mulf %39, %36 : vector<128x64xf32>
    %41 = arith.select %38, %36, %40 : vector<128x64xi1>, vector<128x64xf32>
    %42 = vector.shape_cast %41 : vector<128x64xf32> to vector<8x16x64xf32>
    %c0_65 = arith.constant 0 : index
    %c0_66 = arith.constant 0 : index
    %c0_67 = arith.constant 0 : index
    %c0_68 = arith.constant 0 : index
    %43 = vector.load %arg8[%c0_65, %c0_66, %c0_67, %c0_68] : memref<1x8x16x64xf32, #tpu.memory_space<vmem>>, vector<1x8x16x64xf32>
    %44 = vector.shape_cast %43 : vector<1x8x16x64xf32> to vector<8x16x64xf32>
    %45 = vector.shape_cast %42 : vector<8x16x64xf32> to vector<1x8x16x64xf32>
    tpu.vector_store %arg8[%c0_65, %c0_66, %c0_67, %c0_68], %45 {strides = array<i32>} : memref<1x8x16x64xf32, #tpu.memory_space<vmem>>, vector<1x8x16x64xf32>,
    %c0_69 = arith.constant 0 : index
    %c0_70 = arith.constant 0 : index
    %c0_71 = arith.constant 0 : index
    %c0_72 = arith.constant 0 : index
    %46 = vector.load %arg5[%c0_69, %c0_70, %c0_71, %c0_72] : memref<1x8x16x4xf32, #tpu.memory_space<vmem>>, vector<1x8x16x4xf32>
    %47 = vector.shape_cast %46 : vector<1x8x16x4xf32> to vector<8x16x4xf32>
    %c0_73 = arith.constant 0 : index
    %c0_74 = arith.constant 0 : index
    %c0_75 = arith.constant 0 : index
    %c60 = arith.constant 60 : index
    %48 = vector.load %arg8[%c0_73, %c0_74, %c0_75, %c60] : memref<1x8x16x64xf32, #tpu.memory_space<vmem>>, vector<1x8x16x4xf32>
    %49 = vector.shape_cast %48 : vector<1x8x16x4xf32> to vector<8x16x4xf32>
    %50 = vector.shape_cast %47 : vector<8x16x4xf32> to vector<1x8x16x4xf32>
    tpu.vector_store %arg8[%c0_73, %c0_74, %c0_75, %c60], %50 {strides = array<i32>} : memref<1x8x16x64xf32, #tpu.memory_space<vmem>>, vector<1x8x16x4xf32>,
    return
  }
  func.func @transform_0(%arg0: i32, %arg1: i32) -> (i32, i32, i32, i32) {
    %c0_i32 = arith.constant 0 : i32
    %c0_i32_0 = arith.constant 0 : i32
    %c0_i32_1 = arith.constant 0 : i32
    return %arg0, %arg1, %c0_i32, %c0_i32_0 : i32, i32, i32, i32
  }
  func.func @transform_1(%arg0: i32, %arg1: i32) -> (i32, i32, i32, i32) {
    %c1_i32 = arith.constant 1 : i32
    %0 = arith.subi %arg1, %c1_i32 : i32
    %c0_i32 = arith.constant 0 : i32
    %1 = arith.maxsi %0, %c0_i32 : i32
    %c0_i32_0 = arith.constant 0 : i32
    %c0_i32_1 = arith.constant 0 : i32
    %c0_i32_2 = arith.constant 0 : i32
    return %arg0, %1, %c0_i32_0, %c0_i32_1 : i32, i32, i32, i32
  }
  func.func @transform_2(%arg0: i32, %arg1: i32) -> (i32, i32, i32, i32) {
    %c1_i32 = arith.constant 1 : i32
    %0 = arith.addi %arg1, %c1_i32 : i32
    %c1_i32_0 = arith.constant 1 : i32
    %1 = arith.minsi %0, %c1_i32_0 : i32
    %c0_i32 = arith.constant 0 : i32
    %c0_i32_1 = arith.constant 0 : i32
    %c0_i32_2 = arith.constant 0 : i32
    return %arg0, %1, %c0_i32, %c0_i32_1 : i32, i32, i32, i32
  }
  func.func @transform_3(%arg0: i32, %arg1: i32) -> (i32, i32, i32, i32) {
    %c0_i32 = arith.constant 0 : i32
    %c0_i32_0 = arith.constant 0 : i32
    %c0_i32_1 = arith.constant 0 : i32
    return %arg0, %arg1, %c0_i32, %c0_i32_0 : i32, i32, i32, i32
  }
  func.func @transform_4(%arg0: i32, %arg1: i32) -> (i32, i32) {
    %c0_i32 = arith.constant 0 : i32
    %c0_i32_0 = arith.constant 0 : i32
    %c0_i32_1 = arith.constant 0 : i32
    return %c0_i32, %c0_i32_0 : i32, i32
  }
  func.func @transform_5(%arg0: i32, %arg1: i32) -> (i32, i32) {
    %c0_i32 = arith.constant 0 : i32
    %c0_i32_0 = arith.constant 0 : i32
    %c0_i32_1 = arith.constant 0 : i32
    return %c0_i32, %c0_i32_0 : i32, i32
  }
  func.func @transform_6(%arg0: i32, %arg1: i32) -> (i32, i32, i32, i32) {
    %c0_i32 = arith.constant 0 : i32
    %c0_i32_0 = arith.constant 0 : i32
    %c0_i32_1 = arith.constant 0 : i32
    return %arg0, %arg1, %c0_i32, %c0_i32_0 : i32, i32, i32, i32
  }
}

module attributes {stable_mosaic.version = 11 : i64} {
  func.func @_conv3x3_fused_kernel(%arg0: i32, %arg1: i32, %arg2: memref<1x8x16x64xf32, #tpu.memory_space<vmem>>, %arg3: memref<1x8x16x64xf32, #tpu.memory_space<vmem>>, %arg4: memref<1x8x16x64xf32, #tpu.memory_space<vmem>>, %arg5: memref<1x8x16x4xf32, #tpu.memory_space<vmem>>, %arg6: memref<576x4xbf16, #tpu.memory_space<vmem>>, %arg7: memref<1x4xf32, #tpu.memory_space<vmem>>, %arg8: memref<1x8x16x4xf32, #tpu.memory_space<vmem>>, %arg9: memref<10x18x64xbf16, #tpu.memory_space<vmem>>, %arg10: memref<8x16x576xbf16, #tpu.memory_space<vmem>>) attributes {dimension_semantics = [#tpu.dimension_semantics<parallel>, #tpu.dimension_semantics<arbitrary>], iteration_bounds = array<i64: 2, 2>, scalar_prefetch = 0 : i64, scratch_operands = 2 : i64, tpu.core_type = #tpu.core_type<tc>, window_params = [{transform_indices = @transform_0, window_bounds = array<i64: 1, 8, 16, 64>}, {transform_indices = @transform_1, window_bounds = array<i64: 1, 8, 16, 64>}, {transform_indices = @transform_2, window_bounds = array<i64: 1, 8, 16, 64>}, {transform_indices = @transform_3, window_bounds = array<i64: 1, 8, 16, 4>}, {pipeline_mode = #tpu.pipeline_mode<synchronous>, transform_indices = @transform_4, window_bounds = array<i64: 576, 4>}, {pipeline_mode = #tpu.pipeline_mode<synchronous>, transform_indices = @transform_5, window_bounds = array<i64: 1, 4>}, {transform_indices = @transform_6, window_bounds = array<i64: 1, 8, 16, 4>}]} {
    %cst = arith.constant 0.000000e+00 : bf16
    %0 = vector.broadcast %cst : bf16 to vector<10x18x64xbf16>
    %c0 = arith.constant 0 : index
    %c0_0 = arith.constant 0 : index
    %c0_1 = arith.constant 0 : index
    %1 = vector.load %arg9[%c0, %c0_0, %c0_1] : memref<10x18x64xbf16, #tpu.memory_space<vmem>>, vector<10x18x64xbf16>
    tpu.vector_store %arg9[%c0, %c0_0, %c0_1], %0 {strides = array<i32>} : memref<10x18x64xbf16, #tpu.memory_space<vmem>>, vector<10x18x64xbf16>,
    %c0_2 = arith.constant 0 : index
    %c0_3 = arith.constant 0 : index
    %c0_4 = arith.constant 0 : index
    %c0_5 = arith.constant 0 : index
    %2 = vector.load %arg2[%c0_2, %c0_3, %c0_4, %c0_5] : memref<1x8x16x64xf32, #tpu.memory_space<vmem>>, vector<1x8x16x64xf32>
    %3 = vector.shape_cast %2 : vector<1x8x16x64xf32> to vector<8x16x64xf32>
    %4 = arith.truncf %3 : vector<8x16x64xf32> to vector<8x16x64xbf16>
    %c1 = arith.constant 1 : index
    %c1_6 = arith.constant 1 : index
    %c0_7 = arith.constant 0 : index
    %5 = vector.load %arg9[%c1, %c1_6, %c0_7] : memref<10x18x64xbf16, #tpu.memory_space<vmem>>, vector<8x16x64xbf16>
    tpu.vector_store %arg9[%c1, %c1_6, %c0_7], %4 {strides = array<i32>} : memref<10x18x64xbf16, #tpu.memory_space<vmem>>, vector<8x16x64xbf16>,
    %c0_i32 = arith.constant 0 : i32
    %6 = arith.cmpi sgt, %arg1, %c0_i32 : i32
    %7 = arith.extui %6 : i1 to i32
    %c0_i32_8 = arith.constant 0 : i32
    %8 = arith.cmpi ne, %7, %c0_i32_8 : i32
    scf.if %8 {
      %c0_71 = arith.constant 0 : index
      %c7 = arith.constant 7 : index
      %c0_72 = arith.constant 0 : index
      %c0_73 = arith.constant 0 : index
      %44 = vector.load %arg3[%c0_71, %c7, %c0_72, %c0_73] : memref<1x8x16x64xf32, #tpu.memory_space<vmem>>, vector<1x1x16x64xf32>
      %45 = vector.shape_cast %44 : vector<1x1x16x64xf32> to vector<16x64xf32>
      %46 = arith.truncf %45 : vector<16x64xf32> to vector<16x64xbf16>
      %c0_74 = arith.constant 0 : index
      %c1_75 = arith.constant 1 : index
      %c0_76 = arith.constant 0 : index
      %47 = vector.load %arg9[%c0_74, %c1_75, %c0_76] : memref<10x18x64xbf16, #tpu.memory_space<vmem>>, vector<1x16x64xbf16>
      %48 = vector.shape_cast %47 : vector<1x16x64xbf16> to vector<16x64xbf16>
      %49 = vector.shape_cast %46 : vector<16x64xbf16> to vector<1x16x64xbf16>
      tpu.vector_store %arg9[%c0_74, %c1_75, %c0_76], %49 {strides = array<i32>} : memref<10x18x64xbf16, #tpu.memory_space<vmem>>, vector<1x16x64xbf16>,
    } else {
    }
    %c1_i32 = arith.constant 1 : i32
    %9 = arith.cmpi slt, %arg1, %c1_i32 : i32
    %10 = arith.extui %9 : i1 to i32
    %c0_i32_9 = arith.constant 0 : i32
    %11 = arith.cmpi ne, %10, %c0_i32_9 : i32
    scf.if %11 {
      %c0_71 = arith.constant 0 : index
      %c0_72 = arith.constant 0 : index
      %c0_73 = arith.constant 0 : index
      %c0_74 = arith.constant 0 : index
      %44 = vector.load %arg4[%c0_71, %c0_72, %c0_73, %c0_74] : memref<1x8x16x64xf32, #tpu.memory_space<vmem>>, vector<1x1x16x64xf32>
      %45 = vector.shape_cast %44 : vector<1x1x16x64xf32> to vector<16x64xf32>
      %46 = arith.truncf %45 : vector<16x64xf32> to vector<16x64xbf16>
      %c9 = arith.constant 9 : index
      %c1_75 = arith.constant 1 : index
      %c0_76 = arith.constant 0 : index
      %47 = vector.load %arg9[%c9, %c1_75, %c0_76] : memref<10x18x64xbf16, #tpu.memory_space<vmem>>, vector<1x16x64xbf16>
      %48 = vector.shape_cast %47 : vector<1x16x64xbf16> to vector<16x64xbf16>
      %49 = vector.shape_cast %46 : vector<16x64xbf16> to vector<1x16x64xbf16>
      tpu.vector_store %arg9[%c9, %c1_75, %c0_76], %49 {strides = array<i32>} : memref<10x18x64xbf16, #tpu.memory_space<vmem>>, vector<1x16x64xbf16>,
    } else {
    }
    %c0_10 = arith.constant 0 : index
    %c0_11 = arith.constant 0 : index
    %c0_12 = arith.constant 0 : index
    %12 = vector.load %arg9[%c0_10, %c0_11, %c0_12] : memref<10x18x64xbf16, #tpu.memory_space<vmem>>, vector<8x16x64xbf16>
    %c0_13 = arith.constant 0 : index
    %c0_14 = arith.constant 0 : index
    %c0_15 = arith.constant 0 : index
    %13 = vector.load %arg10[%c0_13, %c0_14, %c0_15] : memref<8x16x576xbf16, #tpu.memory_space<vmem>>, vector<8x16x64xbf16>
    tpu.vector_store %arg10[%c0_13, %c0_14, %c0_15], %12 {strides = array<i32>} : memref<8x16x576xbf16, #tpu.memory_space<vmem>>, vector<8x16x64xbf16>,
    %c0_16 = arith.constant 0 : index
    %c1_17 = arith.constant 1 : index
    %c0_18 = arith.constant 0 : index
    %14 = vector.load %arg9[%c0_16, %c1_17, %c0_18] : memref<10x18x64xbf16, #tpu.memory_space<vmem>>, vector<8x16x64xbf16>
    %c0_19 = arith.constant 0 : index
    %c0_20 = arith.constant 0 : index
    %c64 = arith.constant 64 : index
    %15 = vector.load %arg10[%c0_19, %c0_20, %c64] : memref<8x16x576xbf16, #tpu.memory_space<vmem>>, vector<8x16x64xbf16>
    tpu.vector_store %arg10[%c0_19, %c0_20, %c64], %14 {strides = array<i32>} : memref<8x16x576xbf16, #tpu.memory_space<vmem>>, vector<8x16x64xbf16>,
    %c0_21 = arith.constant 0 : index
    %c2 = arith.constant 2 : index
    %c0_22 = arith.constant 0 : index
    %16 = vector.load %arg9[%c0_21, %c2, %c0_22] : memref<10x18x64xbf16, #tpu.memory_space<vmem>>, vector<8x16x64xbf16>
    %c0_23 = arith.constant 0 : index
    %c0_24 = arith.constant 0 : index
    %c128 = arith.constant 128 : index
    %17 = vector.load %arg10[%c0_23, %c0_24, %c128] : memref<8x16x576xbf16, #tpu.memory_space<vmem>>, vector<8x16x64xbf16>
    tpu.vector_store %arg10[%c0_23, %c0_24, %c128], %16 {strides = array<i32>} : memref<8x16x576xbf16, #tpu.memory_space<vmem>>, vector<8x16x64xbf16>,
    %c1_25 = arith.constant 1 : index
    %c0_26 = arith.constant 0 : index
    %c0_27 = arith.constant 0 : index
    %18 = vector.load %arg9[%c1_25, %c0_26, %c0_27] : memref<10x18x64xbf16, #tpu.memory_space<vmem>>, vector<8x16x64xbf16>
    %c0_28 = arith.constant 0 : index
    %c0_29 = arith.constant 0 : index
    %c192 = arith.constant 192 : index
    %19 = vector.load %arg10[%c0_28, %c0_29, %c192] : memref<8x16x576xbf16, #tpu.memory_space<vmem>>, vector<8x16x64xbf16>
    tpu.vector_store %arg10[%c0_28, %c0_29, %c192], %18 {strides = array<i32>} : memref<8x16x576xbf16, #tpu.memory_space<vmem>>, vector<8x16x64xbf16>,
    %c1_30 = arith.constant 1 : index
    %c1_31 = arith.constant 1 : index
    %c0_32 = arith.constant 0 : index
    %20 = vector.load %arg9[%c1_30, %c1_31, %c0_32] : memref<10x18x64xbf16, #tpu.memory_space<vmem>>, vector<8x16x64xbf16>
    %c0_33 = arith.constant 0 : index
    %c0_34 = arith.constant 0 : index
    %c256 = arith.constant 256 : index
    %21 = vector.load %arg10[%c0_33, %c0_34, %c256] : memref<8x16x576xbf16, #tpu.memory_space<vmem>>, vector<8x16x64xbf16>
    tpu.vector_store %arg10[%c0_33, %c0_34, %c256], %20 {strides = array<i32>} : memref<8x16x576xbf16, #tpu.memory_space<vmem>>, vector<8x16x64xbf16>,
    %c1_35 = arith.constant 1 : index
    %c2_36 = arith.constant 2 : index
    %c0_37 = arith.constant 0 : index
    %22 = vector.load %arg9[%c1_35, %c2_36, %c0_37] : memref<10x18x64xbf16, #tpu.memory_space<vmem>>, vector<8x16x64xbf16>
    %c0_38 = arith.constant 0 : index
    %c0_39 = arith.constant 0 : index
    %c320 = arith.constant 320 : index
    %23 = vector.load %arg10[%c0_38, %c0_39, %c320] : memref<8x16x576xbf16, #tpu.memory_space<vmem>>, vector<8x16x64xbf16>
    tpu.vector_store %arg10[%c0_38, %c0_39, %c320], %22 {strides = array<i32>} : memref<8x16x576xbf16, #tpu.memory_space<vmem>>, vector<8x16x64xbf16>,
    %c2_40 = arith.constant 2 : index
    %c0_41 = arith.constant 0 : index
    %c0_42 = arith.constant 0 : index
    %24 = vector.load %arg9[%c2_40, %c0_41, %c0_42] : memref<10x18x64xbf16, #tpu.memory_space<vmem>>, vector<8x16x64xbf16>
    %c0_43 = arith.constant 0 : index
    %c0_44 = arith.constant 0 : index
    %c384 = arith.constant 384 : index
    %25 = vector.load %arg10[%c0_43, %c0_44, %c384] : memref<8x16x576xbf16, #tpu.memory_space<vmem>>, vector<8x16x64xbf16>
    tpu.vector_store %arg10[%c0_43, %c0_44, %c384], %24 {strides = array<i32>} : memref<8x16x576xbf16, #tpu.memory_space<vmem>>, vector<8x16x64xbf16>,
    %c2_45 = arith.constant 2 : index
    %c1_46 = arith.constant 1 : index
    %c0_47 = arith.constant 0 : index
    %26 = vector.load %arg9[%c2_45, %c1_46, %c0_47] : memref<10x18x64xbf16, #tpu.memory_space<vmem>>, vector<8x16x64xbf16>
    %c0_48 = arith.constant 0 : index
    %c0_49 = arith.constant 0 : index
    %c448 = arith.constant 448 : index
    %27 = vector.load %arg10[%c0_48, %c0_49, %c448] : memref<8x16x576xbf16, #tpu.memory_space<vmem>>, vector<8x16x64xbf16>
    tpu.vector_store %arg10[%c0_48, %c0_49, %c448], %26 {strides = array<i32>} : memref<8x16x576xbf16, #tpu.memory_space<vmem>>, vector<8x16x64xbf16>,
    %c2_50 = arith.constant 2 : index
    %c2_51 = arith.constant 2 : index
    %c0_52 = arith.constant 0 : index
    %28 = vector.load %arg9[%c2_50, %c2_51, %c0_52] : memref<10x18x64xbf16, #tpu.memory_space<vmem>>, vector<8x16x64xbf16>
    %c0_53 = arith.constant 0 : index
    %c0_54 = arith.constant 0 : index
    %c512 = arith.constant 512 : index
    %29 = vector.load %arg10[%c0_53, %c0_54, %c512] : memref<8x16x576xbf16, #tpu.memory_space<vmem>>, vector<8x16x64xbf16>
    tpu.vector_store %arg10[%c0_53, %c0_54, %c512], %28 {strides = array<i32>} : memref<8x16x576xbf16, #tpu.memory_space<vmem>>, vector<8x16x64xbf16>,
    %c0_55 = arith.constant 0 : index
    %c0_56 = arith.constant 0 : index
    %c0_57 = arith.constant 0 : index
    %30 = vector.load %arg10[%c0_55, %c0_56, %c0_57] : memref<8x16x576xbf16, #tpu.memory_space<vmem>>, vector<8x16x576xbf16>
    %31 = vector.shape_cast %30 : vector<8x16x576xbf16> to vector<128x576xbf16>
    %c0_58 = arith.constant 0 : index
    %c0_59 = arith.constant 0 : index
    %32 = vector.load %arg6[%c0_58, %c0_59] : memref<576x4xbf16, #tpu.memory_space<vmem>>, vector<576x4xbf16>
    %cst_60 = arith.constant dense<0.000000e+00> : vector<128x4xf32>
    %33 = tpu.matmul %31, %32, %cst_60 {dimension_numbers = #tpu.dot_dimension_numbers<[1], [0], [0], [1], [0, 0, 1, 1], [], []>} : vector<128x576xbf16>, vector<576x4xbf16>, vector<128x4xf32> -> vector<128x4xf32>
    %c0_61 = arith.constant 0 : index
    %c0_62 = arith.constant 0 : index
    %34 = vector.load %arg7[%c0_61, %c0_62] : memref<1x4xf32, #tpu.memory_space<vmem>>, vector<1x4xf32>
    %35 = vector.broadcast %34 : vector<1x4xf32> to vector<128x4xf32>
    %36 = arith.addf %33, %35 : vector<128x4xf32>
    %37 = vector.shape_cast %36 : vector<128x4xf32> to vector<8x16x4xf32>
    %c0_63 = arith.constant 0 : index
    %c0_64 = arith.constant 0 : index
    %c0_65 = arith.constant 0 : index
    %c0_66 = arith.constant 0 : index
    %38 = vector.load %arg5[%c0_63, %c0_64, %c0_65, %c0_66] : memref<1x8x16x4xf32, #tpu.memory_space<vmem>>, vector<1x8x16x4xf32>
    %39 = vector.shape_cast %38 : vector<1x8x16x4xf32> to vector<8x16x4xf32>
    %40 = arith.addf %37, %39 : vector<8x16x4xf32>
    %c0_67 = arith.constant 0 : index
    %c0_68 = arith.constant 0 : index
    %c0_69 = arith.constant 0 : index
    %c0_70 = arith.constant 0 : index
    %41 = vector.load %arg8[%c0_67, %c0_68, %c0_69, %c0_70] : memref<1x8x16x4xf32, #tpu.memory_space<vmem>>, vector<1x8x16x4xf32>
    %42 = vector.shape_cast %41 : vector<1x8x16x4xf32> to vector<8x16x4xf32>
    %43 = vector.shape_cast %40 : vector<8x16x4xf32> to vector<1x8x16x4xf32>
    tpu.vector_store %arg8[%c0_67, %c0_68, %c0_69, %c0_70], %43 {strides = array<i32>} : memref<1x8x16x4xf32, #tpu.memory_space<vmem>>, vector<1x8x16x4xf32>,
    return
  }
  func.func @transform_0(%arg0: i32, %arg1: i32) -> (i32, i32, i32, i32) {
    %c0_i32 = arith.constant 0 : i32
    %c0_i32_0 = arith.constant 0 : i32
    %c0_i32_1 = arith.constant 0 : i32
    return %arg0, %arg1, %c0_i32, %c0_i32_0 : i32, i32, i32, i32
  }
  func.func @transform_1(%arg0: i32, %arg1: i32) -> (i32, i32, i32, i32) {
    %c1_i32 = arith.constant 1 : i32
    %0 = arith.subi %arg1, %c1_i32 : i32
    %c0_i32 = arith.constant 0 : i32
    %1 = arith.maxsi %0, %c0_i32 : i32
    %c0_i32_0 = arith.constant 0 : i32
    %c0_i32_1 = arith.constant 0 : i32
    %c0_i32_2 = arith.constant 0 : i32
    return %arg0, %1, %c0_i32_0, %c0_i32_1 : i32, i32, i32, i32
  }
  func.func @transform_2(%arg0: i32, %arg1: i32) -> (i32, i32, i32, i32) {
    %c1_i32 = arith.constant 1 : i32
    %0 = arith.addi %arg1, %c1_i32 : i32
    %c1_i32_0 = arith.constant 1 : i32
    %1 = arith.minsi %0, %c1_i32_0 : i32
    %c0_i32 = arith.constant 0 : i32
    %c0_i32_1 = arith.constant 0 : i32
    %c0_i32_2 = arith.constant 0 : i32
    return %arg0, %1, %c0_i32, %c0_i32_1 : i32, i32, i32, i32
  }
  func.func @transform_3(%arg0: i32, %arg1: i32) -> (i32, i32, i32, i32) {
    %c0_i32 = arith.constant 0 : i32
    %c0_i32_0 = arith.constant 0 : i32
    %c0_i32_1 = arith.constant 0 : i32
    return %arg0, %arg1, %c0_i32, %c0_i32_0 : i32, i32, i32, i32
  }
  func.func @transform_4(%arg0: i32, %arg1: i32) -> (i32, i32) {
    %c0_i32 = arith.constant 0 : i32
    %c0_i32_0 = arith.constant 0 : i32
    %c0_i32_1 = arith.constant 0 : i32
    return %c0_i32, %c0_i32_0 : i32, i32
  }
  func.func @transform_5(%arg0: i32, %arg1: i32) -> (i32, i32) {
    %c0_i32 = arith.constant 0 : i32
    %c0_i32_0 = arith.constant 0 : i32
    %c0_i32_1 = arith.constant 0 : i32
    return %c0_i32, %c0_i32_0 : i32, i32
  }
  func.func @transform_6(%arg0: i32, %arg1: i32) -> (i32, i32, i32, i32) {
    %c0_i32 = arith.constant 0 : i32
    %c0_i32_0 = arith.constant 0 : i32
    %c0_i32_1 = arith.constant 0 : i32
    return %arg0, %arg1, %c0_i32, %c0_i32_0 : i32, i32, i32, i32
  }
}

</mosaic_0001>

<llo_original>
// kernel: cnnf_forward.5
$region0: #{cnnf_forward.5}
  #allocation0 [shape = 'u32[]', space=smem, size = 0x4, offset = 0x4, fixed_abs, tag = 'smem constant byte address 0x4 - core index']
  #allocation1 [shape = 'u32[144,128]{1,0:T(1,128)}', space=vmem, size = 0x12000, scoped, tag = 'internal scratch']
  %s0 = inlined_call_operand.vmem [shape: f32[2,32,8], index: 0, kind: input, shape index: {}]
  %s1 = inlined_call_operand.vmem [shape: f32[8,16], index: 1, kind: input, shape index: {}]
  %s2 = inlined_call_operand.vmem [shape: f32[16,8], index: 2, kind: input, shape index: {}]
  %s3 = inlined_call_operand.vmem [shape: f32[2,4,16,16], index: 3, kind: output, shape index: {}]
  %s4 = sld [smem:[#allocation0]]
  $region45: #{cnnf_forward.5} parent=0
    _
  %s6 = ssub.s32 1, %s4
  %s7 = scalar_select 0, %s6, %s4
  loop: start=0, step=1, limit=4
  $region2: #{cnnf_forward.5} parent=0 // loop_pre_header
    _
  $region3: #{cnnf_forward.5} parent=0 // loop_header
    %s9 = sphi 0, %s13
    %p10 = scmp.ge.s32.totalorder %s9, 4
    %s19 = sphi 0, %s21
    %s22 = sphi 0, %s19
    %s23 = sphi 0, %s22
    %s39 = sphi 0, %s23
    %s43 = sphi 0, %s43
    %s45 = sphi 0, %s43
    %s46 = sphi 0, %s45
    %s60 = sphi 0, %s46
    %s64 = sphi 0, %s64
    %s66 = sphi 0, %s64
    %s67 = sphi 0, %s66
    %s81 = sphi 0, %s67
    %s87 = sphi 0, %s89
    %s90 = sphi 0, %s87
    %s91 = sphi 0, %s90
    %s107 = sphi 0, %s91
  $region4: #{cnnf_forward.5} parent=0 // loop_header_branch
    %12 = sbr.rel (%p10) target = $region8
  $region5: #{cnnf_forward.5} parent=0 // loop_body
    %s14 = ssub.s32 %s9, 1
    %s15 = ssub.s32 %s9, 2
    %s16 = sadd.s32 %s9, 1
    %s17 = ssub.s32 %s9, %s16
    %p18 = scmp.eq.s32.totalorder %s17, 0
    %s20 = sadd.s32 %s19, 1
    %s21 = scalar_select %p18, %s19, %s20
    %p24 = pneg %p18
    %p25 = scmp.eq.s32.totalorder %s9, 1
    %p26 = por %p24, %p25
    %p27 = scmp.ne.s32.totalorder %s19, %s22
    %p28 = scmp.eq.s32.totalorder %s9, 0
    %p29 = por %p27, %p28
    %p30 = scmp.ne.s32.totalorder %s19, %s22
    %p31 = scmp.eq.s32.totalorder %s14, 1
    %p32 = por %p30, %p31
    %p33 = scmp.ne.s32.totalorder %s22, %s23
    %p34 = scmp.eq.s32.totalorder %s14, 0
    %p35 = por %p33, %p34
    %p36 = scmp.ne.s32.totalorder %s22, %s23
    %p37 = scmp.eq.s32.totalorder %s15, 1
    %p38 = por %p36, %p37
    %p40 = scmp.ne.s32.totalorder %s23, %s39
    %p41 = scmp.eq.s32.totalorder %s15, 0
    %p42 = por %p40, %p41
    %s44 = sadd.s32 %s43, 1
    %p47 = scmp.eq.s32.totalorder %s9, 1
    %p48 = scmp.ne.s32.totalorder %s43, %s45
    %p49 = scmp.eq.s32.totalorder %s9, 0
    %p50 = por %p48, %p49
    %p51 = scmp.ne.s32.totalorder %s43, %s45
    %p52 = scmp.eq.s32.totalorder %s14, 1
    %p53 = por %p51, %p52
    %p54 = scmp.ne.s32.totalorder %s45, %s46
    %p55 = scmp.eq.s32.totalorder %s14, 0
    %p56 = por %p54, %p55
    %p57 = scmp.ne.s32.totalorder %s45, %s46
    %p58 = scmp.eq.s32.totalorder %s15, 1
    %p59 = por %p57, %p58
    %p61 = scmp.ne.s32.totalorder %s46, %s60
    %p62 = scmp.eq.s32.totalorder %s15, 0
    %p63 = por %p61, %p62
    %s65 = sadd.s32 %s64, 1
    %p68 = scmp.eq.s32.totalorder %s9, 1
    %p69 = scmp.ne.s32.totalorder %s64, %s66
    %p70 = scmp.eq.s32.totalorder %s9, 0
    %p71 = por %p69, %p70
    %p72 = scmp.ne.s32.totalorder %s64, %s66
    %p73 = scmp.eq.s32.totalorder %s14, 1
    %p74 = por %p72, %p73
    %p75 = scmp.ne.s32.totalorder %s66, %s67
    %p76 = scmp.eq.s32.totalorder %s14, 0
    %p77 = por %p75, %p76
    %p78 = scmp.ne.s32.totalorder %s66, %s67
    %p79 = scmp.eq.s32.totalorder %s15, 1
    %p80 = por %p78, %p79
    %p82 = scmp.ne.s32.totalorder %s67, %s81
    %p83 = scmp.eq.s32.totalorder %s15, 0
    %p84 = por %p82, %p83
    %s85 = ssub.s32 %s9, %s16
    %p86 = scmp.eq.s32.totalorder %s85, 0
    %s88 = sadd.s32 %s87, 1
    %s89 = scalar_select %p86, %s87, %s88
    %p92 = pneg %p86
    %p93 = scmp.eq.s32.totalorder %s9, 1
    %p94 = por %p92, %p93
    %p95 = scmp.ne.s32.totalorder %s87, %s90
    %p96 = scmp.eq.s32.totalorder %s9, 0
    %p97 = por %p95, %p96
    %p98 = scmp.ne.s32.totalorder %s87, %s90
    %p99 = scmp.eq.s32.totalorder %s14, 1
    %p100 = por %p98, %p99
    %p101 = scmp.ne.s32.totalorder %s90, %s91
    %p102 = scmp.eq.s32.totalorder %s14, 0
    %p103 = por %p101, %p102
    %p104 = scmp.ne.s32.totalorder %s90, %s91
    %p105 = scmp.eq.s32.totalorder %s15, 1
    %p106 = por %p104, %p105
    %p108 = scmp.ne.s32.totalorder %s91, %s107
    %p109 = scmp.eq.s32.totalorder %s15, 0
    %p110 = por %p108, %p109
    %p111 = scmp.le.s32.totalorder 1, %s9
    %p112 = scmp.lt.s32.totalorder %s9, 3
    %p113 = pnand %p111, %p112
    %p114 = pneg %p113
    // Predicated region
    $region9: #{cnnf_forward.5} parent=5 // pred_check
      _
    $region10: #{cnnf_forward.5} parent=5 // pred_check_branch
      %116 = sbr.rel (%p113) target = $region12
    $region11: #{cnnf_forward.5} parent=5 // pred_region
      %s117 = ssub.s32 %s9, 1
      // Predicated region
      $region13: #{cnnf_forward.5} parent=11 // pred_check
        %p118 = pneg %p56
      $region14: #{cnnf_forward.5} parent=11 // pred_check_branch
        %120 = sbr.rel (%p118) target = $region16
      $region15: #{cnnf_forward.5} parent=11 // pred_region
        _
      $region16: #{cnnf_forward.5} parent=11 // pred_fallthru
        _
      // Predicated region
      $region17: #{cnnf_forward.5} parent=11 // pred_check
        %p121 = pneg %p77
      $region18: #{cnnf_forward.5} parent=11 // pred_check_branch
        %123 = sbr.rel (%p121) target = $region20
      $region19: #{cnnf_forward.5} parent=11 // pred_region
        _
      $region20: #{cnnf_forward.5} parent=11 // pred_fallthru
        _
    $region12: #{cnnf_forward.5} parent=5 // pred_fallthru
      _
    %p124 = scmp.lt.s32.totalorder %s9, 2
    // Predicated region
    $region21: #{cnnf_forward.5} parent=5 // pred_check
      %p125 = pneg %p124
    $region22: #{cnnf_forward.5} parent=5 // pred_check_branch
      %127 = sbr.rel (%p125) target = $region24
    $region23: #{cnnf_forward.5} parent=5 // pred_region
      // Predicated region
      $region25: #{cnnf_forward.5} parent=23 // pred_check
        %p128 = pneg %p29
      $region26: #{cnnf_forward.5} parent=23 // pred_check_branch
        %130 = sbr.rel (%p128) target = $region28
      $region27: #{cnnf_forward.5} parent=23 // pred_region
        %p131 = scmp.lt.s32.totalorder %s9, 1
        %s132 = scalar_select %p131, %s9, 1
        %s133 = smul.addr %s132, 4
        %s134 = smul.addr %s133, 8
        %s135 = scalar_lea.vmem %s0, %s134
      $region28: #{cnnf_forward.5} parent=23 // pred_fallthru
        _
    $region24: #{cnnf_forward.5} parent=5 // pred_fallthru
      _
    %p136 = scmp.le.s32.totalorder 1, %s9
    %p137 = scmp.lt.s32.totalorder %s9, 3
    %p138 = pnand %p136, %p137
    %p139 = pneg %p138
    // Predicated region
    $region29: #{cnnf_forward.5} parent=5 // pred_check
      _
    $region30: #{cnnf_forward.5} parent=5 // pred_check_branch
      %141 = sbr.rel (%p138) target = $region32
    $region31: #{cnnf_forward.5} parent=5 // pred_region
      %s142 = ssub.s32 %s9, 1
      %p143 = scmp.lt.s32.totalorder %s14, 1
      %s144 = scalar_select %p143, %s14, 1
      %s145 = smul.addr %s144, 4
      %s146 = smul.addr %s145, 8
      %s147 = scalar_lea.vmem %s0, %s146
      %p148 = pneg %p35
      %p149 = pneg %p32
      %p150 = pneg %p56
      %p151 = pneg %p53
      %p152 = pneg %p77
      %p153 = pneg %p74
      %p154 = pneg %p103
      %p155 = pneg %p100
      %p156 = scmp.lt.s32.totalorder %s14, 1
      %s157 = scalar_select %p156, %s14, 1
      %s158 = smul.addr %s157, 8
      %s159 = smul.addr %s158, 8
      %s160 = scalar_lea.vmem %s3, %s159
      %p161 = scmp.lt.s32.totalorder %s14, 1
      %s162 = scalar_select %p161, %s14, 1
      %s163 = smul.addr %s162, 4
      %s164 = smul.addr %s163, 8
      %s165 = scalar_lea.vmem %s0, %s164
      %p166 = scmp.lt.s32.totalorder %s14, 1
      %s167 = scalar_select %p166, %s14, 1
      %s168 = smul.addr %s167, 8
      %s169 = smul.addr %s168, 8
      %s170 = scalar_lea.vmem %s3, %s169
      %v171 = vld [vmem:[%s165] sm:$0xff]
      %v172 = vld [vmem:[%s165 + $0x8] sm:$0xff]
      %v173 = vld [vmem:[%s165 + $0x10] sm:$0xff]
      %v174 = vld [vmem:[%s165 + $0x18] sm:$0xff]
      %v175 = vld [vmem:[%s1] sm:$0xff]
      %vm176 = vcmask 64512
      %v178 = vsel %vm176, %v171, 0
      %v181 = vsel %vm176, %v172, 0
      %v184 = vsel %vm176, %v173, 0
      %v187 = vsel %vm176, %v174, 0
      %189 = vmatprep.subr.mxu0 0.0
      %190 = vmatpush1.msra.mxu0 0.0
      %191 = vmatprep.subr.mxu0 0.0
      %192 = vmatpush1.msra.mxu0 0.0
      %193 = vmatprep.subr.mxu0 0.0
      %194 = vmatpush1.msra.mxu0 0.0
      %195 = vmatprep.subr.mxu0 0.0
      %196 = vmatpush1.msra.mxu0 0.0
      %197 = vmatprep.subr.mxu0 0.0
      %198 = vmatpush1.msra.mxu0 0.0
      %199 = vmatprep.subr.mxu0 0.0
      %200 = vmatpush1.msra.mxu0 0.0
      %201 = vmatprep.subr.mxu0 0.0
      %202 = vmatpush1.msra.mxu0 0.0
      %203 = vmatprep.subr.mxu0 0.0
      %204 = vmatpush1.msra.mxu0 0.0
      %205 = vmatprep.subr.mxu0 0.0
      %206 = vmatpush1.msra.mxu0 0.0
      %207 = vmatprep.subr.mxu0 0.0
      %208 = vmatpush1.msra.mxu0 0.0
      %209 = vmatprep.subr.mxu0 0.0
      %210 = vmatpush1.msra.mxu0 0.0
      %211 = vmatprep.subr.mxu0 0.0
      %212 = vmatpush1.msra.mxu0 0.0
      %213 = vmatprep.subr.mxu0 0.0
      %214 = vmatpush1.msra.mxu0 0.0
      %215 = vmatprep.subr.mxu0 0.0
      %216 = vmatpush1.msra.mxu0 0.0
      %217 = vmatprep.subr.mxu0 0.0
      %218 = vmatpush1.msra.mxu0 0.0
      %219 = vmatprep.subr.mxu0 0.0
      %220 = vmatpush1.msra.mxu0 %v175
      %221 = vmatprep.subr.mxu0 0.0
      %222 = vmatpush2.msra.mxu0 0.0
      %223 = vmatprep.subr.mxu0 0.0
      %224 = vmatpush2.msra.mxu0 0.0
      %225 = vmatprep.subr.mxu0 0.0
      %226 = vmatpush2.msra.mxu0 0.0
      %227 = vmatprep.subr.mxu0 0.0
      %228 = vmatpush2.msra.mxu0 0.0
      %229 = vmatprep.subr.mxu0 0.0
      %230 = vmatpush2.msra.mxu0 0.0
      %231 = vmatprep.subr.mxu0 0.0
      %232 = vmatpush2.msra.mxu0 0.0
      %233 = vmatprep.subr.mxu0 0.0
      %234 = vmatpush2.msra.mxu0 0.0
      %235 = vmatprep.subr.mxu0 0.0
      %236 = vmatpush2.msra.mxu0 0.0
      %237 = vmatprep.subr.mxu0 0.0
      %238 = vmatpush2.msra.mxu0 0.0
      %239 = vmatprep.subr.mxu0 0.0
      %240 = vmatpush2.msra.mxu0 0.0
      %241 = vmatprep.subr.mxu0 0.0
      %242 = vmatpush2.msra.mxu0 0.0
      %243 = vmatprep.subr.mxu0 0.0
      %244 = vmatpush2.msra.mxu0 0.0
      %245 = vmatprep.subr.mxu0 0.0
      %246 = vmatpush2.msra.mxu0 0.0
      %247 = vmatprep.subr.mxu0 0.0
      %248 = vmatpush2.msra.mxu0 0.0
      %249 = vmatprep.subr.mxu0 0.0
      %250 = vmatpush2.msra.mxu0 0.0
      %251 = vmatprep.subr.mxu0 0.0
      %252 = vmatpush2.msra.mxu0 0.0
      %253 = vmatprep.mubr.f32.mxu0 0.0
      %254 = vmatmul.mubr.f32.gmra.mxu0 %v178
      %v255 = vpop.f32.mrf.mxu0
      %v256 = vadd.f32 0.0, %v255
      %v257 = vpop.f32.mrf.mxu0
      %258 = vmatprep.mubr.f32.mxu0 0.0
      %259 = vmatmul.mubr.f32.gmra.mxu0 %v181
      %v260 = vpop.f32.mrf.mxu0
      %v261 = vadd.f32 0.0, %v260
      %v262 = vpop.f32.mrf.mxu0
      %263 = vmatprep.mubr.f32.mxu0 0.0
      %264 = vmatmul.mubr.f32.gmra.mxu0 %v184
      %v265 = vpop.f32.mrf.mxu0
      %v266 = vadd.f32 0.0, %v265
      %v267 = vpop.f32.mrf.mxu0
      %268 = vmatprep.mubr.f32.mxu0 0.0
      %269 = vmatmul.mubr.f32.gmra.mxu0 %v187
      %v270 = vpop.f32.mrf.mxu0
      %v271 = vadd.f32 0.0, %v270
      %v272 = vpop.f32.mrf.mxu0
      %273 = vdwg.mxu0
      %v274 = vld [vmem:[%s2] sm:$0xff]
      %v275 = vld [vmem:[%s2 + $0x8] sm:$0xff]
      %v277 = vsel %vm176, %v274, 0
      %v280 = vsel %vm176, %v275, 0
      %282 = vmatprep.subr.mxu0 0.0
      %283 = vmatpush1.msra.mxu0 0.0
      %284 = vmatprep.subr.mxu0 0.0
      %285 = vmatpush1.msra.mxu0 0.0
      %286 = vmatprep.subr.mxu0 0.0
      %287 = vmatpush1.msra.mxu0 0.0
      %288 = vmatprep.subr.mxu0 0.0
      %289 = vmatpush1.msra.mxu0 0.0
      %290 = vmatprep.subr.mxu0 0.0
      %291 = vmatpush1.msra.mxu0 0.0
      %292 = vmatprep.subr.mxu0 0.0
      %293 = vmatpush1.msra.mxu0 0.0
      %294 = vmatprep.subr.mxu0 0.0
      %295 = vmatpush1.msra.mxu0 0.0
      %296 = vmatprep.subr.mxu0 0.0
      %297 = vmatpush1.msra.mxu0 0.0
      %298 = vmatprep.subr.mxu0 0.0
      %299 = vmatpush1.msra.mxu0 0.0
      %300 = vmatprep.subr.mxu0 0.0
      %301 = vmatpush1.msra.mxu0 0.0
      %302 = vmatprep.subr.mxu0 0.0
      %303 = vmatpush1.msra.mxu0 0.0
      %304 = vmatprep.subr.mxu0 0.0
      %305 = vmatpush1.msra.mxu0 0.0
      %306 = vmatprep.subr.mxu0 0.0
      %307 = vmatpush1.msra.mxu0 0.0
      %308 = vmatprep.subr.mxu0 0.0
      %309 = vmatpush1.msra.mxu0 0.0
      %310 = vmatprep.subr.mxu0 0.0
      %311 = vmatpush1.msra.mxu0 0.0
      %312 = vmatprep.subr.mxu0 0.0
      %313 = vmatpush1.msra.mxu0 %v256
      %314 = vmatprep.subr.mxu0 0.0
      %315 = vmatpush2.msra.mxu0 0.0
      %316 = vmatprep.subr.mxu0 0.0
      %317 = vmatpush2.msra.mxu0 0.0
      %318 = vmatprep.subr.mxu0 0.0
      %319 = vmatpush2.msra.mxu0 0.0
      %320 = vmatprep.subr.mxu0 0.0
      %321 = vmatpush2.msra.mxu0 0.0
      %322 = vmatprep.subr.mxu0 0.0
      %323 = vmatpush2.msra.mxu0 0.0
      %324 = vmatprep.subr.mxu0 0.0
      %325 = vmatpush2.msra.mxu0 0.0
      %326 = vmatprep.subr.mxu0 0.0
      %327 = vmatpush2.msra.mxu0 0.0
      %328 = vmatprep.subr.mxu0 0.0
      %329 = vmatpush2.msra.mxu0 0.0
      %330 = vmatprep.subr.mxu0 0.0
      %331 = vmatpush2.msra.mxu0 0.0
      %332 = vmatprep.subr.mxu0 0.0
      %333 = vmatpush2.msra.mxu0 0.0
      %334 = vmatprep.subr.mxu0 0.0
      %335 = vmatpush2.msra.mxu0 0.0
      %336 = vmatprep.subr.mxu0 0.0
      %337 = vmatpush2.msra.mxu0 0.0
      %338 = vmatprep.subr.mxu0 0.0
      %339 = vmatpush2.msra.mxu0 0.0
      %340 = vmatprep.subr.mxu0 0.0
      %341 = vmatpush2.msra.mxu0 0.0
      %342 = vmatprep.subr.mxu0 0.0
      %343 = vmatpush2.msra.mxu0 0.0
      %344 = vmatprep.subr.mxu0 0.0
      %345 = vmatpush2.msra.mxu0 0.0
      %346 = vmatprep.mubr.f32.mxu0 0.0
      %347 = vmatmul.mubr.f32.gmra.mxu0 %v277
      %v348 = vpop.f32.mrf.mxu0
      %v349 = vadd.f32 0.0, %v348
      %v350 = vpop.f32.mrf.mxu0
      %351 = vmatprep.mubr.f32.mxu0 0.0
      %352 = vmatmul.mubr.f32.gmra.mxu0 %v280
      %v353 = vpop.f32.mrf.mxu0
      %v354 = vadd.f32 0.0, %v353
      %v355 = vpop.f32.mrf.mxu0
      %356 = vdwg.mxu0
      %vm357 = vcmask 130048
      %358 = vst.msk [vmem:[%s170] sm:$0xff] %vm357, %v349
      %359 = vst.msk [vmem:[%s170 + $0x8] sm:$0xff] %vm357, %v354
      %v360 = vld [vmem:[%s2] sm:$0xff]
      %v361 = vld [vmem:[%s2 + $0x8] sm:$0xff]
      %v363 = vsel %vm176, %v360, 0
      %v366 = vsel %vm176, %v361, 0
      %368 = vmatprep.subr.mxu0 0.0
      %369 = vmatpush1.msra.mxu0 0.0
      %370 = vmatprep.subr.mxu0 0.0
      %371 = vmatpush1.msra.mxu0 0.0
      %372 = vmatprep.subr.mxu0 0.0
      %373 = vmatpush1.msra.mxu0 0.0
      %374 = vmatprep.subr.mxu0 0.0
      %375 = vmatpush1.msra.mxu0 0.0
      %376 = vmatprep.subr.mxu0 0.0
      %377 = vmatpush1.msra.mxu0 0.0
      %378 = vmatprep.subr.mxu0 0.0
      %379 = vmatpush1.msra.mxu0 0.0
      %380 = vmatprep.subr.mxu0 0.0
      %381 = vmatpush1.msra.mxu0 0.0
      %382 = vmatprep.subr.mxu0 0.0
      %383 = vmatpush1.msra.mxu0 0.0
      %384 = vmatprep.subr.mxu0 0.0
      %385 = vmatpush1.msra.mxu0 0.0
      %386 = vmatprep.subr.mxu0 0.0
      %387 = vmatpush1.msra.mxu0 0.0
      %388 = vmatprep.subr.mxu0 0.0
      %389 = vmatpush1.msra.mxu0 0.0
      %390 = vmatprep.subr.mxu0 0.0
      %391 = vmatpush1.msra.mxu0 0.0
      %392 = vmatprep.subr.mxu0 0.0
      %393 = vmatpush1.msra.mxu0 0.0
      %394 = vmatprep.subr.mxu0 0.0
      %395 = vmatpush1.msra.mxu0 0.0
      %396 = vmatprep.subr.mxu0 0.0
      %397 = vmatpush1.msra.mxu0 0.0
      %398 = vmatprep.subr.mxu0 0.0
      %399 = vmatpush1.msra.mxu0 %v261
      %400 = vmatprep.subr.mxu0 0.0
      %401 = vmatpush2.msra.mxu0 0.0
      %402 = vmatprep.subr.mxu0 0.0
      %403 = vmatpush2.msra.mxu0 0.0
      %404 = vmatprep.subr.mxu0 0.0
      %405 = vmatpush2.msra.mxu0 0.0
      %406 = vmatprep.subr.mxu0 0.0
      %407 = vmatpush2.msra.mxu0 0.0
      %408 = vmatprep.subr.mxu0 0.0
      %409 = vmatpush2.msra.mxu0 0.0
      %410 = vmatprep.subr.mxu0 0.0
      %411 = vmatpush2.msra.mxu0 0.0
      %412 = vmatprep.subr.mxu0 0.0
      %413 = vmatpush2.msra.mxu0 0.0
      %414 = vmatprep.subr.mxu0 0.0
      %415 = vmatpush2.msra.mxu0 0.0
      %416 = vmatprep.subr.mxu0 0.0
      %417 = vmatpush2.msra.mxu0 0.0
      %418 = vmatprep.subr.mxu0 0.0
      %419 = vmatpush2.msra.mxu0 0.0
      %420 = vmatprep.subr.mxu0 0.0
      %421 = vmatpush2.msra.mxu0 0.0
      %422 = vmatprep.subr.mxu0 0.0
      %423 = vmatpush2.msra.mxu0 0.0
      %424 = vmatprep.subr.mxu0 0.0
      %425 = vmatpush2.msra.mxu0 0.0
      %426 = vmatprep.subr.mxu0 0.0
      %427 = vmatpush2.msra.mxu0 0.0
      %428 = vmatprep.subr.mxu0 0.0
      %429 = vmatpush2.msra.mxu0 0.0
      %430 = vmatprep.subr.mxu0 0.0
      %431 = vmatpush2.msra.mxu0 0.0
      %432 = vmatprep.mubr.f32.mxu0 0.0
      %433 = vmatmul.mubr.f32.gmra.mxu0 %v363
      %v434 = vpop.f32.mrf.mxu0
      %v435 = vadd.f32 0.0, %v434
      %v436 = vpop.f32.mrf.mxu0
      %437 = vmatprep.mubr.f32.mxu0 0.0
      %438 = vmatmul.mubr.f32.gmra.mxu0 %v366
      %v439 = vpop.f32.mrf.mxu0
      %v440 = vadd.f32 0.0, %v439
      %v441 = vpop.f32.mrf.mxu0
      %442 = vdwg.mxu0
      %s443 = scalar_lea.vmem %s170, 16
      %444 = vst.msk [vmem:[%s443] sm:$0xff] %vm357, %v435
      %445 = vst.msk [vmem:[%s443 + $0x8] sm:$0xff] %vm357, %v440
      %v446 = vld [vmem:[%s2] sm:$0xff]
      %v447 = vld [vmem:[%s2 + $0x8] sm:$0xff]
      %v449 = vsel %vm176, %v446, 0
      %v452 = vsel %vm176, %v447, 0
      %454 = vmatprep.subr.mxu0 0.0
      %455 = vmatpush1.msra.mxu0 0.0
      %456 = vmatprep.subr.mxu0 0.0
      %457 = vmatpush1.msra.mxu0 0.0
      %458 = vmatprep.subr.mxu0 0.0
      %459 = vmatpush1.msra.mxu0 0.0
      %460 = vmatprep.subr.mxu0 0.0
      %461 = vmatpush1.msra.mxu0 0.0
      %462 = vmatprep.subr.mxu0 0.0
      %463 = vmatpush1.msra.mxu0 0.0
      %464 = vmatprep.subr.mxu0 0.0
      %465 = vmatpush1.msra.mxu0 0.0
      %466 = vmatprep.subr.mxu0 0.0
      %467 = vmatpush1.msra.mxu0 0.0
      %468 = vmatprep.subr.mxu0 0.0
      %469 = vmatpush1.msra.mxu0 0.0
      %470 = vmatprep.subr.mxu0 0.0
      %471 = vmatpush1.msra.mxu0 0.0
      %472 = vmatprep.subr.mxu0 0.0
      %473 = vmatpush1.msra.mxu0 0.0
      %474 = vmatprep.subr.mxu0 0.0
      %475 = vmatpush1.msra.mxu0 0.0
      %476 = vmatprep.subr.mxu0 0.0
      %477 = vmatpush1.msra.mxu0 0.0
      %478 = vmatprep.subr.mxu0 0.0
      %479 = vmatpush1.msra.mxu0 0.0
      %480 = vmatprep.subr.mxu0 0.0
      %481 = vmatpush1.msra.mxu0 0.0
      %482 = vmatprep.subr.mxu0 0.0
      %483 = vmatpush1.msra.mxu0 0.0
      %484 = vmatprep.subr.mxu0 0.0
      %485 = vmatpush1.msra.mxu0 %v266
      %486 = vmatprep.subr.mxu0 0.0
      %487 = vmatpush2.msra.mxu0 0.0
      %488 = vmatprep.subr.mxu0 0.0
      %489 = vmatpush2.msra.mxu0 0.0
      %490 = vmatprep.subr.mxu0 0.0
      %491 = vmatpush2.msra.mxu0 0.0
      %492 = vmatprep.subr.mxu0 0.0
      %493 = vmatpush2.msra.mxu0 0.0
      %494 = vmatprep.subr.mxu0 0.0
      %495 = vmatpush2.msra.mxu0 0.0
      %496 = vmatprep.subr.mxu0 0.0
      %497 = vmatpush2.msra.mxu0 0.0
      %498 = vmatprep.subr.mxu0 0.0
      %499 = vmatpush2.msra.mxu0 0.0
      %500 = vmatprep.subr.mxu0 0.0
      %501 = vmatpush2.msra.mxu0 0.0
      %502 = vmatprep.subr.mxu0 0.0
      %503 = vmatpush2.msra.mxu0 0.0
      %504 = vmatprep.subr.mxu0 0.0
      %505 = vmatpush2.msra.mxu0 0.0
      %506 = vmatprep.subr.mxu0 0.0
      %507 = vmatpush2.msra.mxu0 0.0
      %508 = vmatprep.subr.mxu0 0.0
      %509 = vmatpush2.msra.mxu0 0.0
      %510 = vmatprep.subr.mxu0 0.0
      %511 = vmatpush2.msra.mxu0 0.0
      %512 = vmatprep.subr.mxu0 0.0
      %513 = vmatpush2.msra.mxu0 0.0
      %514 = vmatprep.subr.mxu0 0.0
      %515 = vmatpush2.msra.mxu0 0.0
      %516 = vmatprep.subr.mxu0 0.0
      %517 = vmatpush2.msra.mxu0 0.0
      %518 = vmatprep.mubr.f32.mxu0 0.0
      %519 = vmatmul.mubr.f32.gmra.mxu0 %v449
      %v520 = vpop.f32.mrf.mxu0
      %v521 = vadd.f32 0.0, %v520
      %v522 = vpop.f32.mrf.mxu0
      %523 = vmatprep.mubr.f32.mxu0 0.0
      %524 = vmatmul.mubr.f32.gmra.mxu0 %v452
      %v525 = vpop.f32.mrf.mxu0
      %v526 = vadd.f32 0.0, %v525
      %v527 = vpop.f32.mrf.mxu0
      %528 = vdwg.mxu0
      %s529 = scalar_lea.vmem %s170, 32
      %530 = vst.msk [vmem:[%s529] sm:$0xff] %vm357, %v521
      %531 = vst.msk [vmem:[%s529 + $0x8] sm:$0xff] %vm357, %v526
      %v532 = vld [vmem:[%s2] sm:$0xff]
      %v533 = vld [vmem:[%s2 + $0x8] sm:$0xff]
      %v535 = vsel %vm176, %v532, 0
      %v538 = vsel %vm176, %v533, 0
      %540 = vmatprep.subr.mxu0 0.0
      %541 = vmatpush1.msra.mxu0 0.0
      %542 = vmatprep.subr.mxu0 0.0
      %543 = vmatpush1.msra.mxu0 0.0
      %544 = vmatprep.subr.mxu0 0.0
      %545 = vmatpush1.msra.mxu0 0.0
      %546 = vmatprep.subr.mxu0 0.0
      %547 = vmatpush1.msra.mxu0 0.0
      %548 = vmatprep.subr.mxu0 0.0
      %549 = vmatpush1.msra.mxu0 0.0
      %550 = vmatprep.subr.mxu0 0.0
      %551 = vmatpush1.msra.mxu0 0.0
      %552 = vmatprep.subr.mxu0 0.0
      %553 = vmatpush1.msra.mxu0 0.0
      %554 = vmatprep.subr.mxu0 0.0
      %555 = vmatpush1.msra.mxu0 0.0
      %556 = vmatprep.subr.mxu0 0.0
      %557 = vmatpush1.msra.mxu0 0.0
      %558 = vmatprep.subr.mxu0 0.0
      %559 = vmatpush1.msra.mxu0 0.0
      %560 = vmatprep.subr.mxu0 0.0
      %561 = vmatpush1.msra.mxu0 0.0
      %562 = vmatprep.subr.mxu0 0.0
      %563 = vmatpush1.msra.mxu0 0.0
      %564 = vmatprep.subr.mxu0 0.0
      %565 = vmatpush1.msra.mxu0 0.0
      %566 = vmatprep.subr.mxu0 0.0
      %567 = vmatpush1.msra.mxu0 0.0
      %568 = vmatprep.subr.mxu0 0.0
      %569 = vmatpush1.msra.mxu0 0.0
      %570 = vmatprep.subr.mxu0 0.0
      %571 = vmatpush1.msra.mxu0 %v271
      %572 = vmatprep.subr.mxu0 0.0
      %573 = vmatpush2.msra.mxu0 0.0
      %574 = vmatprep.subr.mxu0 0.0
      %575 = vmatpush2.msra.mxu0 0.0
      %576 = vmatprep.subr.mxu0 0.0
      %577 = vmatpush2.msra.mxu0 0.0
      %578 = vmatprep.subr.mxu0 0.0
      %579 = vmatpush2.msra.mxu0 0.0
      %580 = vmatprep.subr.mxu0 0.0
      %581 = vmatpush2.msra.mxu0 0.0
      %582 = vmatprep.subr.mxu0 0.0
      %583 = vmatpush2.msra.mxu0 0.0
      %584 = vmatprep.subr.mxu0 0.0
      %585 = vmatpush2.msra.mxu0 0.0
      %586 = vmatprep.subr.mxu0 0.0
      %587 = vmatpush2.msra.mxu0 0.0
      %588 = vmatprep.subr.mxu0 0.0
      %589 = vmatpush2.msra.mxu0 0.0
      %590 = vmatprep.subr.mxu0 0.0
      %591 = vmatpush2.msra.mxu0 0.0
      %592 = vmatprep.subr.mxu0 0.0
      %593 = vmatpush2.msra.mxu0 0.0
      %594 = vmatprep.subr.mxu0 0.0
      %595 = vmatpush2.msra.mxu0 0.0
      %596 = vmatprep.subr.mxu0 0.0
      %597 = vmatpush2.msra.mxu0 0.0
      %598 = vmatprep.subr.mxu0 0.0
      %599 = vmatpush2.msra.mxu0 0.0
      %600 = vmatprep.subr.mxu0 0.0
      %601 = vmatpush2.msra.mxu0 0.0
      %602 = vmatprep.subr.mxu0 0.0
      %603 = vmatpush2.msra.mxu0 0.0
      %604 = vmatprep.mubr.f32.mxu0 0.0
      %605 = vmatmul.mubr.f32.gmra.mxu0 %v535
      %v606 = vpop.f32.mrf.mxu0
      %v607 = vadd.f32 0.0, %v606
      %v608 = vpop.f32.mrf.mxu0
      %609 = vmatprep.mubr.f32.mxu0 0.0
      %610 = vmatmul.mubr.f32.gmra.mxu0 %v538
      %v611 = vpop.f32.mrf.mxu0
      %v612 = vadd.f32 0.0, %v611
      %v613 = vpop.f32.mrf.mxu0
      %614 = vdwg.mxu0
      %s615 = scalar_lea.vmem %s170, 48
      %616 = vst.msk [vmem:[%s615] sm:$0xff] %vm357, %v607
      %617 = vst.msk [vmem:[%s615 + $0x8] sm:$0xff] %vm357, %v612
      %p618 = scmp.lt.s32.totalorder %s14, 1
      %s619 = scalar_select %p618, %s14, 1
      %s620 = smul.addr %s619, 8
      %s621 = smul.addr %s620, 8
      %s622 = scalar_lea.vmem %s3, %s621
      // Predicated region
      $region33: #{cnnf_forward.5} parent=31 // pred_check
        %p623 = pneg %p100
      $region34: #{cnnf_forward.5} parent=31 // pred_check_branch
        %625 = sbr.rel (%p623) target = $region36
      $region35: #{cnnf_forward.5} parent=31 // pred_region
        _
      $region36: #{cnnf_forward.5} parent=31 // pred_fallthru
        _
    $region32: #{cnnf_forward.5} parent=5 // pred_fallthru
      _
    %p626 = scmp.le.s32.totalorder 2, %s9
    // Predicated region
    $region37: #{cnnf_forward.5} parent=5 // pred_check
      %p627 = pneg %p626
    $region38: #{cnnf_forward.5} parent=5 // pred_check_branch
      %629 = sbr.rel (%p627) target = $region40
    $region39: #{cnnf_forward.5} parent=5 // pred_region
      %s630 = ssub.s32 %s9, 2
      // Predicated region
      $region41: #{cnnf_forward.5} parent=39 // pred_check
        %p631 = pneg %p106
      $region42: #{cnnf_forward.5} parent=39 // pred_check_branch
        %633 = sbr.rel (%p631) target = $region44
      $region43: #{cnnf_forward.5} parent=39 // pred_region
        %p634 = scmp.lt.s32.totalorder %s15, 1
        %s635 = scalar_select %p634, %s15, 1
        %s636 = smul.addr %s635, 8
        %s637 = smul.addr %s636, 8
        %s638 = scalar_lea.vmem %s3, %s637
      $region44: #{cnnf_forward.5} parent=39 // pred_fallthru
        _
    $region40: #{cnnf_forward.5} parent=5 // pred_fallthru
      _
  $region6: #{cnnf_forward.5} parent=0 // loop_footer
    %s13 = sadd.s32 1, %s9
  $region7: #{cnnf_forward.5} parent=0 // loop_footer_branch
    %8 = sbr.rel target = $region3
  $region8: #{cnnf_forward.5} parent=0 // loop_exit
    _

// kernel: cnnf_forward.6
$region0: #{cnnf_forward.6}
  #allocation0 [shape = 'u32[]', space=smem, size = 0x4, offset = 0x4, fixed_abs, tag = 'smem constant byte address 0x4 - core index']
  #allocation1 [shape = 'u32[144,128]{1,0:T(1,128)}', space=vmem, size = 0x12000, scoped, tag = 'internal scratch']
  #allocation2 [shape = 'bf16[10,18,8]{2,1,0:T(8,128)(2,1)}', space=vmem, size = 0xf000, scoped, tag = 'scratch operand']
  #allocation3 [shape = 'bf16[8,16,72]{2,1,0:T(8,128)(2,1)}', space=vmem, size = 0x8000, scoped, tag = 'scratch operand']
  %s0 = inlined_call_operand.vmem [shape: f32[2,16,16,8], index: 0, kind: input, shape index: {}, may-alias: {0,1,2}]
  %s1 = inlined_call_operand.vmem [shape: f32[2,16,16,8], index: 1, kind: input, shape index: {}, may-alias: {0,1,2}]
  %s2 = inlined_call_operand.vmem [shape: f32[2,16,16,8], index: 2, kind: input, shape index: {}, may-alias: {0,1,2}]
  %s3 = inlined_call_operand.vmem [shape: f32[2,16,16,4], index: 3, kind: input, shape index: {}]
  %s4 = inlined_call_operand.vmem [shape: bf16[72,64], index: 4, kind: input, shape index: {}]
  %s5 = inlined_call_operand.vmem [shape: f32[1,64], index: 5, kind: input, shape index: {}]
  %s6 = inlined_call_operand.vmem [shape: f32[2,16,16,64], index: 6, kind: output, shape index: {}]
  %s7 = sld [smem:[#allocation0]]
  $region65: #{cnnf_forward.6} parent=0
    _
  %s9 = ssub.s32 1, %s7
  %s10 = scalar_select 0, %s9, %s7
  loop: start=0, step=1, limit=6
  $region2: #{cnnf_forward.6} parent=0 // loop_pre_header
    _
  $region3: #{cnnf_forward.6} parent=0 // loop_header
    %s12 = sphi 0, %s16
    %p13 = scmp.ge.s32.totalorder %s12, 6
    %s19 = sphi 0, %s31
    %s20 = sphi 0, %s27
    %s21 = sphi 0, %s19
    %s22 = sphi 0, %s20
    %s23 = sphi 0, %s21
    %s24 = sphi 0, %s22
    %s36 = sphi 0, %s38
    %s39 = sphi 0, %s36
    %s40 = sphi 0, %s39
    %s56 = sphi 0, %s40
    %s70 = sphi 0, %s72
    %s73 = sphi 0, %s70
    %s74 = sphi 0, %s73
    %s90 = sphi 0, %s74
    %s104 = sphi 0, %s106
    %s107 = sphi 0, %s104
    %s108 = sphi 0, %s107
    %s124 = sphi 0, %s108
    %s132 = sphi 0, %s134
    %s135 = sphi 0, %s132
    %s136 = sphi 0, %s135
    %s152 = sphi 0, %s136
    %s156 = sphi 0, %s156
    %s158 = sphi 0, %s156
    %s159 = sphi 0, %s158
    %s173 = sphi 0, %s159
    %s177 = sphi 0, %s177
    %s179 = sphi 0, %s177
    %s180 = sphi 0, %s179
    %s194 = sphi 0, %s180
    %s202 = sphi 0, %s204
    %s205 = sphi 0, %s202
    %s206 = sphi 0, %s205
    %s222 = sphi 0, %s206
  $region4: #{cnnf_forward.6} parent=0 // loop_header_branch
    %15 = sbr.rel (%p13) target = $region8
  $region5: #{cnnf_forward.6} parent=0 // loop_body
    %s17 = ssub.s32 %s12, 1
    %s18 = ssub.s32 %s12, 2
    %s25 = sadd.s32 1, %s20
    %p26 = scmp.ge.s32.totalorder %s25, 2
    %s27 = scalar_select %p26, 0, %s25
    %s28 = sadd.s32 1, %s19
    %s29 = scalar_select %p26, %s28, %s19
    %p30 = scmp.ge.s32.totalorder %s29, 2
    %s31 = scalar_select %p30, 0, %s29
    %s32 = ssub.s32 %s19, %s31
    %s33 = ssub.s32 %s20, %s27
    %s34 = sor.u32 %s32, %s33
    %p35 = scmp.eq.s32.totalorder %s34, 0
    %s37 = sadd.s32 %s36, 1
    %s38 = scalar_select %p35, %s36, %s37
    %p41 = pneg %p35
    %p42 = scmp.eq.s32.totalorder %s12, 3
    %p43 = por %p41, %p42
    %p44 = scmp.ne.s32.totalorder %s36, %s39
    %p45 = scmp.eq.s32.totalorder %s12, 0
    %p46 = por %p44, %p45
    %p47 = scmp.ne.s32.totalorder %s36, %s39
    %p48 = scmp.eq.s32.totalorder %s17, 3
    %p49 = por %p47, %p48
    %p50 = scmp.ne.s32.totalorder %s39, %s40
    %p51 = scmp.eq.s32.totalorder %s17, 0
    %p52 = por %p50, %p51
    %p53 = scmp.ne.s32.totalorder %s39, %s40
    %p54 = scmp.eq.s32.totalorder %s18, 3
    %p55 = por %p53, %p54
    %p57 = scmp.ne.s32.totalorder %s40, %s56
    %p58 = scmp.eq.s32.totalorder %s18, 0
    %p59 = por %p57, %p58
    %s60 = ssub.s32 %s20, 1
    %p61 = scmp.gt.s32.totalorder %s60, 0
    %s62 = scalar_select %p61, %s60, 0
    %s63 = ssub.s32 %s27, 1
    %p64 = scmp.gt.s32.totalorder %s63, 0
    %s65 = scalar_select %p64, %s63, 0
    %s66 = ssub.s32 %s19, %s31
    %s67 = ssub.s32 %s62, %s65
    %s68 = sor.u32 %s66, %s67
    %p69 = scmp.eq.s32.totalorder %s68, 0
    %s71 = sadd.s32 %s70, 1
    %s72 = scalar_select %p69, %s70, %s71
    %p75 = pneg %p69
    %p76 = scmp.eq.s32.totalorder %s12, 3
    %p77 = por %p75, %p76
    %p78 = scmp.ne.s32.totalorder %s70, %s73
    %p79 = scmp.eq.s32.totalorder %s12, 0
    %p80 = por %p78, %p79
    %p81 = scmp.ne.s32.totalorder %s70, %s73
    %p82 = scmp.eq.s32.totalorder %s17, 3
    %p83 = por %p81, %p82
    %p84 = scmp.ne.s32.totalorder %s73, %s74
    %p85 = scmp.eq.s32.totalorder %s17, 0
    %p86 = por %p84, %p85
    %p87 = scmp.ne.s32.totalorder %s73, %s74
    %p88 = scmp.eq.s32.totalorder %s18, 3
    %p89 = por %p87, %p88
    %p91 = scmp.ne.s32.totalorder %s74, %s90
    %p92 = scmp.eq.s32.totalorder %s18, 0
    %p93 = por %p91, %p92
    %s94 = sadd.s32 %s20, 1
    %p95 = scmp.lt.s32.totalorder %s94, 1
    %s96 = scalar_select %p95, %s94, 1
    %s97 = sadd.s32 %s27, 1
    %p98 = scmp.lt.s32.totalorder %s97, 1
    %s99 = scalar_select %p98, %s97, 1
    %s100 = ssub.s32 %s19, %s31
    %s101 = ssub.s32 %s96, %s99
    %s102 = sor.u32 %s100, %s101
    %p103 = scmp.eq.s32.totalorder %s102, 0
    %s105 = sadd.s32 %s104, 1
    %s106 = scalar_select %p103, %s104, %s105
    %p109 = pneg %p103
    %p110 = scmp.eq.s32.totalorder %s12, 3
    %p111 = por %p109, %p110
    %p112 = scmp.ne.s32.totalorder %s104, %s107
    %p113 = scmp.eq.s32.totalorder %s12, 0
    %p114 = por %p112, %p113
    %p115 = scmp.ne.s32.totalorder %s104, %s107
    %p116 = scmp.eq.s32.totalorder %s17, 3
    %p117 = por %p115, %p116
    %p118 = scmp.ne.s32.totalorder %s107, %s108
    %p119 = scmp.eq.s32.totalorder %s17, 0
    %p120 = por %p118, %p119
    %p121 = scmp.ne.s32.totalorder %s107, %s108
    %p122 = scmp.eq.s32.totalorder %s18, 3
    %p123 = por %p121, %p122
    %p125 = scmp.ne.s32.totalorder %s108, %s124
    %p126 = scmp.eq.s32.totalorder %s18, 0
    %p127 = por %p125, %p126
    %s128 = ssub.s32 %s19, %s31
    %s129 = ssub.s32 %s20, %s27
    %s130 = sor.u32 %s128, %s129
    %p131 = scmp.eq.s32.totalorder %s130, 0
    %s133 = sadd.s32 %s132, 1
    %s134 = scalar_select %p131, %s132, %s133
    %p137 = pneg %p131
    %p138 = scmp.eq.s32.totalorder %s12, 3
    %p139 = por %p137, %p138
    %p140 = scmp.ne.s32.totalorder %s132, %s135
    %p141 = scmp.eq.s32.totalorder %s12, 0
    %p142 = por %p140, %p141
    %p143 = scmp.ne.s32.totalorder %s132, %s135
    %p144 = scmp.eq.s32.totalorder %s17, 3
    %p145 = por %p143, %p144
    %p146 = scmp.ne.s32.totalorder %s135, %s136
    %p147 = scmp.eq.s32.totalorder %s17, 0
    %p148 = por %p146, %p147
    %p149 = scmp.ne.s32.totalorder %s135, %s136
    %p150 = scmp.eq.s32.totalorder %s18, 3
    %p151 = por %p149, %p150
    %p153 = scmp.ne.s32.totalorder %s136, %s152
    %p154 = scmp.eq.s32.totalorder %s18, 0
    %p155 = por %p153, %p154
    %s157 = sadd.s32 %s156, 1
    %p160 = scmp.eq.s32.totalorder %s12, 3
    %p161 = scmp.ne.s32.totalorder %s156, %s158
    %p162 = scmp.eq.s32.totalorder %s12, 0
    %p163 = por %p161, %p162
    %p164 = scmp.ne.s32.totalorder %s156, %s158
    %p165 = scmp.eq.s32.totalorder %s17, 3
    %p166 = por %p164, %p165
    %p167 = scmp.ne.s32.totalorder %s158, %s159
    %p168 = scmp.eq.s32.totalorder %s17, 0
    %p169 = por %p167, %p168
    %p170 = scmp.ne.s32.totalorder %s158, %s159
    %p171 = scmp.eq.s32.totalorder %s18, 3
    %p172 = por %p170, %p171
    %p174 = scmp.ne.s32.totalorder %s159, %s173
    %p175 = scmp.eq.s32.totalorder %s18, 0
    %p176 = por %p174, %p175
    %s178 = sadd.s32 %s177, 1
    %p181 = scmp.eq.s32.totalorder %s12, 3
    %p182 = scmp.ne.s32.totalorder %s177, %s179
    %p183 = scmp.eq.s32.totalorder %s12, 0
    %p184 = por %p182, %p183
    %p185 = scmp.ne.s32.totalorder %s177, %s179
    %p186 = scmp.eq.s32.totalorder %s17, 3
    %p187 = por %p185, %p186
    %p188 = scmp.ne.s32.totalorder %s179, %s180
    %p189 = scmp.eq.s32.totalorder %s17, 0
    %p190 = por %p188, %p189
    %p191 = scmp.ne.s32.totalorder %s179, %s180
    %p192 = scmp.eq.s32.totalorder %s18, 3
    %p193 = por %p191, %p192
    %p195 = scmp.ne.s32.totalorder %s180, %s194
    %p196 = scmp.eq.s32.totalorder %s18, 0
    %p197 = por %p195, %p196
    %s198 = ssub.s32 %s19, %s31
    %s199 = ssub.s32 %s20, %s27
    %s200 = sor.u32 %s198, %s199
    %p201 = scmp.eq.s32.totalorder %s200, 0
    %s203 = sadd.s32 %s202, 1
    %s204 = scalar_select %p201, %s202, %s203
    %p207 = pneg %p201
    %p208 = scmp.eq.s32.totalorder %s12, 3
    %p209 = por %p207, %p208
    %p210 = scmp.ne.s32.totalorder %s202, %s205
    %p211 = scmp.eq.s32.totalorder %s12, 0
    %p212 = por %p210, %p211
    %p213 = scmp.ne.s32.totalorder %s202, %s205
    %p214 = scmp.eq.s32.totalorder %s17, 3
    %p215 = por %p213, %p214
    %p216 = scmp.ne.s32.totalorder %s205, %s206
    %p217 = scmp.eq.s32.totalorder %s17, 0
    %p218 = por %p216, %p217
    %p219 = scmp.ne.s32.totalorder %s205, %s206
    %p220 = scmp.eq.s32.totalorder %s18, 3
    %p221 = por %p219, %p220
    %p223 = scmp.ne.s32.totalorder %s206, %s222
    %p224 = scmp.eq.s32.totalorder %s18, 0
    %p225 = por %p223, %p224
    %p226 = scmp.le.s32.totalorder 1, %s12
    %p227 = scmp.lt.s32.totalorder %s12, 5
    %p228 = pnand %p226, %p227
    %p229 = pneg %p228
    // Predicated region
    $region9: #{cnnf_forward.6} parent=5 // pred_check
      _
    $region10: #{cnnf_forward.6} parent=5 // pred_check_branch
      %231 = sbr.rel (%p228) target = $region12
    $region11: #{cnnf_forward.6} parent=5 // pred_region
      %s232 = ssub.s32 %s12, 1
      // Predicated region
      $region13: #{cnnf_forward.6} parent=11 // pred_check
        %p233 = pneg %p169
      $region14: #{cnnf_forward.6} parent=11 // pred_check_branch
        %235 = sbr.rel (%p233) target = $region16
      $region15: #{cnnf_forward.6} parent=11 // pred_region
        _
      $region16: #{cnnf_forward.6} parent=11 // pred_fallthru
        _
      // Predicated region
      $region17: #{cnnf_forward.6} parent=11 // pred_check
        %p236 = pneg %p190
      $region18: #{cnnf_forward.6} parent=11 // pred_check_branch
        %238 = sbr.rel (%p236) target = $region20
      $region19: #{cnnf_forward.6} parent=11 // pred_region
        _
      $region20: #{cnnf_forward.6} parent=11 // pred_fallthru
        _
    $region12: #{cnnf_forward.6} parent=5 // pred_fallthru
      _
    %p239 = scmp.lt.s32.totalorder %s12, 4
    // Predicated region
    $region21: #{cnnf_forward.6} parent=5 // pred_check
      %p240 = pneg %p239
    $region22: #{cnnf_forward.6} parent=5 // pred_check_branch
      %242 = sbr.rel (%p240) target = $region24
    $region23: #{cnnf_forward.6} parent=5 // pred_region
      // Predicated region
      $region25: #{cnnf_forward.6} parent=23 // pred_check
        %p243 = pneg %p46
      $region26: #{cnnf_forward.6} parent=23 // pred_check_branch
        %245 = sbr.rel (%p243) target = $region28
      $region27: #{cnnf_forward.6} parent=23 // pred_region
        %s246 = smul.u32 8, %s20
        %p247 = scmp.lt.s32.totalorder %s19, 1
        %s248 = scalar_select %p247, %s19, 1
        %p249 = scmp.lt.s32.totalorder %s246, 15
        %s250 = scalar_select %p249, %s246, 15
        %s251 = smul.addr %s250, 2
        %s252 = smul.addr %s248, 32
        %s253 = sadd.s32 %s251, %s252
        %s254 = smul.addr %s253, 8
        %s255 = scalar_lea.vmem %s0, %s254
        %s256 = smul.u32 8, %s20
      $region28: #{cnnf_forward.6} parent=23 // pred_fallthru
        _
      // Predicated region
      $region29: #{cnnf_forward.6} parent=23 // pred_check
        %p257 = pneg %p80
      $region30: #{cnnf_forward.6} parent=23 // pred_check_branch
        %259 = sbr.rel (%p257) target = $region32
      $region31: #{cnnf_forward.6} parent=23 // pred_region
        %s260 = ssub.s32 %s20, 1
        %p261 = scmp.gt.s32.totalorder %s260, 0
        %s262 = scalar_select %p261, %s260, 0
        %s263 = smul.u32 8, %s262
        %p264 = scmp.lt.s32.totalorder %s19, 1
        %s265 = scalar_select %p264, %s19, 1
        %p266 = scmp.lt.s32.totalorder %s263, 15
        %s267 = scalar_select %p266, %s263, 15
        %s268 = smul.addr %s267, 2
        %s269 = smul.addr %s265, 32
        %s270 = sadd.s32 %s268, %s269
        %s271 = smul.addr %s270, 8
        %s272 = scalar_lea.vmem %s1, %s271
        %s273 = ssub.s32 %s20, 1
        %p274 = scmp.gt.s32.totalorder %s273, 0
        %s275 = scalar_select %p274, %s273, 0
        %s276 = smul.u32 8, %s275
      $region32: #{cnnf_forward.6} parent=23 // pred_fallthru
        _
      // Predicated region
      $region33: #{cnnf_forward.6} parent=23 // pred_check
        %p277 = pneg %p114
      $region34: #{cnnf_forward.6} parent=23 // pred_check_branch
        %279 = sbr.rel (%p277) target = $region36
      $region35: #{cnnf_forward.6} parent=23 // pred_region
        %s280 = sadd.s32 %s20, 1
        %p281 = scmp.lt.s32.totalorder %s280, 1
        %s282 = scalar_select %p281, %s280, 1
        %s283 = smul.u32 8, %s282
        %p284 = scmp.lt.s32.totalorder %s19, 1
        %s285 = scalar_select %p284, %s19, 1
        %p286 = scmp.lt.s32.totalorder %s283, 15
        %s287 = scalar_select %p286, %s283, 15
        %s288 = smul.addr %s287, 2
        %s289 = smul.addr %s285, 32
        %s290 = sadd.s32 %s288, %s289
        %s291 = smul.addr %s290, 8
        %s292 = scalar_lea.vmem %s2, %s291
        %s293 = sadd.s32 %s20, 1
        %p294 = scmp.lt.s32.totalorder %s293, 1
        %s295 = scalar_select %p294, %s293, 1
        %s296 = smul.u32 8, %s295
      $region36: #{cnnf_forward.6} parent=23 // pred_fallthru
        _
      // Predicated region
      $region37: #{cnnf_forward.6} parent=23 // pred_check
        %p297 = pneg %p142
      $region38: #{cnnf_forward.6} parent=23 // pred_check_branch
        %299 = sbr.rel (%p297) target = $region40
      $region39: #{cnnf_forward.6} parent=23 // pred_region
        %s300 = smul.u32 8, %s20
        %p301 = scmp.lt.s32.totalorder %s19, 1
        %s302 = scalar_select %p301, %s19, 1
        %p303 = scmp.lt.s32.totalorder %s300, 15
        %s304 = scalar_select %p303, %s300, 15
        %s305 = smul.addr %s304, 2
        %s306 = smul.addr %s302, 32
        %s307 = sadd.s32 %s305, %s306
        %s308 = smul.addr %s307, 8
        %s309 = scalar_lea.vmem %s3, %s308
        %s310 = smul.u32 8, %s20
      $region40: #{cnnf_forward.6} parent=23 // pred_fallthru
        _
    $region24: #{cnnf_forward.6} parent=5 // pred_fallthru
      _
    %p311 = scmp.le.s32.totalorder 1, %s12
    %p312 = scmp.lt.s32.totalorder %s12, 5
    %p313 = pnand %p311, %p312
    %p314 = pneg %p313
    // Predicated region
    $region41: #{cnnf_forward.6} parent=5 // pred_check
      _
    $region42: #{cnnf_forward.6} parent=5 // pred_check_branch
      %316 = sbr.rel (%p313) target = $region44
    $region43: #{cnnf_forward.6} parent=5 // pred_region
      %s317 = ssub.s32 %s12, 1
      %s318 = smul.u32 8, %s22
      %p319 = scmp.lt.s32.totalorder %s21, 1
      %s320 = scalar_select %p319, %s21, 1
      %p321 = scmp.lt.s32.totalorder %s318, 15
      %s322 = scalar_select %p321, %s318, 15
      %s323 = smul.addr %s322, 2
      %s324 = smul.addr %s320, 32
      %s325 = sadd.s32 %s323, %s324
      %s326 = smul.addr %s325, 8
      %s327 = scalar_lea.vmem %s0, %s326
      %p328 = pneg %p52
      %p329 = pneg %p49
      %s330 = ssub.s32 %s22, 1
      %p331 = scmp.gt.s32.totalorder %s330, 0
      %s332 = scalar_select %p331, %s330, 0
      %s333 = smul.u32 8, %s332
      %p334 = scmp.lt.s32.totalorder %s21, 1
      %s335 = scalar_select %p334, %s21, 1
      %p336 = scmp.lt.s32.totalorder %s333, 15
      %s337 = scalar_select %p336, %s333, 15
      %s338 = smul.addr %s337, 2
      %s339 = smul.addr %s335, 32
      %s340 = sadd.s32 %s338, %s339
      %s341 = smul.addr %s340, 8
      %s342 = scalar_lea.vmem %s1, %s341
      %p343 = pneg %p86
      %p344 = pneg %p83
      %s345 = sadd.s32 %s22, 1
      %p346 = scmp.lt.s32.totalorder %s345, 1
      %s347 = scalar_select %p346, %s345, 1
      %s348 = smul.u32 8, %s347
      %p349 = scmp.lt.s32.totalorder %s21, 1
      %s350 = scalar_select %p349, %s21, 1
      %p351 = scmp.lt.s32.totalorder %s348, 15
      %s352 = scalar_select %p351, %s348, 15
      %s353 = smul.addr %s352, 2
      %s354 = smul.addr %s350, 32
      %s355 = sadd.s32 %s353, %s354
      %s356 = smul.addr %s355, 8
      %s357 = scalar_lea.vmem %s2, %s356
      %p358 = pneg %p120
      %p359 = pneg %p117
      %s360 = smul.u32 8, %s22
      %p361 = scmp.lt.s32.totalorder %s21, 1
      %s362 = scalar_select %p361, %s21, 1
      %p363 = scmp.lt.s32.totalorder %s360, 15
      %s364 = scalar_select %p363, %s360, 15
      %s365 = smul.addr %s364, 2
      %s366 = smul.addr %s362, 32
      %s367 = sadd.s32 %s365, %s366
      %s368 = smul.addr %s367, 8
      %s369 = scalar_lea.vmem %s3, %s368
      %p370 = pneg %p148
      %p371 = pneg %p145
      %p372 = pneg %p169
      %p373 = pneg %p166
      %p374 = pneg %p190
      %p375 = pneg %p187
      %p376 = pneg %p218
      %p377 = pneg %p215
      %s378 = smul.u32 8, %s22
      %p379 = scmp.lt.s32.totalorder %s21, 1
      %s380 = scalar_select %p379, %s21, 1
      %p381 = scmp.lt.s32.totalorder %s378, 15
      %s382 = scalar_select %p381, %s378, 15
      %s383 = smul.addr %s382, 2
      %s384 = smul.addr %s380, 32
      %s385 = sadd.s32 %s383, %s384
      %s386 = smul.addr %s385, 8
      %s387 = scalar_lea.vmem %s6, %s386
      %s388 = smul.u32 8, %s22
      %p389 = scmp.lt.s32.totalorder %s21, 1
      %s390 = scalar_select %p389, %s21, 1
      %p391 = scmp.lt.s32.totalorder %s388, 15
      %s392 = scalar_select %p391, %s388, 15
      %s393 = smul.addr %s392, 2
      %s394 = smul.addr %s390, 32
      %s395 = sadd.s32 %s393, %s394
      %s396 = smul.addr %s395, 8
      %s397 = scalar_lea.vmem %s0, %s396
      %s398 = smul.u32 8, %s22
      %s399 = ssub.s32 %s22, 1
      %p400 = scmp.gt.s32.totalorder %s399, 0
      %s401 = scalar_select %p400, %s399, 0
      %s402 = smul.u32 8, %s401
      %p403 = scmp.lt.s32.totalorder %s21, 1
      %s404 = scalar_select %p403, %s21, 1
      %p405 = scmp.lt.s32.totalorder %s402, 15
      %s406 = scalar_select %p405, %s402, 15
      %s407 = smul.addr %s406, 2
      %s408 = smul.addr %s404, 32
      %s409 = sadd.s32 %s407, %s408
      %s410 = smul.addr %s409, 8
      %s411 = scalar_lea.vmem %s1, %s410
      %s412 = ssub.s32 %s22, 1
      %p413 = scmp.gt.s32.totalorder %s412, 0
      %s414 = scalar_select %p413, %s412, 0
      %s415 = smul.u32 8, %s414
      %s416 = sadd.s32 %s22, 1
      %p417 = scmp.lt.s32.totalorder %s416, 1
      %s418 = scalar_select %p417, %s416, 1
      %s419 = smul.u32 8, %s418
      %p420 = scmp.lt.s32.totalorder %s21, 1
      %s421 = scalar_select %p420, %s21, 1
      %p422 = scmp.lt.s32.totalorder %s419, 15
      %s423 = scalar_select %p422, %s419, 15
      %s424 = smul.addr %s423, 2
      %s425 = smul.addr %s421, 32
      %s426 = sadd.s32 %s424, %s425
      %s427 = smul.addr %s426, 8
      %s428 = scalar_lea.vmem %s2, %s427
      %s429 = sadd.s32 %s22, 1
      %p430 = scmp.lt.s32.totalorder %s429, 1
      %s431 = scalar_select %p430, %s429, 1
      %s432 = smul.u32 8, %s431
      %s433 = smul.u32 8, %s22
      %p434 = scmp.lt.s32.totalorder %s21, 1
      %s435 = scalar_select %p434, %s21, 1
      %p436 = scmp.lt.s32.totalorder %s433, 15
      %s437 = scalar_select %p436, %s433, 15
      %s438 = smul.addr %s437, 2
      %s439 = smul.addr %s435, 32
      %s440 = sadd.s32 %s438, %s439
      %s441 = smul.addr %s440, 8
      %s442 = scalar_lea.vmem %s3, %s441
      %s443 = smul.u32 8, %s22
      %s444 = smul.u32 8, %s22
      %p445 = scmp.lt.s32.totalorder %s21, 1
      %s446 = scalar_select %p445, %s21, 1
      %p447 = scmp.lt.s32.totalorder %s444, 15
      %s448 = scalar_select %p447, %s444, 15
      %s449 = smul.addr %s448, 2
      %s450 = smul.addr %s446, 32
      %s451 = sadd.s32 %s449, %s450
      %s452 = smul.addr %s451, 8
      %s453 = scalar_lea.vmem %s6, %s452
      %s454 = smul.u32 8, %s22
      %vm456 = vcmask 60416
      %457 = vst.msk [vmem:[#allocation2] sm:$0xf] %vm456, 0
      %458 = vst.msk [vmem:[#allocation2 + $0x4] sm:$0xf] %vm456, 0
      %vm459 = vcmask 57344
      %460 = vst.msk [vmem:[#allocation2 + $0x8] sm:$0x1] %vm459, 0
      %461 = vst.msk [vmem:[#allocation2 + $0xc] sm:$0xf] %vm456, 0
      %462 = vst.msk [vmem:[#allocation2 + $0x10] sm:$0xf] %vm456, 0
      %463 = vst.msk [vmem:[#allocation2 + $0x14] sm:$0x1] %vm459, 0
      %464 = vst.msk [vmem:[#allocation2 + $0x18] sm:$0xf] %vm456, 0
      %465 = vst.msk [vmem:[#allocation2 + $0x1c] sm:$0xf] %vm456, 0
      %466 = vst.msk [vmem:[#allocation2 + $0x20] sm:$0x1] %vm459, 0
      %467 = vst.msk [vmem:[#allocation2 + $0x24] sm:$0xf] %vm456, 0
      %468 = vst.msk [vmem:[#allocation2 + $0x28] sm:$0xf] %vm456, 0
      %469 = vst.msk [vmem:[#allocation2 + $0x2c] sm:$0x1] %vm459, 0
      %470 = vst.msk [vmem:[#allocation2 + $0x30] sm:$0xf] %vm456, 0
      %471 = vst.msk [vmem:[#allocation2 + $0x34] sm:$0xf] %vm456, 0
      %472 = vst.msk [vmem:[#allocation2 + $0x38] sm:$0x1] %vm459, 0
      %473 = vst.msk [vmem:[#allocation2 + $0x3c] sm:$0xf] %vm456, 0
      %474 = vst.msk [vmem:[#allocation2 + $0x40] sm:$0xf] %vm456, 0
      %475 = vst.msk [vmem:[#allocation2 + $0x44] sm:$0x1] %vm459, 0
      %476 = vst.msk [vmem:[#allocation2 + $0x48] sm:$0xf] %vm456, 0
      %477 = vst.msk [vmem:[#allocation2 + $0x4c] sm:$0xf] %vm456, 0
      %478 = vst.msk [vmem:[#allocation2 + $0x50] sm:$0x1] %vm459, 0
      %479 = vst.msk [vmem:[#allocation2 + $0x54] sm:$0xf] %vm456, 0
      %480 = vst.msk [vmem:[#allocation2 + $0x58] sm:$0xf] %vm456, 0
      %481 = vst.msk [vmem:[#allocation2 + $0x5c] sm:$0x1] %vm459, 0
      %482 = vst.msk [vmem:[#allocation2 + $0x60] sm:$0xf] %vm456, 0
      %483 = vst.msk [vmem:[#allocation2 + $0x64] sm:$0xf] %vm456, 0
      %484 = vst.msk [vmem:[#allocation2 + $0x68] sm:$0x1] %vm459, 0
      %485 = vst.msk [vmem:[#allocation2 + $0x6c] sm:$0xf] %vm456, 0
      %486 = vst.msk [vmem:[#allocation2 + $0x70] sm:$0xf] %vm456, 0
      %487 = vst.msk [vmem:[#allocation2 + $0x74] sm:$0x1] %vm459, 0
      %v488 = vld [vmem:[%s397] sm:$0xff]
      %v489 = vld [vmem:[%s397 + $0x8] sm:$0xff]
      %v490 = vld [vmem:[%s397 + $0x10] sm:$0xff]
      %v491 = vld [vmem:[%s397 + $0x18] sm:$0xff]
      %v492 = vld [vmem:[%s397 + $0x20] sm:$0xff]
      %v493 = vld [vmem:[%s397 + $0x28] sm:$0xff]
      %v494 = vld [vmem:[%s397 + $0x30] sm:$0xff]
      %v495 = vld [vmem:[%s397 + $0x38] sm:$0xff]
      %v496 = vld [vmem:[%s397 + $0x40] sm:$0xff]
      %v497 = vld [vmem:[%s397 + $0x48] sm:$0xff]
      %v498 = vld [vmem:[%s397 + $0x50] sm:$0xff]
      %v499 = vld [vmem:[%s397 + $0x58] sm:$0xff]
      %v500 = vld [vmem:[%s397 + $0x60] sm:$0xff]
      %v501 = vld [vmem:[%s397 + $0x68] sm:$0xff]
      %v502 = vld [vmem:[%s397 + $0x70] sm:$0xff]
      %v503 = vld [vmem:[%s397 + $0x78] sm:$0xff]
      %v504 = vpack.c.bf16 %v489, %v488
      %v505 = vpack.c.bf16 %v491, %v490
      %v506 = vpack.c.bf16 %v493, %v492
      %v507 = vpack.c.bf16 %v495, %v494
      %v508 = vpack.c.bf16 %v497, %v496
      %v509 = vpack.c.bf16 %v499, %v498
      %v510 = vpack.c.bf16 %v501, %v500
      %v511 = vpack.c.bf16 %v503, %v502
      %v520 = vunpack.c.l.b16 %v504
      %v521 = vunpack.c.h.b16 %v504
      %v522 = vunpack.c.l.b16 %v505
      %v523 = vunpack.c.h.b16 %v505
      %v524 = vunpack.c.l.b16 %v506
      %v525 = vunpack.c.h.b16 %v506
      %v526 = vunpack.c.l.b16 %v507
      %v527 = vunpack.c.h.b16 %v507
      %v528 = vunpack.c.l.b16 %v508
      %v529 = vunpack.c.h.b16 %v508
      %v530 = vunpack.c.l.b16 %v509
      %v531 = vunpack.c.h.b16 %v509
      %v532 = vunpack.c.l.b16 %v510
      %v533 = vunpack.c.h.b16 %v510
      %v534 = vunpack.c.l.b16 %v511
      %v535 = vunpack.c.h.b16 %v511
      %v536 = vpack.c.b16 %v520, %v520
      %v537 = vpack.c.b16 %v521, %v521
      %v538 = vpack.c.b16 %v522, %v522
      %v539 = vpack.c.b16 %v523, %v523
      %v540 = vpack.c.b16 %v524, %v524
      %v541 = vpack.c.b16 %v525, %v525
      %v542 = vpack.c.b16 %v526, %v526
      %v543 = vpack.c.b16 %v527, %v527
      %v544 = vpack.c.b16 %v528, %v528
      %v545 = vpack.c.b16 %v529, %v529
      %v546 = vpack.c.b16 %v530, %v530
      %v547 = vpack.c.b16 %v531, %v531
      %v548 = vpack.c.b16 %v532, %v532
      %v549 = vpack.c.b16 %v533, %v533
      %v550 = vpack.c.b16 %v534, %v534
      %v551 = vpack.c.b16 %v535, %v535
      %vm552 = vsmask.f32 256
      %vm553 = vsmask.f32 4368
      %vm554 = vmor %vm552, %vm553
      %v556 = vshrl.u32 %v536, 16
      %v558 = vrot.slane %v556, 7
      %v559 = vshll.u32 %v536, 16
      %v561 = vor.u32 %v558, %v559
      %v562 = vrot.slane %v558, 4
      %v564 = vshrl.u32 %v537, 16
      %v566 = vrot.slane %v564, 7
      %v567 = vshll.u32 %v537, 16
      %v569 = vor.u32 %v566, %v567
      %v570 = vsel %vm554, %v562, %v569
      %v571 = vrot.slane %v566, 4
      %v573 = vshrl.u32 %v538, 16
      %v575 = vrot.slane %v573, 7
      %v576 = vshll.u32 %v538, 16
      %v578 = vor.u32 %v575, %v576
      %v579 = vrot.slane %v575, 4
      %v581 = vshrl.u32 %v539, 16
      %v583 = vrot.slane %v581, 7
      %v584 = vshll.u32 %v539, 16
      %v586 = vor.u32 %v583, %v584
      %v587 = vsel %vm554, %v579, %v586
      %v588 = vrot.slane %v583, 4
      %v590 = vshrl.u32 %v540, 16
      %v592 = vrot.slane %v590, 7
      %v593 = vshll.u32 %v540, 16
      %v595 = vor.u32 %v592, %v593
      %v596 = vrot.slane %v592, 4
      %v598 = vshrl.u32 %v541, 16
      %v600 = vrot.slane %v598, 7
      %v601 = vshll.u32 %v541, 16
      %v603 = vor.u32 %v600, %v601
      %v604 = vsel %vm554, %v596, %v603
      %v605 = vrot.slane %v600, 4
      %v607 = vshrl.u32 %v542, 16
      %v609 = vrot.slane %v607, 7
      %v610 = vshll.u32 %v542, 16
      %v612 = vor.u32 %v609, %v610
      %v613 = vrot.slane %v609, 4
      %v615 = vshrl.u32 %v543, 16
      %v617 = vrot.slane %v615, 7
      %v618 = vshll.u32 %v543, 16
      %v620 = vor.u32 %v617, %v618
      %v621 = vsel %vm554, %v613, %v620
      %v622 = vrot.slane %v617, 4
      %v624 = vshrl.u32 %v544, 16
      %v626 = vrot.slane %v624, 7
      %v627 = vshll.u32 %v544, 16
      %v629 = vor.u32 %v626, %v627
      %v630 = vrot.slane %v626, 4
      %v632 = vshrl.u32 %v545, 16
      %v634 = vrot.slane %v632, 7
      %v635 = vshll.u32 %v545, 16
      %v637 = vor.u32 %v634, %v635
      %v638 = vsel %vm554, %v630, %v637
      %v639 = vrot.slane %v634, 4
      %v641 = vshrl.u32 %v546, 16
      %v643 = vrot.slane %v641, 7
      %v644 = vshll.u32 %v546, 16
      %v646 = vor.u32 %v643, %v644
      %v647 = vrot.slane %v643, 4
      %v649 = vshrl.u32 %v547, 16
      %v651 = vrot.slane %v649, 7
      %v652 = vshll.u32 %v547, 16
      %v654 = vor.u32 %v651, %v652
      %v655 = vsel %vm554, %v647, %v654
      %v656 = vrot.slane %v651, 4
      %v658 = vshrl.u32 %v548, 16
      %v660 = vrot.slane %v658, 7
      %v661 = vshll.u32 %v548, 16
      %v663 = vor.u32 %v660, %v661
      %v664 = vrot.slane %v660, 4
      %v666 = vshrl.u32 %v549, 16
      %v668 = vrot.slane %v666, 7
      %v669 = vshll.u32 %v549, 16
      %v671 = vor.u32 %v668, %v669
      %v672 = vsel %vm554, %v664, %v671
      %v673 = vrot.slane %v668, 4
      %v675 = vshrl.u32 %v550, 16
      %v677 = vrot.slane %v675, 7
      %v678 = vshll.u32 %v550, 16
      %v680 = vor.u32 %v677, %v678
      %v681 = vrot.slane %v677, 4
      %v683 = vshrl.u32 %v551, 16
      %v685 = vrot.slane %v683, 7
      %v686 = vshll.u32 %v551, 16
      %v688 = vor.u32 %v685, %v686
      %v689 = vsel %vm554, %v681, %v688
      %v690 = vrot.slane %v685, 4
      %s715 = scalar_lea.vmem [#allocation2], 12
      %vm716 = vcmask 60416
      %vm717 = vsmask.f32 7938
      %vm718 = vmand %vm716, %vm717
      %v719 = vld [vmem:[%s715] sm:$0xf]
      %v720 = vsel %vm718, %v561, %v719
      %721 = vst [vmem:[%s715] sm:$0xf] %v720
      %722 = vst.msk [vmem:[%s715 + $0x4] sm:$0xf] %vm456, %v570
      %vm723 = vcmask 57344
      %vm724 = vmand %vm723, %vm552
      %v725 = vld [vmem:[%s715 + $0x8] sm:$0x1]
      %v726 = vsel %vm724, %v571, %v725
      %727 = vst [vmem:[%s715 + $0x8] sm:$0x1] %v726
      %v728 = vld [vmem:[%s715 + $0xc] sm:$0xf]
      %v729 = vsel %vm718, %v578, %v728
      %730 = vst [vmem:[%s715 + $0xc] sm:$0xf] %v729
      %731 = vst.msk [vmem:[%s715 + $0x10] sm:$0xf] %vm456, %v587
      %v732 = vld [vmem:[%s715 + $0x14] sm:$0x1]
      %v733 = vsel %vm724, %v588, %v732
      %734 = vst [vmem:[%s715 + $0x14] sm:$0x1] %v733
      %v735 = vld [vmem:[%s715 + $0x18] sm:$0xf]
      %v736 = vsel %vm718, %v595, %v735
      %737 = vst [vmem:[%s715 + $0x18] sm:$0xf] %v736
      %738 = vst.msk [vmem:[%s715 + $0x1c] sm:$0xf] %vm456, %v604
      %v739 = vld [vmem:[%s715 + $0x20] sm:$0x1]
      %v740 = vsel %vm724, %v605, %v739
      %741 = vst [vmem:[%s715 + $0x20] sm:$0x1] %v740
      %v742 = vld [vmem:[%s715 + $0x24] sm:$0xf]
      %v743 = vsel %vm718, %v612, %v742
      %744 = vst [vmem:[%s715 + $0x24] sm:$0xf] %v743
      %745 = vst.msk [vmem:[%s715 + $0x28] sm:$0xf] %vm456, %v621
      %v746 = vld [vmem:[%s715 + $0x2c] sm:$0x1]
      %v747 = vsel %vm724, %v622, %v746
      %748 = vst [vmem:[%s715 + $0x2c] sm:$0x1] %v747
      %v749 = vld [vmem:[%s715 + $0x30] sm:$0xf]
      %v750 = vsel %vm718, %v629, %v749
      %751 = vst [vmem:[%s715 + $0x30] sm:$0xf] %v750
      %752 = vst.msk [vmem:[%s715 + $0x34] sm:$0xf] %vm456, %v638
      %v753 = vld [vmem:[%s715 + $0x38] sm:$0x1]
      %v754 = vsel %vm724, %v639, %v753
      %755 = vst [vmem:[%s715 + $0x38] sm:$0x1] %v754
      %v756 = vld [vmem:[%s715 + $0x3c] sm:$0xf]
      %v757 = vsel %vm718, %v646, %v756
      %758 = vst [vmem:[%s715 + $0x3c] sm:$0xf] %v757
      %759 = vst.msk [vmem:[%s715 + $0x40] sm:$0xf] %vm456, %v655
      %v760 = vld [vmem:[%s715 + $0x44] sm:$0x1]
      %v761 = vsel %vm724, %v656, %v760
      %762 = vst [vmem:[%s715 + $0x44] sm:$0x1] %v761
      %v763 = vld [vmem:[%s715 + $0x48] sm:$0xf]
      %v764 = vsel %vm718, %v663, %v763
      %765 = vst [vmem:[%s715 + $0x48] sm:$0xf] %v764
      %766 = vst.msk [vmem:[%s715 + $0x4c] sm:$0xf] %vm456, %v672
      %v767 = vld [vmem:[%s715 + $0x50] sm:$0x1]
      %v768 = vsel %vm724, %v673, %v767
      %769 = vst [vmem:[%s715 + $0x50] sm:$0x1] %v768
      %v770 = vld [vmem:[%s715 + $0x54] sm:$0xf]
      %v771 = vsel %vm718, %v680, %v770
      %772 = vst [vmem:[%s715 + $0x54] sm:$0xf] %v771
      %773 = vst.msk [vmem:[%s715 + $0x58] sm:$0xf] %vm456, %v689
      %v774 = vld [vmem:[%s715 + $0x5c] sm:$0x1]
      %v775 = vsel %vm724, %v690, %v774
      %776 = vst [vmem:[%s715 + $0x5c] sm:$0x1] %v775
      %p777 = scmp.gt.s32.totalorder %s22, 0
      // Predicated region
      $region45: #{cnnf_forward.6} parent=43 // pred_check
        %p778 = pneg %p777
      $region46: #{cnnf_forward.6} parent=43 // pred_check_branch
        %780 = sbr.rel (%p778) target = $region48
      $region47: #{cnnf_forward.6} parent=43 // pred_region
        %s781 = scalar_lea.vmem %s411, 112
        %v782 = vld [vmem:[%s781] sm:$0xff]
        %v783 = vld [vmem:[%s781 + $0x8] sm:$0xff]
        %v784 = vpack.c.bf16 %v783, %v782
        %v786 = vunpack.c.l.b16 %v784
        %v787 = vunpack.c.h.b16 %v784
        %v788 = vpack.c.b16 %v786, %v786
        %v789 = vpack.c.b16 %v787, %v787
        %v791 = vshrl.u32 %v788, 16
        %v793 = vrot.slane %v791, 7
        %v794 = vshll.u32 %v788, 16
        %v796 = vor.u32 %v793, %v794
        %v797 = vrot.slane %v793, 4
        %v799 = vshrl.u32 %v789, 16
        %v801 = vrot.slane %v799, 7
        %v802 = vshll.u32 %v789, 16
        %v804 = vor.u32 %v801, %v802
        %v805 = vsel %vm554, %v797, %v804
        %v806 = vrot.slane %v801, 4
        %v810 = vld [vmem:[#allocation2] sm:$0xf]
        %v811 = vsel %vm718, %v796, %v810
        %812 = vst [vmem:[#allocation2] sm:$0xf] %v811
        %813 = vst.msk [vmem:[#allocation2 + $0x4] sm:$0xf] %vm456, %v805
        %v814 = vld [vmem:[#allocation2 + $0x8] sm:$0x1]
        %v815 = vsel %vm724, %v806, %v814
        %816 = vst [vmem:[#allocation2 + $0x8] sm:$0x1] %v815
      $region48: #{cnnf_forward.6} parent=43 // pred_fallthru
        _
      %p817 = scmp.lt.s32.totalorder %s22, 1
      // Predicated region
      $region49: #{cnnf_forward.6} parent=43 // pred_check
        %p818 = pneg %p817
      $region50: #{cnnf_forward.6} parent=43 // pred_check_branch
        %820 = sbr.rel (%p818) target = $region52
      $region51: #{cnnf_forward.6} parent=43 // pred_region
        %v821 = vld [vmem:[%s428] sm:$0xff]
        %v822 = vld [vmem:[%s428 + $0x8] sm:$0xff]
        %v823 = vpack.c.bf16 %v822, %v821
        %v825 = vunpack.c.l.b16 %v823
        %v826 = vunpack.c.h.b16 %v823
        %v827 = vpack.c.b16 %v825, %v825
        %v828 = vpack.c.b16 %v826, %v826
        %v830 = vshrl.u32 %v827, 16
        %v832 = vrot.slane %v830, 7
        %v833 = vshll.u32 %v827, 16
        %v835 = vor.u32 %v832, %v833
        %v836 = vrot.slane %v832, 4
        %v838 = vshrl.u32 %v828, 16
        %v840 = vrot.slane %v838, 7
        %v841 = vshll.u32 %v828, 16
        %v843 = vor.u32 %v840, %v841
        %v844 = vsel %vm554, %v836, %v843
        %v845 = vrot.slane %v840, 4
        %s849 = scalar_lea.vmem [#allocation2], 108
        %v850 = vld [vmem:[%s849] sm:$0xf]
        %v851 = vsel %vm718, %v835, %v850
        %852 = vst [vmem:[%s849] sm:$0xf] %v851
        %853 = vst.msk [vmem:[%s849 + $0x4] sm:$0xf] %vm456, %v844
        %v854 = vld [vmem:[%s849 + $0x8] sm:$0x1]
        %v855 = vsel %vm724, %v845, %v854
        %856 = vst [vmem:[%s849 + $0x8] sm:$0x1] %v855
      $region52: #{cnnf_forward.6} parent=43 // pred_fallthru
        _
      %v857 = vld [vmem:[#allocation2] sm:$0xf]
      %v858 = vld [vmem:[#allocation2 + $0x4] sm:$0xf]
      %v859 = vld [vmem:[#allocation2 + $0xc] sm:$0xf]
      %v860 = vld [vmem:[#allocation2 + $0x10] sm:$0xf]
      %v861 = vld [vmem:[#allocation2 + $0x18] sm:$0xf]
      %v862 = vld [vmem:[#allocation2 + $0x1c] sm:$0xf]
      %v863 = vld [vmem:[#allocation2 + $0x24] sm:$0xf]
      %v864 = vld [vmem:[#allocation2 + $0x28] sm:$0xf]
      %v865 = vld [vmem:[#allocation2 + $0x30] sm:$0xf]
      %v866 = vld [vmem:[#allocation2 + $0x34] sm:$0xf]
      %v867 = vld [vmem:[#allocation2 + $0x3c] sm:$0xf]
      %v868 = vld [vmem:[#allocation2 + $0x40] sm:$0xf]
      %v869 = vld [vmem:[#allocation2 + $0x48] sm:$0xf]
      %v870 = vld [vmem:[#allocation2 + $0x4c] sm:$0xf]
      %v871 = vld [vmem:[#allocation2 + $0x54] sm:$0xf]
      %v872 = vld [vmem:[#allocation2 + $0x58] sm:$0xf]
      %873 = vst.msk [vmem:[#allocation3] sm:$0xf] %vm456, %v857
      %874 = vst.msk [vmem:[#allocation3 + $0x4] sm:$0xf] %vm456, %v858
      %875 = vst.msk [vmem:[#allocation3 + $0x8] sm:$0xf] %vm456, %v859
      %876 = vst.msk [vmem:[#allocation3 + $0xc] sm:$0xf] %vm456, %v860
      %877 = vst.msk [vmem:[#allocation3 + $0x10] sm:$0xf] %vm456, %v861
      %878 = vst.msk [vmem:[#allocation3 + $0x14] sm:$0xf] %vm456, %v862
      %879 = vst.msk [vmem:[#allocation3 + $0x18] sm:$0xf] %vm456, %v863
      %880 = vst.msk [vmem:[#allocation3 + $0x1c] sm:$0xf] %vm456, %v864
      %881 = vst.msk [vmem:[#allocation3 + $0x20] sm:$0xf] %vm456, %v865
      %882 = vst.msk [vmem:[#allocation3 + $0x24] sm:$0xf] %vm456, %v866
      %883 = vst.msk [vmem:[#allocation3 + $0x28] sm:$0xf] %vm456, %v867
      %884 = vst.msk [vmem:[#allocation3 + $0x2c] sm:$0xf] %vm456, %v868
      %885 = vst.msk [vmem:[#allocation3 + $0x30] sm:$0xf] %vm456, %v869
      %886 = vst.msk [vmem:[#allocation3 + $0x34] sm:$0xf] %vm456, %v870
      %887 = vst.msk [vmem:[#allocation3 + $0x38] sm:$0xf] %vm456, %v871
      %888 = vst.msk [vmem:[#allocation3 + $0x3c] sm:$0xf] %vm456, %v872
      %v889 = vld [vmem:[#allocation2] sm:$0xf]
      %v890 = vld [vmem:[#allocation2 + $0x4] sm:$0xf]
      %v891 = vld [vmem:[#allocation2 + $0x8] sm:$0x1]
      %v892 = vld [vmem:[#allocation2 + $0xc] sm:$0xf]
      %v893 = vld [vmem:[#allocation2 + $0x10] sm:$0xf]
      %v894 = vld [vmem:[#allocation2 + $0x14] sm:$0x1]
      %v895 = vld [vmem:[#allocation2 + $0x18] sm:$0xf]
      %v896 = vld [vmem:[#allocation2 + $0x1c] sm:$0xf]
      %v897 = vld [vmem:[#allocation2 + $0x20] sm:$0x1]
      %v898 = vld [vmem:[#allocation2 + $0x24] sm:$0xf]
      %v899 = vld [vmem:[#allocation2 + $0x28] sm:$0xf]
      %v900 = vld [vmem:[#allocation2 + $0x2c] sm:$0x1]
      %v901 = vld [vmem:[#allocation2 + $0x30] sm:$0xf]
      %v902 = vld [vmem:[#allocation2 + $0x34] sm:$0xf]
      %v903 = vld [vmem:[#allocation2 + $0x38] sm:$0x1]
      %v904 = vld [vmem:[#allocation2 + $0x3c] sm:$0xf]
      %v905 = vld [vmem:[#allocation2 + $0x40] sm:$0xf]
      %v906 = vld [vmem:[#allocation2 + $0x44] sm:$0x1]
      %v907 = vld [vmem:[#allocation2 + $0x48] sm:$0xf]
      %v908 = vld [vmem:[#allocation2 + $0x4c] sm:$0xf]
      %v909 = vld [vmem:[#allocation2 + $0x50] sm:$0x1]
      %v910 = vld [vmem:[#allocation2 + $0x54] sm:$0xf]
      %v911 = vld [vmem:[#allocation2 + $0x58] sm:$0xf]
      %v912 = vld [vmem:[#allocation2 + $0x5c] sm:$0x1]
      %vm913 = vsmask.f32 3328
      %vm914 = vsmask.f32 7440
      %vm915 = vmor %vm913, %vm914
      %v917 = vshrl.u32 %v889, 16
      %v919 = vrot.slane %v917, 4
      %v920 = vshll.u32 %v889, 16
      %v922 = vrot.slane %v920, 5
      %v923 = vor.u32 %v919, %v922
      %v924 = vrot.slane %v923, 4
      %v926 = vshll.u32 %v890, 16
      %v928 = vrot.slane %v926, 5
      %v929 = vsel %vm915, %v924, %v928
      %v930 = vshrl.u32 %v890, 16
      %v932 = vrot.slane %v930, 4
      %v933 = vor.u32 %v932, %v928
      %v934 = vrot.slane %v933, 4
      %v936 = vshll.u32 %v891, 16
      %v938 = vrot.slane %v936, 5
      %v939 = vsel %vm915, %v934, %v938
      %v941 = vshrl.u32 %v892, 16
      %v943 = vrot.slane %v941, 4
      %v944 = vshll.u32 %v892, 16
      %v946 = vrot.slane %v944, 5
      %v947 = vor.u32 %v943, %v946
      %v948 = vrot.slane %v947, 4
      %v950 = vshll.u32 %v893, 16
      %v952 = vrot.slane %v950, 5
      %v953 = vsel %vm915, %v948, %v952
      %v954 = vshrl.u32 %v893, 16
      %v956 = vrot.slane %v954, 4
      %v957 = vor.u32 %v956, %v952
      %v958 = vrot.slane %v957, 4
      %v960 = vshll.u32 %v894, 16
      %v962 = vrot.slane %v960, 5
      %v963 = vsel %vm915, %v958, %v962
      %v965 = vshrl.u32 %v895, 16
      %v967 = vrot.slane %v965, 4
      %v968 = vshll.u32 %v895, 16
      %v970 = vrot.slane %v968, 5
      %v971 = vor.u32 %v967, %v970
      %v972 = vrot.slane %v971, 4
      %v974 = vshll.u32 %v896, 16
      %v976 = vrot.slane %v974, 5
      %v977 = vsel %vm915, %v972, %v976
      %v978 = vshrl.u32 %v896, 16
      %v980 = vrot.slane %v978, 4
      %v981 = vor.u32 %v980, %v976
      %v982 = vrot.slane %v981, 4
      %v984 = vshll.u32 %v897, 16
      %v986 = vrot.slane %v984, 5
      %v987 = vsel %vm915, %v982, %v986
      %v989 = vshrl.u32 %v898, 16
      %v991 = vrot.slane %v989, 4
      %v992 = vshll.u32 %v898, 16
      %v994 = vrot.slane %v992, 5
      %v995 = vor.u32 %v991, %v994
      %v996 = vrot.slane %v995, 4
      %v998 = vshll.u32 %v899, 16
      %v1000 = vrot.slane %v998, 5
      %v1001 = vsel %vm915, %v996, %v1000
      %v1002 = vshrl.u32 %v899, 16
      %v1004 = vrot.slane %v1002, 4
      %v1005 = vor.u32 %v1004, %v1000
      %v1006 = vrot.slane %v1005, 4
      %v1008 = vshll.u32 %v900, 16
      %v1010 = vrot.slane %v1008, 5
      %v1011 = vsel %vm915, %v1006, %v1010
      %v1013 = vshrl.u32 %v901, 16
      %v1015 = vrot.slane %v1013, 4
      %v1016 = vshll.u32 %v901, 16
      %v1018 = vrot.slane %v1016, 5
      %v1019 = vor.u32 %v1015, %v1018
      %v1020 = vrot.slane %v1019, 4
      %v1022 = vshll.u32 %v902, 16
      %v1024 = vrot.slane %v1022, 5
      %v1025 = vsel %vm915, %v1020, %v1024
      %v1026 = vshrl.u32 %v902, 16
      %v1028 = vrot.slane %v1026, 4
      %v1029 = vor.u32 %v1028, %v1024
      %v1030 = vrot.slane %v1029, 4
      %v1032 = vshll.u32 %v903, 16
      %v1034 = vrot.slane %v1032, 5
      %v1035 = vsel %vm915, %v1030, %v1034
      %v1037 = vshrl.u32 %v904, 16
      %v1039 = vrot.slane %v1037, 4
      %v1040 = vshll.u32 %v904, 16
      %v1042 = vrot.slane %v1040, 5
      %v1043 = vor.u32 %v1039, %v1042
      %v1044 = vrot.slane %v1043, 4
      %v1046 = vshll.u32 %v905, 16
      %v1048 = vrot.slane %v1046, 5
      %v1049 = vsel %vm915, %v1044, %v1048
      %v1050 = vshrl.u32 %v905, 16
      %v1052 = vrot.slane %v1050, 4
      %v1053 = vor.u32 %v1052, %v1048
      %v1054 = vrot.slane %v1053, 4
      %v1056 = vshll.u32 %v906, 16
      %v1058 = vrot.slane %v1056, 5
      %v1059 = vsel %vm915, %v1054, %v1058
      %v1061 = vshrl.u32 %v907, 16
      %v1063 = vrot.slane %v1061, 4
      %v1064 = vshll.u32 %v907, 16
      %v1066 = vrot.slane %v1064, 5
      %v1067 = vor.u32 %v1063, %v1066
      %v1068 = vrot.slane %v1067, 4
      %v1070 = vshll.u32 %v908, 16
      %v1072 = vrot.slane %v1070, 5
      %v1073 = vsel %vm915, %v1068, %v1072
      %v1074 = vshrl.u32 %v908, 16
      %v1076 = vrot.slane %v1074, 4
      %v1077 = vor.u32 %v1076, %v1072
      %v1078 = vrot.slane %v1077, 4
      %v1080 = vshll.u32 %v909, 16
      %v1082 = vrot.slane %v1080, 5
      %v1083 = vsel %vm915, %v1078, %v1082
      %v1085 = vshrl.u32 %v910, 16
      %v1087 = vrot.slane %v1085, 4
      %v1088 = vshll.u32 %v910, 16
      %v1090 = vrot.slane %v1088, 5
      %v1091 = vor.u32 %v1087, %v1090
      %v1092 = vrot.slane %v1091, 4
      %v1094 = vshll.u32 %v911, 16
      %v1096 = vrot.slane %v1094, 5
      %v1097 = vsel %vm915, %v1092, %v1096
      %v1098 = vshrl.u32 %v911, 16
      %v1100 = vrot.slane %v1098, 4
      %v1101 = vor.u32 %v1100, %v1096
      %v1102 = vrot.slane %v1101, 4
      %v1104 = vshll.u32 %v912, 16
      %v1106 = vrot.slane %v1104, 5
      %v1107 = vsel %vm915, %v1102, %v1106
      %1108 = vrot.lane.b32.xlu0 %v929, 8
      %v1109 = vpop.permute.xlu0 %1108
      %1110 = vrot.lane.b32.xlu0 %v939, 8
      %v1111 = vpop.permute.xlu0 %1110
      %1112 = vrot.lane.b32.xlu0 %v953, 8
      %v1113 = vpop.permute.xlu0 %1112
      %1114 = vrot.lane.b32.xlu0 %v963, 8
      %v1115 = vpop.permute.xlu0 %1114
      %1116 = vrot.lane.b32.xlu0 %v977, 8
      %v1117 = vpop.permute.xlu0 %1116
      %1118 = vrot.lane.b32.xlu0 %v987, 8
      %v1119 = vpop.permute.xlu0 %1118
      %1120 = vrot.lane.b32.xlu0 %v1001, 8
      %v1121 = vpop.permute.xlu0 %1120
      %1122 = vrot.lane.b32.xlu0 %v1011, 8
      %v1123 = vpop.permute.xlu0 %1122
      %1124 = vrot.lane.b32.xlu0 %v1025, 8
      %v1125 = vpop.permute.xlu0 %1124
      %1126 = vrot.lane.b32.xlu0 %v1035, 8
      %v1127 = vpop.permute.xlu0 %1126
      %1128 = vrot.lane.b32.xlu0 %v1049, 8
      %v1129 = vpop.permute.xlu0 %1128
      %1130 = vrot.lane.b32.xlu0 %v1059, 8
      %v1131 = vpop.permute.xlu0 %1130
      %1132 = vrot.lane.b32.xlu0 %v1073, 8
      %v1133 = vpop.permute.xlu0 %1132
      %1134 = vrot.lane.b32.xlu0 %v1083, 8
      %v1135 = vpop.permute.xlu0 %1134
      %1136 = vrot.lane.b32.xlu0 %v1097, 8
      %v1137 = vpop.permute.xlu0 %1136
      %1138 = vrot.lane.b32.xlu0 %v1107, 8
      %v1139 = vpop.permute.xlu0 %1138
      %vm1156 = vcmask 126016
      %1157 = vst.msk [vmem:[#allocation3] sm:$0xf] %vm1156, %v1109
      %1158 = vst.msk [vmem:[#allocation3 + $0x4] sm:$0xf] %vm1156, %v1111
      %1159 = vst.msk [vmem:[#allocation3 + $0x8] sm:$0xf] %vm1156, %v1113
      %1160 = vst.msk [vmem:[#allocation3 + $0xc] sm:$0xf] %vm1156, %v1115
      %1161 = vst.msk [vmem:[#allocation3 + $0x10] sm:$0xf] %vm1156, %v1117
      %1162 = vst.msk [vmem:[#allocation3 + $0x14] sm:$0xf] %vm1156, %v1119
      %1163 = vst.msk [vmem:[#allocation3 + $0x18] sm:$0xf] %vm1156, %v1121
      %1164 = vst.msk [vmem:[#allocation3 + $0x1c] sm:$0xf] %vm1156, %v1123
      %1165 = vst.msk [vmem:[#allocation3 + $0x20] sm:$0xf] %vm1156, %v1125
      %1166 = vst.msk [vmem:[#allocation3 + $0x24] sm:$0xf] %vm1156, %v1127
      %1167 = vst.msk [vmem:[#allocation3 + $0x28] sm:$0xf] %vm1156, %v1129
      %1168 = vst.msk [vmem:[#allocation3 + $0x2c] sm:$0xf] %vm1156, %v1131
      %1169 = vst.msk [vmem:[#allocation3 + $0x30] sm:$0xf] %vm1156, %v1133
      %1170 = vst.msk [vmem:[#allocation3 + $0x34] sm:$0xf] %vm1156, %v1135
      %1171 = vst.msk [vmem:[#allocation3 + $0x38] sm:$0xf] %vm1156, %v1137
      %1172 = vst.msk [vmem:[#allocation3 + $0x3c] sm:$0xf] %vm1156, %v1139
      %v1173 = vld [vmem:[#allocation2] sm:$0xe]
      %v1174 = vld [vmem:[#allocation2 + $0x4] sm:$0xf]
      %v1175 = vld [vmem:[#allocation2 + $0x8] sm:$0x1]
      %v1176 = vld [vmem:[#allocation2 + $0xc] sm:$0xe]
      %v1177 = vld [vmem:[#allocation2 + $0x10] sm:$0xf]
      %v1178 = vld [vmem:[#allocation2 + $0x14] sm:$0x1]
      %v1179 = vld [vmem:[#allocation2 + $0x18] sm:$0xe]
      %v1180 = vld [vmem:[#allocation2 + $0x1c] sm:$0xf]
      %v1181 = vld [vmem:[#allocation2 + $0x20] sm:$0x1]
      %v1182 = vld [vmem:[#allocation2 + $0x24] sm:$0xe]
      %v1183 = vld [vmem:[#allocation2 + $0x28] sm:$0xf]
      %v1184 = vld [vmem:[#allocation2 + $0x2c] sm:$0x1]
      %v1185 = vld [vmem:[#allocation2 + $0x30] sm:$0xe]
      %v1186 = vld [vmem:[#allocation2 + $0x34] sm:$0xf]
      %v1187 = vld [vmem:[#allocation2 + $0x38] sm:$0x1]
      %v1188 = vld [vmem:[#allocation2 + $0x3c] sm:$0xe]
      %v1189 = vld [vmem:[#allocation2 + $0x40] sm:$0xf]
      %v1190 = vld [vmem:[#allocation2 + $0x44] sm:$0x1]
      %v1191 = vld [vmem:[#allocation2 + $0x48] sm:$0xe]
      %v1192 = vld [vmem:[#allocation2 + $0x4c] sm:$0xf]
      %v1193 = vld [vmem:[#allocation2 + $0x50] sm:$0x1]
      %v1194 = vld [vmem:[#allocation2 + $0x54] sm:$0xe]
      %v1195 = vld [vmem:[#allocation2 + $0x58] sm:$0xf]
      %v1196 = vld [vmem:[#allocation2 + $0x5c] sm:$0x1]
      %vm1221 = vcmask 1042432
      %vm1222 = vcmask 1046532
      %vm1223 = vmor %vm1221, %vm1222
      %v1224 = vrot.slane %v1173, 5
      %v1225 = vrot.slane %v1224, 4
      %v1226 = vrot.slane %v1174, 5
      %v1227 = vsel %vm1223, %v1225, %v1226
      %v1228 = vrot.slane %v1226, 4
      %v1229 = vrot.slane %v1175, 5
      %v1230 = vsel %vm1223, %v1228, %v1229
      %v1231 = vrot.slane %v1176, 5
      %v1232 = vrot.slane %v1231, 4
      %v1233 = vrot.slane %v1177, 5
      %v1234 = vsel %vm1223, %v1232, %v1233
      %v1235 = vrot.slane %v1233, 4
      %v1236 = vrot.slane %v1178, 5
      %v1237 = vsel %vm1223, %v1235, %v1236
      %v1238 = vrot.slane %v1179, 5
      %v1239 = vrot.slane %v1238, 4
      %v1240 = vrot.slane %v1180, 5
      %v1241 = vsel %vm1223, %v1239, %v1240
      %v1242 = vrot.slane %v1240, 4
      %v1243 = vrot.slane %v1181, 5
      %v1244 = vsel %vm1223, %v1242, %v1243
      %v1245 = vrot.slane %v1182, 5
      %v1246 = vrot.slane %v1245, 4
      %v1247 = vrot.slane %v1183, 5
      %v1248 = vsel %vm1223, %v1246, %v1247
      %v1249 = vrot.slane %v1247, 4
      %v1250 = vrot.slane %v1184, 5
      %v1251 = vsel %vm1223, %v1249, %v1250
      %v1252 = vrot.slane %v1185, 5
      %v1253 = vrot.slane %v1252, 4
      %v1254 = vrot.slane %v1186, 5
      %v1255 = vsel %vm1223, %v1253, %v1254
      %v1256 = vrot.slane %v1254, 4
      %v1257 = vrot.slane %v1187, 5
      %v1258 = vsel %vm1223, %v1256, %v1257
      %v1259 = vrot.slane %v1188, 5
      %v1260 = vrot.slane %v1259, 4
      %v1261 = vrot.slane %v1189, 5
      %v1262 = vsel %vm1223, %v1260, %v1261
      %v1263 = vrot.slane %v1261, 4
      %v1264 = vrot.slane %v1190, 5
      %v1265 = vsel %vm1223, %v1263, %v1264
      %v1266 = vrot.slane %v1191, 5
      %v1267 = vrot.slane %v1266, 4
      %v1268 = vrot.slane %v1192, 5
      %v1269 = vsel %vm1223, %v1267, %v1268
      %v1270 = vrot.slane %v1268, 4
      %v1271 = vrot.slane %v1193, 5
      %v1272 = vsel %vm1223, %v1270, %v1271
      %v1273 = vrot.slane %v1194, 5
      %v1274 = vrot.slane %v1273, 4
      %v1275 = vrot.slane %v1195, 5
      %v1276 = vsel %vm1223, %v1274, %v1275
      %v1277 = vrot.slane %v1275, 4
      %v1278 = vrot.slane %v1196, 5
      %v1279 = vsel %vm1223, %v1277, %v1278
      %1280 = vrot.lane.b32.xlu0 %v1227, 16
      %v1281 = vpop.permute.xlu0 %1280
      %1282 = vrot.lane.b32.xlu0 %v1230, 16
      %v1283 = vpop.permute.xlu0 %1282
      %1284 = vrot.lane.b32.xlu0 %v1234, 16
      %v1285 = vpop.permute.xlu0 %1284
      %1286 = vrot.lane.b32.xlu0 %v1237, 16
      %v1287 = vpop.permute.xlu0 %1286
      %1288 = vrot.lane.b32.xlu0 %v1241, 16
      %v1289 = vpop.permute.xlu0 %1288
      %1290 = vrot.lane.b32.xlu0 %v1244, 16
      %v1291 = vpop.permute.xlu0 %1290
      %1292 = vrot.lane.b32.xlu0 %v1248, 16
      %v1293 = vpop.permute.xlu0 %1292
      %1294 = vrot.lane.b32.xlu0 %v1251, 16
      %v1295 = vpop.permute.xlu0 %1294
      %1296 = vrot.lane.b32.xlu0 %v1255, 16
      %v1297 = vpop.permute.xlu0 %1296
      %1298 = vrot.lane.b32.xlu0 %v1258, 16
      %v1299 = vpop.permute.xlu0 %1298
      %1300 = vrot.lane.b32.xlu0 %v1262, 16
      %v1301 = vpop.permute.xlu0 %1300
      %1302 = vrot.lane.b32.xlu0 %v1265, 16
      %v1303 = vpop.permute.xlu0 %1302
      %1304 = vrot.lane.b32.xlu0 %v1269, 16
      %v1305 = vpop.permute.xlu0 %1304
      %1306 = vrot.lane.b32.xlu0 %v1272, 16
      %v1307 = vpop.permute.xlu0 %1306
      %1308 = vrot.lane.b32.xlu0 %v1276, 16
      %v1309 = vpop.permute.xlu0 %1308
      %1310 = vrot.lane.b32.xlu0 %v1279, 16
      %v1311 = vpop.permute.xlu0 %1310
      %vm1328 = vcmask 191616
      %1329 = vst.msk [vmem:[#allocation3] sm:$0xf] %vm1328, %v1281
      %1330 = vst.msk [vmem:[#allocation3 + $0x4] sm:$0xf] %vm1328, %v1283
      %1331 = vst.msk [vmem:[#allocation3 + $0x8] sm:$0xf] %vm1328, %v1285
      %1332 = vst.msk [vmem:[#allocation3 + $0xc] sm:$0xf] %vm1328, %v1287
      %1333 = vst.msk [vmem:[#allocation3 + $0x10] sm:$0xf] %vm1328, %v1289
      %1334 = vst.msk [vmem:[#allocation3 + $0x14] sm:$0xf] %vm1328, %v1291
      %1335 = vst.msk [vmem:[#allocation3 + $0x18] sm:$0xf] %vm1328, %v1293
      %1336 = vst.msk [vmem:[#allocation3 + $0x1c] sm:$0xf] %vm1328, %v1295
      %1337 = vst.msk [vmem:[#allocation3 + $0x20] sm:$0xf] %vm1328, %v1297
      %1338 = vst.msk [vmem:[#allocation3 + $0x24] sm:$0xf] %vm1328, %v1299
      %1339 = vst.msk [vmem:[#allocation3 + $0x28] sm:$0xf] %vm1328, %v1301
      %1340 = vst.msk [vmem:[#allocation3 + $0x2c] sm:$0xf] %vm1328, %v1303
      %1341 = vst.msk [vmem:[#allocation3 + $0x30] sm:$0xf] %vm1328, %v1305
      %1342 = vst.msk [vmem:[#allocation3 + $0x34] sm:$0xf] %vm1328, %v1307
      %1343 = vst.msk [vmem:[#allocation3 + $0x38] sm:$0xf] %vm1328, %v1309
      %1344 = vst.msk [vmem:[#allocation3 + $0x3c] sm:$0xf] %vm1328, %v1311
      %v1345 = vld [vmem:[%s715] sm:$0xf]
      %v1346 = vld [vmem:[%s715 + $0x4] sm:$0xf]
      %v1347 = vld [vmem:[%s715 + $0xc] sm:$0xf]
      %v1348 = vld [vmem:[%s715 + $0x10] sm:$0xf]
      %v1349 = vld [vmem:[%s715 + $0x18] sm:$0xf]
      %v1350 = vld [vmem:[%s715 + $0x1c] sm:$0xf]
      %v1351 = vld [vmem:[%s715 + $0x24] sm:$0xf]
      %v1352 = vld [vmem:[%s715 + $0x28] sm:$0xf]
      %v1353 = vld [vmem:[%s715 + $0x30] sm:$0xf]
      %v1354 = vld [vmem:[%s715 + $0x34] sm:$0xf]
      %v1355 = vld [vmem:[%s715 + $0x3c] sm:$0xf]
      %v1356 = vld [vmem:[%s715 + $0x40] sm:$0xf]
      %v1357 = vld [vmem:[%s715 + $0x48] sm:$0xf]
      %v1358 = vld [vmem:[%s715 + $0x4c] sm:$0xf]
      %v1359 = vld [vmem:[%s715 + $0x54] sm:$0xf]
      %v1360 = vld [vmem:[%s715 + $0x58] sm:$0xf]
      %1377 = vrot.lane.b32.xlu0 %v1345, 24
      %v1378 = vpop.permute.xlu0 %1377
      %1379 = vrot.lane.b32.xlu0 %v1346, 24
      %v1380 = vpop.permute.xlu0 %1379
      %1381 = vrot.lane.b32.xlu0 %v1347, 24
      %v1382 = vpop.permute.xlu0 %1381
      %1383 = vrot.lane.b32.xlu0 %v1348, 24
      %v1384 = vpop.permute.xlu0 %1383
      %1385 = vrot.lane.b32.xlu0 %v1349, 24
      %v1386 = vpop.permute.xlu0 %1385
      %1387 = vrot.lane.b32.xlu0 %v1350, 24
      %v1388 = vpop.permute.xlu0 %1387
      %1389 = vrot.lane.b32.xlu0 %v1351, 24
      %v1390 = vpop.permute.xlu0 %1389
      %1391 = vrot.lane.b32.xlu0 %v1352, 24
      %v1392 = vpop.permute.xlu0 %1391
      %1393 = vrot.lane.b32.xlu0 %v1353, 24
      %v1394 = vpop.permute.xlu0 %1393
      %1395 = vrot.lane.b32.xlu0 %v1354, 24
      %v1396 = vpop.permute.xlu0 %1395
      %1397 = vrot.lane.b32.xlu0 %v1355, 24
      %v1398 = vpop.permute.xlu0 %1397
      %1399 = vrot.lane.b32.xlu0 %v1356, 24
      %v1400 = vpop.permute.xlu0 %1399
      %1401 = vrot.lane.b32.xlu0 %v1357, 24
      %v1402 = vpop.permute.xlu0 %1401
      %1403 = vrot.lane.b32.xlu0 %v1358, 24
      %v1404 = vpop.permute.xlu0 %1403
      %1405 = vrot.lane.b32.xlu0 %v1359, 24
      %v1406 = vpop.permute.xlu0 %1405
      %1407 = vrot.lane.b32.xlu0 %v1360, 24
      %v1408 = vpop.permute.xlu0 %1407
      %vm1425 = vcmask 257216
      %1426 = vst.msk [vmem:[#allocation3] sm:$0xf] %vm1425, %v1378
      %1427 = vst.msk [vmem:[#allocation3 + $0x4] sm:$0xf] %vm1425, %v1380
      %1428 = vst.msk [vmem:[#allocation3 + $0x8] sm:$0xf] %vm1425, %v1382
      %1429 = vst.msk [vmem:[#allocation3 + $0xc] sm:$0xf] %vm1425, %v1384
      %1430 = vst.msk [vmem:[#allocation3 + $0x10] sm:$0xf] %vm1425, %v1386
      %1431 = vst.msk [vmem:[#allocation3 + $0x14] sm:$0xf] %vm1425, %v1388
      %1432 = vst.msk [vmem:[#allocation3 + $0x18] sm:$0xf] %vm1425, %v1390
      %1433 = vst.msk [vmem:[#allocation3 + $0x1c] sm:$0xf] %vm1425, %v1392
      %1434 = vst.msk [vmem:[#allocation3 + $0x20] sm:$0xf] %vm1425, %v1394
      %1435 = vst.msk [vmem:[#allocation3 + $0x24] sm:$0xf] %vm1425, %v1396
      %1436 = vst.msk [vmem:[#allocation3 + $0x28] sm:$0xf] %vm1425, %v1398
      %1437 = vst.msk [vmem:[#allocation3 + $0x2c] sm:$0xf] %vm1425, %v1400
      %1438 = vst.msk [vmem:[#allocation3 + $0x30] sm:$0xf] %vm1425, %v1402
      %1439 = vst.msk [vmem:[#allocation3 + $0x34] sm:$0xf] %vm1425, %v1404
      %1440 = vst.msk [vmem:[#allocation3 + $0x38] sm:$0xf] %vm1425, %v1406
      %1441 = vst.msk [vmem:[#allocation3 + $0x3c] sm:$0xf] %vm1425, %v1408
      %v1442 = vld [vmem:[%s715] sm:$0xf]
      %v1443 = vld [vmem:[%s715 + $0x4] sm:$0xf]
      %v1444 = vld [vmem:[%s715 + $0x8] sm:$0x1]
      %v1445 = vld [vmem:[%s715 + $0xc] sm:$0xf]
      %v1446 = vld [vmem:[%s715 + $0x10] sm:$0xf]
      %v1447 = vld [vmem:[%s715 + $0x14] sm:$0x1]
      %v1448 = vld [vmem:[%s715 + $0x18] sm:$0xf]
      %v1449 = vld [vmem:[%s715 + $0x1c] sm:$0xf]
      %v1450 = vld [vmem:[%s715 + $0x20] sm:$0x1]
      %v1451 = vld [vmem:[%s715 + $0x24] sm:$0xf]
      %v1452 = vld [vmem:[%s715 + $0x28] sm:$0xf]
      %v1453 = vld [vmem:[%s715 + $0x2c] sm:$0x1]
      %v1454 = vld [vmem:[%s715 + $0x30] sm:$0xf]
      %v1455 = vld [vmem:[%s715 + $0x34] sm:$0xf]
      %v1456 = vld [vmem:[%s715 + $0x38] sm:$0x1]
      %v1457 = vld [vmem:[%s715 + $0x3c] sm:$0xf]
      %v1458 = vld [vmem:[%s715 + $0x40] sm:$0xf]
      %v1459 = vld [vmem:[%s715 + $0x44] sm:$0x1]
      %v1460 = vld [vmem:[%s715 + $0x48] sm:$0xf]
      %v1461 = vld [vmem:[%s715 + $0x4c] sm:$0xf]
      %v1462 = vld [vmem:[%s715 + $0x50] sm:$0x1]
      %v1463 = vld [vmem:[%s715 + $0x54] sm:$0xf]
      %v1464 = vld [vmem:[%s715 + $0x58] sm:$0xf]
      %v1465 = vld [vmem:[%s715 + $0x5c] sm:$0x1]
      %v1467 = vshrl.u32 %v1442, 16
      %v1469 = vrot.slane %v1467, 4
      %v1470 = vshll.u32 %v1442, 16
      %v1472 = vrot.slane %v1470, 5
      %v1473 = vor.u32 %v1469, %v1472
      %v1474 = vrot.slane %v1473, 4
      %v1476 = vshll.u32 %v1443, 16
      %v1478 = vrot.slane %v1476, 5
      %v1479 = vsel %vm915, %v1474, %v1478
      %v1480 = vshrl.u32 %v1443, 16
      %v1482 = vrot.slane %v1480, 4
      %v1483 = vor.u32 %v1482, %v1478
      %v1484 = vrot.slane %v1483, 4
      %v1486 = vshll.u32 %v1444, 16
      %v1488 = vrot.slane %v1486, 5
      %v1489 = vsel %vm915, %v1484, %v1488
      %v1491 = vshrl.u32 %v1445, 16
      %v1493 = vrot.slane %v1491, 4
      %v1494 = vshll.u32 %v1445, 16
      %v1496 = vrot.slane %v1494, 5
      %v1497 = vor.u32 %v1493, %v1496
      %v1498 = vrot.slane %v1497, 4
      %v1500 = vshll.u32 %v1446, 16
      %v1502 = vrot.slane %v1500, 5
      %v1503 = vsel %vm915, %v1498, %v1502
      %v1504 = vshrl.u32 %v1446, 16
      %v1506 = vrot.slane %v1504, 4
      %v1507 = vor.u32 %v1506, %v1502
      %v1508 = vrot.slane %v1507, 4
      %v1510 = vshll.u32 %v1447, 16
      %v1512 = vrot.slane %v1510, 5
      %v1513 = vsel %vm915, %v1508, %v1512
      %v1515 = vshrl.u32 %v1448, 16
      %v1517 = vrot.slane %v1515, 4
      %v1518 = vshll.u32 %v1448, 16
      %v1520 = vrot.slane %v1518, 5
      %v1521 = vor.u32 %v1517, %v1520
      %v1522 = vrot.slane %v1521, 4
      %v1524 = vshll.u32 %v1449, 16
      %v1526 = vrot.slane %v1524, 5
      %v1527 = vsel %vm915, %v1522, %v1526
      %v1528 = vshrl.u32 %v1449, 16
      %v1530 = vrot.slane %v1528, 4
      %v1531 = vor.u32 %v1530, %v1526
      %v1532 = vrot.slane %v1531, 4
      %v1534 = vshll.u32 %v1450, 16
      %v1536 = vrot.slane %v1534, 5
      %v1537 = vsel %vm915, %v1532, %v1536
      %v1539 = vshrl.u32 %v1451, 16
      %v1541 = vrot.slane %v1539, 4
      %v1542 = vshll.u32 %v1451, 16
      %v1544 = vrot.slane %v1542, 5
      %v1545 = vor.u32 %v1541, %v1544
      %v1546 = vrot.slane %v1545, 4
      %v1548 = vshll.u32 %v1452, 16
      %v1550 = vrot.slane %v1548, 5
      %v1551 = vsel %vm915, %v1546, %v1550
      %v1552 = vshrl.u32 %v1452, 16
      %v1554 = vrot.slane %v1552, 4
      %v1555 = vor.u32 %v1554, %v1550
      %v1556 = vrot.slane %v1555, 4
      %v1558 = vshll.u32 %v1453, 16
      %v1560 = vrot.slane %v1558, 5
      %v1561 = vsel %vm915, %v1556, %v1560
      %v1563 = vshrl.u32 %v1454, 16
      %v1565 = vrot.slane %v1563, 4
      %v1566 = vshll.u32 %v1454, 16
      %v1568 = vrot.slane %v1566, 5
      %v1569 = vor.u32 %v1565, %v1568
      %v1570 = vrot.slane %v1569, 4
      %v1572 = vshll.u32 %v1455, 16
      %v1574 = vrot.slane %v1572, 5
      %v1575 = vsel %vm915, %v1570, %v1574
      %v1576 = vshrl.u32 %v1455, 16
      %v1578 = vrot.slane %v1576, 4
      %v1579 = vor.u32 %v1578, %v1574
      %v1580 = vrot.slane %v1579, 4
      %v1582 = vshll.u32 %v1456, 16
      %v1584 = vrot.slane %v1582, 5
      %v1585 = vsel %vm915, %v1580, %v1584
      %v1587 = vshrl.u32 %v1457, 16
      %v1589 = vrot.slane %v1587, 4
      %v1590 = vshll.u32 %v1457, 16
      %v1592 = vrot.slane %v1590, 5
      %v1593 = vor.u32 %v1589, %v1592
      %v1594 = vrot.slane %v1593, 4
      %v1596 = vshll.u32 %v1458, 16
      %v1598 = vrot.slane %v1596, 5
      %v1599 = vsel %vm915, %v1594, %v1598
      %v1600 = vshrl.u32 %v1458, 16
      %v1602 = vrot.slane %v1600, 4
      %v1603 = vor.u32 %v1602, %v1598
      %v1604 = vrot.slane %v1603, 4
      %v1606 = vshll.u32 %v1459, 16
      %v1608 = vrot.slane %v1606, 5
      %v1609 = vsel %vm915, %v1604, %v1608
      %v1611 = vshrl.u32 %v1460, 16
      %v1613 = vrot.slane %v1611, 4
      %v1614 = vshll.u32 %v1460, 16
      %v1616 = vrot.slane %v1614, 5
      %v1617 = vor.u32 %v1613, %v1616
      %v1618 = vrot.slane %v1617, 4
      %v1620 = vshll.u32 %v1461, 16
      %v1622 = vrot.slane %v1620, 5
      %v1623 = vsel %vm915, %v1618, %v1622
      %v1624 = vshrl.u32 %v1461, 16
      %v1626 = vrot.slane %v1624, 4
      %v1627 = vor.u32 %v1626, %v1622
      %v1628 = vrot.slane %v1627, 4
      %v1630 = vshll.u32 %v1462, 16
      %v1632 = vrot.slane %v1630, 5
      %v1633 = vsel %vm915, %v1628, %v1632
      %v1635 = vshrl.u32 %v1463, 16
      %v1637 = vrot.slane %v1635, 4
      %v1638 = vshll.u32 %v1463, 16
      %v1640 = vrot.slane %v1638, 5
      %v1641 = vor.u32 %v1637, %v1640
      %v1642 = vrot.slane %v1641, 4
      %v1644 = vshll.u32 %v1464, 16
      %v1646 = vrot.slane %v1644, 5
      %v1647 = vsel %vm915, %v1642, %v1646
      %v1648 = vshrl.u32 %v1464, 16
      %v1650 = vrot.slane %v1648, 4
      %v1651 = vor.u32 %v1650, %v1646
      %v1652 = vrot.slane %v1651, 4
      %v1654 = vshll.u32 %v1465, 16
      %v1656 = vrot.slane %v1654, 5
      %v1657 = vsel %vm915, %v1652, %v1656
      %1658 = vrot.lane.b32.xlu0 %v1479, 32
      %v1659 = vpop.permute.xlu0 %1658
      %1660 = vrot.lane.b32.xlu0 %v1489, 32
      %v1661 = vpop.permute.xlu0 %1660
      %1662 = vrot.lane.b32.xlu0 %v1503, 32
      %v1663 = vpop.permute.xlu0 %1662
      %1664 = vrot.lane.b32.xlu0 %v1513, 32
      %v1665 = vpop.permute.xlu0 %1664
      %1666 = vrot.lane.b32.xlu0 %v1527, 32
      %v1667 = vpop.permute.xlu0 %1666
      %1668 = vrot.lane.b32.xlu0 %v1537, 32
      %v1669 = vpop.permute.xlu0 %1668
      %1670 = vrot.lane.b32.xlu0 %v1551, 32
      %v1671 = vpop.permute.xlu0 %1670
      %1672 = vrot.lane.b32.xlu0 %v1561, 32
      %v1673 = vpop.permute.xlu0 %1672
      %1674 = vrot.lane.b32.xlu0 %v1575, 32
      %v1675 = vpop.permute.xlu0 %1674
      %1676 = vrot.lane.b32.xlu0 %v1585, 32
      %v1677 = vpop.permute.xlu0 %1676
      %1678 = vrot.lane.b32.xlu0 %v1599, 32
      %v1679 = vpop.permute.xlu0 %1678
      %1680 = vrot.lane.b32.xlu0 %v1609, 32
      %v1681 = vpop.permute.xlu0 %1680
      %1682 = vrot.lane.b32.xlu0 %v1623, 32
      %v1683 = vpop.permute.xlu0 %1682
      %1684 = vrot.lane.b32.xlu0 %v1633, 32
      %v1685 = vpop.permute.xlu0 %1684
      %1686 = vrot.lane.b32.xlu0 %v1647, 32
      %v1687 = vpop.permute.xlu0 %1686
      %1688 = vrot.lane.b32.xlu0 %v1657, 32
      %v1689 = vpop.permute.xlu0 %1688
      %vm1706 = vcmask 322816
      %1707 = vst.msk [vmem:[#allocation3] sm:$0xf] %vm1706, %v1659
      %1708 = vst.msk [vmem:[#allocation3 + $0x4] sm:$0xf] %vm1706, %v1661
      %1709 = vst.msk [vmem:[#allocation3 + $0x8] sm:$0xf] %vm1706, %v1663
      %1710 = vst.msk [vmem:[#allocation3 + $0xc] sm:$0xf] %vm1706, %v1665
      %1711 = vst.msk [vmem:[#allocation3 + $0x10] sm:$0xf] %vm1706, %v1667
      %1712 = vst.msk [vmem:[#allocation3 + $0x14] sm:$0xf] %vm1706, %v1669
      %1713 = vst.msk [vmem:[#allocation3 + $0x18] sm:$0xf] %vm1706, %v1671
      %1714 = vst.msk [vmem:[#allocation3 + $0x1c] sm:$0xf] %vm1706, %v1673
      %1715 = vst.msk [vmem:[#allocation3 + $0x20] sm:$0xf] %vm1706, %v1675
      %1716 = vst.msk [vmem:[#allocation3 + $0x24] sm:$0xf] %vm1706, %v1677
      %1717 = vst.msk [vmem:[#allocation3 + $0x28] sm:$0xf] %vm1706, %v1679
      %1718 = vst.msk [vmem:[#allocation3 + $0x2c] sm:$0xf] %vm1706, %v1681
      %1719 = vst.msk [vmem:[#allocation3 + $0x30] sm:$0xf] %vm1706, %v1683
      %1720 = vst.msk [vmem:[#allocation3 + $0x34] sm:$0xf] %vm1706, %v1685
      %1721 = vst.msk [vmem:[#allocation3 + $0x38] sm:$0xf] %vm1706, %v1687
      %1722 = vst.msk [vmem:[#allocation3 + $0x3c] sm:$0xf] %vm1706, %v1689
      %v1723 = vld [vmem:[%s715] sm:$0xe]
      %v1724 = vld [vmem:[%s715 + $0x4] sm:$0xf]
      %v1725 = vld [vmem:[%s715 + $0x8] sm:$0x1]
      %v1726 = vld [vmem:[%s715 + $0xc] sm:$0xe]
      %v1727 = vld [vmem:[%s715 + $0x10] sm:$0xf]
      %v1728 = vld [vmem:[%s715 + $0x14] sm:$0x1]
      %v1729 = vld [vmem:[%s715 + $0x18] sm:$0xe]
      %v1730 = vld [vmem:[%s715 + $0x1c] sm:$0xf]
      %v1731 = vld [vmem:[%s715 + $0x20] sm:$0x1]
      %v1732 = vld [vmem:[%s715 + $0x24] sm:$0xe]
      %v1733 = vld [vmem:[%s715 + $0x28] sm:$0xf]
      %v1734 = vld [vmem:[%s715 + $0x2c] sm:$0x1]
      %v1735 = vld [vmem:[%s715 + $0x30] sm:$0xe]
      %v1736 = vld [vmem:[%s715 + $0x34] sm:$0xf]
      %v1737 = vld [vmem:[%s715 + $0x38] sm:$0x1]
      %v1738 = vld [vmem:[%s715 + $0x3c] sm:$0xe]
      %v1739 = vld [vmem:[%s715 + $0x40] sm:$0xf]
      %v1740 = vld [vmem:[%s715 + $0x44] sm:$0x1]
      %v1741 = vld [vmem:[%s715 + $0x48] sm:$0xe]
      %v1742 = vld [vmem:[%s715 + $0x4c] sm:$0xf]
      %v1743 = vld [vmem:[%s715 + $0x50] sm:$0x1]
      %v1744 = vld [vmem:[%s715 + $0x54] sm:$0xe]
      %v1745 = vld [vmem:[%s715 + $0x58] sm:$0xf]
      %v1746 = vld [vmem:[%s715 + $0x5c] sm:$0x1]
      %v1771 = vrot.slane %v1723, 5
      %v1772 = vrot.slane %v1771, 4
      %v1773 = vrot.slane %v1724, 5
      %v1774 = vsel %vm1223, %v1772, %v1773
      %v1775 = vrot.slane %v1773, 4
      %v1776 = vrot.slane %v1725, 5
      %v1777 = vsel %vm1223, %v1775, %v1776
      %v1778 = vrot.slane %v1726, 5
      %v1779 = vrot.slane %v1778, 4
      %v1780 = vrot.slane %v1727, 5
      %v1781 = vsel %vm1223, %v1779, %v1780
      %v1782 = vrot.slane %v1780, 4
      %v1783 = vrot.slane %v1728, 5
      %v1784 = vsel %vm1223, %v1782, %v1783
      %v1785 = vrot.slane %v1729, 5
      %v1786 = vrot.slane %v1785, 4
      %v1787 = vrot.slane %v1730, 5
      %v1788 = vsel %vm1223, %v1786, %v1787
      %v1789 = vrot.slane %v1787, 4
      %v1790 = vrot.slane %v1731, 5
      %v1791 = vsel %vm1223, %v1789, %v1790
      %v1792 = vrot.slane %v1732, 5
      %v1793 = vrot.slane %v1792, 4
      %v1794 = vrot.slane %v1733, 5
      %v1795 = vsel %vm1223, %v1793, %v1794
      %v1796 = vrot.slane %v1794, 4
      %v1797 = vrot.slane %v1734, 5
      %v1798 = vsel %vm1223, %v1796, %v1797
      %v1799 = vrot.slane %v1735, 5
      %v1800 = vrot.slane %v1799, 4
      %v1801 = vrot.slane %v1736, 5
      %v1802 = vsel %vm1223, %v1800, %v1801
      %v1803 = vrot.slane %v1801, 4
      %v1804 = vrot.slane %v1737, 5
      %v1805 = vsel %vm1223, %v1803, %v1804
      %v1806 = vrot.slane %v1738, 5
      %v1807 = vrot.slane %v1806, 4
      %v1808 = vrot.slane %v1739, 5
      %v1809 = vsel %vm1223, %v1807, %v1808
      %v1810 = vrot.slane %v1808, 4
      %v1811 = vrot.slane %v1740, 5
      %v1812 = vsel %vm1223, %v1810, %v1811
      %v1813 = vrot.slane %v1741, 5
      %v1814 = vrot.slane %v1813, 4
      %v1815 = vrot.slane %v1742, 5
      %v1816 = vsel %vm1223, %v1814, %v1815
      %v1817 = vrot.slane %v1815, 4
      %v1818 = vrot.slane %v1743, 5
      %v1819 = vsel %vm1223, %v1817, %v1818
      %v1820 = vrot.slane %v1744, 5
      %v1821 = vrot.slane %v1820, 4
      %v1822 = vrot.slane %v1745, 5
      %v1823 = vsel %vm1223, %v1821, %v1822
      %v1824 = vrot.slane %v1822, 4
      %v1825 = vrot.slane %v1746, 5
      %v1826 = vsel %vm1223, %v1824, %v1825
      %1827 = vrot.lane.b32.xlu0 %v1774, 40
      %v1828 = vpop.permute.xlu0 %1827
      %1829 = vrot.lane.b32.xlu0 %v1777, 40
      %v1830 = vpop.permute.xlu0 %1829
      %1831 = vrot.lane.b32.xlu0 %v1781, 40
      %v1832 = vpop.permute.xlu0 %1831
      %1833 = vrot.lane.b32.xlu0 %v1784, 40
      %v1834 = vpop.permute.xlu0 %1833
      %1835 = vrot.lane.b32.xlu0 %v1788, 40
      %v1836 = vpop.permute.xlu0 %1835
      %1837 = vrot.lane.b32.xlu0 %v1791, 40
      %v1838 = vpop.permute.xlu0 %1837
      %1839 = vrot.lane.b32.xlu0 %v1795, 40
      %v1840 = vpop.permute.xlu0 %1839
      %1841 = vrot.lane.b32.xlu0 %v1798, 40
      %v1842 = vpop.permute.xlu0 %1841
      %1843 = vrot.lane.b32.xlu0 %v1802, 40
      %v1844 = vpop.permute.xlu0 %1843
      %1845 = vrot.lane.b32.xlu0 %v1805, 40
      %v1846 = vpop.permute.xlu0 %1845
      %1847 = vrot.lane.b32.xlu0 %v1809, 40
      %v1848 = vpop.permute.xlu0 %1847
      %1849 = vrot.lane.b32.xlu0 %v1812, 40
      %v1850 = vpop.permute.xlu0 %1849
      %1851 = vrot.lane.b32.xlu0 %v1816, 40
      %v1852 = vpop.permute.xlu0 %1851
      %1853 = vrot.lane.b32.xlu0 %v1819, 40
      %v1854 = vpop.permute.xlu0 %1853
      %1855 = vrot.lane.b32.xlu0 %v1823, 40
      %v1856 = vpop.permute.xlu0 %1855
      %1857 = vrot.lane.b32.xlu0 %v1826, 40
      %v1858 = vpop.permute.xlu0 %1857
      %vm1875 = vcmask 388416
      %1876 = vst.msk [vmem:[#allocation3] sm:$0xf] %vm1875, %v1828
      %1877 = vst.msk [vmem:[#allocation3 + $0x4] sm:$0xf] %vm1875, %v1830
      %1878 = vst.msk [vmem:[#allocation3 + $0x8] sm:$0xf] %vm1875, %v1832
      %1879 = vst.msk [vmem:[#allocation3 + $0xc] sm:$0xf] %vm1875, %v1834
      %1880 = vst.msk [vmem:[#allocation3 + $0x10] sm:$0xf] %vm1875, %v1836
      %1881 = vst.msk [vmem:[#allocation3 + $0x14] sm:$0xf] %vm1875, %v1838
      %1882 = vst.msk [vmem:[#allocation3 + $0x18] sm:$0xf] %vm1875, %v1840
      %1883 = vst.msk [vmem:[#allocation3 + $0x1c] sm:$0xf] %vm1875, %v1842
      %1884 = vst.msk [vmem:[#allocation3 + $0x20] sm:$0xf] %vm1875, %v1844
      %1885 = vst.msk [vmem:[#allocation3 + $0x24] sm:$0xf] %vm1875, %v1846
      %1886 = vst.msk [vmem:[#allocation3 + $0x28] sm:$0xf] %vm1875, %v1848
      %1887 = vst.msk [vmem:[#allocation3 + $0x2c] sm:$0xf] %vm1875, %v1850
      %1888 = vst.msk [vmem:[#allocation3 + $0x30] sm:$0xf] %vm1875, %v1852
      %1889 = vst.msk [vmem:[#allocation3 + $0x34] sm:$0xf] %vm1875, %v1854
      %1890 = vst.msk [vmem:[#allocation3 + $0x38] sm:$0xf] %vm1875, %v1856
      %1891 = vst.msk [vmem:[#allocation3 + $0x3c] sm:$0xf] %vm1875, %v1858
      %s1892 = scalar_lea.vmem [#allocation2], 24
      %v1893 = vld [vmem:[%s1892] sm:$0xf]
      %v1894 = vld [vmem:[%s1892 + $0x4] sm:$0xf]
      %v1895 = vld [vmem:[%s1892 + $0xc] sm:$0xf]
      %v1896 = vld [vmem:[%s1892 + $0x10] sm:$0xf]
      %v1897 = vld [vmem:[%s1892 + $0x18] sm:$0xf]
      %v1898 = vld [vmem:[%s1892 + $0x1c] sm:$0xf]
      %v1899 = vld [vmem:[%s1892 + $0x24] sm:$0xf]
      %v1900 = vld [vmem:[%s1892 + $0x28] sm:$0xf]
      %v1901 = vld [vmem:[%s1892 + $0x30] sm:$0xf]
      %v1902 = vld [vmem:[%s1892 + $0x34] sm:$0xf]
      %v1903 = vld [vmem:[%s1892 + $0x3c] sm:$0xf]
      %v1904 = vld [vmem:[%s1892 + $0x40] sm:$0xf]
      %v1905 = vld [vmem:[%s1892 + $0x48] sm:$0xf]
      %v1906 = vld [vmem:[%s1892 + $0x4c] sm:$0xf]
      %v1907 = vld [vmem:[%s1892 + $0x54] sm:$0xf]
      %v1908 = vld [vmem:[%s1892 + $0x58] sm:$0xf]
      %1925 = vrot.lane.b32.xlu0 %v1893, 48
      %v1926 = vpop.permute.xlu0 %1925
      %1927 = vrot.lane.b32.xlu0 %v1894, 48
      %v1928 = vpop.permute.xlu0 %1927
      %1929 = vrot.lane.b32.xlu0 %v1895, 48
      %v1930 = vpop.permute.xlu0 %1929
      %1931 = vrot.lane.b32.xlu0 %v1896, 48
      %v1932 = vpop.permute.xlu0 %1931
      %1933 = vrot.lane.b32.xlu0 %v1897, 48
      %v1934 = vpop.permute.xlu0 %1933
      %1935 = vrot.lane.b32.xlu0 %v1898, 48
      %v1936 = vpop.permute.xlu0 %1935
      %1937 = vrot.lane.b32.xlu0 %v1899, 48
      %v1938 = vpop.permute.xlu0 %1937
      %1939 = vrot.lane.b32.xlu0 %v1900, 48
      %v1940 = vpop.permute.xlu0 %1939
      %1941 = vrot.lane.b32.xlu0 %v1901, 48
      %v1942 = vpop.permute.xlu0 %1941
      %1943 = vrot.lane.b32.xlu0 %v1902, 48
      %v1944 = vpop.permute.xlu0 %1943
      %1945 = vrot.lane.b32.xlu0 %v1903, 48
      %v1946 = vpop.permute.xlu0 %1945
      %1947 = vrot.lane.b32.xlu0 %v1904, 48
      %v1948 = vpop.permute.xlu0 %1947
      %1949 = vrot.lane.b32.xlu0 %v1905, 48
      %v1950 = vpop.permute.xlu0 %1949
      %1951 = vrot.lane.b32.xlu0 %v1906, 48
      %v1952 = vpop.permute.xlu0 %1951
      %1953 = vrot.lane.b32.xlu0 %v1907, 48
      %v1954 = vpop.permute.xlu0 %1953
      %1955 = vrot.lane.b32.xlu0 %v1908, 48
      %v1956 = vpop.permute.xlu0 %1955
      %vm1973 = vcmask 454016
      %1974 = vst.msk [vmem:[#allocation3] sm:$0xf] %vm1973, %v1926
      %1975 = vst.msk [vmem:[#allocation3 + $0x4] sm:$0xf] %vm1973, %v1928
      %1976 = vst.msk [vmem:[#allocation3 + $0x8] sm:$0xf] %vm1973, %v1930
      %1977 = vst.msk [vmem:[#allocation3 + $0xc] sm:$0xf] %vm1973, %v1932
      %1978 = vst.msk [vmem:[#allocation3 + $0x10] sm:$0xf] %vm1973, %v1934
      %1979 = vst.msk [vmem:[#allocation3 + $0x14] sm:$0xf] %vm1973, %v1936
      %1980 = vst.msk [vmem:[#allocation3 + $0x18] sm:$0xf] %vm1973, %v1938
      %1981 = vst.msk [vmem:[#allocation3 + $0x1c] sm:$0xf] %vm1973, %v1940
      %1982 = vst.msk [vmem:[#allocation3 + $0x20] sm:$0xf] %vm1973, %v1942
      %1983 = vst.msk [vmem:[#allocation3 + $0x24] sm:$0xf] %vm1973, %v1944
      %1984 = vst.msk [vmem:[#allocation3 + $0x28] sm:$0xf] %vm1973, %v1946
      %1985 = vst.msk [vmem:[#allocation3 + $0x2c] sm:$0xf] %vm1973, %v1948
      %1986 = vst.msk [vmem:[#allocation3 + $0x30] sm:$0xf] %vm1973, %v1950
      %1987 = vst.msk [vmem:[#allocation3 + $0x34] sm:$0xf] %vm1973, %v1952
      %1988 = vst.msk [vmem:[#allocation3 + $0x38] sm:$0xf] %vm1973, %v1954
      %1989 = vst.msk [vmem:[#allocation3 + $0x3c] sm:$0xf] %vm1973, %v1956
      %v1990 = vld [vmem:[%s1892] sm:$0xf]
      %v1991 = vld [vmem:[%s1892 + $0x4] sm:$0xf]
      %v1992 = vld [vmem:[%s1892 + $0x8] sm:$0x1]
      %v1993 = vld [vmem:[%s1892 + $0xc] sm:$0xf]
      %v1994 = vld [vmem:[%s1892 + $0x10] sm:$0xf]
      %v1995 = vld [vmem:[%s1892 + $0x14] sm:$0x1]
      %v1996 = vld [vmem:[%s1892 + $0x18] sm:$0xf]
      %v1997 = vld [vmem:[%s1892 + $0x1c] sm:$0xf]
      %v1998 = vld [vmem:[%s1892 + $0x20] sm:$0x1]
      %v1999 = vld [vmem:[%s1892 + $0x24] sm:$0xf]
      %v2000 = vld [vmem:[%s1892 + $0x28] sm:$0xf]
      %v2001 = vld [vmem:[%s1892 + $0x2c] sm:$0x1]
      %v2002 = vld [vmem:[%s1892 + $0x30] sm:$0xf]
      %v2003 = vld [vmem:[%s1892 + $0x34] sm:$0xf]
      %v2004 = vld [vmem:[%s1892 + $0x38] sm:$0x1]
      %v2005 = vld [vmem:[%s1892 + $0x3c] sm:$0xf]
      %v2006 = vld [vmem:[%s1892 + $0x40] sm:$0xf]
      %v2007 = vld [vmem:[%s1892 + $0x44] sm:$0x1]
      %v2008 = vld [vmem:[%s1892 + $0x48] sm:$0xf]
      %v2009 = vld [vmem:[%s1892 + $0x4c] sm:$0xf]
      %v2010 = vld [vmem:[%s1892 + $0x50] sm:$0x1]
      %v2011 = vld [vmem:[%s1892 + $0x54] sm:$0xf]
      %v2012 = vld [vmem:[%s1892 + $0x58] sm:$0xf]
      %v2013 = vld [vmem:[%s1892 + $0x5c] sm:$0x1]
      %v2015 = vshrl.u32 %v1990, 16
      %v2017 = vrot.slane %v2015, 4
      %v2018 = vshll.u32 %v1990, 16
      %v2020 = vrot.slane %v2018, 5
      %v2021 = vor.u32 %v2017, %v2020
      %v2022 = vrot.slane %v2021, 4
      %v2024 = vshll.u32 %v1991, 16
      %v2026 = vrot.slane %v2024, 5
      %v2027 = vsel %vm915, %v2022, %v2026
      %v2028 = vshrl.u32 %v1991, 16
      %v2030 = vrot.slane %v2028, 4
      %v2031 = vor.u32 %v2030, %v2026
      %v2032 = vrot.slane %v2031, 4
      %v2034 = vshll.u32 %v1992, 16
      %v2036 = vrot.slane %v2034, 5
      %v2037 = vsel %vm915, %v2032, %v2036
      %v2039 = vshrl.u32 %v1993, 16
      %v2041 = vrot.slane %v2039, 4
      %v2042 = vshll.u32 %v1993, 16
      %v2044 = vrot.slane %v2042, 5
      %v2045 = vor.u32 %v2041, %v2044
      %v2046 = vrot.slane %v2045, 4
      %v2048 = vshll.u32 %v1994, 16
      %v2050 = vrot.slane %v2048, 5
      %v2051 = vsel %vm915, %v2046, %v2050
      %v2052 = vshrl.u32 %v1994, 16
      %v2054 = vrot.slane %v2052, 4
      %v2055 = vor.u32 %v2054, %v2050
      %v2056 = vrot.slane %v2055, 4
      %v2058 = vshll.u32 %v1995, 16
      %v2060 = vrot.slane %v2058, 5
      %v2061 = vsel %vm915, %v2056, %v2060
      %v2063 = vshrl.u32 %v1996, 16
      %v2065 = vrot.slane %v2063, 4
      %v2066 = vshll.u32 %v1996, 16
      %v2068 = vrot.slane %v2066, 5
      %v2069 = vor.u32 %v2065, %v2068
      %v2070 = vrot.slane %v2069, 4
      %v2072 = vshll.u32 %v1997, 16
      %v2074 = vrot.slane %v2072, 5
      %v2075 = vsel %vm915, %v2070, %v2074
      %v2076 = vshrl.u32 %v1997, 16
      %v2078 = vrot.slane %v2076, 4
      %v2079 = vor.u32 %v2078, %v2074
      %v2080 = vrot.slane %v2079, 4
      %v2082 = vshll.u32 %v1998, 16
      %v2084 = vrot.slane %v2082, 5
      %v2085 = vsel %vm915, %v2080, %v2084
      %v2087 = vshrl.u32 %v1999, 16
      %v2089 = vrot.slane %v2087, 4
      %v2090 = vshll.u32 %v1999, 16
      %v2092 = vrot.slane %v2090, 5
      %v2093 = vor.u32 %v2089, %v2092
      %v2094 = vrot.slane %v2093, 4
      %v2096 = vshll.u32 %v2000, 16
      %v2098 = vrot.slane %v2096, 5
      %v2099 = vsel %vm915, %v2094, %v2098
      %v2100 = vshrl.u32 %v2000, 16
      %v2102 = vrot.slane %v2100, 4
      %v2103 = vor.u32 %v2102, %v2098
      %v2104 = vrot.slane %v2103, 4
      %v2106 = vshll.u32 %v2001, 16
      %v2108 = vrot.slane %v2106, 5
      %v2109 = vsel %vm915, %v2104, %v2108
      %v2111 = vshrl.u32 %v2002, 16
      %v2113 = vrot.slane %v2111, 4
      %v2114 = vshll.u32 %v2002, 16
      %v2116 = vrot.slane %v2114, 5
      %v2117 = vor.u32 %v2113, %v2116
      %v2118 = vrot.slane %v2117, 4
      %v2120 = vshll.u32 %v2003, 16
      %v2122 = vrot.slane %v2120, 5
      %v2123 = vsel %vm915, %v2118, %v2122
      %v2124 = vshrl.u32 %v2003, 16
      %v2126 = vrot.slane %v2124, 4
      %v2127 = vor.u32 %v2126, %v2122
      %v2128 = vrot.slane %v2127, 4
      %v2130 = vshll.u32 %v2004, 16
      %v2132 = vrot.slane %v2130, 5
      %v2133 = vsel %vm915, %v2128, %v2132
      %v2135 = vshrl.u32 %v2005, 16
      %v2137 = vrot.slane %v2135, 4
      %v2138 = vshll.u32 %v2005, 16
      %v2140 = vrot.slane %v2138, 5
      %v2141 = vor.u32 %v2137, %v2140
      %v2142 = vrot.slane %v2141, 4
      %v2144 = vshll.u32 %v2006, 16
      %v2146 = vrot.slane %v2144, 5
      %v2147 = vsel %vm915, %v2142, %v2146
      %v2148 = vshrl.u32 %v2006, 16
      %v2150 = vrot.slane %v2148, 4
      %v2151 = vor.u32 %v2150, %v2146
      %v2152 = vrot.slane %v2151, 4
      %v2154 = vshll.u32 %v2007, 16
      %v2156 = vrot.slane %v2154, 5
      %v2157 = vsel %vm915, %v2152, %v2156
      %v2159 = vshrl.u32 %v2008, 16
      %v2161 = vrot.slane %v2159, 4
      %v2162 = vshll.u32 %v2008, 16
      %v2164 = vrot.slane %v2162, 5
      %v2165 = vor.u32 %v2161, %v2164
      %v2166 = vrot.slane %v2165, 4
      %v2168 = vshll.u32 %v2009, 16
      %v2170 = vrot.slane %v2168, 5
      %v2171 = vsel %vm915, %v2166, %v2170
      %v2172 = vshrl.u32 %v2009, 16
      %v2174 = vrot.slane %v2172, 4
      %v2175 = vor.u32 %v2174, %v2170
      %v2176 = vrot.slane %v2175, 4
      %v2178 = vshll.u32 %v2010, 16
      %v2180 = vrot.slane %v2178, 5
      %v2181 = vsel %vm915, %v2176, %v2180
      %v2183 = vshrl.u32 %v2011, 16
      %v2185 = vrot.slane %v2183, 4
      %v2186 = vshll.u32 %v2011, 16
      %v2188 = vrot.slane %v2186, 5
      %v2189 = vor.u32 %v2185, %v2188
      %v2190 = vrot.slane %v2189, 4
      %v2192 = vshll.u32 %v2012, 16
      %v2194 = vrot.slane %v2192, 5
      %v2195 = vsel %vm915, %v2190, %v2194
      %v2196 = vshrl.u32 %v2012, 16
      %v2198 = vrot.slane %v2196, 4
      %v2199 = vor.u32 %v2198, %v2194
      %v2200 = vrot.slane %v2199, 4
      %v2202 = vshll.u32 %v2013, 16
      %v2204 = vrot.slane %v2202, 5
      %v2205 = vsel %vm915, %v2200, %v2204
      %2206 = vrot.lane.b32.xlu0 %v2027, 56
      %v2207 = vpop.permute.xlu0 %2206
      %2208 = vrot.lane.b32.xlu0 %v2037, 56
      %v2209 = vpop.permute.xlu0 %2208
      %2210 = vrot.lane.b32.xlu0 %v2051, 56
      %v2211 = vpop.permute.xlu0 %2210
      %2212 = vrot.lane.b32.xlu0 %v2061, 56
      %v2213 = vpop.permute.xlu0 %2212
      %2214 = vrot.lane.b32.xlu0 %v2075, 56
      %v2215 = vpop.permute.xlu0 %2214
      %2216 = vrot.lane.b32.xlu0 %v2085, 56
      %v2217 = vpop.permute.xlu0 %2216
      %2218 = vrot.lane.b32.xlu0 %v2099, 56
      %v2219 = vpop.permute.xlu0 %2218
      %2220 = vrot.lane.b32.xlu0 %v2109, 56
      %v2221 = vpop.permute.xlu0 %2220
      %2222 = vrot.lane.b32.xlu0 %v2123, 56
      %v2223 = vpop.permute.xlu0 %2222
      %2224 = vrot.lane.b32.xlu0 %v2133, 56
      %v2225 = vpop.permute.xlu0 %2224
      %2226 = vrot.lane.b32.xlu0 %v2147, 56
      %v2227 = vpop.permute.xlu0 %2226
      %2228 = vrot.lane.b32.xlu0 %v2157, 56
      %v2229 = vpop.permute.xlu0 %2228
      %2230 = vrot.lane.b32.xlu0 %v2171, 56
      %v2231 = vpop.permute.xlu0 %2230
      %2232 = vrot.lane.b32.xlu0 %v2181, 56
      %v2233 = vpop.permute.xlu0 %2232
      %2234 = vrot.lane.b32.xlu0 %v2195, 56
      %v2235 = vpop.permute.xlu0 %2234
      %2236 = vrot.lane.b32.xlu0 %v2205, 56
      %v2237 = vpop.permute.xlu0 %2236
      %vm2254 = vcmask 519616
      %2255 = vst.msk [vmem:[#allocation3] sm:$0xf] %vm2254, %v2207
      %2256 = vst.msk [vmem:[#allocation3 + $0x4] sm:$0xf] %vm2254, %v2209
      %2257 = vst.msk [vmem:[#allocation3 + $0x8] sm:$0xf] %vm2254, %v2211
      %2258 = vst.msk [vmem:[#allocation3 + $0xc] sm:$0xf] %vm2254, %v2213
      %2259 = vst.msk [vmem:[#allocation3 + $0x10] sm:$0xf] %vm2254, %v2215
      %2260 = vst.msk [vmem:[#allocation3 + $0x14] sm:$0xf] %vm2254, %v2217
      %2261 = vst.msk [vmem:[#allocation3 + $0x18] sm:$0xf] %vm2254, %v2219
      %2262 = vst.msk [vmem:[#allocation3 + $0x1c] sm:$0xf] %vm2254, %v2221
      %2263 = vst.msk [vmem:[#allocation3 + $0x20] sm:$0xf] %vm2254, %v2223
      %2264 = vst.msk [vmem:[#allocation3 + $0x24] sm:$0xf] %vm2254, %v2225
      %2265 = vst.msk [vmem:[#allocation3 + $0x28] sm:$0xf] %vm2254, %v2227
      %2266 = vst.msk [vmem:[#allocation3 + $0x2c] sm:$0xf] %vm2254, %v2229
      %2267 = vst.msk [vmem:[#allocation3 + $0x30] sm:$0xf] %vm2254, %v2231
      %2268 = vst.msk [vmem:[#allocation3 + $0x34] sm:$0xf] %vm2254, %v2233
      %2269 = vst.msk [vmem:[#allocation3 + $0x38] sm:$0xf] %vm2254, %v2235
      %2270 = vst.msk [vmem:[#allocation3 + $0x3c] sm:$0xf] %vm2254, %v2237
      %v2271 = vld [vmem:[%s1892] sm:$0xe]
      %v2272 = vld [vmem:[%s1892 + $0x4] sm:$0xf]
      %v2273 = vld [vmem:[%s1892 + $0x8] sm:$0x1]
      %v2274 = vld [vmem:[%s1892 + $0xc] sm:$0xe]
      %v2275 = vld [vmem:[%s1892 + $0x10] sm:$0xf]
      %v2276 = vld [vmem:[%s1892 + $0x14] sm:$0x1]
      %v2277 = vld [vmem:[%s1892 + $0x18] sm:$0xe]
      %v2278 = vld [vmem:[%s1892 + $0x1c] sm:$0xf]
      %v2279 = vld [vmem:[%s1892 + $0x20] sm:$0x1]
      %v2280 = vld [vmem:[%s1892 + $0x24] sm:$0xe]
      %v2281 = vld [vmem:[%s1892 + $0x28] sm:$0xf]
      %v2282 = vld [vmem:[%s1892 + $0x2c] sm:$0x1]
      %v2283 = vld [vmem:[%s1892 + $0x30] sm:$0xe]
      %v2284 = vld [vmem:[%s1892 + $0x34] sm:$0xf]
      %v2285 = vld [vmem:[%s1892 + $0x38] sm:$0x1]
      %v2286 = vld [vmem:[%s1892 + $0x3c] sm:$0xe]
      %v2287 = vld [vmem:[%s1892 + $0x40] sm:$0xf]
      %v2288 = vld [vmem:[%s1892 + $0x44] sm:$0x1]
      %v2289 = vld [vmem:[%s1892 + $0x48] sm:$0xe]
      %v2290 = vld [vmem:[%s1892 + $0x4c] sm:$0xf]
      %v2291 = vld [vmem:[%s1892 + $0x50] sm:$0x1]
      %v2292 = vld [vmem:[%s1892 + $0x54] sm:$0xe]
      %v2293 = vld [vmem:[%s1892 + $0x58] sm:$0xf]
      %v2294 = vld [vmem:[%s1892 + $0x5c] sm:$0x1]
      %v2319 = vrot.slane %v2271, 5
      %v2320 = vrot.slane %v2319, 4
      %v2321 = vrot.slane %v2272, 5
      %v2322 = vsel %vm1223, %v2320, %v2321
      %v2323 = vrot.slane %v2321, 4
      %v2324 = vrot.slane %v2273, 5
      %v2325 = vsel %vm1223, %v2323, %v2324
      %v2326 = vrot.slane %v2274, 5
      %v2327 = vrot.slane %v2326, 4
      %v2328 = vrot.slane %v2275, 5
      %v2329 = vsel %vm1223, %v2327, %v2328
      %v2330 = vrot.slane %v2328, 4
      %v2331 = vrot.slane %v2276, 5
      %v2332 = vsel %vm1223, %v2330, %v2331
      %v2333 = vrot.slane %v2277, 5
      %v2334 = vrot.slane %v2333, 4
      %v2335 = vrot.slane %v2278, 5
      %v2336 = vsel %vm1223, %v2334, %v2335
      %v2337 = vrot.slane %v2335, 4
      %v2338 = vrot.slane %v2279, 5
      %v2339 = vsel %vm1223, %v2337, %v2338
      %v2340 = vrot.slane %v2280, 5
      %v2341 = vrot.slane %v2340, 4
      %v2342 = vrot.slane %v2281, 5
      %v2343 = vsel %vm1223, %v2341, %v2342
      %v2344 = vrot.slane %v2342, 4
      %v2345 = vrot.slane %v2282, 5
      %v2346 = vsel %vm1223, %v2344, %v2345
      %v2347 = vrot.slane %v2283, 5
      %v2348 = vrot.slane %v2347, 4
      %v2349 = vrot.slane %v2284, 5
      %v2350 = vsel %vm1223, %v2348, %v2349
      %v2351 = vrot.slane %v2349, 4
      %v2352 = vrot.slane %v2285, 5
      %v2353 = vsel %vm1223, %v2351, %v2352
      %v2354 = vrot.slane %v2286, 5
      %v2355 = vrot.slane %v2354, 4
      %v2356 = vrot.slane %v2287, 5
      %v2357 = vsel %vm1223, %v2355, %v2356
      %v2358 = vrot.slane %v2356, 4
      %v2359 = vrot.slane %v2288, 5
      %v2360 = vsel %vm1223, %v2358, %v2359
      %v2361 = vrot.slane %v2289, 5
      %v2362 = vrot.slane %v2361, 4
      %v2363 = vrot.slane %v2290, 5
      %v2364 = vsel %vm1223, %v2362, %v2363
      %v2365 = vrot.slane %v2363, 4
      %v2366 = vrot.slane %v2291, 5
      %v2367 = vsel %vm1223, %v2365, %v2366
      %v2368 = vrot.slane %v2292, 5
      %v2369 = vrot.slane %v2368, 4
      %v2370 = vrot.slane %v2293, 5
      %v2371 = vsel %vm1223, %v2369, %v2370
      %v2372 = vrot.slane %v2370, 4
      %v2373 = vrot.slane %v2294, 5
      %v2374 = vsel %vm1223, %v2372, %v2373
      %2375 = vrot.lane.b32.xlu0 %v2322, 64
      %v2376 = vpop.permute.xlu0 %2375
      %2377 = vrot.lane.b32.xlu0 %v2325, 64
      %v2378 = vpop.permute.xlu0 %2377
      %2379 = vrot.lane.b32.xlu0 %v2329, 64
      %v2380 = vpop.permute.xlu0 %2379
      %2381 = vrot.lane.b32.xlu0 %v2332, 64
      %v2382 = vpop.permute.xlu0 %2381
      %2383 = vrot.lane.b32.xlu0 %v2336, 64
      %v2384 = vpop.permute.xlu0 %2383
      %2385 = vrot.lane.b32.xlu0 %v2339, 64
      %v2386 = vpop.permute.xlu0 %2385
      %2387 = vrot.lane.b32.xlu0 %v2343, 64
      %v2388 = vpop.permute.xlu0 %2387
      %2389 = vrot.lane.b32.xlu0 %v2346, 64
      %v2390 = vpop.permute.xlu0 %2389
      %2391 = vrot.lane.b32.xlu0 %v2350, 64
      %v2392 = vpop.permute.xlu0 %2391
      %2393 = vrot.lane.b32.xlu0 %v2353, 64
      %v2394 = vpop.permute.xlu0 %2393
      %2395 = vrot.lane.b32.xlu0 %v2357, 64
      %v2396 = vpop.permute.xlu0 %2395
      %2397 = vrot.lane.b32.xlu0 %v2360, 64
      %v2398 = vpop.permute.xlu0 %2397
      %2399 = vrot.lane.b32.xlu0 %v2364, 64
      %v2400 = vpop.permute.xlu0 %2399
      %2401 = vrot.lane.b32.xlu0 %v2367, 64
      %v2402 = vpop.permute.xlu0 %2401
      %2403 = vrot.lane.b32.xlu0 %v2371, 64
      %v2404 = vpop.permute.xlu0 %2403
      %2405 = vrot.lane.b32.xlu0 %v2374, 64
      %v2406 = vpop.permute.xlu0 %2405
      %vm2423 = vcmask 585216
      %2424 = vst.msk [vmem:[#allocation3] sm:$0xf] %vm2423, %v2376
      %2425 = vst.msk [vmem:[#allocation3 + $0x4] sm:$0xf] %vm2423, %v2378
      %2426 = vst.msk [vmem:[#allocation3 + $0x8] sm:$0xf] %vm2423, %v2380
      %2427 = vst.msk [vmem:[#allocation3 + $0xc] sm:$0xf] %vm2423, %v2382
      %2428 = vst.msk [vmem:[#allocation3 + $0x10] sm:$0xf] %vm2423, %v2384
      %2429 = vst.msk [vmem:[#allocation3 + $0x14] sm:$0xf] %vm2423, %v2386
      %2430 = vst.msk [vmem:[#allocation3 + $0x18] sm:$0xf] %vm2423, %v2388
      %2431 = vst.msk [vmem:[#allocation3 + $0x1c] sm:$0xf] %vm2423, %v2390
      %2432 = vst.msk [vmem:[#allocation3 + $0x20] sm:$0xf] %vm2423, %v2392
      %2433 = vst.msk [vmem:[#allocation3 + $0x24] sm:$0xf] %vm2423, %v2394
      %2434 = vst.msk [vmem:[#allocation3 + $0x28] sm:$0xf] %vm2423, %v2396
      %2435 = vst.msk [vmem:[#allocation3 + $0x2c] sm:$0xf] %vm2423, %v2398
      %2436 = vst.msk [vmem:[#allocation3 + $0x30] sm:$0xf] %vm2423, %v2400
      %2437 = vst.msk [vmem:[#allocation3 + $0x34] sm:$0xf] %vm2423, %v2402
      %2438 = vst.msk [vmem:[#allocation3 + $0x38] sm:$0xf] %vm2423, %v2404
      %2439 = vst.msk [vmem:[#allocation3 + $0x3c] sm:$0xf] %vm2423, %v2406
      %v2440 = vld [vmem:[#allocation3] sm:$0xf]
      %v2441 = vld [vmem:[#allocation3 + $0x4] sm:$0xf]
      %v2442 = vld [vmem:[#allocation3 + $0x8] sm:$0xf]
      %v2443 = vld [vmem:[#allocation3 + $0xc] sm:$0xf]
      %v2444 = vld [vmem:[#allocation3 + $0x10] sm:$0xf]
      %v2445 = vld [vmem:[#allocation3 + $0x14] sm:$0xf]
      %v2446 = vld [vmem:[#allocation3 + $0x18] sm:$0xf]
      %v2447 = vld [vmem:[#allocation3 + $0x1c] sm:$0xf]
      %v2448 = vld [vmem:[#allocation3 + $0x20] sm:$0xf]
      %v2449 = vld [vmem:[#allocation3 + $0x24] sm:$0xf]
      %v2450 = vld [vmem:[#allocation3 + $0x28] sm:$0xf]
      %v2451 = vld [vmem:[#allocation3 + $0x2c] sm:$0xf]
      %v2452 = vld [vmem:[#allocation3 + $0x30] sm:$0xf]
      %v2453 = vld [vmem:[#allocation3 + $0x34] sm:$0xf]
      %v2454 = vld [vmem:[#allocation3 + $0x38] sm:$0xf]
      %v2455 = vld [vmem:[#allocation3 + $0x3c] sm:$0xf]
      %v2456 = vld [vmem:[%s4] sm:$0xf]
      %v2457 = vld [vmem:[%s4 + $0x4] sm:$0xf]
      %v2458 = vld [vmem:[%s4 + $0x8] sm:$0xf]
      %v2459 = vld [vmem:[%s4 + $0xc] sm:$0xf]
      %v2460 = vld [vmem:[%s4 + $0x10] sm:$0xf]
      %v2461 = vld [vmem:[%s4 + $0x14] sm:$0xf]
      %v2462 = vld [vmem:[%s4 + $0x18] sm:$0xf]
      %v2463 = vld [vmem:[%s4 + $0x1c] sm:$0xf]
      %v2464 = vld [vmem:[%s4 + $0x20] sm:$0xf]
      %v2465 = vld [vmem:[%s5] sm:$0x1]
      %v2467 = vlaneseq
      %v2468 = vshrl.u32 %v2467, 7
      %v2469 = vsub.s32 0, %v2468
      %v2470 = vrot.slane %v2465, %v2469
      %v2488 = vunpack.c.l.b16 %v2440
      %v2489 = vunpack.c.l.b16 %v2441
      %v2490 = vunpack.c.l.b16 %v2442
      %v2491 = vunpack.c.l.b16 %v2443
      %v2492 = vunpack.c.l.b16 %v2444
      %v2493 = vunpack.c.l.b16 %v2445
      %v2494 = vunpack.c.l.b16 %v2446
      %v2495 = vunpack.c.l.b16 %v2447
      %v2496 = vunpack.c.l.b16 %v2448
      %v2497 = vunpack.c.l.b16 %v2449
      %v2498 = vunpack.c.l.b16 %v2450
      %v2499 = vunpack.c.l.b16 %v2451
      %v2500 = vunpack.c.l.b16 %v2452
      %v2501 = vunpack.c.l.b16 %v2453
      %v2502 = vunpack.c.l.b16 %v2454
      %v2503 = vunpack.c.l.b16 %v2455
      %v2504 = vpack.c.b16 %v2489, %v2488
      %v2505 = vpack.c.b16 %v2491, %v2490
      %v2506 = vpack.c.b16 %v2493, %v2492
      %v2507 = vpack.c.b16 %v2495, %v2494
      %v2508 = vpack.c.b16 %v2497, %v2496
      %v2509 = vpack.c.b16 %v2499, %v2498
      %v2510 = vpack.c.b16 %v2501, %v2500
      %v2511 = vpack.c.b16 %v2503, %v2502
      %v2521 = vunpack.c.l.b16 %v2456
      %v2522 = vunpack.c.l.b16 %v2457
      %v2523 = vunpack.c.l.b16 %v2458
      %v2524 = vunpack.c.l.b16 %v2459
      %v2525 = vunpack.c.l.b16 %v2460
      %v2526 = vunpack.c.l.b16 %v2461
      %v2527 = vunpack.c.l.b16 %v2462
      %v2528 = vunpack.c.l.b16 %v2463
      %v2529 = vunpack.c.l.b16 %v2464
      %v2530 = vpack.c.b16 %v2522, %v2521
      %v2531 = vpack.c.b16 %v2524, %v2523
      %v2532 = vpack.c.b16 %v2526, %v2525
      %v2533 = vpack.c.b16 %v2528, %v2527
      %v2534 = vpack.c.b16 %v2529, %v2529
      %vm2539 = vcmask 588800
      %v2541 = vsel %vm2539, %v2504, 0
      %v2544 = vsel %vm2539, %v2505, 0
      %v2547 = vsel %vm2539, %v2506, 0
      %v2550 = vsel %vm2539, %v2507, 0
      %v2553 = vsel %vm2539, %v2508, 0
      %v2556 = vsel %vm2539, %v2509, 0
      %v2559 = vsel %vm2539, %v2510, 0
      %v2562 = vsel %vm2539, %v2511, 0
      %vm2564 = vcmask 1043456
      %v2566 = vsel %vm2564, %v2534, 0
      %2568 = vmatprep.subr.bf16.mxu0 0
      %2569 = vmatpush1.bf16.msra.mxu0 0
      %2570 = vmatprep.subr.bf16.mxu0 0
      %2571 = vmatpush1.bf16.msra.mxu0 0
      %2572 = vmatprep.subr.bf16.mxu0 0
      %2573 = vmatpush1.bf16.msra.mxu0 0
      %2574 = vmatprep.subr.bf16.mxu0 0
      %2575 = vmatpush1.bf16.msra.mxu0 %v2566
      %2576 = vmatprep.subr.bf16.mxu0 0
      %2577 = vmatpush1.bf16.msra.mxu0 %v2533
      %2578 = vmatprep.subr.bf16.mxu0 0
      %2579 = vmatpush1.bf16.msra.mxu0 %v2532
      %2580 = vmatprep.subr.bf16.mxu0 0
      %2581 = vmatpush1.bf16.msra.mxu0 %v2531
      %2582 = vmatprep.subr.bf16.mxu0 0
      %2583 = vmatpush1.bf16.msra.mxu0 %v2530
      %2584 = vmatprep.subr.bf16.mxu0 0
      %2585 = vmatpush2.bf16.msra.mxu0 0
      %2586 = vmatprep.subr.bf16.mxu0 0
      %2587 = vmatpush2.bf16.msra.mxu0 0
      %2588 = vmatprep.subr.bf16.mxu0 0
      %2589 = vmatpush2.bf16.msra.mxu0 0
      %2590 = vmatprep.subr.bf16.mxu0 0
      %2591 = vmatpush2.bf16.msra.mxu0 0
      %2592 = vmatprep.subr.bf16.mxu0 0
      %2593 = vmatpush2.bf16.msra.mxu0 0
      %2594 = vmatprep.subr.bf16.mxu0 0
      %2595 = vmatpush2.bf16.msra.mxu0 0
      %2596 = vmatprep.subr.bf16.mxu0 0
      %2597 = vmatpush2.bf16.msra.mxu0 0
      %2598 = vmatprep.subr.bf16.mxu0 0
      %2599 = vmatpush2.bf16.msra.mxu0 0
      %2600 = vmatprep.mubr.bf16.mxu0 0
      %2601 = vmatmul.mubr.bf16.gmra.mxu0 %v2541
      %v2602 = vpop.f32.mrf.mxu0
      %v2603 = vadd.f32 %v2470, %v2602
      %v2604 = vpop.f32.mrf.mxu0
      %v2605 = vpop.f32.mrf.mxu0
      %v2606 = vadd.f32 %v2470, %v2605
      %v2607 = vpop.f32.mrf.mxu0
      %2608 = vmatprep.mubr.bf16.mxu0 0
      %2609 = vmatmul.mubr.bf16.gmra.mxu0 %v2544
      %v2610 = vpop.f32.mrf.mxu0
      %v2611 = vadd.f32 %v2470, %v2610
      %v2612 = vpop.f32.mrf.mxu0
      %v2613 = vpop.f32.mrf.mxu0
      %v2614 = vadd.f32 %v2470, %v2613
      %v2615 = vpop.f32.mrf.mxu0
      %2616 = vmatprep.mubr.bf16.mxu0 0
      %2617 = vmatmul.mubr.bf16.gmra.mxu0 %v2547
      %v2618 = vpop.f32.mrf.mxu0
      %v2619 = vadd.f32 %v2470, %v2618
      %v2620 = vpop.f32.mrf.mxu0
      %v2621 = vpop.f32.mrf.mxu0
      %v2622 = vadd.f32 %v2470, %v2621
      %v2623 = vpop.f32.mrf.mxu0
      %2624 = vmatprep.mubr.bf16.mxu0 0
      %2625 = vmatmul.mubr.bf16.gmra.mxu0 %v2550
      %v2626 = vpop.f32.mrf.mxu0
      %v2627 = vadd.f32 %v2470, %v2626
      %v2628 = vpop.f32.mrf.mxu0
      %v2629 = vpop.f32.mrf.mxu0
      %v2630 = vadd.f32 %v2470, %v2629
      %v2631 = vpop.f32.mrf.mxu0
      %2632 = vmatprep.mubr.bf16.mxu0 0
      %2633 = vmatmul.mubr.bf16.gmra.mxu0 %v2553
      %v2634 = vpop.f32.mrf.mxu0
      %v2635 = vadd.f32 %v2470, %v2634
      %v2636 = vpop.f32.mrf.mxu0
      %v2637 = vpop.f32.mrf.mxu0
      %v2638 = vadd.f32 %v2470, %v2637
      %v2639 = vpop.f32.mrf.mxu0
      %2640 = vmatprep.mubr.bf16.mxu0 0
      %2641 = vmatmul.mubr.bf16.gmra.mxu0 %v2556
      %v2642 = vpop.f32.mrf.mxu0
      %v2643 = vadd.f32 %v2470, %v2642
      %v2644 = vpop.f32.mrf.mxu0
      %v2645 = vpop.f32.mrf.mxu0
      %v2646 = vadd.f32 %v2470, %v2645
      %v2647 = vpop.f32.mrf.mxu0
      %2648 = vmatprep.mubr.bf16.mxu0 0
      %2649 = vmatmul.mubr.bf16.gmra.mxu0 %v2559
      %v2650 = vpop.f32.mrf.mxu0
      %v2651 = vadd.f32 %v2470, %v2650
      %v2652 = vpop.f32.mrf.mxu0
      %v2653 = vpop.f32.mrf.mxu0
      %v2654 = vadd.f32 %v2470, %v2653
      %v2655 = vpop.f32.mrf.mxu0
      %2656 = vmatprep.mubr.bf16.mxu0 0
      %2657 = vmatmul.mubr.bf16.gmra.mxu0 %v2562
      %v2658 = vpop.f32.mrf.mxu0
      %v2659 = vadd.f32 %v2470, %v2658
      %v2660 = vpop.f32.mrf.mxu0
      %v2661 = vpop.f32.mrf.mxu0
      %v2662 = vadd.f32 %v2470, %v2661
      %v2663 = vpop.f32.mrf.mxu0
      %2664 = vdwg.mxu0
      %vm2665 = vcmp.ge.f32.partialorder %v2603, 0.0
      %vm2666 = vcmp.ge.f32.partialorder %v2606, 0.0
      %vm2667 = vcmp.ge.f32.partialorder %v2611, 0.0
      %vm2668 = vcmp.ge.f32.partialorder %v2614, 0.0
      %vm2669 = vcmp.ge.f32.partialorder %v2619, 0.0
      %vm2670 = vcmp.ge.f32.partialorder %v2622, 0.0
      %vm2671 = vcmp.ge.f32.partialorder %v2627, 0.0
      %vm2672 = vcmp.ge.f32.partialorder %v2630, 0.0
      %vm2673 = vcmp.ge.f32.partialorder %v2635, 0.0
      %vm2674 = vcmp.ge.f32.partialorder %v2638, 0.0
      %vm2675 = vcmp.ge.f32.partialorder %v2643, 0.0
      %vm2676 = vcmp.ge.f32.partialorder %v2646, 0.0
      %vm2677 = vcmp.ge.f32.partialorder %v2651, 0.0
      %vm2678 = vcmp.ge.f32.partialorder %v2654, 0.0
      %vm2679 = vcmp.ge.f32.partialorder %v2659, 0.0
      %vm2680 = vcmp.ge.f32.partialorder %v2662, 0.0
      %v2681 = vmul.f32 %v2603, 0.2
      %v2682 = vmul.f32 %v2606, 0.2
      %v2683 = vmul.f32 %v2611, 0.2
      %v2684 = vmul.f32 %v2614, 0.2
      %v2685 = vmul.f32 %v2619, 0.2
      %v2686 = vmul.f32 %v2622, 0.2
      %v2687 = vmul.f32 %v2627, 0.2
      %v2688 = vmul.f32 %v2630, 0.2
      %v2689 = vmul.f32 %v2635, 0.2
      %v2690 = vmul.f32 %v2638, 0.2
      %v2691 = vmul.f32 %v2643, 0.2
      %v2692 = vmul.f32 %v2646, 0.2
      %v2693 = vmul.f32 %v2651, 0.2
      %v2694 = vmul.f32 %v2654, 0.2
      %v2695 = vmul.f32 %v2659, 0.2
      %v2696 = vmul.f32 %v2662, 0.2
      %v2697 = vsel %vm2665, %v2603, %v2681
      %v2698 = vsel %vm2666, %v2606, %v2682
      %v2699 = vsel %vm2667, %v2611, %v2683
      %v2700 = vsel %vm2668, %v2614, %v2684
      %v2701 = vsel %vm2669, %v2619, %v2685
      %v2702 = vsel %vm2670, %v2622, %v2686
      %v2703 = vsel %vm2671, %v2627, %v2687
      %v2704 = vsel %vm2672, %v2630, %v2688
      %v2705 = vsel %vm2673, %v2635, %v2689
      %v2706 = vsel %vm2674, %v2638, %v2690
      %v2707 = vsel %vm2675, %v2643, %v2691
      %v2708 = vsel %vm2676, %v2646, %v2692
      %v2709 = vsel %vm2677, %v2651, %v2693
      %v2710 = vsel %vm2678, %v2654, %v2694
      %v2711 = vsel %vm2679, %v2659, %v2695
      %v2712 = vsel %vm2680, %v2662, %v2696
      %vm2713 = vcmask 523264
      %2714 = vst.msk [vmem:[%s453] sm:$0xff] %vm2713, %v2697
      %2715 = vst.msk [vmem:[%s453 + $0x8] sm:$0xff] %vm2713, %v2698
      %2716 = vst.msk [vmem:[%s453 + $0x10] sm:$0xff] %vm2713, %v2699
      %2717 = vst.msk [vmem:[%s453 + $0x18] sm:$0xff] %vm2713, %v2700
      %2718 = vst.msk [vmem:[%s453 + $0x20] sm:$0xff] %vm2713, %v2701
      %2719 = vst.msk [vmem:[%s453 + $0x28] sm:$0xff] %vm2713, %v2702
      %2720 = vst.msk [vmem:[%s453 + $0x30] sm:$0xff] %vm2713, %v2703
      %2721 = vst.msk [vmem:[%s453 + $0x38] sm:$0xff] %vm2713, %v2704
      %2722 = vst.msk [vmem:[%s453 + $0x40] sm:$0xff] %vm2713, %v2705
      %2723 = vst.msk [vmem:[%s453 + $0x48] sm:$0xff] %vm2713, %v2706
      %2724 = vst.msk [vmem:[%s453 + $0x50] sm:$0xff] %vm2713, %v2707
      %2725 = vst.msk [vmem:[%s453 + $0x58] sm:$0xff] %vm2713, %v2708
      %2726 = vst.msk [vmem:[%s453 + $0x60] sm:$0xff] %vm2713, %v2709
      %2727 = vst.msk [vmem:[%s453 + $0x68] sm:$0xff] %vm2713, %v2710
      %2728 = vst.msk [vmem:[%s453 + $0x70] sm:$0xff] %vm2713, %v2711
      %2729 = vst.msk [vmem:[%s453 + $0x78] sm:$0xff] %vm2713, %v2712
      %v2730 = vld [vmem:[%s442] sm:$0xff]
      %v2731 = vld [vmem:[%s442 + $0x8] sm:$0xff]
      %v2732 = vld [vmem:[%s442 + $0x10] sm:$0xff]
      %v2733 = vld [vmem:[%s442 + $0x18] sm:$0xff]
      %v2734 = vld [vmem:[%s442 + $0x20] sm:$0xff]
      %v2735 = vld [vmem:[%s442 + $0x28] sm:$0xff]
      %v2736 = vld [vmem:[%s442 + $0x30] sm:$0xff]
      %v2737 = vld [vmem:[%s442 + $0x38] sm:$0xff]
      %v2738 = vld [vmem:[%s442 + $0x40] sm:$0xff]
      %v2739 = vld [vmem:[%s442 + $0x48] sm:$0xff]
      %v2740 = vld [vmem:[%s442 + $0x50] sm:$0xff]
      %v2741 = vld [vmem:[%s442 + $0x58] sm:$0xff]
      %v2742 = vld [vmem:[%s442 + $0x60] sm:$0xff]
      %v2743 = vld [vmem:[%s442 + $0x68] sm:$0xff]
      %v2744 = vld [vmem:[%s442 + $0x70] sm:$0xff]
      %v2745 = vld [vmem:[%s442 + $0x78] sm:$0xff]
      %2762 = vrot.lane.b32.xlu0 %v2730, 60
      %v2763 = vpop.permute.xlu0 %2762
      %2764 = vrot.lane.b32.xlu0 %v2731, 60
      %v2765 = vpop.permute.xlu0 %2764
      %2766 = vrot.lane.b32.xlu0 %v2732, 60
      %v2767 = vpop.permute.xlu0 %2766
      %2768 = vrot.lane.b32.xlu0 %v2733, 60
      %v2769 = vpop.permute.xlu0 %2768
      %2770 = vrot.lane.b32.xlu0 %v2734, 60
      %v2771 = vpop.permute.xlu0 %2770
      %2772 = vrot.lane.b32.xlu0 %v2735, 60
      %v2773 = vpop.permute.xlu0 %2772
      %2774 = vrot.lane.b32.xlu0 %v2736, 60
      %v2775 = vpop.permute.xlu0 %2774
      %2776 = vrot.lane.b32.xlu0 %v2737, 60
      %v2777 = vpop.permute.xlu0 %2776
      %2778 = vrot.lane.b32.xlu0 %v2738, 60
      %v2779 = vpop.permute.xlu0 %2778
      %2780 = vrot.lane.b32.xlu0 %v2739, 60
      %v2781 = vpop.permute.xlu0 %2780
      %2782 = vrot.lane.b32.xlu0 %v2740, 60
      %v2783 = vpop.permute.xlu0 %2782
      %2784 = vrot.lane.b32.xlu0 %v2741, 60
      %v2785 = vpop.permute.xlu0 %2784
      %2786 = vrot.lane.b32.xlu0 %v2742, 60
      %v2787 = vpop.permute.xlu0 %2786
      %2788 = vrot.lane.b32.xlu0 %v2743, 60
      %v2789 = vpop.permute.xlu0 %2788
      %2790 = vrot.lane.b32.xlu0 %v2744, 60
      %v2791 = vpop.permute.xlu0 %2790
      %2792 = vrot.lane.b32.xlu0 %v2745, 60
      %v2793 = vpop.permute.xlu0 %2792
      %vm2810 = vcmask 523744
      %2811 = vst.msk [vmem:[%s453] sm:$0xff] %vm2810, %v2763
      %2812 = vst.msk [vmem:[%s453 + $0x8] sm:$0xff] %vm2810, %v2765
      %2813 = vst.msk [vmem:[%s453 + $0x10] sm:$0xff] %vm2810, %v2767
      %2814 = vst.msk [vmem:[%s453 + $0x18] sm:$0xff] %vm2810, %v2769
      %2815 = vst.msk [vmem:[%s453 + $0x20] sm:$0xff] %vm2810, %v2771
      %2816 = vst.msk [vmem:[%s453 + $0x28] sm:$0xff] %vm2810, %v2773
      %2817 = vst.msk [vmem:[%s453 + $0x30] sm:$0xff] %vm2810, %v2775
      %2818 = vst.msk [vmem:[%s453 + $0x38] sm:$0xff] %vm2810, %v2777
      %2819 = vst.msk [vmem:[%s453 + $0x40] sm:$0xff] %vm2810, %v2779
      %2820 = vst.msk [vmem:[%s453 + $0x48] sm:$0xff] %vm2810, %v2781
      %2821 = vst.msk [vmem:[%s453 + $0x50] sm:$0xff] %vm2810, %v2783
      %2822 = vst.msk [vmem:[%s453 + $0x58] sm:$0xff] %vm2810, %v2785
      %2823 = vst.msk [vmem:[%s453 + $0x60] sm:$0xff] %vm2810, %v2787
      %2824 = vst.msk [vmem:[%s453 + $0x68] sm:$0xff] %vm2810, %v2789
      %2825 = vst.msk [vmem:[%s453 + $0x70] sm:$0xff] %vm2810, %v2791
      %2826 = vst.msk [vmem:[%s453 + $0x78] sm:$0xff] %vm2810, %v2793
      %s2827 = smul.u32 8, %s22
      %p2828 = scmp.lt.s32.totalorder %s21, 1
      %s2829 = scalar_select %p2828, %s21, 1
      %p2830 = scmp.lt.s32.totalorder %s2827, 15
      %s2831 = scalar_select %p2830, %s2827, 15
      %s2832 = smul.addr %s2831, 2
      %s2833 = smul.addr %s2829, 32
      %s2834 = sadd.s32 %s2832, %s2833
      %s2835 = smul.addr %s2834, 8
      %s2836 = scalar_lea.vmem %s6, %s2835
      // Predicated region
      $region53: #{cnnf_forward.6} parent=43 // pred_check
        %p2837 = pneg %p215
      $region54: #{cnnf_forward.6} parent=43 // pred_check_branch
        %2839 = sbr.rel (%p2837) target = $region56
      $region55: #{cnnf_forward.6} parent=43 // pred_region
        %s2840 = smul.u32 8, %s22
      $region56: #{cnnf_forward.6} parent=43 // pred_fallthru
        _
    $region44: #{cnnf_forward.6} parent=5 // pred_fallthru
      _
    %p2841 = scmp.le.s32.totalorder 2, %s12
    // Predicated region
    $region57: #{cnnf_forward.6} parent=5 // pred_check
      %p2842 = pneg %p2841
    $region58: #{cnnf_forward.6} parent=5 // pred_check_branch
      %2844 = sbr.rel (%p2842) target = $region60
    $region59: #{cnnf_forward.6} parent=5 // pred_region
      %s2845 = ssub.s32 %s12, 2
      // Predicated region
      $region61: #{cnnf_forward.6} parent=59 // pred_check
        %p2846 = pneg %p221
      $region62: #{cnnf_forward.6} parent=59 // pred_check_branch
        %2848 = sbr.rel (%p2846) target = $region64
      $region63: #{cnnf_forward.6} parent=59 // pred_region
        %s2849 = smul.u32 8, %s24
        %p2850 = scmp.lt.s32.totalorder %s23, 1
        %s2851 = scalar_select %p2850, %s23, 1
        %p2852 = scmp.lt.s32.totalorder %s2849, 15
        %s2853 = scalar_select %p2852, %s2849, 15
        %s2854 = smul.addr %s2853, 2
        %s2855 = smul.addr %s2851, 32
        %s2856 = sadd.s32 %s2854, %s2855
        %s2857 = smul.addr %s2856, 8
        %s2858 = scalar_lea.vmem %s6, %s2857
      $region64: #{cnnf_forward.6} parent=59 // pred_fallthru
        _
    $region60: #{cnnf_forward.6} parent=5 // pred_fallthru
      _
  $region6: #{cnnf_forward.6} parent=0 // loop_footer
    %s16 = sadd.s32 1, %s12
  $region7: #{cnnf_forward.6} parent=0 // loop_footer_branch
    %11 = sbr.rel target = $region3
  $region8: #{cnnf_forward.6} parent=0 // loop_exit
    _

// kernel: cnnf_forward.9
$region0: #{cnnf_forward.9}
  #allocation0 [shape = 'u32[]', space=smem, size = 0x4, offset = 0x4, fixed_abs, tag = 'smem constant byte address 0x4 - core index']
  #allocation1 [shape = 'u32[144,128]{1,0:T(1,128)}', space=vmem, size = 0x12000, scoped, tag = 'internal scratch']
  #allocation2 [shape = 'bf16[10,18,64]{2,1,0:T(8,128)(2,1)}', space=vmem, size = 0xf000, scoped, tag = 'scratch operand']
  #allocation3 [shape = 'bf16[8,16,576]{2,1,0:T(8,128)(2,1)}', space=vmem, size = 0x28000, scoped, tag = 'scratch operand']
  %s0 = inlined_call_operand.vmem [shape: f32[2,16,16,64], index: 0, kind: input, shape index: {}, may-alias: {0,1,2}]
  %s1 = inlined_call_operand.vmem [shape: f32[2,16,16,64], index: 1, kind: input, shape index: {}, may-alias: {0,1,2}]
  %s2 = inlined_call_operand.vmem [shape: f32[2,16,16,64], index: 2, kind: input, shape index: {}, may-alias: {0,1,2}]
  %s3 = inlined_call_operand.vmem [shape: f32[2,16,16,4], index: 3, kind: input, shape index: {}]
  %s4 = inlined_call_operand.vmem [shape: bf16[576,4], index: 4, kind: input, shape index: {}]
  %s5 = inlined_call_operand.vmem [shape: f32[1,4], index: 5, kind: input, shape index: {}]
  %s6 = inlined_call_operand.vmem [shape: f32[2,16,16,4], index: 6, kind: output, shape index: {}]
  %s7 = sld [smem:[#allocation0]]
  $region65: #{cnnf_forward.9} parent=0
    _
  %s9 = ssub.s32 1, %s7
  %s10 = scalar_select 0, %s9, %s7
  loop: start=0, step=1, limit=6
  $region2: #{cnnf_forward.9} parent=0 // loop_pre_header
    _
  $region3: #{cnnf_forward.9} parent=0 // loop_header
    %s12 = sphi 0, %s16
    %p13 = scmp.ge.s32.totalorder %s12, 6
    %s19 = sphi 0, %s31
    %s20 = sphi 0, %s27
    %s21 = sphi 0, %s19
    %s22 = sphi 0, %s20
    %s23 = sphi 0, %s21
    %s24 = sphi 0, %s22
    %s36 = sphi 0, %s38
    %s39 = sphi 0, %s36
    %s40 = sphi 0, %s39
    %s56 = sphi 0, %s40
    %s70 = sphi 0, %s72
    %s73 = sphi 0, %s70
    %s74 = sphi 0, %s73
    %s90 = sphi 0, %s74
    %s104 = sphi 0, %s106
    %s107 = sphi 0, %s104
    %s108 = sphi 0, %s107
    %s124 = sphi 0, %s108
    %s132 = sphi 0, %s134
    %s135 = sphi 0, %s132
    %s136 = sphi 0, %s135
    %s152 = sphi 0, %s136
    %s156 = sphi 0, %s156
    %s158 = sphi 0, %s156
    %s159 = sphi 0, %s158
    %s173 = sphi 0, %s159
    %s177 = sphi 0, %s177
    %s179 = sphi 0, %s177
    %s180 = sphi 0, %s179
    %s194 = sphi 0, %s180
    %s202 = sphi 0, %s204
    %s205 = sphi 0, %s202
    %s206 = sphi 0, %s205
    %s222 = sphi 0, %s206
  $region4: #{cnnf_forward.9} parent=0 // loop_header_branch
    %15 = sbr.rel (%p13) target = $region8
  $region5: #{cnnf_forward.9} parent=0 // loop_body
    %s17 = ssub.s32 %s12, 1
    %s18 = ssub.s32 %s12, 2
    %s25 = sadd.s32 1, %s20
    %p26 = scmp.ge.s32.totalorder %s25, 2
    %s27 = scalar_select %p26, 0, %s25
    %s28 = sadd.s32 1, %s19
    %s29 = scalar_select %p26, %s28, %s19
    %p30 = scmp.ge.s32.totalorder %s29, 2
    %s31 = scalar_select %p30, 0, %s29
    %s32 = ssub.s32 %s19, %s31
    %s33 = ssub.s32 %s20, %s27
    %s34 = sor.u32 %s32, %s33
    %p35 = scmp.eq.s32.totalorder %s34, 0
    %s37 = sadd.s32 %s36, 1
    %s38 = scalar_select %p35, %s36, %s37
    %p41 = pneg %p35
    %p42 = scmp.eq.s32.totalorder %s12, 3
    %p43 = por %p41, %p42
    %p44 = scmp.ne.s32.totalorder %s36, %s39
    %p45 = scmp.eq.s32.totalorder %s12, 0
    %p46 = por %p44, %p45
    %p47 = scmp.ne.s32.totalorder %s36, %s39
    %p48 = scmp.eq.s32.totalorder %s17, 3
    %p49 = por %p47, %p48
    %p50 = scmp.ne.s32.totalorder %s39, %s40
    %p51 = scmp.eq.s32.totalorder %s17, 0
    %p52 = por %p50, %p51
    %p53 = scmp.ne.s32.totalorder %s39, %s40
    %p54 = scmp.eq.s32.totalorder %s18, 3
    %p55 = por %p53, %p54
    %p57 = scmp.ne.s32.totalorder %s40, %s56
    %p58 = scmp.eq.s32.totalorder %s18, 0
    %p59 = por %p57, %p58
    %s60 = ssub.s32 %s20, 1
    %p61 = scmp.gt.s32.totalorder %s60, 0
    %s62 = scalar_select %p61, %s60, 0
    %s63 = ssub.s32 %s27, 1
    %p64 = scmp.gt.s32.totalorder %s63, 0
    %s65 = scalar_select %p64, %s63, 0
    %s66 = ssub.s32 %s19, %s31
    %s67 = ssub.s32 %s62, %s65
    %s68 = sor.u32 %s66, %s67
    %p69 = scmp.eq.s32.totalorder %s68, 0
    %s71 = sadd.s32 %s70, 1
    %s72 = scalar_select %p69, %s70, %s71
    %p75 = pneg %p69
    %p76 = scmp.eq.s32.totalorder %s12, 3
    %p77 = por %p75, %p76
    %p78 = scmp.ne.s32.totalorder %s70, %s73
    %p79 = scmp.eq.s32.totalorder %s12, 0
    %p80 = por %p78, %p79
    %p81 = scmp.ne.s32.totalorder %s70, %s73
    %p82 = scmp.eq.s32.totalorder %s17, 3
    %p83 = por %p81, %p82
    %p84 = scmp.ne.s32.totalorder %s73, %s74
    %p85 = scmp.eq.s32.totalorder %s17, 0
    %p86 = por %p84, %p85
    %p87 = scmp.ne.s32.totalorder %s73, %s74
    %p88 = scmp.eq.s32.totalorder %s18, 3
    %p89 = por %p87, %p88
    %p91 = scmp.ne.s32.totalorder %s74, %s90
    %p92 = scmp.eq.s32.totalorder %s18, 0
    %p93 = por %p91, %p92
    %s94 = sadd.s32 %s20, 1
    %p95 = scmp.lt.s32.totalorder %s94, 1
    %s96 = scalar_select %p95, %s94, 1
    %s97 = sadd.s32 %s27, 1
    %p98 = scmp.lt.s32.totalorder %s97, 1
    %s99 = scalar_select %p98, %s97, 1
    %s100 = ssub.s32 %s19, %s31
    %s101 = ssub.s32 %s96, %s99
    %s102 = sor.u32 %s100, %s101
    %p103 = scmp.eq.s32.totalorder %s102, 0
    %s105 = sadd.s32 %s104, 1
    %s106 = scalar_select %p103, %s104, %s105
    %p109 = pneg %p103
    %p110 = scmp.eq.s32.totalorder %s12, 3
    %p111 = por %p109, %p110
    %p112 = scmp.ne.s32.totalorder %s104, %s107
    %p113 = scmp.eq.s32.totalorder %s12, 0
    %p114 = por %p112, %p113
    %p115 = scmp.ne.s32.totalorder %s104, %s107
    %p116 = scmp.eq.s32.totalorder %s17, 3
    %p117 = por %p115, %p116
    %p118 = scmp.ne.s32.totalorder %s107, %s108
    %p119 = scmp.eq.s32.totalorder %s17, 0
    %p120 = por %p118, %p119
    %p121 = scmp.ne.s32.totalorder %s107, %s108
    %p122 = scmp.eq.s32.totalorder %s18, 3
    %p123 = por %p121, %p122
    %p125 = scmp.ne.s32.totalorder %s108, %s124
    %p126 = scmp.eq.s32.totalorder %s18, 0
    %p127 = por %p125, %p126
    %s128 = ssub.s32 %s19, %s31
    %s129 = ssub.s32 %s20, %s27
    %s130 = sor.u32 %s128, %s129
    %p131 = scmp.eq.s32.totalorder %s130, 0
    %s133 = sadd.s32 %s132, 1
    %s134 = scalar_select %p131, %s132, %s133
    %p137 = pneg %p131
    %p138 = scmp.eq.s32.totalorder %s12, 3
    %p139 = por %p137, %p138
    %p140 = scmp.ne.s32.totalorder %s132, %s135
    %p141 = scmp.eq.s32.totalorder %s12, 0
    %p142 = por %p140, %p141
    %p143 = scmp.ne.s32.totalorder %s132, %s135
    %p144 = scmp.eq.s32.totalorder %s17, 3
    %p145 = por %p143, %p144
    %p146 = scmp.ne.s32.totalorder %s135, %s136
    %p147 = scmp.eq.s32.totalorder %s17, 0
    %p148 = por %p146, %p147
    %p149 = scmp.ne.s32.totalorder %s135, %s136
    %p150 = scmp.eq.s32.totalorder %s18, 3
    %p151 = por %p149, %p150
    %p153 = scmp.ne.s32.totalorder %s136, %s152
    %p154 = scmp.eq.s32.totalorder %s18, 0
    %p155 = por %p153, %p154
    %s157 = sadd.s32 %s156, 1
    %p160 = scmp.eq.s32.totalorder %s12, 3
    %p161 = scmp.ne.s32.totalorder %s156, %s158
    %p162 = scmp.eq.s32.totalorder %s12, 0
    %p163 = por %p161, %p162
    %p164 = scmp.ne.s32.totalorder %s156, %s158
    %p165 = scmp.eq.s32.totalorder %s17, 3
    %p166 = por %p164, %p165
    %p167 = scmp.ne.s32.totalorder %s158, %s159
    %p168 = scmp.eq.s32.totalorder %s17, 0
    %p169 = por %p167, %p168
    %p170 = scmp.ne.s32.totalorder %s158, %s159
    %p171 = scmp.eq.s32.totalorder %s18, 3
    %p172 = por %p170, %p171
    %p174 = scmp.ne.s32.totalorder %s159, %s173
    %p175 = scmp.eq.s32.totalorder %s18, 0
    %p176 = por %p174, %p175
    %s178 = sadd.s32 %s177, 1
    %p181 = scmp.eq.s32.totalorder %s12, 3
    %p182 = scmp.ne.s32.totalorder %s177, %s179
    %p183 = scmp.eq.s32.totalorder %s12, 0
    %p184 = por %p182, %p183
    %p185 = scmp.ne.s32.totalorder %s177, %s179
    %p186 = scmp.eq.s32.totalorder %s17, 3
    %p187 = por %p185, %p186
    %p188 = scmp.ne.s32.totalorder %s179, %s180
    %p189 = scmp.eq.s32.totalorder %s17, 0
    %p190 = por %p188, %p189
    %p191 = scmp.ne.s32.totalorder %s179, %s180
    %p192 = scmp.eq.s32.totalorder %s18, 3
    %p193 = por %p191, %p192
    %p195 = scmp.ne.s32.totalorder %s180, %s194
    %p196 = scmp.eq.s32.totalorder %s18, 0
    %p197 = por %p195, %p196
    %s198 = ssub.s32 %s19, %s31
    %s199 = ssub.s32 %s20, %s27
    %s200 = sor.u32 %s198, %s199
    %p201 = scmp.eq.s32.totalorder %s200, 0
    %s203 = sadd.s32 %s202, 1
    %s204 = scalar_select %p201, %s202, %s203
    %p207 = pneg %p201
    %p208 = scmp.eq.s32.totalorder %s12, 3
    %p209 = por %p207, %p208
    %p210 = scmp.ne.s32.totalorder %s202, %s205
    %p211 = scmp.eq.s32.totalorder %s12, 0
    %p212 = por %p210, %p211
    %p213 = scmp.ne.s32.totalorder %s202, %s205
    %p214 = scmp.eq.s32.totalorder %s17, 3
    %p215 = por %p213, %p214
    %p216 = scmp.ne.s32.totalorder %s205, %s206
    %p217 = scmp.eq.s32.totalorder %s17, 0
    %p218 = por %p216, %p217
    %p219 = scmp.ne.s32.totalorder %s205, %s206
    %p220 = scmp.eq.s32.totalorder %s18, 3
    %p221 = por %p219, %p220
    %p223 = scmp.ne.s32.totalorder %s206, %s222
    %p224 = scmp.eq.s32.totalorder %s18, 0
    %p225 = por %p223, %p224
    %p226 = scmp.le.s32.totalorder 1, %s12
    %p227 = scmp.lt.s32.totalorder %s12, 5
    %p228 = pnand %p226, %p227
    %p229 = pneg %p228
    // Predicated region
    $region9: #{cnnf_forward.9} parent=5 // pred_check
      _
    $region10: #{cnnf_forward.9} parent=5 // pred_check_branch
      %231 = sbr.rel (%p228) target = $region12
    $region11: #{cnnf_forward.9} parent=5 // pred_region
      %s232 = ssub.s32 %s12, 1
      // Predicated region
      $region13: #{cnnf_forward.9} parent=11 // pred_check
        %p233 = pneg %p169
      $region14: #{cnnf_forward.9} parent=11 // pred_check_branch
        %235 = sbr.rel (%p233) target = $region16
      $region15: #{cnnf_forward.9} parent=11 // pred_region
        _
      $region16: #{cnnf_forward.9} parent=11 // pred_fallthru
        _
      // Predicated region
      $region17: #{cnnf_forward.9} parent=11 // pred_check
        %p236 = pneg %p190
      $region18: #{cnnf_forward.9} parent=11 // pred_check_branch
        %238 = sbr.rel (%p236) target = $region20
      $region19: #{cnnf_forward.9} parent=11 // pred_region
        _
      $region20: #{cnnf_forward.9} parent=11 // pred_fallthru
        _
    $region12: #{cnnf_forward.9} parent=5 // pred_fallthru
      _
    %p239 = scmp.lt.s32.totalorder %s12, 4
    // Predicated region
    $region21: #{cnnf_forward.9} parent=5 // pred_check
      %p240 = pneg %p239
    $region22: #{cnnf_forward.9} parent=5 // pred_check_branch
      %242 = sbr.rel (%p240) target = $region24
    $region23: #{cnnf_forward.9} parent=5 // pred_region
      // Predicated region
      $region25: #{cnnf_forward.9} parent=23 // pred_check
        %p243 = pneg %p46
      $region26: #{cnnf_forward.9} parent=23 // pred_check_branch
        %245 = sbr.rel (%p243) target = $region28
      $region27: #{cnnf_forward.9} parent=23 // pred_region
        %s246 = smul.u32 8, %s20
        %p247 = scmp.lt.s32.totalorder %s19, 1
        %s248 = scalar_select %p247, %s19, 1
        %p249 = scmp.lt.s32.totalorder %s246, 15
        %s250 = scalar_select %p249, %s246, 15
        %s251 = smul.addr %s250, 2
        %s252 = smul.addr %s248, 32
        %s253 = sadd.s32 %s251, %s252
        %s254 = smul.addr %s253, 8
        %s255 = scalar_lea.vmem %s0, %s254
        %s256 = smul.u32 8, %s20
      $region28: #{cnnf_forward.9} parent=23 // pred_fallthru
        _
      // Predicated region
      $region29: #{cnnf_forward.9} parent=23 // pred_check
        %p257 = pneg %p80
      $region30: #{cnnf_forward.9} parent=23 // pred_check_branch
        %259 = sbr.rel (%p257) target = $region32
      $region31: #{cnnf_forward.9} parent=23 // pred_region
        %s260 = ssub.s32 %s20, 1
        %p261 = scmp.gt.s32.totalorder %s260, 0
        %s262 = scalar_select %p261, %s260, 0
        %s263 = smul.u32 8, %s262
        %p264 = scmp.lt.s32.totalorder %s19, 1
        %s265 = scalar_select %p264, %s19, 1
        %p266 = scmp.lt.s32.totalorder %s263, 15
        %s267 = scalar_select %p266, %s263, 15
        %s268 = smul.addr %s267, 2
        %s269 = smul.addr %s265, 32
        %s270 = sadd.s32 %s268, %s269
        %s271 = smul.addr %s270, 8
        %s272 = scalar_lea.vmem %s1, %s271
        %s273 = ssub.s32 %s20, 1
        %p274 = scmp.gt.s32.totalorder %s273, 0
        %s275 = scalar_select %p274, %s273, 0
        %s276 = smul.u32 8, %s275
      $region32: #{cnnf_forward.9} parent=23 // pred_fallthru
        _
      // Predicated region
      $region33: #{cnnf_forward.9} parent=23 // pred_check
        %p277 = pneg %p114
      $region34: #{cnnf_forward.9} parent=23 // pred_check_branch
        %279 = sbr.rel (%p277) target = $region36
      $region35: #{cnnf_forward.9} parent=23 // pred_region
        %s280 = sadd.s32 %s20, 1
        %p281 = scmp.lt.s32.totalorder %s280, 1
        %s282 = scalar_select %p281, %s280, 1
        %s283 = smul.u32 8, %s282
        %p284 = scmp.lt.s32.totalorder %s19, 1
        %s285 = scalar_select %p284, %s19, 1
        %p286 = scmp.lt.s32.totalorder %s283, 15
        %s287 = scalar_select %p286, %s283, 15
        %s288 = smul.addr %s287, 2
        %s289 = smul.addr %s285, 32
        %s290 = sadd.s32 %s288, %s289
        %s291 = smul.addr %s290, 8
        %s292 = scalar_lea.vmem %s2, %s291
        %s293 = sadd.s32 %s20, 1
        %p294 = scmp.lt.s32.totalorder %s293, 1
        %s295 = scalar_select %p294, %s293, 1
        %s296 = smul.u32 8, %s295
      $region36: #{cnnf_forward.9} parent=23 // pred_fallthru
        _
      // Predicated region
      $region37: #{cnnf_forward.9} parent=23 // pred_check
        %p297 = pneg %p142
      $region38: #{cnnf_forward.9} parent=23 // pred_check_branch
        %299 = sbr.rel (%p297) target = $region40
      $region39: #{cnnf_forward.9} parent=23 // pred_region
        %s300 = smul.u32 8, %s20
        %p301 = scmp.lt.s32.totalorder %s19, 1
        %s302 = scalar_select %p301, %s19, 1
        %p303 = scmp.lt.s32.totalorder %s300, 15
        %s304 = scalar_select %p303, %s300, 15
        %s305 = smul.addr %s304, 2
        %s306 = smul.addr %s302, 32
        %s307 = sadd.s32 %s305, %s306
        %s308 = smul.addr %s307, 8
        %s309 = scalar_lea.vmem %s3, %s308
        %s310 = smul.u32 8, %s20
      $region40: #{cnnf_forward.9} parent=23 // pred_fallthru
        _
    $region24: #{cnnf_forward.9} parent=5 // pred_fallthru
      _
    %p311 = scmp.le.s32.totalorder 1, %s12
    %p312 = scmp.lt.s32.totalorder %s12, 5
    %p313 = pnand %p311, %p312
    %p314 = pneg %p313
    // Predicated region
    $region41: #{cnnf_forward.9} parent=5 // pred_check
      _
    $region42: #{cnnf_forward.9} parent=5 // pred_check_branch
      %316 = sbr.rel (%p313) target = $region44
    $region43: #{cnnf_forward.9} parent=5 // pred_region
      %s317 = ssub.s32 %s12, 1
      %s318 = smul.u32 8, %s22
      %p319 = scmp.lt.s32.totalorder %s21, 1
      %s320 = scalar_select %p319, %s21, 1
      %p321 = scmp.lt.s32.totalorder %s318, 15
      %s322 = scalar_select %p321, %s318, 15
      %s323 = smul.addr %s322, 2
      %s324 = smul.addr %s320, 32
      %s325 = sadd.s32 %s323, %s324
      %s326 = smul.addr %s325, 8
      %s327 = scalar_lea.vmem %s0, %s326
      %p328 = pneg %p52
      %p329 = pneg %p49
      %s330 = ssub.s32 %s22, 1
      %p331 = scmp.gt.s32.totalorder %s330, 0
      %s332 = scalar_select %p331, %s330, 0
      %s333 = smul.u32 8, %s332
      %p334 = scmp.lt.s32.totalorder %s21, 1
      %s335 = scalar_select %p334, %s21, 1
      %p336 = scmp.lt.s32.totalorder %s333, 15
      %s337 = scalar_select %p336, %s333, 15
      %s338 = smul.addr %s337, 2
      %s339 = smul.addr %s335, 32
      %s340 = sadd.s32 %s338, %s339
      %s341 = smul.addr %s340, 8
      %s342 = scalar_lea.vmem %s1, %s341
      %p343 = pneg %p86
      %p344 = pneg %p83
      %s345 = sadd.s32 %s22, 1
      %p346 = scmp.lt.s32.totalorder %s345, 1
      %s347 = scalar_select %p346, %s345, 1
      %s348 = smul.u32 8, %s347
      %p349 = scmp.lt.s32.totalorder %s21, 1
      %s350 = scalar_select %p349, %s21, 1
      %p351 = scmp.lt.s32.totalorder %s348, 15
      %s352 = scalar_select %p351, %s348, 15
      %s353 = smul.addr %s352, 2
      %s354 = smul.addr %s350, 32
      %s355 = sadd.s32 %s353, %s354
      %s356 = smul.addr %s355, 8
      %s357 = scalar_lea.vmem %s2, %s356
      %p358 = pneg %p120
      %p359 = pneg %p117
      %s360 = smul.u32 8, %s22
      %p361 = scmp.lt.s32.totalorder %s21, 1
      %s362 = scalar_select %p361, %s21, 1
      %p363 = scmp.lt.s32.totalorder %s360, 15
      %s364 = scalar_select %p363, %s360, 15
      %s365 = smul.addr %s364, 2
      %s366 = smul.addr %s362, 32
      %s367 = sadd.s32 %s365, %s366
      %s368 = smul.addr %s367, 8
      %s369 = scalar_lea.vmem %s3, %s368
      %p370 = pneg %p148
      %p371 = pneg %p145
      %p372 = pneg %p169
      %p373 = pneg %p166
      %p374 = pneg %p190
      %p375 = pneg %p187
      %p376 = pneg %p218
      %p377 = pneg %p215
      %s378 = smul.u32 8, %s22
      %p379 = scmp.lt.s32.totalorder %s21, 1
      %s380 = scalar_select %p379, %s21, 1
      %p381 = scmp.lt.s32.totalorder %s378, 15
      %s382 = scalar_select %p381, %s378, 15
      %s383 = smul.addr %s382, 2
      %s384 = smul.addr %s380, 32
      %s385 = sadd.s32 %s383, %s384
      %s386 = smul.addr %s385, 8
      %s387 = scalar_lea.vmem %s6, %s386
      %s388 = smul.u32 8, %s22
      %p389 = scmp.lt.s32.totalorder %s21, 1
      %s390 = scalar_select %p389, %s21, 1
      %p391 = scmp.lt.s32.totalorder %s388, 15
      %s392 = scalar_select %p391, %s388, 15
      %s393 = smul.addr %s392, 2
      %s394 = smul.addr %s390, 32
      %s395 = sadd.s32 %s393, %s394
      %s396 = smul.addr %s395, 8
      %s397 = scalar_lea.vmem %s0, %s396
      %s398 = smul.u32 8, %s22
      %s399 = ssub.s32 %s22, 1
      %p400 = scmp.gt.s32.totalorder %s399, 0
      %s401 = scalar_select %p400, %s399, 0
      %s402 = smul.u32 8, %s401
      %p403 = scmp.lt.s32.totalorder %s21, 1
      %s404 = scalar_select %p403, %s21, 1
      %p405 = scmp.lt.s32.totalorder %s402, 15
      %s406 = scalar_select %p405, %s402, 15
      %s407 = smul.addr %s406, 2
      %s408 = smul.addr %s404, 32
      %s409 = sadd.s32 %s407, %s408
      %s410 = smul.addr %s409, 8
      %s411 = scalar_lea.vmem %s1, %s410
      %s412 = ssub.s32 %s22, 1
      %p413 = scmp.gt.s32.totalorder %s412, 0
      %s414 = scalar_select %p413, %s412, 0
      %s415 = smul.u32 8, %s414
      %s416 = sadd.s32 %s22, 1
      %p417 = scmp.lt.s32.totalorder %s416, 1
      %s418 = scalar_select %p417, %s416, 1
      %s419 = smul.u32 8, %s418
      %p420 = scmp.lt.s32.totalorder %s21, 1
      %s421 = scalar_select %p420, %s21, 1
      %p422 = scmp.lt.s32.totalorder %s419, 15
      %s423 = scalar_select %p422, %s419, 15
      %s424 = smul.addr %s423, 2
      %s425 = smul.addr %s421, 32
      %s426 = sadd.s32 %s424, %s425
      %s427 = smul.addr %s426, 8
      %s428 = scalar_lea.vmem %s2, %s427
      %s429 = sadd.s32 %s22, 1
      %p430 = scmp.lt.s32.totalorder %s429, 1
      %s431 = scalar_select %p430, %s429, 1
      %s432 = smul.u32 8, %s431
      %s433 = smul.u32 8, %s22
      %p434 = scmp.lt.s32.totalorder %s21, 1
      %s435 = scalar_select %p434, %s21, 1
      %p436 = scmp.lt.s32.totalorder %s433, 15
      %s437 = scalar_select %p436, %s433, 15
      %s438 = smul.addr %s437, 2
      %s439 = smul.addr %s435, 32
      %s440 = sadd.s32 %s438, %s439
      %s441 = smul.addr %s440, 8
      %s442 = scalar_lea.vmem %s3, %s441
      %s443 = smul.u32 8, %s22
      %s444 = smul.u32 8, %s22
      %p445 = scmp.lt.s32.totalorder %s21, 1
      %s446 = scalar_select %p445, %s21, 1
      %p447 = scmp.lt.s32.totalorder %s444, 15
      %s448 = scalar_select %p447, %s444, 15
      %s449 = smul.addr %s448, 2
      %s450 = smul.addr %s446, 32
      %s451 = sadd.s32 %s449, %s450
      %s452 = smul.addr %s451, 8
      %s453 = scalar_lea.vmem %s6, %s452
      %s454 = smul.u32 8, %s22
      %vm456 = vcmask 519168
      %457 = vst.msk [vmem:[#allocation2] sm:$0xf] %vm456, 0
      %458 = vst.msk [vmem:[#allocation2 + $0x4] sm:$0xf] %vm456, 0
      %vm459 = vcmask 516096
      %460 = vst.msk [vmem:[#allocation2 + $0x8] sm:$0x1] %vm459, 0
      %461 = vst.msk [vmem:[#allocation2 + $0xc] sm:$0xf] %vm456, 0
      %462 = vst.msk [vmem:[#allocation2 + $0x10] sm:$0xf] %vm456, 0
      %463 = vst.msk [vmem:[#allocation2 + $0x14] sm:$0x1] %vm459, 0
      %464 = vst.msk [vmem:[#allocation2 + $0x18] sm:$0xf] %vm456, 0
      %465 = vst.msk [vmem:[#allocation2 + $0x1c] sm:$0xf] %vm456, 0
      %466 = vst.msk [vmem:[#allocation2 + $0x20] sm:$0x1] %vm459, 0
      %467 = vst.msk [vmem:[#allocation2 + $0x24] sm:$0xf] %vm456, 0
      %468 = vst.msk [vmem:[#allocation2 + $0x28] sm:$0xf] %vm456, 0
      %469 = vst.msk [vmem:[#allocation2 + $0x2c] sm:$0x1] %vm459, 0
      %470 = vst.msk [vmem:[#allocation2 + $0x30] sm:$0xf] %vm456, 0
      %471 = vst.msk [vmem:[#allocation2 + $0x34] sm:$0xf] %vm456, 0
      %472 = vst.msk [vmem:[#allocation2 + $0x38] sm:$0x1] %vm459, 0
      %473 = vst.msk [vmem:[#allocation2 + $0x3c] sm:$0xf] %vm456, 0
      %474 = vst.msk [vmem:[#allocation2 + $0x40] sm:$0xf] %vm456, 0
      %475 = vst.msk [vmem:[#allocation2 + $0x44] sm:$0x1] %vm459, 0
      %476 = vst.msk [vmem:[#allocation2 + $0x48] sm:$0xf] %vm456, 0
      %477 = vst.msk [vmem:[#allocation2 + $0x4c] sm:$0xf] %vm456, 0
      %478 = vst.msk [vmem:[#allocation2 + $0x50] sm:$0x1] %vm459, 0
      %479 = vst.msk [vmem:[#allocation2 + $0x54] sm:$0xf] %vm456, 0
      %480 = vst.msk [vmem:[#allocation2 + $0x58] sm:$0xf] %vm456, 0
      %481 = vst.msk [vmem:[#allocation2 + $0x5c] sm:$0x1] %vm459, 0
      %482 = vst.msk [vmem:[#allocation2 + $0x60] sm:$0xf] %vm456, 0
      %483 = vst.msk [vmem:[#allocation2 + $0x64] sm:$0xf] %vm456, 0
      %484 = vst.msk [vmem:[#allocation2 + $0x68] sm:$0x1] %vm459, 0
      %485 = vst.msk [vmem:[#allocation2 + $0x6c] sm:$0xf] %vm456, 0
      %486 = vst.msk [vmem:[#allocation2 + $0x70] sm:$0xf] %vm456, 0
      %487 = vst.msk [vmem:[#allocation2 + $0x74] sm:$0x1] %vm459, 0
      %v488 = vld [vmem:[%s397] sm:$0xff]
      %v489 = vld [vmem:[%s397 + $0x8] sm:$0xff]
      %v490 = vld [vmem:[%s397 + $0x10] sm:$0xff]
      %v491 = vld [vmem:[%s397 + $0x18] sm:$0xff]
      %v492 = vld [vmem:[%s397 + $0x20] sm:$0xff]
      %v493 = vld [vmem:[%s397 + $0x28] sm:$0xff]
      %v494 = vld [vmem:[%s397 + $0x30] sm:$0xff]
      %v495 = vld [vmem:[%s397 + $0x38] sm:$0xff]
      %v496 = vld [vmem:[%s397 + $0x40] sm:$0xff]
      %v497 = vld [vmem:[%s397 + $0x48] sm:$0xff]
      %v498 = vld [vmem:[%s397 + $0x50] sm:$0xff]
      %v499 = vld [vmem:[%s397 + $0x58] sm:$0xff]
      %v500 = vld [vmem:[%s397 + $0x60] sm:$0xff]
      %v501 = vld [vmem:[%s397 + $0x68] sm:$0xff]
      %v502 = vld [vmem:[%s397 + $0x70] sm:$0xff]
      %v503 = vld [vmem:[%s397 + $0x78] sm:$0xff]
      %v504 = vpack.c.bf16 %v489, %v488
      %v505 = vpack.c.bf16 %v491, %v490
      %v506 = vpack.c.bf16 %v493, %v492
      %v507 = vpack.c.bf16 %v495, %v494
      %v508 = vpack.c.bf16 %v497, %v496
      %v509 = vpack.c.bf16 %v499, %v498
      %v510 = vpack.c.bf16 %v501, %v500
      %v511 = vpack.c.bf16 %v503, %v502
      %v520 = vunpack.c.l.b16 %v504
      %v521 = vunpack.c.h.b16 %v504
      %v522 = vunpack.c.l.b16 %v505
      %v523 = vunpack.c.h.b16 %v505
      %v524 = vunpack.c.l.b16 %v506
      %v525 = vunpack.c.h.b16 %v506
      %v526 = vunpack.c.l.b16 %v507
      %v527 = vunpack.c.h.b16 %v507
      %v528 = vunpack.c.l.b16 %v508
      %v529 = vunpack.c.h.b16 %v508
      %v530 = vunpack.c.l.b16 %v509
      %v531 = vunpack.c.h.b16 %v509
      %v532 = vunpack.c.l.b16 %v510
      %v533 = vunpack.c.h.b16 %v510
      %v534 = vunpack.c.l.b16 %v511
      %v535 = vunpack.c.h.b16 %v511
      %v536 = vpack.c.b16 %v520, %v520
      %v537 = vpack.c.b16 %v521, %v521
      %v538 = vpack.c.b16 %v522, %v522
      %v539 = vpack.c.b16 %v523, %v523
      %v540 = vpack.c.b16 %v524, %v524
      %v541 = vpack.c.b16 %v525, %v525
      %v542 = vpack.c.b16 %v526, %v526
      %v543 = vpack.c.b16 %v527, %v527
      %v544 = vpack.c.b16 %v528, %v528
      %v545 = vpack.c.b16 %v529, %v529
      %v546 = vpack.c.b16 %v530, %v530
      %v547 = vpack.c.b16 %v531, %v531
      %v548 = vpack.c.b16 %v532, %v532
      %v549 = vpack.c.b16 %v533, %v533
      %v550 = vpack.c.b16 %v534, %v534
      %v551 = vpack.c.b16 %v535, %v535
      %vm552 = vsmask.f32 256
      %vm553 = vsmask.f32 4368
      %vm554 = vmor %vm552, %vm553
      %v556 = vshrl.u32 %v536, 16
      %v558 = vrot.slane %v556, 7
      %v559 = vshll.u32 %v536, 16
      %v561 = vor.u32 %v558, %v559
      %v562 = vrot.slane %v558, 4
      %v564 = vshrl.u32 %v537, 16
      %v566 = vrot.slane %v564, 7
      %v567 = vshll.u32 %v537, 16
      %v569 = vor.u32 %v566, %v567
      %v570 = vsel %vm554, %v562, %v569
      %v571 = vrot.slane %v566, 4
      %v573 = vshrl.u32 %v538, 16
      %v575 = vrot.slane %v573, 7
      %v576 = vshll.u32 %v538, 16
      %v578 = vor.u32 %v575, %v576
      %v579 = vrot.slane %v575, 4
      %v581 = vshrl.u32 %v539, 16
      %v583 = vrot.slane %v581, 7
      %v584 = vshll.u32 %v539, 16
      %v586 = vor.u32 %v583, %v584
      %v587 = vsel %vm554, %v579, %v586
      %v588 = vrot.slane %v583, 4
      %v590 = vshrl.u32 %v540, 16
      %v592 = vrot.slane %v590, 7
      %v593 = vshll.u32 %v540, 16
      %v595 = vor.u32 %v592, %v593
      %v596 = vrot.slane %v592, 4
      %v598 = vshrl.u32 %v541, 16
      %v600 = vrot.slane %v598, 7
      %v601 = vshll.u32 %v541, 16
      %v603 = vor.u32 %v600, %v601
      %v604 = vsel %vm554, %v596, %v603
      %v605 = vrot.slane %v600, 4
      %v607 = vshrl.u32 %v542, 16
      %v609 = vrot.slane %v607, 7
      %v610 = vshll.u32 %v542, 16
      %v612 = vor.u32 %v609, %v610
      %v613 = vrot.slane %v609, 4
      %v615 = vshrl.u32 %v543, 16
      %v617 = vrot.slane %v615, 7
      %v618 = vshll.u32 %v543, 16
      %v620 = vor.u32 %v617, %v618
      %v621 = vsel %vm554, %v613, %v620
      %v622 = vrot.slane %v617, 4
      %v624 = vshrl.u32 %v544, 16
      %v626 = vrot.slane %v624, 7
      %v627 = vshll.u32 %v544, 16
      %v629 = vor.u32 %v626, %v627
      %v630 = vrot.slane %v626, 4
      %v632 = vshrl.u32 %v545, 16
      %v634 = vrot.slane %v632, 7
      %v635 = vshll.u32 %v545, 16
      %v637 = vor.u32 %v634, %v635
      %v638 = vsel %vm554, %v630, %v637
      %v639 = vrot.slane %v634, 4
      %v641 = vshrl.u32 %v546, 16
      %v643 = vrot.slane %v641, 7
      %v644 = vshll.u32 %v546, 16
      %v646 = vor.u32 %v643, %v644
      %v647 = vrot.slane %v643, 4
      %v649 = vshrl.u32 %v547, 16
      %v651 = vrot.slane %v649, 7
      %v652 = vshll.u32 %v547, 16
      %v654 = vor.u32 %v651, %v652
      %v655 = vsel %vm554, %v647, %v654
      %v656 = vrot.slane %v651, 4
      %v658 = vshrl.u32 %v548, 16
      %v660 = vrot.slane %v658, 7
      %v661 = vshll.u32 %v548, 16
      %v663 = vor.u32 %v660, %v661
      %v664 = vrot.slane %v660, 4
      %v666 = vshrl.u32 %v549, 16
      %v668 = vrot.slane %v666, 7
      %v669 = vshll.u32 %v549, 16
      %v671 = vor.u32 %v668, %v669
      %v672 = vsel %vm554, %v664, %v671
      %v673 = vrot.slane %v668, 4
      %v675 = vshrl.u32 %v550, 16
      %v677 = vrot.slane %v675, 7
      %v678 = vshll.u32 %v550, 16
      %v680 = vor.u32 %v677, %v678
      %v681 = vrot.slane %v677, 4
      %v683 = vshrl.u32 %v551, 16
      %v685 = vrot.slane %v683, 7
      %v686 = vshll.u32 %v551, 16
      %v688 = vor.u32 %v685, %v686
      %v689 = vsel %vm554, %v681, %v688
      %v690 = vrot.slane %v685, 4
      %s715 = scalar_lea.vmem [#allocation2], 12
      %vm716 = vcmask 519168
      %vm717 = vsmask.f32 7938
      %vm718 = vmand %vm716, %vm717
      %v719 = vld [vmem:[%s715] sm:$0xf]
      %v720 = vsel %vm718, %v561, %v719
      %721 = vst [vmem:[%s715] sm:$0xf] %v720
      %722 = vst.msk [vmem:[%s715 + $0x4] sm:$0xf] %vm456, %v570
      %vm723 = vcmask 516096
      %vm724 = vmand %vm723, %vm552
      %v725 = vld [vmem:[%s715 + $0x8] sm:$0x1]
      %v726 = vsel %vm724, %v571, %v725
      %727 = vst [vmem:[%s715 + $0x8] sm:$0x1] %v726
      %v728 = vld [vmem:[%s715 + $0xc] sm:$0xf]
      %v729 = vsel %vm718, %v578, %v728
      %730 = vst [vmem:[%s715 + $0xc] sm:$0xf] %v729
      %731 = vst.msk [vmem:[%s715 + $0x10] sm:$0xf] %vm456, %v587
      %v732 = vld [vmem:[%s715 + $0x14] sm:$0x1]
      %v733 = vsel %vm724, %v588, %v732
      %734 = vst [vmem:[%s715 + $0x14] sm:$0x1] %v733
      %v735 = vld [vmem:[%s715 + $0x18] sm:$0xf]
      %v736 = vsel %vm718, %v595, %v735
      %737 = vst [vmem:[%s715 + $0x18] sm:$0xf] %v736
      %738 = vst.msk [vmem:[%s715 + $0x1c] sm:$0xf] %vm456, %v604
      %v739 = vld [vmem:[%s715 + $0x20] sm:$0x1]
      %v740 = vsel %vm724, %v605, %v739
      %741 = vst [vmem:[%s715 + $0x20] sm:$0x1] %v740
      %v742 = vld [vmem:[%s715 + $0x24] sm:$0xf]
      %v743 = vsel %vm718, %v612, %v742
      %744 = vst [vmem:[%s715 + $0x24] sm:$0xf] %v743
      %745 = vst.msk [vmem:[%s715 + $0x28] sm:$0xf] %vm456, %v621
      %v746 = vld [vmem:[%s715 + $0x2c] sm:$0x1]
      %v747 = vsel %vm724, %v622, %v746
      %748 = vst [vmem:[%s715 + $0x2c] sm:$0x1] %v747
      %v749 = vld [vmem:[%s715 + $0x30] sm:$0xf]
      %v750 = vsel %vm718, %v629, %v749
      %751 = vst [vmem:[%s715 + $0x30] sm:$0xf] %v750
      %752 = vst.msk [vmem:[%s715 + $0x34] sm:$0xf] %vm456, %v638
      %v753 = vld [vmem:[%s715 + $0x38] sm:$0x1]
      %v754 = vsel %vm724, %v639, %v753
      %755 = vst [vmem:[%s715 + $0x38] sm:$0x1] %v754
      %v756 = vld [vmem:[%s715 + $0x3c] sm:$0xf]
      %v757 = vsel %vm718, %v646, %v756
      %758 = vst [vmem:[%s715 + $0x3c] sm:$0xf] %v757
      %759 = vst.msk [vmem:[%s715 + $0x40] sm:$0xf] %vm456, %v655
      %v760 = vld [vmem:[%s715 + $0x44] sm:$0x1]
      %v761 = vsel %vm724, %v656, %v760
      %762 = vst [vmem:[%s715 + $0x44] sm:$0x1] %v761
      %v763 = vld [vmem:[%s715 + $0x48] sm:$0xf]
      %v764 = vsel %vm718, %v663, %v763
      %765 = vst [vmem:[%s715 + $0x48] sm:$0xf] %v764
      %766 = vst.msk [vmem:[%s715 + $0x4c] sm:$0xf] %vm456, %v672
      %v767 = vld [vmem:[%s715 + $0x50] sm:$0x1]
      %v768 = vsel %vm724, %v673, %v767
      %769 = vst [vmem:[%s715 + $0x50] sm:$0x1] %v768
      %v770 = vld [vmem:[%s715 + $0x54] sm:$0xf]
      %v771 = vsel %vm718, %v680, %v770
      %772 = vst [vmem:[%s715 + $0x54] sm:$0xf] %v771
      %773 = vst.msk [vmem:[%s715 + $0x58] sm:$0xf] %vm456, %v689
      %v774 = vld [vmem:[%s715 + $0x5c] sm:$0x1]
      %v775 = vsel %vm724, %v690, %v774
      %776 = vst [vmem:[%s715 + $0x5c] sm:$0x1] %v775
      %p777 = scmp.gt.s32.totalorder %s22, 0
      // Predicated region
      $region45: #{cnnf_forward.9} parent=43 // pred_check
        %p778 = pneg %p777
      $region46: #{cnnf_forward.9} parent=43 // pred_check_branch
        %780 = sbr.rel (%p778) target = $region48
      $region47: #{cnnf_forward.9} parent=43 // pred_region
        %s781 = scalar_lea.vmem %s411, 112
        %v782 = vld [vmem:[%s781] sm:$0xff]
        %v783 = vld [vmem:[%s781 + $0x8] sm:$0xff]
        %v784 = vpack.c.bf16 %v783, %v782
        %v786 = vunpack.c.l.b16 %v784
        %v787 = vunpack.c.h.b16 %v784
        %v788 = vpack.c.b16 %v786, %v786
        %v789 = vpack.c.b16 %v787, %v787
        %v791 = vshrl.u32 %v788, 16
        %v793 = vrot.slane %v791, 7
        %v794 = vshll.u32 %v788, 16
        %v796 = vor.u32 %v793, %v794
        %v797 = vrot.slane %v793, 4
        %v799 = vshrl.u32 %v789, 16
        %v801 = vrot.slane %v799, 7
        %v802 = vshll.u32 %v789, 16
        %v804 = vor.u32 %v801, %v802
        %v805 = vsel %vm554, %v797, %v804
        %v806 = vrot.slane %v801, 4
        %v810 = vld [vmem:[#allocation2] sm:$0xf]
        %v811 = vsel %vm718, %v796, %v810
        %812 = vst [vmem:[#allocation2] sm:$0xf] %v811
        %813 = vst.msk [vmem:[#allocation2 + $0x4] sm:$0xf] %vm456, %v805
        %v814 = vld [vmem:[#allocation2 + $0x8] sm:$0x1]
        %v815 = vsel %vm724, %v806, %v814
        %816 = vst [vmem:[#allocation2 + $0x8] sm:$0x1] %v815
      $region48: #{cnnf_forward.9} parent=43 // pred_fallthru
        _
      %p817 = scmp.lt.s32.totalorder %s22, 1
      // Predicated region
      $region49: #{cnnf_forward.9} parent=43 // pred_check
        %p818 = pneg %p817
      $region50: #{cnnf_forward.9} parent=43 // pred_check_branch
        %820 = sbr.rel (%p818) target = $region52
      $region51: #{cnnf_forward.9} parent=43 // pred_region
        %v821 = vld [vmem:[%s428] sm:$0xff]
        %v822 = vld [vmem:[%s428 + $0x8] sm:$0xff]
        %v823 = vpack.c.bf16 %v822, %v821
        %v825 = vunpack.c.l.b16 %v823
        %v826 = vunpack.c.h.b16 %v823
        %v827 = vpack.c.b16 %v825, %v825
        %v828 = vpack.c.b16 %v826, %v826
        %v830 = vshrl.u32 %v827, 16
        %v832 = vrot.slane %v830, 7
        %v833 = vshll.u32 %v827, 16
        %v835 = vor.u32 %v832, %v833
        %v836 = vrot.slane %v832, 4
        %v838 = vshrl.u32 %v828, 16
        %v840 = vrot.slane %v838, 7
        %v841 = vshll.u32 %v828, 16
        %v843 = vor.u32 %v840, %v841
        %v844 = vsel %vm554, %v836, %v843
        %v845 = vrot.slane %v840, 4
        %s849 = scalar_lea.vmem [#allocation2], 108
        %v850 = vld [vmem:[%s849] sm:$0xf]
        %v851 = vsel %vm718, %v835, %v850
        %852 = vst [vmem:[%s849] sm:$0xf] %v851
        %853 = vst.msk [vmem:[%s849 + $0x4] sm:$0xf] %vm456, %v844
        %v854 = vld [vmem:[%s849 + $0x8] sm:$0x1]
        %v855 = vsel %vm724, %v845, %v854
        %856 = vst [vmem:[%s849 + $0x8] sm:$0x1] %v855
      $region52: #{cnnf_forward.9} parent=43 // pred_fallthru
        _
      %v857 = vld [vmem:[#allocation2] sm:$0xf]
      %v858 = vld [vmem:[#allocation2 + $0x4] sm:$0xf]
      %v859 = vld [vmem:[#allocation2 + $0xc] sm:$0xf]
      %v860 = vld [vmem:[#allocation2 + $0x10] sm:$0xf]
      %v861 = vld [vmem:[#allocation2 + $0x18] sm:$0xf]
      %v862 = vld [vmem:[#allocation2 + $0x1c] sm:$0xf]
      %v863 = vld [vmem:[#allocation2 + $0x24] sm:$0xf]
      %v864 = vld [vmem:[#allocation2 + $0x28] sm:$0xf]
      %v865 = vld [vmem:[#allocation2 + $0x30] sm:$0xf]
      %v866 = vld [vmem:[#allocation2 + $0x34] sm:$0xf]
      %v867 = vld [vmem:[#allocation2 + $0x3c] sm:$0xf]
      %v868 = vld [vmem:[#allocation2 + $0x40] sm:$0xf]
      %v869 = vld [vmem:[#allocation2 + $0x48] sm:$0xf]
      %v870 = vld [vmem:[#allocation2 + $0x4c] sm:$0xf]
      %v871 = vld [vmem:[#allocation2 + $0x54] sm:$0xf]
      %v872 = vld [vmem:[#allocation2 + $0x58] sm:$0xf]
      %873 = vst.msk [vmem:[#allocation3] sm:$0xf] %vm456, %v857
      %874 = vst.msk [vmem:[#allocation3 + $0x14] sm:$0xf] %vm456, %v858
      %875 = vst.msk [vmem:[#allocation3 + $0x28] sm:$0xf] %vm456, %v859
      %876 = vst.msk [vmem:[#allocation3 + $0x3c] sm:$0xf] %vm456, %v860
      %877 = vst.msk [vmem:[#allocation3 + $0x50] sm:$0xf] %vm456, %v861
      %878 = vst.msk [vmem:[#allocation3 + $0x64] sm:$0xf] %vm456, %v862
      %879 = vst.msk [vmem:[#allocation3 + $0x78] sm:$0xf] %vm456, %v863
      %880 = vst.msk [vmem:[#allocation3 + $0x8c] sm:$0xf] %vm456, %v864
      %881 = vst.msk [vmem:[#allocation3 + $0xa0] sm:$0xf] %vm456, %v865
      %882 = vst.msk [vmem:[#allocation3 + $0xb4] sm:$0xf] %vm456, %v866
      %883 = vst.msk [vmem:[#allocation3 + $0xc8] sm:$0xf] %vm456, %v867
      %884 = vst.msk [vmem:[#allocation3 + $0xdc] sm:$0xf] %vm456, %v868
      %885 = vst.msk [vmem:[#allocation3 + $0xf0] sm:$0xf] %vm456, %v869
      %886 = vst.msk [vmem:[#allocation3 + $0x104] sm:$0xf] %vm456, %v870
      %887 = vst.msk [vmem:[#allocation3 + $0x118] sm:$0xf] %vm456, %v871
      %888 = vst.msk [vmem:[#allocation3 + $0x12c] sm:$0xf] %vm456, %v872
      %v889 = vld [vmem:[#allocation2] sm:$0xf]
      %v890 = vld [vmem:[#allocation2 + $0x4] sm:$0xf]
      %v891 = vld [vmem:[#allocation2 + $0x8] sm:$0x1]
      %v892 = vld [vmem:[#allocation2 + $0xc] sm:$0xf]
      %v893 = vld [vmem:[#allocation2 + $0x10] sm:$0xf]
      %v894 = vld [vmem:[#allocation2 + $0x14] sm:$0x1]
      %v895 = vld [vmem:[#allocation2 + $0x18] sm:$0xf]
      %v896 = vld [vmem:[#allocation2 + $0x1c] sm:$0xf]
      %v897 = vld [vmem:[#allocation2 + $0x20] sm:$0x1]
      %v898 = vld [vmem:[#allocation2 + $0x24] sm:$0xf]
      %v899 = vld [vmem:[#allocation2 + $0x28] sm:$0xf]
      %v900 = vld [vmem:[#allocation2 + $0x2c] sm:$0x1]
      %v901 = vld [vmem:[#allocation2 + $0x30] sm:$0xf]
      %v902 = vld [vmem:[#allocation2 + $0x34] sm:$0xf]
      %v903 = vld [vmem:[#allocation2 + $0x38] sm:$0x1]
      %v904 = vld [vmem:[#allocation2 + $0x3c] sm:$0xf]
      %v905 = vld [vmem:[#allocation2 + $0x40] sm:$0xf]
      %v906 = vld [vmem:[#allocation2 + $0x44] sm:$0x1]
      %v907 = vld [vmem:[#allocation2 + $0x48] sm:$0xf]
      %v908 = vld [vmem:[#allocation2 + $0x4c] sm:$0xf]
      %v909 = vld [vmem:[#allocation2 + $0x50] sm:$0x1]
      %v910 = vld [vmem:[#allocation2 + $0x54] sm:$0xf]
      %v911 = vld [vmem:[#allocation2 + $0x58] sm:$0xf]
      %v912 = vld [vmem:[#allocation2 + $0x5c] sm:$0x1]
      %vm913 = vsmask.f32 3328
      %vm914 = vsmask.f32 7440
      %vm915 = vmor %vm913, %vm914
      %v917 = vshrl.u32 %v889, 16
      %v919 = vrot.slane %v917, 4
      %v920 = vshll.u32 %v889, 16
      %v922 = vrot.slane %v920, 5
      %v923 = vor.u32 %v919, %v922
      %v924 = vrot.slane %v923, 4
      %v926 = vshll.u32 %v890, 16
      %v928 = vrot.slane %v926, 5
      %v929 = vsel %vm915, %v924, %v928
      %v930 = vshrl.u32 %v890, 16
      %v932 = vrot.slane %v930, 4
      %v933 = vor.u32 %v932, %v928
      %v934 = vrot.slane %v933, 4
      %v936 = vshll.u32 %v891, 16
      %v938 = vrot.slane %v936, 5
      %v939 = vsel %vm915, %v934, %v938
      %v941 = vshrl.u32 %v892, 16
      %v943 = vrot.slane %v941, 4
      %v944 = vshll.u32 %v892, 16
      %v946 = vrot.slane %v944, 5
      %v947 = vor.u32 %v943, %v946
      %v948 = vrot.slane %v947, 4
      %v950 = vshll.u32 %v893, 16
      %v952 = vrot.slane %v950, 5
      %v953 = vsel %vm915, %v948, %v952
      %v954 = vshrl.u32 %v893, 16
      %v956 = vrot.slane %v954, 4
      %v957 = vor.u32 %v956, %v952
      %v958 = vrot.slane %v957, 4
      %v960 = vshll.u32 %v894, 16
      %v962 = vrot.slane %v960, 5
      %v963 = vsel %vm915, %v958, %v962
      %v965 = vshrl.u32 %v895, 16
      %v967 = vrot.slane %v965, 4
      %v968 = vshll.u32 %v895, 16
      %v970 = vrot.slane %v968, 5
      %v971 = vor.u32 %v967, %v970
      %v972 = vrot.slane %v971, 4
      %v974 = vshll.u32 %v896, 16
      %v976 = vrot.slane %v974, 5
      %v977 = vsel %vm915, %v972, %v976
      %v978 = vshrl.u32 %v896, 16
      %v980 = vrot.slane %v978, 4
      %v981 = vor.u32 %v980, %v976
      %v982 = vrot.slane %v981, 4
      %v984 = vshll.u32 %v897, 16
      %v986 = vrot.slane %v984, 5
      %v987 = vsel %vm915, %v982, %v986
      %v989 = vshrl.u32 %v898, 16
      %v991 = vrot.slane %v989, 4
      %v992 = vshll.u32 %v898, 16
      %v994 = vrot.slane %v992, 5
      %v995 = vor.u32 %v991, %v994
      %v996 = vrot.slane %v995, 4
      %v998 = vshll.u32 %v899, 16
      %v1000 = vrot.slane %v998, 5
      %v1001 = vsel %vm915, %v996, %v1000
      %v1002 = vshrl.u32 %v899, 16
      %v1004 = vrot.slane %v1002, 4
      %v1005 = vor.u32 %v1004, %v1000
      %v1006 = vrot.slane %v1005, 4
      %v1008 = vshll.u32 %v900, 16
      %v1010 = vrot.slane %v1008, 5
      %v1011 = vsel %vm915, %v1006, %v1010
      %v1013 = vshrl.u32 %v901, 16
      %v1015 = vrot.slane %v1013, 4
      %v1016 = vshll.u32 %v901, 16
      %v1018 = vrot.slane %v1016, 5
      %v1019 = vor.u32 %v1015, %v1018
      %v1020 = vrot.slane %v1019, 4
      %v1022 = vshll.u32 %v902, 16
      %v1024 = vrot.slane %v1022, 5
      %v1025 = vsel %vm915, %v1020, %v1024
      %v1026 = vshrl.u32 %v902, 16
      %v1028 = vrot.slane %v1026, 4
      %v1029 = vor.u32 %v1028, %v1024
      %v1030 = vrot.slane %v1029, 4
      %v1032 = vshll.u32 %v903, 16
      %v1034 = vrot.slane %v1032, 5
      %v1035 = vsel %vm915, %v1030, %v1034
      %v1037 = vshrl.u32 %v904, 16
      %v1039 = vrot.slane %v1037, 4
      %v1040 = vshll.u32 %v904, 16
      %v1042 = vrot.slane %v1040, 5
      %v1043 = vor.u32 %v1039, %v1042
      %v1044 = vrot.slane %v1043, 4
      %v1046 = vshll.u32 %v905, 16
      %v1048 = vrot.slane %v1046, 5
      %v1049 = vsel %vm915, %v1044, %v1048
      %v1050 = vshrl.u32 %v905, 16
      %v1052 = vrot.slane %v1050, 4
      %v1053 = vor.u32 %v1052, %v1048
      %v1054 = vrot.slane %v1053, 4
      %v1056 = vshll.u32 %v906, 16
      %v1058 = vrot.slane %v1056, 5
      %v1059 = vsel %vm915, %v1054, %v1058
      %v1061 = vshrl.u32 %v907, 16
      %v1063 = vrot.slane %v1061, 4
      %v1064 = vshll.u32 %v907, 16
      %v1066 = vrot.slane %v1064, 5
      %v1067 = vor.u32 %v1063, %v1066
      %v1068 = vrot.slane %v1067, 4
      %v1070 = vshll.u32 %v908, 16
      %v1072 = vrot.slane %v1070, 5
      %v1073 = vsel %vm915, %v1068, %v1072
      %v1074 = vshrl.u32 %v908, 16
      %v1076 = vrot.slane %v1074, 4
      %v1077 = vor.u32 %v1076, %v1072
      %v1078 = vrot.slane %v1077, 4
      %v1080 = vshll.u32 %v909, 16
      %v1082 = vrot.slane %v1080, 5
      %v1083 = vsel %vm915, %v1078, %v1082
      %v1085 = vshrl.u32 %v910, 16
      %v1087 = vrot.slane %v1085, 4
      %v1088 = vshll.u32 %v910, 16
      %v1090 = vrot.slane %v1088, 5
      %v1091 = vor.u32 %v1087, %v1090
      %v1092 = vrot.slane %v1091, 4
      %v1094 = vshll.u32 %v911, 16
      %v1096 = vrot.slane %v1094, 5
      %v1097 = vsel %vm915, %v1092, %v1096
      %v1098 = vshrl.u32 %v911, 16
      %v1100 = vrot.slane %v1098, 4
      %v1101 = vor.u32 %v1100, %v1096
      %v1102 = vrot.slane %v1101, 4
      %v1104 = vshll.u32 %v912, 16
      %v1106 = vrot.slane %v1104, 5
      %v1107 = vsel %vm915, %v1102, %v1106
      %1108 = vrot.lane.b32.xlu0 %v929, 64
      %v1109 = vpop.permute.xlu0 %1108
      %1110 = vrot.lane.b32.xlu0 %v939, 64
      %v1111 = vpop.permute.xlu0 %1110
      %1112 = vrot.lane.b32.xlu0 %v953, 64
      %v1113 = vpop.permute.xlu0 %1112
      %1114 = vrot.lane.b32.xlu0 %v963, 64
      %v1115 = vpop.permute.xlu0 %1114
      %1116 = vrot.lane.b32.xlu0 %v977, 64
      %v1117 = vpop.permute.xlu0 %1116
      %1118 = vrot.lane.b32.xlu0 %v987, 64
      %v1119 = vpop.permute.xlu0 %1118
      %1120 = vrot.lane.b32.xlu0 %v1001, 64
      %v1121 = vpop.permute.xlu0 %1120
      %1122 = vrot.lane.b32.xlu0 %v1011, 64
      %v1123 = vpop.permute.xlu0 %1122
      %1124 = vrot.lane.b32.xlu0 %v1025, 64
      %v1125 = vpop.permute.xlu0 %1124
      %1126 = vrot.lane.b32.xlu0 %v1035, 64
      %v1127 = vpop.permute.xlu0 %1126
      %1128 = vrot.lane.b32.xlu0 %v1049, 64
      %v1129 = vpop.permute.xlu0 %1128
      %1130 = vrot.lane.b32.xlu0 %v1059, 64
      %v1131 = vpop.permute.xlu0 %1130
      %1132 = vrot.lane.b32.xlu0 %v1073, 64
      %v1133 = vpop.permute.xlu0 %1132
      %1134 = vrot.lane.b32.xlu0 %v1083, 64
      %v1135 = vpop.permute.xlu0 %1134
      %1136 = vrot.lane.b32.xlu0 %v1097, 64
      %v1137 = vpop.permute.xlu0 %1136
      %1138 = vrot.lane.b32.xlu0 %v1107, 64
      %v1139 = vpop.permute.xlu0 %1138
      %vm1156 = vcmask 1043968
      %1157 = vst.msk [vmem:[#allocation3] sm:$0xf] %vm1156, %v1109
      %1158 = vst.msk [vmem:[#allocation3 + $0x14] sm:$0xf] %vm1156, %v1111
      %1159 = vst.msk [vmem:[#allocation3 + $0x28] sm:$0xf] %vm1156, %v1113
      %1160 = vst.msk [vmem:[#allocation3 + $0x3c] sm:$0xf] %vm1156, %v1115
      %1161 = vst.msk [vmem:[#allocation3 + $0x50] sm:$0xf] %vm1156, %v1117
      %1162 = vst.msk [vmem:[#allocation3 + $0x64] sm:$0xf] %vm1156, %v1119
      %1163 = vst.msk [vmem:[#allocation3 + $0x78] sm:$0xf] %vm1156, %v1121
      %1164 = vst.msk [vmem:[#allocation3 + $0x8c] sm:$0xf] %vm1156, %v1123
      %1165 = vst.msk [vmem:[#allocation3 + $0xa0] sm:$0xf] %vm1156, %v1125
      %1166 = vst.msk [vmem:[#allocation3 + $0xb4] sm:$0xf] %vm1156, %v1127
      %1167 = vst.msk [vmem:[#allocation3 + $0xc8] sm:$0xf] %vm1156, %v1129
      %1168 = vst.msk [vmem:[#allocation3 + $0xdc] sm:$0xf] %vm1156, %v1131
      %1169 = vst.msk [vmem:[#allocation3 + $0xf0] sm:$0xf] %vm1156, %v1133
      %1170 = vst.msk [vmem:[#allocation3 + $0x104] sm:$0xf] %vm1156, %v1135
      %1171 = vst.msk [vmem:[#allocation3 + $0x118] sm:$0xf] %vm1156, %v1137
      %1172 = vst.msk [vmem:[#allocation3 + $0x12c] sm:$0xf] %vm1156, %v1139
      %v1173 = vld [vmem:[#allocation2] sm:$0xe]
      %v1174 = vld [vmem:[#allocation2 + $0x4] sm:$0xf]
      %v1175 = vld [vmem:[#allocation2 + $0x8] sm:$0x1]
      %v1176 = vld [vmem:[#allocation2 + $0xc] sm:$0xe]
      %v1177 = vld [vmem:[#allocation2 + $0x10] sm:$0xf]
      %v1178 = vld [vmem:[#allocation2 + $0x14] sm:$0x1]
      %v1179 = vld [vmem:[#allocation2 + $0x18] sm:$0xe]
      %v1180 = vld [vmem:[#allocation2 + $0x1c] sm:$0xf]
      %v1181 = vld [vmem:[#allocation2 + $0x20] sm:$0x1]
      %v1182 = vld [vmem:[#allocation2 + $0x24] sm:$0xe]
      %v1183 = vld [vmem:[#allocation2 + $0x28] sm:$0xf]
      %v1184 = vld [vmem:[#allocation2 + $0x2c] sm:$0x1]
      %v1185 = vld [vmem:[#allocation2 + $0x30] sm:$0xe]
      %v1186 = vld [vmem:[#allocation2 + $0x34] sm:$0xf]
      %v1187 = vld [vmem:[#allocation2 + $0x38] sm:$0x1]
      %v1188 = vld [vmem:[#allocation2 + $0x3c] sm:$0xe]
      %v1189 = vld [vmem:[#allocation2 + $0x40] sm:$0xf]
      %v1190 = vld [vmem:[#allocation2 + $0x44] sm:$0x1]
      %v1191 = vld [vmem:[#allocation2 + $0x48] sm:$0xe]
      %v1192 = vld [vmem:[#allocation2 + $0x4c] sm:$0xf]
      %v1193 = vld [vmem:[#allocation2 + $0x50] sm:$0x1]
      %v1194 = vld [vmem:[#allocation2 + $0x54] sm:$0xe]
      %v1195 = vld [vmem:[#allocation2 + $0x58] sm:$0xf]
      %v1196 = vld [vmem:[#allocation2 + $0x5c] sm:$0x1]
      %vm1221 = vcmask 1042432
      %vm1222 = vcmask 1046532
      %vm1223 = vmor %vm1221, %vm1222
      %v1224 = vrot.slane %v1173, 5
      %v1225 = vrot.slane %v1224, 4
      %v1226 = vrot.slane %v1174, 5
      %v1227 = vsel %vm1223, %v1225, %v1226
      %v1228 = vrot.slane %v1226, 4
      %v1229 = vrot.slane %v1175, 5
      %v1230 = vsel %vm1223, %v1228, %v1229
      %v1231 = vrot.slane %v1176, 5
      %v1232 = vrot.slane %v1231, 4
      %v1233 = vrot.slane %v1177, 5
      %v1234 = vsel %vm1223, %v1232, %v1233
      %v1235 = vrot.slane %v1233, 4
      %v1236 = vrot.slane %v1178, 5
      %v1237 = vsel %vm1223, %v1235, %v1236
      %v1238 = vrot.slane %v1179, 5
      %v1239 = vrot.slane %v1238, 4
      %v1240 = vrot.slane %v1180, 5
      %v1241 = vsel %vm1223, %v1239, %v1240
      %v1242 = vrot.slane %v1240, 4
      %v1243 = vrot.slane %v1181, 5
      %v1244 = vsel %vm1223, %v1242, %v1243
      %v1245 = vrot.slane %v1182, 5
      %v1246 = vrot.slane %v1245, 4
      %v1247 = vrot.slane %v1183, 5
      %v1248 = vsel %vm1223, %v1246, %v1247
      %v1249 = vrot.slane %v1247, 4
      %v1250 = vrot.slane %v1184, 5
      %v1251 = vsel %vm1223, %v1249, %v1250
      %v1252 = vrot.slane %v1185, 5
      %v1253 = vrot.slane %v1252, 4
      %v1254 = vrot.slane %v1186, 5
      %v1255 = vsel %vm1223, %v1253, %v1254
      %v1256 = vrot.slane %v1254, 4
      %v1257 = vrot.slane %v1187, 5
      %v1258 = vsel %vm1223, %v1256, %v1257
      %v1259 = vrot.slane %v1188, 5
      %v1260 = vrot.slane %v1259, 4
      %v1261 = vrot.slane %v1189, 5
      %v1262 = vsel %vm1223, %v1260, %v1261
      %v1263 = vrot.slane %v1261, 4
      %v1264 = vrot.slane %v1190, 5
      %v1265 = vsel %vm1223, %v1263, %v1264
      %v1266 = vrot.slane %v1191, 5
      %v1267 = vrot.slane %v1266, 4
      %v1268 = vrot.slane %v1192, 5
      %v1269 = vsel %vm1223, %v1267, %v1268
      %v1270 = vrot.slane %v1268, 4
      %v1271 = vrot.slane %v1193, 5
      %v1272 = vsel %vm1223, %v1270, %v1271
      %v1273 = vrot.slane %v1194, 5
      %v1274 = vrot.slane %v1273, 4
      %v1275 = vrot.slane %v1195, 5
      %v1276 = vsel %vm1223, %v1274, %v1275
      %v1277 = vrot.slane %v1275, 4
      %v1278 = vrot.slane %v1196, 5
      %v1279 = vsel %vm1223, %v1277, %v1278
      %1296 = vst.msk [vmem:[#allocation3 + $0x4] sm:$0xf] %vm456, %v1227
      %1297 = vst.msk [vmem:[#allocation3 + $0x18] sm:$0xf] %vm456, %v1230
      %1298 = vst.msk [vmem:[#allocation3 + $0x2c] sm:$0xf] %vm456, %v1234
      %1299 = vst.msk [vmem:[#allocation3 + $0x40] sm:$0xf] %vm456, %v1237
      %1300 = vst.msk [vmem:[#allocation3 + $0x54] sm:$0xf] %vm456, %v1241
      %1301 = vst.msk [vmem:[#allocation3 + $0x68] sm:$0xf] %vm456, %v1244
      %1302 = vst.msk [vmem:[#allocation3 + $0x7c] sm:$0xf] %vm456, %v1248
      %1303 = vst.msk [vmem:[#allocation3 + $0x90] sm:$0xf] %vm456, %v1251
      %1304 = vst.msk [vmem:[#allocation3 + $0xa4] sm:$0xf] %vm456, %v1255
      %1305 = vst.msk [vmem:[#allocation3 + $0xb8] sm:$0xf] %vm456, %v1258
      %1306 = vst.msk [vmem:[#allocation3 + $0xcc] sm:$0xf] %vm456, %v1262
      %1307 = vst.msk [vmem:[#allocation3 + $0xe0] sm:$0xf] %vm456, %v1265
      %1308 = vst.msk [vmem:[#allocation3 + $0xf4] sm:$0xf] %vm456, %v1269
      %1309 = vst.msk [vmem:[#allocation3 + $0x108] sm:$0xf] %vm456, %v1272
      %1310 = vst.msk [vmem:[#allocation3 + $0x11c] sm:$0xf] %vm456, %v1276
      %1311 = vst.msk [vmem:[#allocation3 + $0x130] sm:$0xf] %vm456, %v1279
      %v1312 = vld [vmem:[%s715] sm:$0xf]
      %v1313 = vld [vmem:[%s715 + $0x4] sm:$0xf]
      %v1314 = vld [vmem:[%s715 + $0xc] sm:$0xf]
      %v1315 = vld [vmem:[%s715 + $0x10] sm:$0xf]
      %v1316 = vld [vmem:[%s715 + $0x18] sm:$0xf]
      %v1317 = vld [vmem:[%s715 + $0x1c] sm:$0xf]
      %v1318 = vld [vmem:[%s715 + $0x24] sm:$0xf]
      %v1319 = vld [vmem:[%s715 + $0x28] sm:$0xf]
      %v1320 = vld [vmem:[%s715 + $0x30] sm:$0xf]
      %v1321 = vld [vmem:[%s715 + $0x34] sm:$0xf]
      %v1322 = vld [vmem:[%s715 + $0x3c] sm:$0xf]
      %v1323 = vld [vmem:[%s715 + $0x40] sm:$0xf]
      %v1324 = vld [vmem:[%s715 + $0x48] sm:$0xf]
      %v1325 = vld [vmem:[%s715 + $0x4c] sm:$0xf]
      %v1326 = vld [vmem:[%s715 + $0x54] sm:$0xf]
      %v1327 = vld [vmem:[%s715 + $0x58] sm:$0xf]
      %1344 = vrot.lane.b32.xlu0 %v1312, 64
      %v1345 = vpop.permute.xlu0 %1344
      %1346 = vrot.lane.b32.xlu0 %v1313, 64
      %v1347 = vpop.permute.xlu0 %1346
      %1348 = vrot.lane.b32.xlu0 %v1314, 64
      %v1349 = vpop.permute.xlu0 %1348
      %1350 = vrot.lane.b32.xlu0 %v1315, 64
      %v1351 = vpop.permute.xlu0 %1350
      %1352 = vrot.lane.b32.xlu0 %v1316, 64
      %v1353 = vpop.permute.xlu0 %1352
      %1354 = vrot.lane.b32.xlu0 %v1317, 64
      %v1355 = vpop.permute.xlu0 %1354
      %1356 = vrot.lane.b32.xlu0 %v1318, 64
      %v1357 = vpop.permute.xlu0 %1356
      %1358 = vrot.lane.b32.xlu0 %v1319, 64
      %v1359 = vpop.permute.xlu0 %1358
      %1360 = vrot.lane.b32.xlu0 %v1320, 64
      %v1361 = vpop.permute.xlu0 %1360
      %1362 = vrot.lane.b32.xlu0 %v1321, 64
      %v1363 = vpop.permute.xlu0 %1362
      %1364 = vrot.lane.b32.xlu0 %v1322, 64
      %v1365 = vpop.permute.xlu0 %1364
      %1366 = vrot.lane.b32.xlu0 %v1323, 64
      %v1367 = vpop.permute.xlu0 %1366
      %1368 = vrot.lane.b32.xlu0 %v1324, 64
      %v1369 = vpop.permute.xlu0 %1368
      %1370 = vrot.lane.b32.xlu0 %v1325, 64
      %v1371 = vpop.permute.xlu0 %1370
      %1372 = vrot.lane.b32.xlu0 %v1326, 64
      %v1373 = vpop.permute.xlu0 %1372
      %1374 = vrot.lane.b32.xlu0 %v1327, 64
      %v1375 = vpop.permute.xlu0 %1374
      %1392 = vst.msk [vmem:[#allocation3 + $0x4] sm:$0xf] %vm1156, %v1345
      %1393 = vst.msk [vmem:[#allocation3 + $0x18] sm:$0xf] %vm1156, %v1347
      %1394 = vst.msk [vmem:[#allocation3 + $0x2c] sm:$0xf] %vm1156, %v1349
      %1395 = vst.msk [vmem:[#allocation3 + $0x40] sm:$0xf] %vm1156, %v1351
      %1396 = vst.msk [vmem:[#allocation3 + $0x54] sm:$0xf] %vm1156, %v1353
      %1397 = vst.msk [vmem:[#allocation3 + $0x68] sm:$0xf] %vm1156, %v1355
      %1398 = vst.msk [vmem:[#allocation3 + $0x7c] sm:$0xf] %vm1156, %v1357
      %1399 = vst.msk [vmem:[#allocation3 + $0x90] sm:$0xf] %vm1156, %v1359
      %1400 = vst.msk [vmem:[#allocation3 + $0xa4] sm:$0xf] %vm1156, %v1361
      %1401 = vst.msk [vmem:[#allocation3 + $0xb8] sm:$0xf] %vm1156, %v1363
      %1402 = vst.msk [vmem:[#allocation3 + $0xcc] sm:$0xf] %vm1156, %v1365
      %1403 = vst.msk [vmem:[#allocation3 + $0xe0] sm:$0xf] %vm1156, %v1367
      %1404 = vst.msk [vmem:[#allocation3 + $0xf4] sm:$0xf] %vm1156, %v1369
      %1405 = vst.msk [vmem:[#allocation3 + $0x108] sm:$0xf] %vm1156, %v1371
      %1406 = vst.msk [vmem:[#allocation3 + $0x11c] sm:$0xf] %vm1156, %v1373
      %1407 = vst.msk [vmem:[#allocation3 + $0x130] sm:$0xf] %vm1156, %v1375
      %v1408 = vld [vmem:[%s715] sm:$0xf]
      %v1409 = vld [vmem:[%s715 + $0x4] sm:$0xf]
      %v1410 = vld [vmem:[%s715 + $0x8] sm:$0x1]
      %v1411 = vld [vmem:[%s715 + $0xc] sm:$0xf]
      %v1412 = vld [vmem:[%s715 + $0x10] sm:$0xf]
      %v1413 = vld [vmem:[%s715 + $0x14] sm:$0x1]
      %v1414 = vld [vmem:[%s715 + $0x18] sm:$0xf]
      %v1415 = vld [vmem:[%s715 + $0x1c] sm:$0xf]
      %v1416 = vld [vmem:[%s715 + $0x20] sm:$0x1]
      %v1417 = vld [vmem:[%s715 + $0x24] sm:$0xf]
      %v1418 = vld [vmem:[%s715 + $0x28] sm:$0xf]
      %v1419 = vld [vmem:[%s715 + $0x2c] sm:$0x1]
      %v1420 = vld [vmem:[%s715 + $0x30] sm:$0xf]
      %v1421 = vld [vmem:[%s715 + $0x34] sm:$0xf]
      %v1422 = vld [vmem:[%s715 + $0x38] sm:$0x1]
      %v1423 = vld [vmem:[%s715 + $0x3c] sm:$0xf]
      %v1424 = vld [vmem:[%s715 + $0x40] sm:$0xf]
      %v1425 = vld [vmem:[%s715 + $0x44] sm:$0x1]
      %v1426 = vld [vmem:[%s715 + $0x48] sm:$0xf]
      %v1427 = vld [vmem:[%s715 + $0x4c] sm:$0xf]
      %v1428 = vld [vmem:[%s715 + $0x50] sm:$0x1]
      %v1429 = vld [vmem:[%s715 + $0x54] sm:$0xf]
      %v1430 = vld [vmem:[%s715 + $0x58] sm:$0xf]
      %v1431 = vld [vmem:[%s715 + $0x5c] sm:$0x1]
      %v1433 = vshrl.u32 %v1408, 16
      %v1435 = vrot.slane %v1433, 4
      %v1436 = vshll.u32 %v1408, 16
      %v1438 = vrot.slane %v1436, 5
      %v1439 = vor.u32 %v1435, %v1438
      %v1440 = vrot.slane %v1439, 4
      %v1442 = vshll.u32 %v1409, 16
      %v1444 = vrot.slane %v1442, 5
      %v1445 = vsel %vm915, %v1440, %v1444
      %v1446 = vshrl.u32 %v1409, 16
      %v1448 = vrot.slane %v1446, 4
      %v1449 = vor.u32 %v1448, %v1444
      %v1450 = vrot.slane %v1449, 4
      %v1452 = vshll.u32 %v1410, 16
      %v1454 = vrot.slane %v1452, 5
      %v1455 = vsel %vm915, %v1450, %v1454
      %v1457 = vshrl.u32 %v1411, 16
      %v1459 = vrot.slane %v1457, 4
      %v1460 = vshll.u32 %v1411, 16
      %v1462 = vrot.slane %v1460, 5
      %v1463 = vor.u32 %v1459, %v1462
      %v1464 = vrot.slane %v1463, 4
      %v1466 = vshll.u32 %v1412, 16
      %v1468 = vrot.slane %v1466, 5
      %v1469 = vsel %vm915, %v1464, %v1468
      %v1470 = vshrl.u32 %v1412, 16
      %v1472 = vrot.slane %v1470, 4
      %v1473 = vor.u32 %v1472, %v1468
      %v1474 = vrot.slane %v1473, 4
      %v1476 = vshll.u32 %v1413, 16
      %v1478 = vrot.slane %v1476, 5
      %v1479 = vsel %vm915, %v1474, %v1478
      %v1481 = vshrl.u32 %v1414, 16
      %v1483 = vrot.slane %v1481, 4
      %v1484 = vshll.u32 %v1414, 16
      %v1486 = vrot.slane %v1484, 5
      %v1487 = vor.u32 %v1483, %v1486
      %v1488 = vrot.slane %v1487, 4
      %v1490 = vshll.u32 %v1415, 16
      %v1492 = vrot.slane %v1490, 5
      %v1493 = vsel %vm915, %v1488, %v1492
      %v1494 = vshrl.u32 %v1415, 16
      %v1496 = vrot.slane %v1494, 4
      %v1497 = vor.u32 %v1496, %v1492
      %v1498 = vrot.slane %v1497, 4
      %v1500 = vshll.u32 %v1416, 16
      %v1502 = vrot.slane %v1500, 5
      %v1503 = vsel %vm915, %v1498, %v1502
      %v1505 = vshrl.u32 %v1417, 16
      %v1507 = vrot.slane %v1505, 4
      %v1508 = vshll.u32 %v1417, 16
      %v1510 = vrot.slane %v1508, 5
      %v1511 = vor.u32 %v1507, %v1510
      %v1512 = vrot.slane %v1511, 4
      %v1514 = vshll.u32 %v1418, 16
      %v1516 = vrot.slane %v1514, 5
      %v1517 = vsel %vm915, %v1512, %v1516
      %v1518 = vshrl.u32 %v1418, 16
      %v1520 = vrot.slane %v1518, 4
      %v1521 = vor.u32 %v1520, %v1516
      %v1522 = vrot.slane %v1521, 4
      %v1524 = vshll.u32 %v1419, 16
      %v1526 = vrot.slane %v1524, 5
      %v1527 = vsel %vm915, %v1522, %v1526
      %v1529 = vshrl.u32 %v1420, 16
      %v1531 = vrot.slane %v1529, 4
      %v1532 = vshll.u32 %v1420, 16
      %v1534 = vrot.slane %v1532, 5
      %v1535 = vor.u32 %v1531, %v1534
      %v1536 = vrot.slane %v1535, 4
      %v1538 = vshll.u32 %v1421, 16
      %v1540 = vrot.slane %v1538, 5
      %v1541 = vsel %vm915, %v1536, %v1540
      %v1542 = vshrl.u32 %v1421, 16
      %v1544 = vrot.slane %v1542, 4
      %v1545 = vor.u32 %v1544, %v1540
      %v1546 = vrot.slane %v1545, 4
      %v1548 = vshll.u32 %v1422, 16
      %v1550 = vrot.slane %v1548, 5
      %v1551 = vsel %vm915, %v1546, %v1550
      %v1553 = vshrl.u32 %v1423, 16
      %v1555 = vrot.slane %v1553, 4
      %v1556 = vshll.u32 %v1423, 16
      %v1558 = vrot.slane %v1556, 5
      %v1559 = vor.u32 %v1555, %v1558
      %v1560 = vrot.slane %v1559, 4
      %v1562 = vshll.u32 %v1424, 16
      %v1564 = vrot.slane %v1562, 5
      %v1565 = vsel %vm915, %v1560, %v1564
      %v1566 = vshrl.u32 %v1424, 16
      %v1568 = vrot.slane %v1566, 4
      %v1569 = vor.u32 %v1568, %v1564
      %v1570 = vrot.slane %v1569, 4
      %v1572 = vshll.u32 %v1425, 16
      %v1574 = vrot.slane %v1572, 5
      %v1575 = vsel %vm915, %v1570, %v1574
      %v1577 = vshrl.u32 %v1426, 16
      %v1579 = vrot.slane %v1577, 4
      %v1580 = vshll.u32 %v1426, 16
      %v1582 = vrot.slane %v1580, 5
      %v1583 = vor.u32 %v1579, %v1582
      %v1584 = vrot.slane %v1583, 4
      %v1586 = vshll.u32 %v1427, 16
      %v1588 = vrot.slane %v1586, 5
      %v1589 = vsel %vm915, %v1584, %v1588
      %v1590 = vshrl.u32 %v1427, 16
      %v1592 = vrot.slane %v1590, 4
      %v1593 = vor.u32 %v1592, %v1588
      %v1594 = vrot.slane %v1593, 4
      %v1596 = vshll.u32 %v1428, 16
      %v1598 = vrot.slane %v1596, 5
      %v1599 = vsel %vm915, %v1594, %v1598
      %v1601 = vshrl.u32 %v1429, 16
      %v1603 = vrot.slane %v1601, 4
      %v1604 = vshll.u32 %v1429, 16
      %v1606 = vrot.slane %v1604, 5
      %v1607 = vor.u32 %v1603, %v1606
      %v1608 = vrot.slane %v1607, 4
      %v1610 = vshll.u32 %v1430, 16
      %v1612 = vrot.slane %v1610, 5
      %v1613 = vsel %vm915, %v1608, %v1612
      %v1614 = vshrl.u32 %v1430, 16
      %v1616 = vrot.slane %v1614, 4
      %v1617 = vor.u32 %v1616, %v1612
      %v1618 = vrot.slane %v1617, 4
      %v1620 = vshll.u32 %v1431, 16
      %v1622 = vrot.slane %v1620, 5
      %v1623 = vsel %vm915, %v1618, %v1622
      %1640 = vst.msk [vmem:[#allocation3 + $0x8] sm:$0xf] %vm456, %v1445
      %1641 = vst.msk [vmem:[#allocation3 + $0x1c] sm:$0xf] %vm456, %v1455
      %1642 = vst.msk [vmem:[#allocation3 + $0x30] sm:$0xf] %vm456, %v1469
      %1643 = vst.msk [vmem:[#allocation3 + $0x44] sm:$0xf] %vm456, %v1479
      %1644 = vst.msk [vmem:[#allocation3 + $0x58] sm:$0xf] %vm456, %v1493
      %1645 = vst.msk [vmem:[#allocation3 + $0x6c] sm:$0xf] %vm456, %v1503
      %1646 = vst.msk [vmem:[#allocation3 + $0x80] sm:$0xf] %vm456, %v1517
      %1647 = vst.msk [vmem:[#allocation3 + $0x94] sm:$0xf] %vm456, %v1527
      %1648 = vst.msk [vmem:[#allocation3 + $0xa8] sm:$0xf] %vm456, %v1541
      %1649 = vst.msk [vmem:[#allocation3 + $0xbc] sm:$0xf] %vm456, %v1551
      %1650 = vst.msk [vmem:[#allocation3 + $0xd0] sm:$0xf] %vm456, %v1565
      %1651 = vst.msk [vmem:[#allocation3 + $0xe4] sm:$0xf] %vm456, %v1575
      %1652 = vst.msk [vmem:[#allocation3 + $0xf8] sm:$0xf] %vm456, %v1589
      %1653 = vst.msk [vmem:[#allocation3 + $0x10c] sm:$0xf] %vm456, %v1599
      %1654 = vst.msk [vmem:[#allocation3 + $0x120] sm:$0xf] %vm456, %v1613
      %1655 = vst.msk [vmem:[#allocation3 + $0x134] sm:$0xf] %vm456, %v1623
      %v1656 = vld [vmem:[%s715] sm:$0xe]
      %v1657 = vld [vmem:[%s715 + $0x4] sm:$0xf]
      %v1658 = vld [vmem:[%s715 + $0x8] sm:$0x1]
      %v1659 = vld [vmem:[%s715 + $0xc] sm:$0xe]
      %v1660 = vld [vmem:[%s715 + $0x10] sm:$0xf]
      %v1661 = vld [vmem:[%s715 + $0x14] sm:$0x1]
      %v1662 = vld [vmem:[%s715 + $0x18] sm:$0xe]
      %v1663 = vld [vmem:[%s715 + $0x1c] sm:$0xf]
      %v1664 = vld [vmem:[%s715 + $0x20] sm:$0x1]
      %v1665 = vld [vmem:[%s715 + $0x24] sm:$0xe]
      %v1666 = vld [vmem:[%s715 + $0x28] sm:$0xf]
      %v1667 = vld [vmem:[%s715 + $0x2c] sm:$0x1]
      %v1668 = vld [vmem:[%s715 + $0x30] sm:$0xe]
      %v1669 = vld [vmem:[%s715 + $0x34] sm:$0xf]
      %v1670 = vld [vmem:[%s715 + $0x38] sm:$0x1]
      %v1671 = vld [vmem:[%s715 + $0x3c] sm:$0xe]
      %v1672 = vld [vmem:[%s715 + $0x40] sm:$0xf]
      %v1673 = vld [vmem:[%s715 + $0x44] sm:$0x1]
      %v1674 = vld [vmem:[%s715 + $0x48] sm:$0xe]
      %v1675 = vld [vmem:[%s715 + $0x4c] sm:$0xf]
      %v1676 = vld [vmem:[%s715 + $0x50] sm:$0x1]
      %v1677 = vld [vmem:[%s715 + $0x54] sm:$0xe]
      %v1678 = vld [vmem:[%s715 + $0x58] sm:$0xf]
      %v1679 = vld [vmem:[%s715 + $0x5c] sm:$0x1]
      %v1704 = vrot.slane %v1656, 5
      %v1705 = vrot.slane %v1704, 4
      %v1706 = vrot.slane %v1657, 5
      %v1707 = vsel %vm1223, %v1705, %v1706
      %v1708 = vrot.slane %v1706, 4
      %v1709 = vrot.slane %v1658, 5
      %v1710 = vsel %vm1223, %v1708, %v1709
      %v1711 = vrot.slane %v1659, 5
      %v1712 = vrot.slane %v1711, 4
      %v1713 = vrot.slane %v1660, 5
      %v1714 = vsel %vm1223, %v1712, %v1713
      %v1715 = vrot.slane %v1713, 4
      %v1716 = vrot.slane %v1661, 5
      %v1717 = vsel %vm1223, %v1715, %v1716
      %v1718 = vrot.slane %v1662, 5
      %v1719 = vrot.slane %v1718, 4
      %v1720 = vrot.slane %v1663, 5
      %v1721 = vsel %vm1223, %v1719, %v1720
      %v1722 = vrot.slane %v1720, 4
      %v1723 = vrot.slane %v1664, 5
      %v1724 = vsel %vm1223, %v1722, %v1723
      %v1725 = vrot.slane %v1665, 5
      %v1726 = vrot.slane %v1725, 4
      %v1727 = vrot.slane %v1666, 5
      %v1728 = vsel %vm1223, %v1726, %v1727
      %v1729 = vrot.slane %v1727, 4
      %v1730 = vrot.slane %v1667, 5
      %v1731 = vsel %vm1223, %v1729, %v1730
      %v1732 = vrot.slane %v1668, 5
      %v1733 = vrot.slane %v1732, 4
      %v1734 = vrot.slane %v1669, 5
      %v1735 = vsel %vm1223, %v1733, %v1734
      %v1736 = vrot.slane %v1734, 4
      %v1737 = vrot.slane %v1670, 5
      %v1738 = vsel %vm1223, %v1736, %v1737
      %v1739 = vrot.slane %v1671, 5
      %v1740 = vrot.slane %v1739, 4
      %v1741 = vrot.slane %v1672, 5
      %v1742 = vsel %vm1223, %v1740, %v1741
      %v1743 = vrot.slane %v1741, 4
      %v1744 = vrot.slane %v1673, 5
      %v1745 = vsel %vm1223, %v1743, %v1744
      %v1746 = vrot.slane %v1674, 5
      %v1747 = vrot.slane %v1746, 4
      %v1748 = vrot.slane %v1675, 5
      %v1749 = vsel %vm1223, %v1747, %v1748
      %v1750 = vrot.slane %v1748, 4
      %v1751 = vrot.slane %v1676, 5
      %v1752 = vsel %vm1223, %v1750, %v1751
      %v1753 = vrot.slane %v1677, 5
      %v1754 = vrot.slane %v1753, 4
      %v1755 = vrot.slane %v1678, 5
      %v1756 = vsel %vm1223, %v1754, %v1755
      %v1757 = vrot.slane %v1755, 4
      %v1758 = vrot.slane %v1679, 5
      %v1759 = vsel %vm1223, %v1757, %v1758
      %1760 = vrot.lane.b32.xlu0 %v1707, 64
      %v1761 = vpop.permute.xlu0 %1760
      %1762 = vrot.lane.b32.xlu0 %v1710, 64
      %v1763 = vpop.permute.xlu0 %1762
      %1764 = vrot.lane.b32.xlu0 %v1714, 64
      %v1765 = vpop.permute.xlu0 %1764
      %1766 = vrot.lane.b32.xlu0 %v1717, 64
      %v1767 = vpop.permute.xlu0 %1766
      %1768 = vrot.lane.b32.xlu0 %v1721, 64
      %v1769 = vpop.permute.xlu0 %1768
      %1770 = vrot.lane.b32.xlu0 %v1724, 64
      %v1771 = vpop.permute.xlu0 %1770
      %1772 = vrot.lane.b32.xlu0 %v1728, 64
      %v1773 = vpop.permute.xlu0 %1772
      %1774 = vrot.lane.b32.xlu0 %v1731, 64
      %v1775 = vpop.permute.xlu0 %1774
      %1776 = vrot.lane.b32.xlu0 %v1735, 64
      %v1777 = vpop.permute.xlu0 %1776
      %1778 = vrot.lane.b32.xlu0 %v1738, 64
      %v1779 = vpop.permute.xlu0 %1778
      %1780 = vrot.lane.b32.xlu0 %v1742, 64
      %v1781 = vpop.permute.xlu0 %1780
      %1782 = vrot.lane.b32.xlu0 %v1745, 64
      %v1783 = vpop.permute.xlu0 %1782
      %1784 = vrot.lane.b32.xlu0 %v1749, 64
      %v1785 = vpop.permute.xlu0 %1784
      %1786 = vrot.lane.b32.xlu0 %v1752, 64
      %v1787 = vpop.permute.xlu0 %1786
      %1788 = vrot.lane.b32.xlu0 %v1756, 64
      %v1789 = vpop.permute.xlu0 %1788
      %1790 = vrot.lane.b32.xlu0 %v1759, 64
      %v1791 = vpop.permute.xlu0 %1790
      %1808 = vst.msk [vmem:[#allocation3 + $0x8] sm:$0xf] %vm1156, %v1761
      %1809 = vst.msk [vmem:[#allocation3 + $0x1c] sm:$0xf] %vm1156, %v1763
      %1810 = vst.msk [vmem:[#allocation3 + $0x30] sm:$0xf] %vm1156, %v1765
      %1811 = vst.msk [vmem:[#allocation3 + $0x44] sm:$0xf] %vm1156, %v1767
      %1812 = vst.msk [vmem:[#allocation3 + $0x58] sm:$0xf] %vm1156, %v1769
      %1813 = vst.msk [vmem:[#allocation3 + $0x6c] sm:$0xf] %vm1156, %v1771
      %1814 = vst.msk [vmem:[#allocation3 + $0x80] sm:$0xf] %vm1156, %v1773
      %1815 = vst.msk [vmem:[#allocation3 + $0x94] sm:$0xf] %vm1156, %v1775
      %1816 = vst.msk [vmem:[#allocation3 + $0xa8] sm:$0xf] %vm1156, %v1777
      %1817 = vst.msk [vmem:[#allocation3 + $0xbc] sm:$0xf] %vm1156, %v1779
      %1818 = vst.msk [vmem:[#allocation3 + $0xd0] sm:$0xf] %vm1156, %v1781
      %1819 = vst.msk [vmem:[#allocation3 + $0xe4] sm:$0xf] %vm1156, %v1783
      %1820 = vst.msk [vmem:[#allocation3 + $0xf8] sm:$0xf] %vm1156, %v1785
      %1821 = vst.msk [vmem:[#allocation3 + $0x10c] sm:$0xf] %vm1156, %v1787
      %1822 = vst.msk [vmem:[#allocation3 + $0x120] sm:$0xf] %vm1156, %v1789
      %1823 = vst.msk [vmem:[#allocation3 + $0x134] sm:$0xf] %vm1156, %v1791
      %s1824 = scalar_lea.vmem [#allocation2], 24
      %v1825 = vld [vmem:[%s1824] sm:$0xf]
      %v1826 = vld [vmem:[%s1824 + $0x4] sm:$0xf]
      %v1827 = vld [vmem:[%s1824 + $0xc] sm:$0xf]
      %v1828 = vld [vmem:[%s1824 + $0x10] sm:$0xf]
      %v1829 = vld [vmem:[%s1824 + $0x18] sm:$0xf]
      %v1830 = vld [vmem:[%s1824 + $0x1c] sm:$0xf]
      %v1831 = vld [vmem:[%s1824 + $0x24] sm:$0xf]
      %v1832 = vld [vmem:[%s1824 + $0x28] sm:$0xf]
      %v1833 = vld [vmem:[%s1824 + $0x30] sm:$0xf]
      %v1834 = vld [vmem:[%s1824 + $0x34] sm:$0xf]
      %v1835 = vld [vmem:[%s1824 + $0x3c] sm:$0xf]
      %v1836 = vld [vmem:[%s1824 + $0x40] sm:$0xf]
      %v1837 = vld [vmem:[%s1824 + $0x48] sm:$0xf]
      %v1838 = vld [vmem:[%s1824 + $0x4c] sm:$0xf]
      %v1839 = vld [vmem:[%s1824 + $0x54] sm:$0xf]
      %v1840 = vld [vmem:[%s1824 + $0x58] sm:$0xf]
      %1841 = vst.msk [vmem:[#allocation3 + $0xc] sm:$0xf] %vm456, %v1825
      %1842 = vst.msk [vmem:[#allocation3 + $0x20] sm:$0xf] %vm456, %v1826
      %1843 = vst.msk [vmem:[#allocation3 + $0x34] sm:$0xf] %vm456, %v1827
      %1844 = vst.msk [vmem:[#allocation3 + $0x48] sm:$0xf] %vm456, %v1828
      %1845 = vst.msk [vmem:[#allocation3 + $0x5c] sm:$0xf] %vm456, %v1829
      %1846 = vst.msk [vmem:[#allocation3 + $0x70] sm:$0xf] %vm456, %v1830
      %1847 = vst.msk [vmem:[#allocation3 + $0x84] sm:$0xf] %vm456, %v1831
      %1848 = vst.msk [vmem:[#allocation3 + $0x98] sm:$0xf] %vm456, %v1832
      %1849 = vst.msk [vmem:[#allocation3 + $0xac] sm:$0xf] %vm456, %v1833
      %1850 = vst.msk [vmem:[#allocation3 + $0xc0] sm:$0xf] %vm456, %v1834
      %1851 = vst.msk [vmem:[#allocation3 + $0xd4] sm:$0xf] %vm456, %v1835
      %1852 = vst.msk [vmem:[#allocation3 + $0xe8] sm:$0xf] %vm456, %v1836
      %1853 = vst.msk [vmem:[#allocation3 + $0xfc] sm:$0xf] %vm456, %v1837
      %1854 = vst.msk [vmem:[#allocation3 + $0x110] sm:$0xf] %vm456, %v1838
      %1855 = vst.msk [vmem:[#allocation3 + $0x124] sm:$0xf] %vm456, %v1839
      %1856 = vst.msk [vmem:[#allocation3 + $0x138] sm:$0xf] %vm456, %v1840
      %v1857 = vld [vmem:[%s1824] sm:$0xf]
      %v1858 = vld [vmem:[%s1824 + $0x4] sm:$0xf]
      %v1859 = vld [vmem:[%s1824 + $0x8] sm:$0x1]
      %v1860 = vld [vmem:[%s1824 + $0xc] sm:$0xf]
      %v1861 = vld [vmem:[%s1824 + $0x10] sm:$0xf]
      %v1862 = vld [vmem:[%s1824 + $0x14] sm:$0x1]
      %v1863 = vld [vmem:[%s1824 + $0x18] sm:$0xf]
      %v1864 = vld [vmem:[%s1824 + $0x1c] sm:$0xf]
      %v1865 = vld [vmem:[%s1824 + $0x20] sm:$0x1]
      %v1866 = vld [vmem:[%s1824 + $0x24] sm:$0xf]
      %v1867 = vld [vmem:[%s1824 + $0x28] sm:$0xf]
      %v1868 = vld [vmem:[%s1824 + $0x2c] sm:$0x1]
      %v1869 = vld [vmem:[%s1824 + $0x30] sm:$0xf]
      %v1870 = vld [vmem:[%s1824 + $0x34] sm:$0xf]
      %v1871 = vld [vmem:[%s1824 + $0x38] sm:$0x1]
      %v1872 = vld [vmem:[%s1824 + $0x3c] sm:$0xf]
      %v1873 = vld [vmem:[%s1824 + $0x40] sm:$0xf]
      %v1874 = vld [vmem:[%s1824 + $0x44] sm:$0x1]
      %v1875 = vld [vmem:[%s1824 + $0x48] sm:$0xf]
      %v1876 = vld [vmem:[%s1824 + $0x4c] sm:$0xf]
      %v1877 = vld [vmem:[%s1824 + $0x50] sm:$0x1]
      %v1878 = vld [vmem:[%s1824 + $0x54] sm:$0xf]
      %v1879 = vld [vmem:[%s1824 + $0x58] sm:$0xf]
      %v1880 = vld [vmem:[%s1824 + $0x5c] sm:$0x1]
      %v1882 = vshrl.u32 %v1857, 16
      %v1884 = vrot.slane %v1882, 4
      %v1885 = vshll.u32 %v1857, 16
      %v1887 = vrot.slane %v1885, 5
      %v1888 = vor.u32 %v1884, %v1887
      %v1889 = vrot.slane %v1888, 4
      %v1891 = vshll.u32 %v1858, 16
      %v1893 = vrot.slane %v1891, 5
      %v1894 = vsel %vm915, %v1889, %v1893
      %v1895 = vshrl.u32 %v1858, 16
      %v1897 = vrot.slane %v1895, 4
      %v1898 = vor.u32 %v1897, %v1893
      %v1899 = vrot.slane %v1898, 4
      %v1901 = vshll.u32 %v1859, 16
      %v1903 = vrot.slane %v1901, 5
      %v1904 = vsel %vm915, %v1899, %v1903
      %v1906 = vshrl.u32 %v1860, 16
      %v1908 = vrot.slane %v1906, 4
      %v1909 = vshll.u32 %v1860, 16
      %v1911 = vrot.slane %v1909, 5
      %v1912 = vor.u32 %v1908, %v1911
      %v1913 = vrot.slane %v1912, 4
      %v1915 = vshll.u32 %v1861, 16
      %v1917 = vrot.slane %v1915, 5
      %v1918 = vsel %vm915, %v1913, %v1917
      %v1919 = vshrl.u32 %v1861, 16
      %v1921 = vrot.slane %v1919, 4
      %v1922 = vor.u32 %v1921, %v1917
      %v1923 = vrot.slane %v1922, 4
      %v1925 = vshll.u32 %v1862, 16
      %v1927 = vrot.slane %v1925, 5
      %v1928 = vsel %vm915, %v1923, %v1927
      %v1930 = vshrl.u32 %v1863, 16
      %v1932 = vrot.slane %v1930, 4
      %v1933 = vshll.u32 %v1863, 16
      %v1935 = vrot.slane %v1933, 5
      %v1936 = vor.u32 %v1932, %v1935
      %v1937 = vrot.slane %v1936, 4
      %v1939 = vshll.u32 %v1864, 16
      %v1941 = vrot.slane %v1939, 5
      %v1942 = vsel %vm915, %v1937, %v1941
      %v1943 = vshrl.u32 %v1864, 16
      %v1945 = vrot.slane %v1943, 4
      %v1946 = vor.u32 %v1945, %v1941
      %v1947 = vrot.slane %v1946, 4
      %v1949 = vshll.u32 %v1865, 16
      %v1951 = vrot.slane %v1949, 5
      %v1952 = vsel %vm915, %v1947, %v1951
      %v1954 = vshrl.u32 %v1866, 16
      %v1956 = vrot.slane %v1954, 4
      %v1957 = vshll.u32 %v1866, 16
      %v1959 = vrot.slane %v1957, 5
      %v1960 = vor.u32 %v1956, %v1959
      %v1961 = vrot.slane %v1960, 4
      %v1963 = vshll.u32 %v1867, 16
      %v1965 = vrot.slane %v1963, 5
      %v1966 = vsel %vm915, %v1961, %v1965
      %v1967 = vshrl.u32 %v1867, 16
      %v1969 = vrot.slane %v1967, 4
      %v1970 = vor.u32 %v1969, %v1965
      %v1971 = vrot.slane %v1970, 4
      %v1973 = vshll.u32 %v1868, 16
      %v1975 = vrot.slane %v1973, 5
      %v1976 = vsel %vm915, %v1971, %v1975
      %v1978 = vshrl.u32 %v1869, 16
      %v1980 = vrot.slane %v1978, 4
      %v1981 = vshll.u32 %v1869, 16
      %v1983 = vrot.slane %v1981, 5
      %v1984 = vor.u32 %v1980, %v1983
      %v1985 = vrot.slane %v1984, 4
      %v1987 = vshll.u32 %v1870, 16
      %v1989 = vrot.slane %v1987, 5
      %v1990 = vsel %vm915, %v1985, %v1989
      %v1991 = vshrl.u32 %v1870, 16
      %v1993 = vrot.slane %v1991, 4
      %v1994 = vor.u32 %v1993, %v1989
      %v1995 = vrot.slane %v1994, 4
      %v1997 = vshll.u32 %v1871, 16
      %v1999 = vrot.slane %v1997, 5
      %v2000 = vsel %vm915, %v1995, %v1999
      %v2002 = vshrl.u32 %v1872, 16
      %v2004 = vrot.slane %v2002, 4
      %v2005 = vshll.u32 %v1872, 16
      %v2007 = vrot.slane %v2005, 5
      %v2008 = vor.u32 %v2004, %v2007
      %v2009 = vrot.slane %v2008, 4
      %v2011 = vshll.u32 %v1873, 16
      %v2013 = vrot.slane %v2011, 5
      %v2014 = vsel %vm915, %v2009, %v2013
      %v2015 = vshrl.u32 %v1873, 16
      %v2017 = vrot.slane %v2015, 4
      %v2018 = vor.u32 %v2017, %v2013
      %v2019 = vrot.slane %v2018, 4
      %v2021 = vshll.u32 %v1874, 16
      %v2023 = vrot.slane %v2021, 5
      %v2024 = vsel %vm915, %v2019, %v2023
      %v2026 = vshrl.u32 %v1875, 16
      %v2028 = vrot.slane %v2026, 4
      %v2029 = vshll.u32 %v1875, 16
      %v2031 = vrot.slane %v2029, 5
      %v2032 = vor.u32 %v2028, %v2031
      %v2033 = vrot.slane %v2032, 4
      %v2035 = vshll.u32 %v1876, 16
      %v2037 = vrot.slane %v2035, 5
      %v2038 = vsel %vm915, %v2033, %v2037
      %v2039 = vshrl.u32 %v1876, 16
      %v2041 = vrot.slane %v2039, 4
      %v2042 = vor.u32 %v2041, %v2037
      %v2043 = vrot.slane %v2042, 4
      %v2045 = vshll.u32 %v1877, 16
      %v2047 = vrot.slane %v2045, 5
      %v2048 = vsel %vm915, %v2043, %v2047
      %v2050 = vshrl.u32 %v1878, 16
      %v2052 = vrot.slane %v2050, 4
      %v2053 = vshll.u32 %v1878, 16
      %v2055 = vrot.slane %v2053, 5
      %v2056 = vor.u32 %v2052, %v2055
      %v2057 = vrot.slane %v2056, 4
      %v2059 = vshll.u32 %v1879, 16
      %v2061 = vrot.slane %v2059, 5
      %v2062 = vsel %vm915, %v2057, %v2061
      %v2063 = vshrl.u32 %v1879, 16
      %v2065 = vrot.slane %v2063, 4
      %v2066 = vor.u32 %v2065, %v2061
      %v2067 = vrot.slane %v2066, 4
      %v2069 = vshll.u32 %v1880, 16
      %v2071 = vrot.slane %v2069, 5
      %v2072 = vsel %vm915, %v2067, %v2071
      %2073 = vrot.lane.b32.xlu0 %v1894, 64
      %v2074 = vpop.permute.xlu0 %2073
      %2075 = vrot.lane.b32.xlu0 %v1904, 64
      %v2076 = vpop.permute.xlu0 %2075
      %2077 = vrot.lane.b32.xlu0 %v1918, 64
      %v2078 = vpop.permute.xlu0 %2077
      %2079 = vrot.lane.b32.xlu0 %v1928, 64
      %v2080 = vpop.permute.xlu0 %2079
      %2081 = vrot.lane.b32.xlu0 %v1942, 64
      %v2082 = vpop.permute.xlu0 %2081
      %2083 = vrot.lane.b32.xlu0 %v1952, 64
      %v2084 = vpop.permute.xlu0 %2083
      %2085 = vrot.lane.b32.xlu0 %v1966, 64
      %v2086 = vpop.permute.xlu0 %2085
      %2087 = vrot.lane.b32.xlu0 %v1976, 64
      %v2088 = vpop.permute.xlu0 %2087
      %2089 = vrot.lane.b32.xlu0 %v1990, 64
      %v2090 = vpop.permute.xlu0 %2089
      %2091 = vrot.lane.b32.xlu0 %v2000, 64
      %v2092 = vpop.permute.xlu0 %2091
      %2093 = vrot.lane.b32.xlu0 %v2014, 64
      %v2094 = vpop.permute.xlu0 %2093
      %2095 = vrot.lane.b32.xlu0 %v2024, 64
      %v2096 = vpop.permute.xlu0 %2095
      %2097 = vrot.lane.b32.xlu0 %v2038, 64
      %v2098 = vpop.permute.xlu0 %2097
      %2099 = vrot.lane.b32.xlu0 %v2048, 64
      %v2100 = vpop.permute.xlu0 %2099
      %2101 = vrot.lane.b32.xlu0 %v2062, 64
      %v2102 = vpop.permute.xlu0 %2101
      %2103 = vrot.lane.b32.xlu0 %v2072, 64
      %v2104 = vpop.permute.xlu0 %2103
      %2121 = vst.msk [vmem:[#allocation3 + $0xc] sm:$0xf] %vm1156, %v2074
      %2122 = vst.msk [vmem:[#allocation3 + $0x20] sm:$0xf] %vm1156, %v2076
      %2123 = vst.msk [vmem:[#allocation3 + $0x34] sm:$0xf] %vm1156, %v2078
      %2124 = vst.msk [vmem:[#allocation3 + $0x48] sm:$0xf] %vm1156, %v2080
      %2125 = vst.msk [vmem:[#allocation3 + $0x5c] sm:$0xf] %vm1156, %v2082
      %2126 = vst.msk [vmem:[#allocation3 + $0x70] sm:$0xf] %vm1156, %v2084
      %2127 = vst.msk [vmem:[#allocation3 + $0x84] sm:$0xf] %vm1156, %v2086
      %2128 = vst.msk [vmem:[#allocation3 + $0x98] sm:$0xf] %vm1156, %v2088
      %2129 = vst.msk [vmem:[#allocation3 + $0xac] sm:$0xf] %vm1156, %v2090
      %2130 = vst.msk [vmem:[#allocation3 + $0xc0] sm:$0xf] %vm1156, %v2092
      %2131 = vst.msk [vmem:[#allocation3 + $0xd4] sm:$0xf] %vm1156, %v2094
      %2132 = vst.msk [vmem:[#allocation3 + $0xe8] sm:$0xf] %vm1156, %v2096
      %2133 = vst.msk [vmem:[#allocation3 + $0xfc] sm:$0xf] %vm1156, %v2098
      %2134 = vst.msk [vmem:[#allocation3 + $0x110] sm:$0xf] %vm1156, %v2100
      %2135 = vst.msk [vmem:[#allocation3 + $0x124] sm:$0xf] %vm1156, %v2102
      %2136 = vst.msk [vmem:[#allocation3 + $0x138] sm:$0xf] %vm1156, %v2104
      %v2137 = vld [vmem:[%s1824] sm:$0xe]
      %v2138 = vld [vmem:[%s1824 + $0x4] sm:$0xf]
      %v2139 = vld [vmem:[%s1824 + $0x8] sm:$0x1]
      %v2140 = vld [vmem:[%s1824 + $0xc] sm:$0xe]
      %v2141 = vld [vmem:[%s1824 + $0x10] sm:$0xf]
      %v2142 = vld [vmem:[%s1824 + $0x14] sm:$0x1]
      %v2143 = vld [vmem:[%s1824 + $0x18] sm:$0xe]
      %v2144 = vld [vmem:[%s1824 + $0x1c] sm:$0xf]
      %v2145 = vld [vmem:[%s1824 + $0x20] sm:$0x1]
      %v2146 = vld [vmem:[%s1824 + $0x24] sm:$0xe]
      %v2147 = vld [vmem:[%s1824 + $0x28] sm:$0xf]
      %v2148 = vld [vmem:[%s1824 + $0x2c] sm:$0x1]
      %v2149 = vld [vmem:[%s1824 + $0x30] sm:$0xe]
      %v2150 = vld [vmem:[%s1824 + $0x34] sm:$0xf]
      %v2151 = vld [vmem:[%s1824 + $0x38] sm:$0x1]
      %v2152 = vld [vmem:[%s1824 + $0x3c] sm:$0xe]
      %v2153 = vld [vmem:[%s1824 + $0x40] sm:$0xf]
      %v2154 = vld [vmem:[%s1824 + $0x44] sm:$0x1]
      %v2155 = vld [vmem:[%s1824 + $0x48] sm:$0xe]
      %v2156 = vld [vmem:[%s1824 + $0x4c] sm:$0xf]
      %v2157 = vld [vmem:[%s1824 + $0x50] sm:$0x1]
      %v2158 = vld [vmem:[%s1824 + $0x54] sm:$0xe]
      %v2159 = vld [vmem:[%s1824 + $0x58] sm:$0xf]
      %v2160 = vld [vmem:[%s1824 + $0x5c] sm:$0x1]
      %v2185 = vrot.slane %v2137, 5
      %v2186 = vrot.slane %v2185, 4
      %v2187 = vrot.slane %v2138, 5
      %v2188 = vsel %vm1223, %v2186, %v2187
      %v2189 = vrot.slane %v2187, 4
      %v2190 = vrot.slane %v2139, 5
      %v2191 = vsel %vm1223, %v2189, %v2190
      %v2192 = vrot.slane %v2140, 5
      %v2193 = vrot.slane %v2192, 4
      %v2194 = vrot.slane %v2141, 5
      %v2195 = vsel %vm1223, %v2193, %v2194
      %v2196 = vrot.slane %v2194, 4
      %v2197 = vrot.slane %v2142, 5
      %v2198 = vsel %vm1223, %v2196, %v2197
      %v2199 = vrot.slane %v2143, 5
      %v2200 = vrot.slane %v2199, 4
      %v2201 = vrot.slane %v2144, 5
      %v2202 = vsel %vm1223, %v2200, %v2201
      %v2203 = vrot.slane %v2201, 4
      %v2204 = vrot.slane %v2145, 5
      %v2205 = vsel %vm1223, %v2203, %v2204
      %v2206 = vrot.slane %v2146, 5
      %v2207 = vrot.slane %v2206, 4
      %v2208 = vrot.slane %v2147, 5
      %v2209 = vsel %vm1223, %v2207, %v2208
      %v2210 = vrot.slane %v2208, 4
      %v2211 = vrot.slane %v2148, 5
      %v2212 = vsel %vm1223, %v2210, %v2211
      %v2213 = vrot.slane %v2149, 5
      %v2214 = vrot.slane %v2213, 4
      %v2215 = vrot.slane %v2150, 5
      %v2216 = vsel %vm1223, %v2214, %v2215
      %v2217 = vrot.slane %v2215, 4
      %v2218 = vrot.slane %v2151, 5
      %v2219 = vsel %vm1223, %v2217, %v2218
      %v2220 = vrot.slane %v2152, 5
      %v2221 = vrot.slane %v2220, 4
      %v2222 = vrot.slane %v2153, 5
      %v2223 = vsel %vm1223, %v2221, %v2222
      %v2224 = vrot.slane %v2222, 4
      %v2225 = vrot.slane %v2154, 5
      %v2226 = vsel %vm1223, %v2224, %v2225
      %v2227 = vrot.slane %v2155, 5
      %v2228 = vrot.slane %v2227, 4
      %v2229 = vrot.slane %v2156, 5
      %v2230 = vsel %vm1223, %v2228, %v2229
      %v2231 = vrot.slane %v2229, 4
      %v2232 = vrot.slane %v2157, 5
      %v2233 = vsel %vm1223, %v2231, %v2232
      %v2234 = vrot.slane %v2158, 5
      %v2235 = vrot.slane %v2234, 4
      %v2236 = vrot.slane %v2159, 5
      %v2237 = vsel %vm1223, %v2235, %v2236
      %v2238 = vrot.slane %v2236, 4
      %v2239 = vrot.slane %v2160, 5
      %v2240 = vsel %vm1223, %v2238, %v2239
      %2257 = vst.msk [vmem:[#allocation3 + $0x10] sm:$0xf] %vm456, %v2188
      %2258 = vst.msk [vmem:[#allocation3 + $0x24] sm:$0xf] %vm456, %v2191
      %2259 = vst.msk [vmem:[#allocation3 + $0x38] sm:$0xf] %vm456, %v2195
      %2260 = vst.msk [vmem:[#allocation3 + $0x4c] sm:$0xf] %vm456, %v2198
      %2261 = vst.msk [vmem:[#allocation3 + $0x60] sm:$0xf] %vm456, %v2202
      %2262 = vst.msk [vmem:[#allocation3 + $0x74] sm:$0xf] %vm456, %v2205
      %2263 = vst.msk [vmem:[#allocation3 + $0x88] sm:$0xf] %vm456, %v2209
      %2264 = vst.msk [vmem:[#allocation3 + $0x9c] sm:$0xf] %vm456, %v2212
      %2265 = vst.msk [vmem:[#allocation3 + $0xb0] sm:$0xf] %vm456, %v2216
      %2266 = vst.msk [vmem:[#allocation3 + $0xc4] sm:$0xf] %vm456, %v2219
      %2267 = vst.msk [vmem:[#allocation3 + $0xd8] sm:$0xf] %vm456, %v2223
      %2268 = vst.msk [vmem:[#allocation3 + $0xec] sm:$0xf] %vm456, %v2226
      %2269 = vst.msk [vmem:[#allocation3 + $0x100] sm:$0xf] %vm456, %v2230
      %2270 = vst.msk [vmem:[#allocation3 + $0x114] sm:$0xf] %vm456, %v2233
      %2271 = vst.msk [vmem:[#allocation3 + $0x128] sm:$0xf] %vm456, %v2237
      %2272 = vst.msk [vmem:[#allocation3 + $0x13c] sm:$0xf] %vm456, %v2240
      %v2273 = vld [vmem:[#allocation3] sm:$0xff]
      %v2274 = vld [vmem:[#allocation3 + $0x8] sm:$0xff]
      %v2275 = vld [vmem:[#allocation3 + $0x10] sm:$0xf]
      %v2276 = vld [vmem:[#allocation3 + $0x14] sm:$0xff]
      %v2277 = vld [vmem:[#allocation3 + $0x1c] sm:$0xff]
      %v2278 = vld [vmem:[#allocation3 + $0x24] sm:$0xf]
      %v2279 = vld [vmem:[#allocation3 + $0x28] sm:$0xff]
      %v2280 = vld [vmem:[#allocation3 + $0x30] sm:$0xff]
      %v2281 = vld [vmem:[#allocation3 + $0x38] sm:$0xf]
      %v2282 = vld [vmem:[#allocation3 + $0x3c] sm:$0xff]
      %v2283 = vld [vmem:[#allocation3 + $0x44] sm:$0xff]
      %v2284 = vld [vmem:[#allocation3 + $0x4c] sm:$0xf]
      %v2285 = vld [vmem:[#allocation3 + $0x50] sm:$0xff]
      %v2286 = vld [vmem:[#allocation3 + $0x58] sm:$0xff]
      %v2287 = vld [vmem:[#allocation3 + $0x60] sm:$0xf]
      %v2288 = vld [vmem:[#allocation3 + $0x64] sm:$0xff]
      %v2289 = vld [vmem:[#allocation3 + $0x6c] sm:$0xff]
      %v2290 = vld [vmem:[#allocation3 + $0x74] sm:$0xf]
      %v2291 = vld [vmem:[#allocation3 + $0x78] sm:$0xff]
      %v2292 = vld [vmem:[#allocation3 + $0x80] sm:$0xff]
      %v2293 = vld [vmem:[#allocation3 + $0x88] sm:$0xf]
      %v2294 = vld [vmem:[#allocation3 + $0x8c] sm:$0xff]
      %v2295 = vld [vmem:[#allocation3 + $0x94] sm:$0xff]
      %v2296 = vld [vmem:[#allocation3 + $0x9c] sm:$0xf]
      %v2297 = vld [vmem:[#allocation3 + $0xa0] sm:$0xff]
      %v2298 = vld [vmem:[#allocation3 + $0xa8] sm:$0xff]
      %v2299 = vld [vmem:[#allocation3 + $0xb0] sm:$0xf]
      %v2300 = vld [vmem:[#allocation3 + $0xb4] sm:$0xff]
      %v2301 = vld [vmem:[#allocation3 + $0xbc] sm:$0xff]
      %v2302 = vld [vmem:[#allocation3 + $0xc4] sm:$0xf]
      %v2303 = vld [vmem:[#allocation3 + $0xc8] sm:$0xff]
      %v2304 = vld [vmem:[#allocation3 + $0xd0] sm:$0xff]
      %v2305 = vld [vmem:[#allocation3 + $0xd8] sm:$0xf]
      %v2306 = vld [vmem:[#allocation3 + $0xdc] sm:$0xff]
      %v2307 = vld [vmem:[#allocation3 + $0xe4] sm:$0xff]
      %v2308 = vld [vmem:[#allocation3 + $0xec] sm:$0xf]
      %v2309 = vld [vmem:[#allocation3 + $0xf0] sm:$0xff]
      %v2310 = vld [vmem:[#allocation3 + $0xf8] sm:$0xff]
      %v2311 = vld [vmem:[#allocation3 + $0x100] sm:$0xf]
      %v2312 = vld [vmem:[#allocation3 + $0x104] sm:$0xff]
      %v2313 = vld [vmem:[#allocation3 + $0x10c] sm:$0xff]
      %v2314 = vld [vmem:[#allocation3 + $0x114] sm:$0xf]
      %v2315 = vld [vmem:[#allocation3 + $0x118] sm:$0xff]
      %v2316 = vld [vmem:[#allocation3 + $0x120] sm:$0xff]
      %v2317 = vld [vmem:[#allocation3 + $0x128] sm:$0xf]
      %v2318 = vld [vmem:[#allocation3 + $0x12c] sm:$0xff]
      %v2319 = vld [vmem:[#allocation3 + $0x134] sm:$0xff]
      %v2320 = vld [vmem:[#allocation3 + $0x13c] sm:$0xf]
      %v2321 = vld [vmem:[%s4] sm:$0xf]
      %v2322 = vld [vmem:[%s4 + $0x4] sm:$0xf]
      %v2323 = vld [vmem:[%s4 + $0x8] sm:$0xf]
      %v2324 = vld [vmem:[%s4 + $0xc] sm:$0xf]
      %v2325 = vld [vmem:[%s4 + $0x10] sm:$0xf]
      %v2326 = vld [vmem:[%s4 + $0x14] sm:$0xf]
      %v2327 = vld [vmem:[%s4 + $0x18] sm:$0xf]
      %v2328 = vld [vmem:[%s4 + $0x1c] sm:$0xf]
      %v2329 = vld [vmem:[%s4 + $0x20] sm:$0xf]
      %v2330 = vld [vmem:[%s4 + $0x24] sm:$0xf]
      %v2331 = vld [vmem:[%s4 + $0x28] sm:$0xf]
      %v2332 = vld [vmem:[%s4 + $0x2c] sm:$0xf]
      %v2333 = vld [vmem:[%s4 + $0x30] sm:$0xf]
      %v2334 = vld [vmem:[%s4 + $0x34] sm:$0xf]
      %v2335 = vld [vmem:[%s4 + $0x38] sm:$0xf]
      %v2336 = vld [vmem:[%s4 + $0x3c] sm:$0xf]
      %v2337 = vld [vmem:[%s4 + $0x40] sm:$0xf]
      %v2338 = vld [vmem:[%s4 + $0x44] sm:$0xf]
      %v2339 = vld [vmem:[%s4 + $0x48] sm:$0xf]
      %v2340 = vld [vmem:[%s4 + $0x4c] sm:$0xf]
      %v2341 = vld [vmem:[%s4 + $0x50] sm:$0xf]
      %v2342 = vld [vmem:[%s4 + $0x54] sm:$0xf]
      %v2343 = vld [vmem:[%s4 + $0x58] sm:$0xf]
      %v2344 = vld [vmem:[%s4 + $0x5c] sm:$0xf]
      %v2345 = vld [vmem:[%s4 + $0x60] sm:$0xf]
      %v2346 = vld [vmem:[%s4 + $0x64] sm:$0xf]
      %v2347 = vld [vmem:[%s4 + $0x68] sm:$0xf]
      %v2348 = vld [vmem:[%s4 + $0x6c] sm:$0xf]
      %v2349 = vld [vmem:[%s4 + $0x70] sm:$0xf]
      %v2350 = vld [vmem:[%s4 + $0x74] sm:$0xf]
      %v2351 = vld [vmem:[%s4 + $0x78] sm:$0xf]
      %v2352 = vld [vmem:[%s4 + $0x7c] sm:$0xf]
      %v2353 = vld [vmem:[%s4 + $0x80] sm:$0xf]
      %v2354 = vld [vmem:[%s4 + $0x84] sm:$0xf]
      %v2355 = vld [vmem:[%s4 + $0x88] sm:$0xf]
      %v2356 = vld [vmem:[%s4 + $0x8c] sm:$0xf]
      %v2357 = vld [vmem:[%s4 + $0x90] sm:$0xf]
      %v2358 = vld [vmem:[%s4 + $0x94] sm:$0xf]
      %v2359 = vld [vmem:[%s4 + $0x98] sm:$0xf]
      %v2360 = vld [vmem:[%s4 + $0x9c] sm:$0xf]
      %v2361 = vld [vmem:[%s4 + $0xa0] sm:$0xf]
      %v2362 = vld [vmem:[%s4 + $0xa4] sm:$0xf]
      %v2363 = vld [vmem:[%s4 + $0xa8] sm:$0xf]
      %v2364 = vld [vmem:[%s4 + $0xac] sm:$0xf]
      %v2365 = vld [vmem:[%s4 + $0xb0] sm:$0xf]
      %v2366 = vld [vmem:[%s4 + $0xb4] sm:$0xf]
      %v2367 = vld [vmem:[%s4 + $0xb8] sm:$0xf]
      %v2368 = vld [vmem:[%s4 + $0xbc] sm:$0xf]
      %v2369 = vld [vmem:[%s4 + $0xc0] sm:$0xf]
      %v2370 = vld [vmem:[%s4 + $0xc4] sm:$0xf]
      %v2371 = vld [vmem:[%s4 + $0xc8] sm:$0xf]
      %v2372 = vld [vmem:[%s4 + $0xcc] sm:$0xf]
      %v2373 = vld [vmem:[%s4 + $0xd0] sm:$0xf]
      %v2374 = vld [vmem:[%s4 + $0xd4] sm:$0xf]
      %v2375 = vld [vmem:[%s4 + $0xd8] sm:$0xf]
      %v2376 = vld [vmem:[%s4 + $0xdc] sm:$0xf]
      %v2377 = vld [vmem:[%s4 + $0xe0] sm:$0xf]
      %v2378 = vld [vmem:[%s4 + $0xe4] sm:$0xf]
      %v2379 = vld [vmem:[%s4 + $0xe8] sm:$0xf]
      %v2380 = vld [vmem:[%s4 + $0xec] sm:$0xf]
      %v2381 = vld [vmem:[%s4 + $0xf0] sm:$0xf]
      %v2382 = vld [vmem:[%s4 + $0xf4] sm:$0xf]
      %v2383 = vld [vmem:[%s4 + $0xf8] sm:$0xf]
      %v2384 = vld [vmem:[%s4 + $0xfc] sm:$0xf]
      %v2385 = vld [vmem:[%s4 + $0x100] sm:$0xf]
      %v2386 = vld [vmem:[%s4 + $0x104] sm:$0xf]
      %v2387 = vld [vmem:[%s4 + $0x108] sm:$0xf]
      %v2388 = vld [vmem:[%s4 + $0x10c] sm:$0xf]
      %v2389 = vld [vmem:[%s4 + $0x110] sm:$0xf]
      %v2390 = vld [vmem:[%s4 + $0x114] sm:$0xf]
      %v2391 = vld [vmem:[%s4 + $0x118] sm:$0xf]
      %v2392 = vld [vmem:[%s4 + $0x11c] sm:$0xf]
      %v2393 = vld [vmem:[%s5] sm:$0x1]
      %v2395 = vlaneseq
      %v2396 = vshrl.u32 %v2395, 7
      %v2397 = vsub.s32 0, %v2396
      %v2398 = vrot.slane %v2393, %v2397
      %v2448 = vunpack.c.l.b16 %v2273
      %v2449 = vunpack.c.h.b16 %v2273
      %v2450 = vunpack.c.l.b16 %v2274
      %v2451 = vunpack.c.h.b16 %v2274
      %v2452 = vunpack.c.l.b16 %v2275
      %v2453 = vunpack.c.l.b16 %v2276
      %v2454 = vunpack.c.h.b16 %v2276
      %v2455 = vunpack.c.l.b16 %v2277
      %v2456 = vunpack.c.h.b16 %v2277
      %v2457 = vunpack.c.l.b16 %v2278
      %v2458 = vunpack.c.l.b16 %v2279
      %v2459 = vunpack.c.h.b16 %v2279
      %v2460 = vunpack.c.l.b16 %v2280
      %v2461 = vunpack.c.h.b16 %v2280
      %v2462 = vunpack.c.l.b16 %v2281
      %v2463 = vunpack.c.l.b16 %v2282
      %v2464 = vunpack.c.h.b16 %v2282
      %v2465 = vunpack.c.l.b16 %v2283
      %v2466 = vunpack.c.h.b16 %v2283
      %v2467 = vunpack.c.l.b16 %v2284
      %v2468 = vunpack.c.l.b16 %v2285
      %v2469 = vunpack.c.h.b16 %v2285
      %v2470 = vunpack.c.l.b16 %v2286
      %v2471 = vunpack.c.h.b16 %v2286
      %v2472 = vunpack.c.l.b16 %v2287
      %v2473 = vunpack.c.l.b16 %v2288
      %v2474 = vunpack.c.h.b16 %v2288
      %v2475 = vunpack.c.l.b16 %v2289
      %v2476 = vunpack.c.h.b16 %v2289
      %v2477 = vunpack.c.l.b16 %v2290
      %v2478 = vunpack.c.l.b16 %v2291
      %v2479 = vunpack.c.h.b16 %v2291
      %v2480 = vunpack.c.l.b16 %v2292
      %v2481 = vunpack.c.h.b16 %v2292
      %v2482 = vunpack.c.l.b16 %v2293
      %v2483 = vunpack.c.l.b16 %v2294
      %v2484 = vunpack.c.h.b16 %v2294
      %v2485 = vunpack.c.l.b16 %v2295
      %v2486 = vunpack.c.h.b16 %v2295
      %v2487 = vunpack.c.l.b16 %v2296
      %v2488 = vunpack.c.l.b16 %v2297
      %v2489 = vunpack.c.h.b16 %v2297
      %v2490 = vunpack.c.l.b16 %v2298
      %v2491 = vunpack.c.h.b16 %v2298
      %v2492 = vunpack.c.l.b16 %v2299
      %v2493 = vunpack.c.l.b16 %v2300
      %v2494 = vunpack.c.h.b16 %v2300
      %v2495 = vunpack.c.l.b16 %v2301
      %v2496 = vunpack.c.h.b16 %v2301
      %v2497 = vunpack.c.l.b16 %v2302
      %v2498 = vunpack.c.l.b16 %v2303
      %v2499 = vunpack.c.h.b16 %v2303
      %v2500 = vunpack.c.l.b16 %v2304
      %v2501 = vunpack.c.h.b16 %v2304
      %v2502 = vunpack.c.l.b16 %v2305
      %v2503 = vunpack.c.l.b16 %v2306
      %v2504 = vunpack.c.h.b16 %v2306
      %v2505 = vunpack.c.l.b16 %v2307
      %v2506 = vunpack.c.h.b16 %v2307
      %v2507 = vunpack.c.l.b16 %v2308
      %v2508 = vunpack.c.l.b16 %v2309
      %v2509 = vunpack.c.h.b16 %v2309
      %v2510 = vunpack.c.l.b16 %v2310
      %v2511 = vunpack.c.h.b16 %v2310
      %v2512 = vunpack.c.l.b16 %v2311
      %v2513 = vunpack.c.l.b16 %v2312
      %v2514 = vunpack.c.h.b16 %v2312
      %v2515 = vunpack.c.l.b16 %v2313
      %v2516 = vunpack.c.h.b16 %v2313
      %v2517 = vunpack.c.l.b16 %v2314
      %v2518 = vunpack.c.l.b16 %v2315
      %v2519 = vunpack.c.h.b16 %v2315
      %v2520 = vunpack.c.l.b16 %v2316
      %v2521 = vunpack.c.h.b16 %v2316
      %v2522 = vunpack.c.l.b16 %v2317
      %v2523 = vunpack.c.l.b16 %v2318
      %v2524 = vunpack.c.h.b16 %v2318
      %v2525 = vunpack.c.l.b16 %v2319
      %v2526 = vunpack.c.h.b16 %v2319
      %v2527 = vunpack.c.l.b16 %v2320
      %v2528 = vpack.c.b16 %v2453, %v2448
      %v2529 = vpack.c.b16 %v2454, %v2449
      %v2530 = vpack.c.b16 %v2455, %v2450
      %v2531 = vpack.c.b16 %v2456, %v2451
      %v2532 = vpack.c.b16 %v2457, %v2452
      %v2533 = vpack.c.b16 %v2463, %v2458
      %v2534 = vpack.c.b16 %v2464, %v2459
      %v2535 = vpack.c.b16 %v2465, %v2460
      %v2536 = vpack.c.b16 %v2466, %v2461
      %v2537 = vpack.c.b16 %v2467, %v2462
      %v2538 = vpack.c.b16 %v2473, %v2468
      %v2539 = vpack.c.b16 %v2474, %v2469
      %v2540 = vpack.c.b16 %v2475, %v2470
      %v2541 = vpack.c.b16 %v2476, %v2471
      %v2542 = vpack.c.b16 %v2477, %v2472
      %v2543 = vpack.c.b16 %v2483, %v2478
      %v2544 = vpack.c.b16 %v2484, %v2479
      %v2545 = vpack.c.b16 %v2485, %v2480
      %v2546 = vpack.c.b16 %v2486, %v2481
      %v2547 = vpack.c.b16 %v2487, %v2482
      %v2548 = vpack.c.b16 %v2493, %v2488
      %v2549 = vpack.c.b16 %v2494, %v2489
      %v2550 = vpack.c.b16 %v2495, %v2490
      %v2551 = vpack.c.b16 %v2496, %v2491
      %v2552 = vpack.c.b16 %v2497, %v2492
      %v2553 = vpack.c.b16 %v2503, %v2498
      %v2554 = vpack.c.b16 %v2504, %v2499
      %v2555 = vpack.c.b16 %v2505, %v2500
      %v2556 = vpack.c.b16 %v2506, %v2501
      %v2557 = vpack.c.b16 %v2507, %v2502
      %v2558 = vpack.c.b16 %v2513, %v2508
      %v2559 = vpack.c.b16 %v2514, %v2509
      %v2560 = vpack.c.b16 %v2515, %v2510
      %v2561 = vpack.c.b16 %v2516, %v2511
      %v2562 = vpack.c.b16 %v2517, %v2512
      %v2563 = vpack.c.b16 %v2523, %v2518
      %v2564 = vpack.c.b16 %v2524, %v2519
      %v2565 = vpack.c.b16 %v2525, %v2520
      %v2566 = vpack.c.b16 %v2526, %v2521
      %v2567 = vpack.c.b16 %v2527, %v2522
      %v2672 = vunpack.c.l.b16 %v2321
      %v2673 = vunpack.c.l.b16 %v2322
      %v2674 = vunpack.c.l.b16 %v2323
      %v2675 = vunpack.c.l.b16 %v2324
      %v2676 = vunpack.c.l.b16 %v2325
      %v2677 = vunpack.c.l.b16 %v2326
      %v2678 = vunpack.c.l.b16 %v2327
      %v2679 = vunpack.c.l.b16 %v2328
      %v2680 = vunpack.c.l.b16 %v2329
      %v2681 = vunpack.c.l.b16 %v2330
      %v2682 = vunpack.c.l.b16 %v2331
      %v2683 = vunpack.c.l.b16 %v2332
      %v2684 = vunpack.c.l.b16 %v2333
      %v2685 = vunpack.c.l.b16 %v2334
      %v2686 = vunpack.c.l.b16 %v2335
      %v2687 = vunpack.c.l.b16 %v2336
      %v2688 = vunpack.c.l.b16 %v2337
      %v2689 = vunpack.c.l.b16 %v2338
      %v2690 = vunpack.c.l.b16 %v2339
      %v2691 = vunpack.c.l.b16 %v2340
      %v2692 = vunpack.c.l.b16 %v2341
      %v2693 = vunpack.c.l.b16 %v2342
      %v2694 = vunpack.c.l.b16 %v2343
      %v2695 = vunpack.c.l.b16 %v2344
      %v2696 = vunpack.c.l.b16 %v2345
      %v2697 = vunpack.c.l.b16 %v2346
      %v2698 = vunpack.c.l.b16 %v2347
      %v2699 = vunpack.c.l.b16 %v2348
      %v2700 = vunpack.c.l.b16 %v2349
      %v2701 = vunpack.c.l.b16 %v2350
      %v2702 = vunpack.c.l.b16 %v2351
      %v2703 = vunpack.c.l.b16 %v2352
      %v2704 = vunpack.c.l.b16 %v2353
      %v2705 = vunpack.c.l.b16 %v2354
      %v2706 = vunpack.c.l.b16 %v2355
      %v2707 = vunpack.c.l.b16 %v2356
      %v2708 = vunpack.c.l.b16 %v2357
      %v2709 = vunpack.c.l.b16 %v2358
      %v2710 = vunpack.c.l.b16 %v2359
      %v2711 = vunpack.c.l.b16 %v2360
      %v2712 = vunpack.c.l.b16 %v2361
      %v2713 = vunpack.c.l.b16 %v2362
      %v2714 = vunpack.c.l.b16 %v2363
      %v2715 = vunpack.c.l.b16 %v2364
      %v2716 = vunpack.c.l.b16 %v2365
      %v2717 = vunpack.c.l.b16 %v2366
      %v2718 = vunpack.c.l.b16 %v2367
      %v2719 = vunpack.c.l.b16 %v2368
      %v2720 = vunpack.c.l.b16 %v2369
      %v2721 = vunpack.c.l.b16 %v2370
      %v2722 = vunpack.c.l.b16 %v2371
      %v2723 = vunpack.c.l.b16 %v2372
      %v2724 = vunpack.c.l.b16 %v2373
      %v2725 = vunpack.c.l.b16 %v2374
      %v2726 = vunpack.c.l.b16 %v2375
      %v2727 = vunpack.c.l.b16 %v2376
      %v2728 = vunpack.c.l.b16 %v2377
      %v2729 = vunpack.c.l.b16 %v2378
      %v2730 = vunpack.c.l.b16 %v2379
      %v2731 = vunpack.c.l.b16 %v2380
      %v2732 = vunpack.c.l.b16 %v2381
      %v2733 = vunpack.c.l.b16 %v2382
      %v2734 = vunpack.c.l.b16 %v2383
      %v2735 = vunpack.c.l.b16 %v2384
      %v2736 = vunpack.c.l.b16 %v2385
      %v2737 = vunpack.c.l.b16 %v2386
      %v2738 = vunpack.c.l.b16 %v2387
      %v2739 = vunpack.c.l.b16 %v2388
      %v2740 = vunpack.c.l.b16 %v2389
      %v2741 = vunpack.c.l.b16 %v2390
      %v2742 = vunpack.c.l.b16 %v2391
      %v2743 = vunpack.c.l.b16 %v2392
      %v2744 = vpack.c.b16 %v2673, %v2672
      %v2745 = vpack.c.b16 %v2675, %v2674
      %v2746 = vpack.c.b16 %v2677, %v2676
      %v2747 = vpack.c.b16 %v2679, %v2678
      %v2748 = vpack.c.b16 %v2681, %v2680
      %v2749 = vpack.c.b16 %v2683, %v2682
      %v2750 = vpack.c.b16 %v2685, %v2684
      %v2751 = vpack.c.b16 %v2687, %v2686
      %v2752 = vpack.c.b16 %v2689, %v2688
      %v2753 = vpack.c.b16 %v2691, %v2690
      %v2754 = vpack.c.b16 %v2693, %v2692
      %v2755 = vpack.c.b16 %v2695, %v2694
      %v2756 = vpack.c.b16 %v2697, %v2696
      %v2757 = vpack.c.b16 %v2699, %v2698
      %v2758 = vpack.c.b16 %v2701, %v2700
      %v2759 = vpack.c.b16 %v2703, %v2702
      %v2760 = vpack.c.b16 %v2705, %v2704
      %v2761 = vpack.c.b16 %v2707, %v2706
      %v2762 = vpack.c.b16 %v2709, %v2708
      %v2763 = vpack.c.b16 %v2711, %v2710
      %v2764 = vpack.c.b16 %v2713, %v2712
      %v2765 = vpack.c.b16 %v2715, %v2714
      %v2766 = vpack.c.b16 %v2717, %v2716
      %v2767 = vpack.c.b16 %v2719, %v2718
      %v2768 = vpack.c.b16 %v2721, %v2720
      %v2769 = vpack.c.b16 %v2723, %v2722
      %v2770 = vpack.c.b16 %v2725, %v2724
      %v2771 = vpack.c.b16 %v2727, %v2726
      %v2772 = vpack.c.b16 %v2729, %v2728
      %v2773 = vpack.c.b16 %v2731, %v2730
      %v2774 = vpack.c.b16 %v2733, %v2732
      %v2775 = vpack.c.b16 %v2735, %v2734
      %v2776 = vpack.c.b16 %v2737, %v2736
      %v2777 = vpack.c.b16 %v2739, %v2738
      %v2778 = vpack.c.b16 %v2741, %v2740
      %v2779 = vpack.c.b16 %v2743, %v2742
      %vm2816 = vcmask 523264
      %v2818 = vsel %vm2816, %v2532, 0
      %v2821 = vsel %vm2816, %v2537, 0
      %v2824 = vsel %vm2816, %v2542, 0
      %v2827 = vsel %vm2816, %v2547, 0
      %v2830 = vsel %vm2816, %v2552, 0
      %v2833 = vsel %vm2816, %v2557, 0
      %v2836 = vsel %vm2816, %v2562, 0
      %v2839 = vsel %vm2816, %v2567, 0
      %2841 = vmatprep.subr.bf16.mxu0 0
      %2842 = vmatpush1.bf16.msra.mxu0 %v2751
      %2843 = vmatprep.subr.bf16.mxu0 0
      %2844 = vmatpush1.bf16.msra.mxu0 %v2750
      %2845 = vmatprep.subr.bf16.mxu0 0
      %2846 = vmatpush1.bf16.msra.mxu0 %v2749
      %2847 = vmatprep.subr.bf16.mxu0 0
      %2848 = vmatpush1.bf16.msra.mxu0 %v2748
      %2849 = vmatprep.subr.bf16.mxu0 0
      %2850 = vmatpush1.bf16.msra.mxu0 %v2747
      %2851 = vmatprep.subr.bf16.mxu0 0
      %2852 = vmatpush1.bf16.msra.mxu0 %v2746
      %2853 = vmatprep.subr.bf16.mxu0 0
      %2854 = vmatpush1.bf16.msra.mxu0 %v2745
      %2855 = vmatprep.subr.bf16.mxu0 0
      %2856 = vmatpush1.bf16.msra.mxu0 %v2744
      %2857 = vmatprep.subr.bf16.mxu0 0
      %2858 = vmatpush2.bf16.msra.mxu0 %v2759
      %2859 = vmatprep.subr.bf16.mxu0 0
      %2860 = vmatpush2.bf16.msra.mxu0 %v2758
      %2861 = vmatprep.subr.bf16.mxu0 0
      %2862 = vmatpush2.bf16.msra.mxu0 %v2757
      %2863 = vmatprep.subr.bf16.mxu0 0
      %2864 = vmatpush2.bf16.msra.mxu0 %v2756
      %2865 = vmatprep.subr.bf16.mxu0 0
      %2866 = vmatpush2.bf16.msra.mxu0 %v2755
      %2867 = vmatprep.subr.bf16.mxu0 0
      %2868 = vmatpush2.bf16.msra.mxu0 %v2754
      %2869 = vmatprep.subr.bf16.mxu0 0
      %2870 = vmatpush2.bf16.msra.mxu0 %v2753
      %2871 = vmatprep.subr.bf16.mxu0 0
      %2872 = vmatpush2.bf16.msra.mxu0 %v2752
      %2873 = vmatprep.mubr.bf16.mxu0 %v2529
      %2874 = vmatmul.mubr.bf16.gmra.mxu0 %v2528
      %v2875 = vpop.f32.mrf.mxu0
      %v2876 = vadd.f32 %v2398, %v2875
      %v2877 = vpop.f32.mrf.mxu0
      %v2878 = vpop.f32.mrf.mxu0
      %v2879 = vadd.f32 %v2398, %v2878
      %v2880 = vpop.f32.mrf.mxu0
      %2881 = vmatprep.mubr.bf16.mxu0 %v2534
      %2882 = vmatmul.mubr.bf16.gmra.mxu0 %v2533
      %v2883 = vpop.f32.mrf.mxu0
      %v2884 = vadd.f32 %v2398, %v2883
      %v2885 = vpop.f32.mrf.mxu0
      %v2886 = vpop.f32.mrf.mxu0
      %v2887 = vadd.f32 %v2398, %v2886
      %v2888 = vpop.f32.mrf.mxu0
      %2889 = vmatprep.mubr.bf16.mxu0 %v2539
      %2890 = vmatmul.mubr.bf16.gmra.mxu0 %v2538
      %v2891 = vpop.f32.mrf.mxu0
      %v2892 = vadd.f32 %v2398, %v2891
      %v2893 = vpop.f32.mrf.mxu0
      %v2894 = vpop.f32.mrf.mxu0
      %v2895 = vadd.f32 %v2398, %v2894
      %v2896 = vpop.f32.mrf.mxu0
      %2897 = vmatprep.mubr.bf16.mxu0 %v2544
      %2898 = vmatmul.mubr.bf16.gmra.mxu0 %v2543
      %v2899 = vpop.f32.mrf.mxu0
      %v2900 = vadd.f32 %v2398, %v2899
      %v2901 = vpop.f32.mrf.mxu0
      %v2902 = vpop.f32.mrf.mxu0
      %v2903 = vadd.f32 %v2398, %v2902
      %v2904 = vpop.f32.mrf.mxu0
      %2905 = vmatprep.mubr.bf16.mxu0 %v2549
      %2906 = vmatmul.mubr.bf16.gmra.mxu0 %v2548
      %v2907 = vpop.f32.mrf.mxu0
      %v2908 = vadd.f32 %v2398, %v2907
      %v2909 = vpop.f32.mrf.mxu0
      %v2910 = vpop.f32.mrf.mxu0
      %v2911 = vadd.f32 %v2398, %v2910
      %v2912 = vpop.f32.mrf.mxu0
      %2913 = vmatprep.mubr.bf16.mxu0 %v2554
      %2914 = vmatmul.mubr.bf16.gmra.mxu0 %v2553
      %v2915 = vpop.f32.mrf.mxu0
      %v2916 = vadd.f32 %v2398, %v2915
      %v2917 = vpop.f32.mrf.mxu0
      %v2918 = vpop.f32.mrf.mxu0
      %v2919 = vadd.f32 %v2398, %v2918
      %v2920 = vpop.f32.mrf.mxu0
      %2921 = vmatprep.mubr.bf16.mxu0 %v2559
      %2922 = vmatmul.mubr.bf16.gmra.mxu0 %v2558
      %v2923 = vpop.f32.mrf.mxu0
      %v2924 = vadd.f32 %v2398, %v2923
      %v2925 = vpop.f32.mrf.mxu0
      %v2926 = vpop.f32.mrf.mxu0
      %v2927 = vadd.f32 %v2398, %v2926
      %v2928 = vpop.f32.mrf.mxu0
      %2929 = vmatprep.mubr.bf16.mxu0 %v2564
      %2930 = vmatmul.mubr.bf16.gmra.mxu0 %v2563
      %v2931 = vpop.f32.mrf.mxu0
      %v2932 = vadd.f32 %v2398, %v2931
      %v2933 = vpop.f32.mrf.mxu0
      %v2934 = vpop.f32.mrf.mxu0
      %v2935 = vadd.f32 %v2398, %v2934
      %v2936 = vpop.f32.mrf.mxu0
      %2937 = vdwg.mxu0
      %2938 = vmatprep.subr.bf16.mxu0 0
      %2939 = vmatpush1.bf16.msra.mxu0 %v2767
      %2940 = vmatprep.subr.bf16.mxu0 0
      %2941 = vmatpush1.bf16.msra.mxu0 %v2766
      %2942 = vmatprep.subr.bf16.mxu0 0
      %2943 = vmatpush1.bf16.msra.mxu0 %v2765
      %2944 = vmatprep.subr.bf16.mxu0 0
      %2945 = vmatpush1.bf16.msra.mxu0 %v2764
      %2946 = vmatprep.subr.bf16.mxu0 0
      %2947 = vmatpush1.bf16.msra.mxu0 %v2763
      %2948 = vmatprep.subr.bf16.mxu0 0
      %2949 = vmatpush1.bf16.msra.mxu0 %v2762
      %2950 = vmatprep.subr.bf16.mxu0 0
      %2951 = vmatpush1.bf16.msra.mxu0 %v2761
      %2952 = vmatprep.subr.bf16.mxu0 0
      %2953 = vmatpush1.bf16.msra.mxu0 %v2760
      %2954 = vmatprep.subr.bf16.mxu0 0
      %2955 = vmatpush2.bf16.msra.mxu0 %v2775
      %2956 = vmatprep.subr.bf16.mxu0 0
      %2957 = vmatpush2.bf16.msra.mxu0 %v2774
      %2958 = vmatprep.subr.bf16.mxu0 0
      %2959 = vmatpush2.bf16.msra.mxu0 %v2773
      %2960 = vmatprep.subr.bf16.mxu0 0
      %2961 = vmatpush2.bf16.msra.mxu0 %v2772
      %2962 = vmatprep.subr.bf16.mxu0 0
      %2963 = vmatpush2.bf16.msra.mxu0 %v2771
      %2964 = vmatprep.subr.bf16.mxu0 0
      %2965 = vmatpush2.bf16.msra.mxu0 %v2770
      %2966 = vmatprep.subr.bf16.mxu0 0
      %2967 = vmatpush2.bf16.msra.mxu0 %v2769
      %2968 = vmatprep.subr.bf16.mxu0 0
      %2969 = vmatpush2.bf16.msra.mxu0 %v2768
      %2970 = vmatprep.mubr.bf16.mxu0 %v2531
      %2971 = vmatmul.mubr.bf16.gmra.mxu0 %v2530
      %v2972 = vpop.f32.mrf.mxu0
      %v2973 = vadd.f32 %v2876, %v2972
      %v2974 = vpop.f32.mrf.mxu0
      %v2975 = vpop.f32.mrf.mxu0
      %v2976 = vadd.f32 %v2879, %v2975
      %v2977 = vpop.f32.mrf.mxu0
      %2978 = vmatprep.mubr.bf16.mxu0 %v2536
      %2979 = vmatmul.mubr.bf16.gmra.mxu0 %v2535
      %v2980 = vpop.f32.mrf.mxu0
      %v2981 = vadd.f32 %v2884, %v2980
      %v2982 = vpop.f32.mrf.mxu0
      %v2983 = vpop.f32.mrf.mxu0
      %v2984 = vadd.f32 %v2887, %v2983
      %v2985 = vpop.f32.mrf.mxu0
      %2986 = vmatprep.mubr.bf16.mxu0 %v2541
      %2987 = vmatmul.mubr.bf16.gmra.mxu0 %v2540
      %v2988 = vpop.f32.mrf.mxu0
      %v2989 = vadd.f32 %v2892, %v2988
      %v2990 = vpop.f32.mrf.mxu0
      %v2991 = vpop.f32.mrf.mxu0
      %v2992 = vadd.f32 %v2895, %v2991
      %v2993 = vpop.f32.mrf.mxu0
      %2994 = vmatprep.mubr.bf16.mxu0 %v2546
      %2995 = vmatmul.mubr.bf16.gmra.mxu0 %v2545
      %v2996 = vpop.f32.mrf.mxu0
      %v2997 = vadd.f32 %v2900, %v2996
      %v2998 = vpop.f32.mrf.mxu0
      %v2999 = vpop.f32.mrf.mxu0
      %v3000 = vadd.f32 %v2903, %v2999
      %v3001 = vpop.f32.mrf.mxu0
      %3002 = vmatprep.mubr.bf16.mxu0 %v2551
      %3003 = vmatmul.mubr.bf16.gmra.mxu0 %v2550
      %v3004 = vpop.f32.mrf.mxu0
      %v3005 = vadd.f32 %v2908, %v3004
      %v3006 = vpop.f32.mrf.mxu0
      %v3007 = vpop.f32.mrf.mxu0
      %v3008 = vadd.f32 %v2911, %v3007
      %v3009 = vpop.f32.mrf.mxu0
      %3010 = vmatprep.mubr.bf16.mxu0 %v2556
      %3011 = vmatmul.mubr.bf16.gmra.mxu0 %v2555
      %v3012 = vpop.f32.mrf.mxu0
      %v3013 = vadd.f32 %v2916, %v3012
      %v3014 = vpop.f32.mrf.mxu0
      %v3015 = vpop.f32.mrf.mxu0
      %v3016 = vadd.f32 %v2919, %v3015
      %v3017 = vpop.f32.mrf.mxu0
      %3018 = vmatprep.mubr.bf16.mxu0 %v2561
      %3019 = vmatmul.mubr.bf16.gmra.mxu0 %v2560
      %v3020 = vpop.f32.mrf.mxu0
      %v3021 = vadd.f32 %v2924, %v3020
      %v3022 = vpop.f32.mrf.mxu0
      %v3023 = vpop.f32.mrf.mxu0
      %v3024 = vadd.f32 %v2927, %v3023
      %v3025 = vpop.f32.mrf.mxu0
      %3026 = vmatprep.mubr.bf16.mxu0 %v2566
      %3027 = vmatmul.mubr.bf16.gmra.mxu0 %v2565
      %v3028 = vpop.f32.mrf.mxu0
      %v3029 = vadd.f32 %v2932, %v3028
      %v3030 = vpop.f32.mrf.mxu0
      %v3031 = vpop.f32.mrf.mxu0
      %v3032 = vadd.f32 %v2935, %v3031
      %v3033 = vpop.f32.mrf.mxu0
      %3034 = vdwg.mxu0
      %3035 = vmatprep.subr.bf16.mxu0 0
      %3036 = vmatpush1.bf16.msra.mxu0 0
      %3037 = vmatprep.subr.bf16.mxu0 0
      %3038 = vmatpush1.bf16.msra.mxu0 0
      %3039 = vmatprep.subr.bf16.mxu0 0
      %3040 = vmatpush1.bf16.msra.mxu0 0
      %3041 = vmatprep.subr.bf16.mxu0 0
      %3042 = vmatpush1.bf16.msra.mxu0 0
      %3043 = vmatprep.subr.bf16.mxu0 0
      %3044 = vmatpush1.bf16.msra.mxu0 %v2779
      %3045 = vmatprep.subr.bf16.mxu0 0
      %3046 = vmatpush1.bf16.msra.mxu0 %v2778
      %3047 = vmatprep.subr.bf16.mxu0 0
      %3048 = vmatpush1.bf16.msra.mxu0 %v2777
      %3049 = vmatprep.subr.bf16.mxu0 0
      %3050 = vmatpush1.bf16.msra.mxu0 %v2776
      %3051 = vmatprep.subr.bf16.mxu0 0
      %3052 = vmatpush2.bf16.msra.mxu0 0
      %3053 = vmatprep.subr.bf16.mxu0 0
      %3054 = vmatpush2.bf16.msra.mxu0 0
      %3055 = vmatprep.subr.bf16.mxu0 0
      %3056 = vmatpush2.bf16.msra.mxu0 0
      %3057 = vmatprep.subr.bf16.mxu0 0
      %3058 = vmatpush2.bf16.msra.mxu0 0
      %3059 = vmatprep.subr.bf16.mxu0 0
      %3060 = vmatpush2.bf16.msra.mxu0 0
      %3061 = vmatprep.subr.bf16.mxu0 0
      %3062 = vmatpush2.bf16.msra.mxu0 0
      %3063 = vmatprep.subr.bf16.mxu0 0
      %3064 = vmatpush2.bf16.msra.mxu0 0
      %3065 = vmatprep.subr.bf16.mxu0 0
      %3066 = vmatpush2.bf16.msra.mxu0 0
      %3067 = vmatprep.mubr.bf16.mxu0 0
      %3068 = vmatmul.mubr.bf16.gmra.mxu0 %v2818
      %v3069 = vpop.f32.mrf.mxu0
      %v3070 = vadd.f32 %v2973, %v3069
      %v3071 = vpop.f32.mrf.mxu0
      %v3072 = vpop.f32.mrf.mxu0
      %v3073 = vadd.f32 %v2976, %v3072
      %v3074 = vpop.f32.mrf.mxu0
      %3075 = vmatprep.mubr.bf16.mxu0 0
      %3076 = vmatmul.mubr.bf16.gmra.mxu0 %v2821
      %v3077 = vpop.f32.mrf.mxu0
      %v3078 = vadd.f32 %v2981, %v3077
      %v3079 = vpop.f32.mrf.mxu0
      %v3080 = vpop.f32.mrf.mxu0
      %v3081 = vadd.f32 %v2984, %v3080
      %v3082 = vpop.f32.mrf.mxu0
      %3083 = vmatprep.mubr.bf16.mxu0 0
      %3084 = vmatmul.mubr.bf16.gmra.mxu0 %v2824
      %v3085 = vpop.f32.mrf.mxu0
      %v3086 = vadd.f32 %v2989, %v3085
      %v3087 = vpop.f32.mrf.mxu0
      %v3088 = vpop.f32.mrf.mxu0
      %v3089 = vadd.f32 %v2992, %v3088
      %v3090 = vpop.f32.mrf.mxu0
      %3091 = vmatprep.mubr.bf16.mxu0 0
      %3092 = vmatmul.mubr.bf16.gmra.mxu0 %v2827
      %v3093 = vpop.f32.mrf.mxu0
      %v3094 = vadd.f32 %v2997, %v3093
      %v3095 = vpop.f32.mrf.mxu0
      %v3096 = vpop.f32.mrf.mxu0
      %v3097 = vadd.f32 %v3000, %v3096
      %v3098 = vpop.f32.mrf.mxu0
      %3099 = vmatprep.mubr.bf16.mxu0 0
      %3100 = vmatmul.mubr.bf16.gmra.mxu0 %v2830
      %v3101 = vpop.f32.mrf.mxu0
      %v3102 = vadd.f32 %v3005, %v3101
      %v3103 = vpop.f32.mrf.mxu0
      %v3104 = vpop.f32.mrf.mxu0
      %v3105 = vadd.f32 %v3008, %v3104
      %v3106 = vpop.f32.mrf.mxu0
      %3107 = vmatprep.mubr.bf16.mxu0 0
      %3108 = vmatmul.mubr.bf16.gmra.mxu0 %v2833
      %v3109 = vpop.f32.mrf.mxu0
      %v3110 = vadd.f32 %v3013, %v3109
      %v3111 = vpop.f32.mrf.mxu0
      %v3112 = vpop.f32.mrf.mxu0
      %v3113 = vadd.f32 %v3016, %v3112
      %v3114 = vpop.f32.mrf.mxu0
      %3115 = vmatprep.mubr.bf16.mxu0 0
      %3116 = vmatmul.mubr.bf16.gmra.mxu0 %v2836
      %v3117 = vpop.f32.mrf.mxu0
      %v3118 = vadd.f32 %v3021, %v3117
      %v3119 = vpop.f32.mrf.mxu0
      %v3120 = vpop.f32.mrf.mxu0
      %v3121 = vadd.f32 %v3024, %v3120
      %v3122 = vpop.f32.mrf.mxu0
      %3123 = vmatprep.mubr.bf16.mxu0 0
      %3124 = vmatmul.mubr.bf16.gmra.mxu0 %v2839
      %v3125 = vpop.f32.mrf.mxu0
      %v3126 = vadd.f32 %v3029, %v3125
      %v3127 = vpop.f32.mrf.mxu0
      %v3128 = vpop.f32.mrf.mxu0
      %v3129 = vadd.f32 %v3032, %v3128
      %v3130 = vpop.f32.mrf.mxu0
      %3131 = vdwg.mxu0
      %v3132 = vld [vmem:[%s442] sm:$0xff]
      %v3133 = vld [vmem:[%s442 + $0x8] sm:$0xff]
      %v3134 = vld [vmem:[%s442 + $0x10] sm:$0xff]
      %v3135 = vld [vmem:[%s442 + $0x18] sm:$0xff]
      %v3136 = vld [vmem:[%s442 + $0x20] sm:$0xff]
      %v3137 = vld [vmem:[%s442 + $0x28] sm:$0xff]
      %v3138 = vld [vmem:[%s442 + $0x30] sm:$0xff]
      %v3139 = vld [vmem:[%s442 + $0x38] sm:$0xff]
      %v3140 = vld [vmem:[%s442 + $0x40] sm:$0xff]
      %v3141 = vld [vmem:[%s442 + $0x48] sm:$0xff]
      %v3142 = vld [vmem:[%s442 + $0x50] sm:$0xff]
      %v3143 = vld [vmem:[%s442 + $0x58] sm:$0xff]
      %v3144 = vld [vmem:[%s442 + $0x60] sm:$0xff]
      %v3145 = vld [vmem:[%s442 + $0x68] sm:$0xff]
      %v3146 = vld [vmem:[%s442 + $0x70] sm:$0xff]
      %v3147 = vld [vmem:[%s442 + $0x78] sm:$0xff]
      %v3148 = vadd.f32 %v3070, %v3132
      %v3149 = vadd.f32 %v3073, %v3133
      %v3150 = vadd.f32 %v3078, %v3134
      %v3151 = vadd.f32 %v3081, %v3135
      %v3152 = vadd.f32 %v3086, %v3136
      %v3153 = vadd.f32 %v3089, %v3137
      %v3154 = vadd.f32 %v3094, %v3138
      %v3155 = vadd.f32 %v3097, %v3139
      %v3156 = vadd.f32 %v3102, %v3140
      %v3157 = vadd.f32 %v3105, %v3141
      %v3158 = vadd.f32 %v3110, %v3142
      %v3159 = vadd.f32 %v3113, %v3143
      %v3160 = vadd.f32 %v3118, %v3144
      %v3161 = vadd.f32 %v3121, %v3145
      %v3162 = vadd.f32 %v3126, %v3146
      %v3163 = vadd.f32 %v3129, %v3147
      %vm3164 = vcmask 31744
      %3165 = vst.msk [vmem:[%s453] sm:$0xff] %vm3164, %v3148
      %3166 = vst.msk [vmem:[%s453 + $0x8] sm:$0xff] %vm3164, %v3149
      %3167 = vst.msk [vmem:[%s453 + $0x10] sm:$0xff] %vm3164, %v3150
      %3168 = vst.msk [vmem:[%s453 + $0x18] sm:$0xff] %vm3164, %v3151
      %3169 = vst.msk [vmem:[%s453 + $0x20] sm:$0xff] %vm3164, %v3152
      %3170 = vst.msk [vmem:[%s453 + $0x28] sm:$0xff] %vm3164, %v3153
      %3171 = vst.msk [vmem:[%s453 + $0x30] sm:$0xff] %vm3164, %v3154
      %3172 = vst.msk [vmem:[%s453 + $0x38] sm:$0xff] %vm3164, %v3155
      %3173 = vst.msk [vmem:[%s453 + $0x40] sm:$0xff] %vm3164, %v3156
      %3174 = vst.msk [vmem:[%s453 + $0x48] sm:$0xff] %vm3164, %v3157
      %3175 = vst.msk [vmem:[%s453 + $0x50] sm:$0xff] %vm3164, %v3158
      %3176 = vst.msk [vmem:[%s453 + $0x58] sm:$0xff] %vm3164, %v3159
      %3177 = vst.msk [vmem:[%s453 + $0x60] sm:$0xff] %vm3164, %v3160
      %3178 = vst.msk [vmem:[%s453 + $0x68] sm:$0xff] %vm3164, %v3161
      %3179 = vst.msk [vmem:[%s453 + $0x70] sm:$0xff] %vm3164, %v3162
      %3180 = vst.msk [vmem:[%s453 + $0x78] sm:$0xff] %vm3164, %v3163
      %s3181 = smul.u32 8, %s22
      %p3182 = scmp.lt.s32.totalorder %s21, 1
      %s3183 = scalar_select %p3182, %s21, 1
      %p3184 = scmp.lt.s32.totalorder %s3181, 15
      %s3185 = scalar_select %p3184, %s3181, 15
      %s3186 = smul.addr %s3185, 2
      %s3187 = smul.addr %s3183, 32
      %s3188 = sadd.s32 %s3186, %s3187
      %s3189 = smul.addr %s3188, 8
      %s3190 = scalar_lea.vmem %s6, %s3189
      // Predicated region
      $region53: #{cnnf_forward.9} parent=43 // pred_check
        %p3191 = pneg %p215
      $region54: #{cnnf_forward.9} parent=43 // pred_check_branch
        %3193 = sbr.rel (%p3191) target = $region56
      $region55: #{cnnf_forward.9} parent=43 // pred_region
        %s3194 = smul.u32 8, %s22
      $region56: #{cnnf_forward.9} parent=43 // pred_fallthru
        _
    $region44: #{cnnf_forward.9} parent=5 // pred_fallthru
      _
    %p3195 = scmp.le.s32.totalorder 2, %s12
    // Predicated region
    $region57: #{cnnf_forward.9} parent=5 // pred_check
      %p3196 = pneg %p3195
    $region58: #{cnnf_forward.9} parent=5 // pred_check_branch
      %3198 = sbr.rel (%p3196) target = $region60
    $region59: #{cnnf_forward.9} parent=5 // pred_region
      %s3199 = ssub.s32 %s12, 2
      // Predicated region
      $region61: #{cnnf_forward.9} parent=59 // pred_check
        %p3200 = pneg %p221
      $region62: #{cnnf_forward.9} parent=59 // pred_check_branch
        %3202 = sbr.rel (%p3200) target = $region64
      $region63: #{cnnf_forward.9} parent=59 // pred_region
        %s3203 = smul.u32 8, %s24
        %p3204 = scmp.lt.s32.totalorder %s23, 1
        %s3205 = scalar_select %p3204, %s23, 1
        %p3206 = scmp.lt.s32.totalorder %s3203, 15
        %s3207 = scalar_select %p3206, %s3203, 15
        %s3208 = smul.addr %s3207, 2
        %s3209 = smul.addr %s3205, 32
        %s3210 = sadd.s32 %s3208, %s3209
        %s3211 = smul.addr %s3210, 8
        %s3212 = scalar_lea.vmem %s6, %s3211
      $region64: #{cnnf_forward.9} parent=59 // pred_fallthru
        _
    $region60: #{cnnf_forward.9} parent=5 // pred_fallthru
      _
  $region6: #{cnnf_forward.9} parent=0 // loop_footer
    %s16 = sadd.s32 1, %s12
  $region7: #{cnnf_forward.9} parent=0 // loop_footer_branch
    %11 = sbr.rel target = $region3
  $region8: #{cnnf_forward.9} parent=0 // loop_exit
    _

// kernel: cnnf_forward.7
$region0: #{cnnf_forward.7}
  #allocation0 [shape = 'u32[]', space=smem, size = 0x4, offset = 0x4, fixed_abs, tag = 'smem constant byte address 0x4 - core index']
  #allocation1 [shape = 'u32[144,128]{1,0:T(1,128)}', space=vmem, size = 0x12000, scoped, tag = 'internal scratch']
  #allocation2 [shape = 'bf16[10,18,64]{2,1,0:T(8,128)(2,1)}', space=vmem, size = 0xf000, scoped, tag = 'scratch operand']
  #allocation3 [shape = 'bf16[8,16,576]{2,1,0:T(8,128)(2,1)}', space=vmem, size = 0x28000, scoped, tag = 'scratch operand']
  %s0 = inlined_call_operand.vmem [shape: f32[2,16,16,64], index: 0, kind: input, shape index: {}, may-alias: {0,1,2}]
  %s1 = inlined_call_operand.vmem [shape: f32[2,16,16,64], index: 1, kind: input, shape index: {}, may-alias: {0,1,2}]
  %s2 = inlined_call_operand.vmem [shape: f32[2,16,16,64], index: 2, kind: input, shape index: {}, may-alias: {0,1,2}]
  %s3 = inlined_call_operand.vmem [shape: f32[2,16,16,4], index: 3, kind: input, shape index: {}]
  %s4 = inlined_call_operand.vmem [shape: bf16[576,64], index: 4, kind: input, shape index: {}]
  %s5 = inlined_call_operand.vmem [shape: f32[1,64], index: 5, kind: input, shape index: {}]
  %s6 = inlined_call_operand.vmem [shape: f32[2,16,16,64], index: 6, kind: output, shape index: {}]
  %s7 = sld [smem:[#allocation0]]
  $region65: #{cnnf_forward.7} parent=0
    _
  %s9 = ssub.s32 1, %s7
  %s10 = scalar_select 0, %s9, %s7
  loop: start=0, step=1, limit=6
  $region2: #{cnnf_forward.7} parent=0 // loop_pre_header
    _
  $region3: #{cnnf_forward.7} parent=0 // loop_header
    %s12 = sphi 0, %s16
    %p13 = scmp.ge.s32.totalorder %s12, 6
    %s19 = sphi 0, %s31
    %s20 = sphi 0, %s27
    %s21 = sphi 0, %s19
    %s22 = sphi 0, %s20
    %s23 = sphi 0, %s21
    %s24 = sphi 0, %s22
    %s36 = sphi 0, %s38
    %s39 = sphi 0, %s36
    %s40 = sphi 0, %s39
    %s56 = sphi 0, %s40
    %s70 = sphi 0, %s72
    %s73 = sphi 0, %s70
    %s74 = sphi 0, %s73
    %s90 = sphi 0, %s74
    %s104 = sphi 0, %s106
    %s107 = sphi 0, %s104
    %s108 = sphi 0, %s107
    %s124 = sphi 0, %s108
    %s132 = sphi 0, %s134
    %s135 = sphi 0, %s132
    %s136 = sphi 0, %s135
    %s152 = sphi 0, %s136
    %s156 = sphi 0, %s156
    %s158 = sphi 0, %s156
    %s159 = sphi 0, %s158
    %s173 = sphi 0, %s159
    %s177 = sphi 0, %s177
    %s179 = sphi 0, %s177
    %s180 = sphi 0, %s179
    %s194 = sphi 0, %s180
    %s202 = sphi 0, %s204
    %s205 = sphi 0, %s202
    %s206 = sphi 0, %s205
    %s222 = sphi 0, %s206
  $region4: #{cnnf_forward.7} parent=0 // loop_header_branch
    %15 = sbr.rel (%p13) target = $region8
  $region5: #{cnnf_forward.7} parent=0 // loop_body
    %s17 = ssub.s32 %s12, 1
    %s18 = ssub.s32 %s12, 2
    %s25 = sadd.s32 1, %s20
    %p26 = scmp.ge.s32.totalorder %s25, 2
    %s27 = scalar_select %p26, 0, %s25
    %s28 = sadd.s32 1, %s19
    %s29 = scalar_select %p26, %s28, %s19
    %p30 = scmp.ge.s32.totalorder %s29, 2
    %s31 = scalar_select %p30, 0, %s29
    %s32 = ssub.s32 %s19, %s31
    %s33 = ssub.s32 %s20, %s27
    %s34 = sor.u32 %s32, %s33
    %p35 = scmp.eq.s32.totalorder %s34, 0
    %s37 = sadd.s32 %s36, 1
    %s38 = scalar_select %p35, %s36, %s37
    %p41 = pneg %p35
    %p42 = scmp.eq.s32.totalorder %s12, 3
    %p43 = por %p41, %p42
    %p44 = scmp.ne.s32.totalorder %s36, %s39
    %p45 = scmp.eq.s32.totalorder %s12, 0
    %p46 = por %p44, %p45
    %p47 = scmp.ne.s32.totalorder %s36, %s39
    %p48 = scmp.eq.s32.totalorder %s17, 3
    %p49 = por %p47, %p48
    %p50 = scmp.ne.s32.totalorder %s39, %s40
    %p51 = scmp.eq.s32.totalorder %s17, 0
    %p52 = por %p50, %p51
    %p53 = scmp.ne.s32.totalorder %s39, %s40
    %p54 = scmp.eq.s32.totalorder %s18, 3
    %p55 = por %p53, %p54
    %p57 = scmp.ne.s32.totalorder %s40, %s56
    %p58 = scmp.eq.s32.totalorder %s18, 0
    %p59 = por %p57, %p58
    %s60 = ssub.s32 %s20, 1
    %p61 = scmp.gt.s32.totalorder %s60, 0
    %s62 = scalar_select %p61, %s60, 0
    %s63 = ssub.s32 %s27, 1
    %p64 = scmp.gt.s32.totalorder %s63, 0
    %s65 = scalar_select %p64, %s63, 0
    %s66 = ssub.s32 %s19, %s31
    %s67 = ssub.s32 %s62, %s65
    %s68 = sor.u32 %s66, %s67
    %p69 = scmp.eq.s32.totalorder %s68, 0
    %s71 = sadd.s32 %s70, 1
    %s72 = scalar_select %p69, %s70, %s71
    %p75 = pneg %p69
    %p76 = scmp.eq.s32.totalorder %s12, 3
    %p77 = por %p75, %p76
    %p78 = scmp.ne.s32.totalorder %s70, %s73
    %p79 = scmp.eq.s32.totalorder %s12, 0
    %p80 = por %p78, %p79
    %p81 = scmp.ne.s32.totalorder %s70, %s73
    %p82 = scmp.eq.s32.totalorder %s17, 3
    %p83 = por %p81, %p82
    %p84 = scmp.ne.s32.totalorder %s73, %s74
    %p85 = scmp.eq.s32.totalorder %s17, 0
    %p86 = por %p84, %p85
    %p87 = scmp.ne.s32.totalorder %s73, %s74
    %p88 = scmp.eq.s32.totalorder %s18, 3
    %p89 = por %p87, %p88
    %p91 = scmp.ne.s32.totalorder %s74, %s90
    %p92 = scmp.eq.s32.totalorder %s18, 0
    %p93 = por %p91, %p92
    %s94 = sadd.s32 %s20, 1
    %p95 = scmp.lt.s32.totalorder %s94, 1
    %s96 = scalar_select %p95, %s94, 1
    %s97 = sadd.s32 %s27, 1
    %p98 = scmp.lt.s32.totalorder %s97, 1
    %s99 = scalar_select %p98, %s97, 1
    %s100 = ssub.s32 %s19, %s31
    %s101 = ssub.s32 %s96, %s99
    %s102 = sor.u32 %s100, %s101
    %p103 = scmp.eq.s32.totalorder %s102, 0
    %s105 = sadd.s32 %s104, 1
    %s106 = scalar_select %p103, %s104, %s105
    %p109 = pneg %p103
    %p110 = scmp.eq.s32.totalorder %s12, 3
    %p111 = por %p109, %p110
    %p112 = scmp.ne.s32.totalorder %s104, %s107
    %p113 = scmp.eq.s32.totalorder %s12, 0
    %p114 = por %p112, %p113
    %p115 = scmp.ne.s32.totalorder %s104, %s107
    %p116 = scmp.eq.s32.totalorder %s17, 3
    %p117 = por %p115, %p116
    %p118 = scmp.ne.s32.totalorder %s107, %s108
    %p119 = scmp.eq.s32.totalorder %s17, 0
    %p120 = por %p118, %p119
    %p121 = scmp.ne.s32.totalorder %s107, %s108
    %p122 = scmp.eq.s32.totalorder %s18, 3
    %p123 = por %p121, %p122
    %p125 = scmp.ne.s32.totalorder %s108, %s124
    %p126 = scmp.eq.s32.totalorder %s18, 0
    %p127 = por %p125, %p126
    %s128 = ssub.s32 %s19, %s31
    %s129 = ssub.s32 %s20, %s27
    %s130 = sor.u32 %s128, %s129
    %p131 = scmp.eq.s32.totalorder %s130, 0
    %s133 = sadd.s32 %s132, 1
    %s134 = scalar_select %p131, %s132, %s133
    %p137 = pneg %p131
    %p138 = scmp.eq.s32.totalorder %s12, 3
    %p139 = por %p137, %p138
    %p140 = scmp.ne.s32.totalorder %s132, %s135
    %p141 = scmp.eq.s32.totalorder %s12, 0
    %p142 = por %p140, %p141
    %p143 = scmp.ne.s32.totalorder %s132, %s135
    %p144 = scmp.eq.s32.totalorder %s17, 3
    %p145 = por %p143, %p144
    %p146 = scmp.ne.s32.totalorder %s135, %s136
    %p147 = scmp.eq.s32.totalorder %s17, 0
    %p148 = por %p146, %p147
    %p149 = scmp.ne.s32.totalorder %s135, %s136
    %p150 = scmp.eq.s32.totalorder %s18, 3
    %p151 = por %p149, %p150
    %p153 = scmp.ne.s32.totalorder %s136, %s152
    %p154 = scmp.eq.s32.totalorder %s18, 0
    %p155 = por %p153, %p154
    %s157 = sadd.s32 %s156, 1
    %p160 = scmp.eq.s32.totalorder %s12, 3
    %p161 = scmp.ne.s32.totalorder %s156, %s158
    %p162 = scmp.eq.s32.totalorder %s12, 0
    %p163 = por %p161, %p162
    %p164 = scmp.ne.s32.totalorder %s156, %s158
    %p165 = scmp.eq.s32.totalorder %s17, 3
    %p166 = por %p164, %p165
    %p167 = scmp.ne.s32.totalorder %s158, %s159
    %p168 = scmp.eq.s32.totalorder %s17, 0
    %p169 = por %p167, %p168
    %p170 = scmp.ne.s32.totalorder %s158, %s159
    %p171 = scmp.eq.s32.totalorder %s18, 3
    %p172 = por %p170, %p171
    %p174 = scmp.ne.s32.totalorder %s159, %s173
    %p175 = scmp.eq.s32.totalorder %s18, 0
    %p176 = por %p174, %p175
    %s178 = sadd.s32 %s177, 1
    %p181 = scmp.eq.s32.totalorder %s12, 3
    %p182 = scmp.ne.s32.totalorder %s177, %s179
    %p183 = scmp.eq.s32.totalorder %s12, 0
    %p184 = por %p182, %p183
    %p185 = scmp.ne.s32.totalorder %s177, %s179
    %p186 = scmp.eq.s32.totalorder %s17, 3
    %p187 = por %p185, %p186
    %p188 = scmp.ne.s32.totalorder %s179, %s180
    %p189 = scmp.eq.s32.totalorder %s17, 0
    %p190 = por %p188, %p189
    %p191 = scmp.ne.s32.totalorder %s179, %s180
    %p192 = scmp.eq.s32.totalorder %s18, 3
    %p193 = por %p191, %p192
    %p195 = scmp.ne.s32.totalorder %s180, %s194
    %p196 = scmp.eq.s32.totalorder %s18, 0
    %p197 = por %p195, %p196
    %s198 = ssub.s32 %s19, %s31
    %s199 = ssub.s32 %s20, %s27
    %s200 = sor.u32 %s198, %s199
    %p201 = scmp.eq.s32.totalorder %s200, 0
    %s203 = sadd.s32 %s202, 1
    %s204 = scalar_select %p201, %s202, %s203
    %p207 = pneg %p201
    %p208 = scmp.eq.s32.totalorder %s12, 3
    %p209 = por %p207, %p208
    %p210 = scmp.ne.s32.totalorder %s202, %s205
    %p211 = scmp.eq.s32.totalorder %s12, 0
    %p212 = por %p210, %p211
    %p213 = scmp.ne.s32.totalorder %s202, %s205
    %p214 = scmp.eq.s32.totalorder %s17, 3
    %p215 = por %p213, %p214
    %p216 = scmp.ne.s32.totalorder %s205, %s206
    %p217 = scmp.eq.s32.totalorder %s17, 0
    %p218 = por %p216, %p217
    %p219 = scmp.ne.s32.totalorder %s205, %s206
    %p220 = scmp.eq.s32.totalorder %s18, 3
    %p221 = por %p219, %p220
    %p223 = scmp.ne.s32.totalorder %s206, %s222
    %p224 = scmp.eq.s32.totalorder %s18, 0
    %p225 = por %p223, %p224
    %p226 = scmp.le.s32.totalorder 1, %s12
    %p227 = scmp.lt.s32.totalorder %s12, 5
    %p228 = pnand %p226, %p227
    %p229 = pneg %p228
    // Predicated region
    $region9: #{cnnf_forward.7} parent=5 // pred_check
      _
    $region10: #{cnnf_forward.7} parent=5 // pred_check_branch
      %231 = sbr.rel (%p228) target = $region12
    $region11: #{cnnf_forward.7} parent=5 // pred_region
      %s232 = ssub.s32 %s12, 1
      // Predicated region
      $region13: #{cnnf_forward.7} parent=11 // pred_check
        %p233 = pneg %p169
      $region14: #{cnnf_forward.7} parent=11 // pred_check_branch
        %235 = sbr.rel (%p233) target = $region16
      $region15: #{cnnf_forward.7} parent=11 // pred_region
        _
      $region16: #{cnnf_forward.7} parent=11 // pred_fallthru
        _
      // Predicated region
      $region17: #{cnnf_forward.7} parent=11 // pred_check
        %p236 = pneg %p190
      $region18: #{cnnf_forward.7} parent=11 // pred_check_branch
        %238 = sbr.rel (%p236) target = $region20
      $region19: #{cnnf_forward.7} parent=11 // pred_region
        _
      $region20: #{cnnf_forward.7} parent=11 // pred_fallthru
        _
    $region12: #{cnnf_forward.7} parent=5 // pred_fallthru
      _
    %p239 = scmp.lt.s32.totalorder %s12, 4
    // Predicated region
    $region21: #{cnnf_forward.7} parent=5 // pred_check
      %p240 = pneg %p239
    $region22: #{cnnf_forward.7} parent=5 // pred_check_branch
      %242 = sbr.rel (%p240) target = $region24
    $region23: #{cnnf_forward.7} parent=5 // pred_region
      // Predicated region
      $region25: #{cnnf_forward.7} parent=23 // pred_check
        %p243 = pneg %p46
      $region26: #{cnnf_forward.7} parent=23 // pred_check_branch
        %245 = sbr.rel (%p243) target = $region28
      $region27: #{cnnf_forward.7} parent=23 // pred_region
        %s246 = smul.u32 8, %s20
        %p247 = scmp.lt.s32.totalorder %s19, 1
        %s248 = scalar_select %p247, %s19, 1
        %p249 = scmp.lt.s32.totalorder %s246, 15
        %s250 = scalar_select %p249, %s246, 15
        %s251 = smul.addr %s250, 2
        %s252 = smul.addr %s248, 32
        %s253 = sadd.s32 %s251, %s252
        %s254 = smul.addr %s253, 8
        %s255 = scalar_lea.vmem %s0, %s254
        %s256 = smul.u32 8, %s20
      $region28: #{cnnf_forward.7} parent=23 // pred_fallthru
        _
      // Predicated region
      $region29: #{cnnf_forward.7} parent=23 // pred_check
        %p257 = pneg %p80
      $region30: #{cnnf_forward.7} parent=23 // pred_check_branch
        %259 = sbr.rel (%p257) target = $region32
      $region31: #{cnnf_forward.7} parent=23 // pred_region
        %s260 = ssub.s32 %s20, 1
        %p261 = scmp.gt.s32.totalorder %s260, 0
        %s262 = scalar_select %p261, %s260, 0
        %s263 = smul.u32 8, %s262
        %p264 = scmp.lt.s32.totalorder %s19, 1
        %s265 = scalar_select %p264, %s19, 1
        %p266 = scmp.lt.s32.totalorder %s263, 15
        %s267 = scalar_select %p266, %s263, 15
        %s268 = smul.addr %s267, 2
        %s269 = smul.addr %s265, 32
        %s270 = sadd.s32 %s268, %s269
        %s271 = smul.addr %s270, 8
        %s272 = scalar_lea.vmem %s1, %s271
        %s273 = ssub.s32 %s20, 1
        %p274 = scmp.gt.s32.totalorder %s273, 0
        %s275 = scalar_select %p274, %s273, 0
        %s276 = smul.u32 8, %s275
      $region32: #{cnnf_forward.7} parent=23 // pred_fallthru
        _
      // Predicated region
      $region33: #{cnnf_forward.7} parent=23 // pred_check
        %p277 = pneg %p114
      $region34: #{cnnf_forward.7} parent=23 // pred_check_branch
        %279 = sbr.rel (%p277) target = $region36
      $region35: #{cnnf_forward.7} parent=23 // pred_region
        %s280 = sadd.s32 %s20, 1
        %p281 = scmp.lt.s32.totalorder %s280, 1
        %s282 = scalar_select %p281, %s280, 1
        %s283 = smul.u32 8, %s282
        %p284 = scmp.lt.s32.totalorder %s19, 1
        %s285 = scalar_select %p284, %s19, 1
        %p286 = scmp.lt.s32.totalorder %s283, 15
        %s287 = scalar_select %p286, %s283, 15
        %s288 = smul.addr %s287, 2
        %s289 = smul.addr %s285, 32
        %s290 = sadd.s32 %s288, %s289
        %s291 = smul.addr %s290, 8
        %s292 = scalar_lea.vmem %s2, %s291
        %s293 = sadd.s32 %s20, 1
        %p294 = scmp.lt.s32.totalorder %s293, 1
        %s295 = scalar_select %p294, %s293, 1
        %s296 = smul.u32 8, %s295
      $region36: #{cnnf_forward.7} parent=23 // pred_fallthru
        _
      // Predicated region
      $region37: #{cnnf_forward.7} parent=23 // pred_check
        %p297 = pneg %p142
      $region38: #{cnnf_forward.7} parent=23 // pred_check_branch
        %299 = sbr.rel (%p297) target = $region40
      $region39: #{cnnf_forward.7} parent=23 // pred_region
        %s300 = smul.u32 8, %s20
        %p301 = scmp.lt.s32.totalorder %s19, 1
        %s302 = scalar_select %p301, %s19, 1
        %p303 = scmp.lt.s32.totalorder %s300, 15
        %s304 = scalar_select %p303, %s300, 15
        %s305 = smul.addr %s304, 2
        %s306 = smul.addr %s302, 32
        %s307 = sadd.s32 %s305, %s306
        %s308 = smul.addr %s307, 8
        %s309 = scalar_lea.vmem %s3, %s308
        %s310 = smul.u32 8, %s20
      $region40: #{cnnf_forward.7} parent=23 // pred_fallthru
        _
    $region24: #{cnnf_forward.7} parent=5 // pred_fallthru
      _
    %p311 = scmp.le.s32.totalorder 1, %s12
    %p312 = scmp.lt.s32.totalorder %s12, 5
    %p313 = pnand %p311, %p312
    %p314 = pneg %p313
    // Predicated region
    $region41: #{cnnf_forward.7} parent=5 // pred_check
      _
    $region42: #{cnnf_forward.7} parent=5 // pred_check_branch
      %316 = sbr.rel (%p313) target = $region44
    $region43: #{cnnf_forward.7} parent=5 // pred_region
      %s317 = ssub.s32 %s12, 1
      %s318 = smul.u32 8, %s22
      %p319 = scmp.lt.s32.totalorder %s21, 1
      %s320 = scalar_select %p319, %s21, 1
      %p321 = scmp.lt.s32.totalorder %s318, 15
      %s322 = scalar_select %p321, %s318, 15
      %s323 = smul.addr %s322, 2
      %s324 = smul.addr %s320, 32
      %s325 = sadd.s32 %s323, %s324
      %s326 = smul.addr %s325, 8
      %s327 = scalar_lea.vmem %s0, %s326
      %p328 = pneg %p52
      %p329 = pneg %p49
      %s330 = ssub.s32 %s22, 1
      %p331 = scmp.gt.s32.totalorder %s330, 0
      %s332 = scalar_select %p331, %s330, 0
      %s333 = smul.u32 8, %s332
      %p334 = scmp.lt.s32.totalorder %s21, 1
      %s335 = scalar_select %p334, %s21, 1
      %p336 = scmp.lt.s32.totalorder %s333, 15
      %s337 = scalar_select %p336, %s333, 15
      %s338 = smul.addr %s337, 2
      %s339 = smul.addr %s335, 32
      %s340 = sadd.s32 %s338, %s339
      %s341 = smul.addr %s340, 8
      %s342 = scalar_lea.vmem %s1, %s341
      %p343 = pneg %p86
      %p344 = pneg %p83
      %s345 = sadd.s32 %s22, 1
      %p346 = scmp.lt.s32.totalorder %s345, 1
      %s347 = scalar_select %p346, %s345, 1
      %s348 = smul.u32 8, %s347
      %p349 = scmp.lt.s32.totalorder %s21, 1
      %s350 = scalar_select %p349, %s21, 1
      %p351 = scmp.lt.s32.totalorder %s348, 15
      %s352 = scalar_select %p351, %s348, 15
      %s353 = smul.addr %s352, 2
      %s354 = smul.addr %s350, 32
      %s355 = sadd.s32 %s353, %s354
      %s356 = smul.addr %s355, 8
      %s357 = scalar_lea.vmem %s2, %s356
      %p358 = pneg %p120
      %p359 = pneg %p117
      %s360 = smul.u32 8, %s22
      %p361 = scmp.lt.s32.totalorder %s21, 1
      %s362 = scalar_select %p361, %s21, 1
      %p363 = scmp.lt.s32.totalorder %s360, 15
      %s364 = scalar_select %p363, %s360, 15
      %s365 = smul.addr %s364, 2
      %s366 = smul.addr %s362, 32
      %s367 = sadd.s32 %s365, %s366
      %s368 = smul.addr %s367, 8
      %s369 = scalar_lea.vmem %s3, %s368
      %p370 = pneg %p148
      %p371 = pneg %p145
      %p372 = pneg %p169
      %p373 = pneg %p166
      %p374 = pneg %p190
      %p375 = pneg %p187
      %p376 = pneg %p218
      %p377 = pneg %p215
      %s378 = smul.u32 8, %s22
      %p379 = scmp.lt.s32.totalorder %s21, 1
      %s380 = scalar_select %p379, %s21, 1
      %p381 = scmp.lt.s32.totalorder %s378, 15
      %s382 = scalar_select %p381, %s378, 15
      %s383 = smul.addr %s382, 2
      %s384 = smul.addr %s380, 32
      %s385 = sadd.s32 %s383, %s384
      %s386 = smul.addr %s385, 8
      %s387 = scalar_lea.vmem %s6, %s386
      %s388 = smul.u32 8, %s22
      %p389 = scmp.lt.s32.totalorder %s21, 1
      %s390 = scalar_select %p389, %s21, 1
      %p391 = scmp.lt.s32.totalorder %s388, 15
      %s392 = scalar_select %p391, %s388, 15
      %s393 = smul.addr %s392, 2
      %s394 = smul.addr %s390, 32
      %s395 = sadd.s32 %s393, %s394
      %s396 = smul.addr %s395, 8
      %s397 = scalar_lea.vmem %s0, %s396
      %s398 = smul.u32 8, %s22
      %s399 = ssub.s32 %s22, 1
      %p400 = scmp.gt.s32.totalorder %s399, 0
      %s401 = scalar_select %p400, %s399, 0
      %s402 = smul.u32 8, %s401
      %p403 = scmp.lt.s32.totalorder %s21, 1
      %s404 = scalar_select %p403, %s21, 1
      %p405 = scmp.lt.s32.totalorder %s402, 15
      %s406 = scalar_select %p405, %s402, 15
      %s407 = smul.addr %s406, 2
      %s408 = smul.addr %s404, 32
      %s409 = sadd.s32 %s407, %s408
      %s410 = smul.addr %s409, 8
      %s411 = scalar_lea.vmem %s1, %s410
      %s412 = ssub.s32 %s22, 1
      %p413 = scmp.gt.s32.totalorder %s412, 0
      %s414 = scalar_select %p413, %s412, 0
      %s415 = smul.u32 8, %s414
      %s416 = sadd.s32 %s22, 1
      %p417 = scmp.lt.s32.totalorder %s416, 1
      %s418 = scalar_select %p417, %s416, 1
      %s419 = smul.u32 8, %s418
      %p420 = scmp.lt.s32.totalorder %s21, 1
      %s421 = scalar_select %p420, %s21, 1
      %p422 = scmp.lt.s32.totalorder %s419, 15
      %s423 = scalar_select %p422, %s419, 15
      %s424 = smul.addr %s423, 2
      %s425 = smul.addr %s421, 32
      %s426 = sadd.s32 %s424, %s425
      %s427 = smul.addr %s426, 8
      %s428 = scalar_lea.vmem %s2, %s427
      %s429 = sadd.s32 %s22, 1
      %p430 = scmp.lt.s32.totalorder %s429, 1
      %s431 = scalar_select %p430, %s429, 1
      %s432 = smul.u32 8, %s431
      %s433 = smul.u32 8, %s22
      %p434 = scmp.lt.s32.totalorder %s21, 1
      %s435 = scalar_select %p434, %s21, 1
      %p436 = scmp.lt.s32.totalorder %s433, 15
      %s437 = scalar_select %p436, %s433, 15
      %s438 = smul.addr %s437, 2
      %s439 = smul.addr %s435, 32
      %s440 = sadd.s32 %s438, %s439
      %s441 = smul.addr %s440, 8
      %s442 = scalar_lea.vmem %s3, %s441
      %s443 = smul.u32 8, %s22
      %s444 = smul.u32 8, %s22
      %p445 = scmp.lt.s32.totalorder %s21, 1
      %s446 = scalar_select %p445, %s21, 1
      %p447 = scmp.lt.s32.totalorder %s444, 15
      %s448 = scalar_select %p447, %s444, 15
      %s449 = smul.addr %s448, 2
      %s450 = smul.addr %s446, 32
      %s451 = sadd.s32 %s449, %s450
      %s452 = smul.addr %s451, 8
      %s453 = scalar_lea.vmem %s6, %s452
      %s454 = smul.u32 8, %s22
      %vm456 = vcmask 519168
      %457 = vst.msk [vmem:[#allocation2] sm:$0xf] %vm456, 0
      %458 = vst.msk [vmem:[#allocation2 + $0x4] sm:$0xf] %vm456, 0
      %vm459 = vcmask 516096
      %460 = vst.msk [vmem:[#allocation2 + $0x8] sm:$0x1] %vm459, 0
      %461 = vst.msk [vmem:[#allocation2 + $0xc] sm:$0xf] %vm456, 0
      %462 = vst.msk [vmem:[#allocation2 + $0x10] sm:$0xf] %vm456, 0
      %463 = vst.msk [vmem:[#allocation2 + $0x14] sm:$0x1] %vm459, 0
      %464 = vst.msk [vmem:[#allocation2 + $0x18] sm:$0xf] %vm456, 0
      %465 = vst.msk [vmem:[#allocation2 + $0x1c] sm:$0xf] %vm456, 0
      %466 = vst.msk [vmem:[#allocation2 + $0x20] sm:$0x1] %vm459, 0
      %467 = vst.msk [vmem:[#allocation2 + $0x24] sm:$0xf] %vm456, 0
      %468 = vst.msk [vmem:[#allocation2 + $0x28] sm:$0xf] %vm456, 0
      %469 = vst.msk [vmem:[#allocation2 + $0x2c] sm:$0x1] %vm459, 0
      %470 = vst.msk [vmem:[#allocation2 + $0x30] sm:$0xf] %vm456, 0
      %471 = vst.msk [vmem:[#allocation2 + $0x34] sm:$0xf] %vm456, 0
      %472 = vst.msk [vmem:[#allocation2 + $0x38] sm:$0x1] %vm459, 0
      %473 = vst.msk [vmem:[#allocation2 + $0x3c] sm:$0xf] %vm456, 0
      %474 = vst.msk [vmem:[#allocation2 + $0x40] sm:$0xf] %vm456, 0
      %475 = vst.msk [vmem:[#allocation2 + $0x44] sm:$0x1] %vm459, 0
      %476 = vst.msk [vmem:[#allocation2 + $0x48] sm:$0xf] %vm456, 0
      %477 = vst.msk [vmem:[#allocation2 + $0x4c] sm:$0xf] %vm456, 0
      %478 = vst.msk [vmem:[#allocation2 + $0x50] sm:$0x1] %vm459, 0
      %479 = vst.msk [vmem:[#allocation2 + $0x54] sm:$0xf] %vm456, 0
      %480 = vst.msk [vmem:[#allocation2 + $0x58] sm:$0xf] %vm456, 0
      %481 = vst.msk [vmem:[#allocation2 + $0x5c] sm:$0x1] %vm459, 0
      %482 = vst.msk [vmem:[#allocation2 + $0x60] sm:$0xf] %vm456, 0
      %483 = vst.msk [vmem:[#allocation2 + $0x64] sm:$0xf] %vm456, 0
      %484 = vst.msk [vmem:[#allocation2 + $0x68] sm:$0x1] %vm459, 0
      %485 = vst.msk [vmem:[#allocation2 + $0x6c] sm:$0xf] %vm456, 0
      %486 = vst.msk [vmem:[#allocation2 + $0x70] sm:$0xf] %vm456, 0
      %487 = vst.msk [vmem:[#allocation2 + $0x74] sm:$0x1] %vm459, 0
      %v488 = vld [vmem:[%s397] sm:$0xff]
      %v489 = vld [vmem:[%s397 + $0x8] sm:$0xff]
      %v490 = vld [vmem:[%s397 + $0x10] sm:$0xff]
      %v491 = vld [vmem:[%s397 + $0x18] sm:$0xff]
      %v492 = vld [vmem:[%s397 + $0x20] sm:$0xff]
      %v493 = vld [vmem:[%s397 + $0x28] sm:$0xff]
      %v494 = vld [vmem:[%s397 + $0x30] sm:$0xff]
      %v495 = vld [vmem:[%s397 + $0x38] sm:$0xff]
      %v496 = vld [vmem:[%s397 + $0x40] sm:$0xff]
      %v497 = vld [vmem:[%s397 + $0x48] sm:$0xff]
      %v498 = vld [vmem:[%s397 + $0x50] sm:$0xff]
      %v499 = vld [vmem:[%s397 + $0x58] sm:$0xff]
      %v500 = vld [vmem:[%s397 + $0x60] sm:$0xff]
      %v501 = vld [vmem:[%s397 + $0x68] sm:$0xff]
      %v502 = vld [vmem:[%s397 + $0x70] sm:$0xff]
      %v503 = vld [vmem:[%s397 + $0x78] sm:$0xff]
      %v504 = vpack.c.bf16 %v489, %v488
      %v505 = vpack.c.bf16 %v491, %v490
      %v506 = vpack.c.bf16 %v493, %v492
      %v507 = vpack.c.bf16 %v495, %v494
      %v508 = vpack.c.bf16 %v497, %v496
      %v509 = vpack.c.bf16 %v499, %v498
      %v510 = vpack.c.bf16 %v501, %v500
      %v511 = vpack.c.bf16 %v503, %v502
      %v520 = vunpack.c.l.b16 %v504
      %v521 = vunpack.c.h.b16 %v504
      %v522 = vunpack.c.l.b16 %v505
      %v523 = vunpack.c.h.b16 %v505
      %v524 = vunpack.c.l.b16 %v506
      %v525 = vunpack.c.h.b16 %v506
      %v526 = vunpack.c.l.b16 %v507
      %v527 = vunpack.c.h.b16 %v507
      %v528 = vunpack.c.l.b16 %v508
      %v529 = vunpack.c.h.b16 %v508
      %v530 = vunpack.c.l.b16 %v509
      %v531 = vunpack.c.h.b16 %v509
      %v532 = vunpack.c.l.b16 %v510
      %v533 = vunpack.c.h.b16 %v510
      %v534 = vunpack.c.l.b16 %v511
      %v535 = vunpack.c.h.b16 %v511
      %v536 = vpack.c.b16 %v520, %v520
      %v537 = vpack.c.b16 %v521, %v521
      %v538 = vpack.c.b16 %v522, %v522
      %v539 = vpack.c.b16 %v523, %v523
      %v540 = vpack.c.b16 %v524, %v524
      %v541 = vpack.c.b16 %v525, %v525
      %v542 = vpack.c.b16 %v526, %v526
      %v543 = vpack.c.b16 %v527, %v527
      %v544 = vpack.c.b16 %v528, %v528
      %v545 = vpack.c.b16 %v529, %v529
      %v546 = vpack.c.b16 %v530, %v530
      %v547 = vpack.c.b16 %v531, %v531
      %v548 = vpack.c.b16 %v532, %v532
      %v549 = vpack.c.b16 %v533, %v533
      %v550 = vpack.c.b16 %v534, %v534
      %v551 = vpack.c.b16 %v535, %v535
      %vm552 = vsmask.f32 256
      %vm553 = vsmask.f32 4368
      %vm554 = vmor %vm552, %vm553
      %v556 = vshrl.u32 %v536, 16
      %v558 = vrot.slane %v556, 7
      %v559 = vshll.u32 %v536, 16
      %v561 = vor.u32 %v558, %v559
      %v562 = vrot.slane %v558, 4
      %v564 = vshrl.u32 %v537, 16
      %v566 = vrot.slane %v564, 7
      %v567 = vshll.u32 %v537, 16
      %v569 = vor.u32 %v566, %v567
      %v570 = vsel %vm554, %v562, %v569
      %v571 = vrot.slane %v566, 4
      %v573 = vshrl.u32 %v538, 16
      %v575 = vrot.slane %v573, 7
      %v576 = vshll.u32 %v538, 16
      %v578 = vor.u32 %v575, %v576
      %v579 = vrot.slane %v575, 4
      %v581 = vshrl.u32 %v539, 16
      %v583 = vrot.slane %v581, 7
      %v584 = vshll.u32 %v539, 16
      %v586 = vor.u32 %v583, %v584
      %v587 = vsel %vm554, %v579, %v586
      %v588 = vrot.slane %v583, 4
      %v590 = vshrl.u32 %v540, 16
      %v592 = vrot.slane %v590, 7
      %v593 = vshll.u32 %v540, 16
      %v595 = vor.u32 %v592, %v593
      %v596 = vrot.slane %v592, 4
      %v598 = vshrl.u32 %v541, 16
      %v600 = vrot.slane %v598, 7
      %v601 = vshll.u32 %v541, 16
      %v603 = vor.u32 %v600, %v601
      %v604 = vsel %vm554, %v596, %v603
      %v605 = vrot.slane %v600, 4
      %v607 = vshrl.u32 %v542, 16
      %v609 = vrot.slane %v607, 7
      %v610 = vshll.u32 %v542, 16
      %v612 = vor.u32 %v609, %v610
      %v613 = vrot.slane %v609, 4
      %v615 = vshrl.u32 %v543, 16
      %v617 = vrot.slane %v615, 7
      %v618 = vshll.u32 %v543, 16
      %v620 = vor.u32 %v617, %v618
      %v621 = vsel %vm554, %v613, %v620
      %v622 = vrot.slane %v617, 4
      %v624 = vshrl.u32 %v544, 16
      %v626 = vrot.slane %v624, 7
      %v627 = vshll.u32 %v544, 16
      %v629 = vor.u32 %v626, %v627
      %v630 = vrot.slane %v626, 4
      %v632 = vshrl.u32 %v545, 16
      %v634 = vrot.slane %v632, 7
      %v635 = vshll.u32 %v545, 16
      %v637 = vor.u32 %v634, %v635
      %v638 = vsel %vm554, %v630, %v637
      %v639 = vrot.slane %v634, 4
      %v641 = vshrl.u32 %v546, 16
      %v643 = vrot.slane %v641, 7
      %v644 = vshll.u32 %v546, 16
      %v646 = vor.u32 %v643, %v644
      %v647 = vrot.slane %v643, 4
      %v649 = vshrl.u32 %v547, 16
      %v651 = vrot.slane %v649, 7
      %v652 = vshll.u32 %v547, 16
      %v654 = vor.u32 %v651, %v652
      %v655 = vsel %vm554, %v647, %v654
      %v656 = vrot.slane %v651, 4
      %v658 = vshrl.u32 %v548, 16
      %v660 = vrot.slane %v658, 7
      %v661 = vshll.u32 %v548, 16
      %v663 = vor.u32 %v660, %v661
      %v664 = vrot.slane %v660, 4
      %v666 = vshrl.u32 %v549, 16
      %v668 = vrot.slane %v666, 7
      %v669 = vshll.u32 %v549, 16
      %v671 = vor.u32 %v668, %v669
      %v672 = vsel %vm554, %v664, %v671
      %v673 = vrot.slane %v668, 4
      %v675 = vshrl.u32 %v550, 16
      %v677 = vrot.slane %v675, 7
      %v678 = vshll.u32 %v550, 16
      %v680 = vor.u32 %v677, %v678
      %v681 = vrot.slane %v677, 4
      %v683 = vshrl.u32 %v551, 16
      %v685 = vrot.slane %v683, 7
      %v686 = vshll.u32 %v551, 16
      %v688 = vor.u32 %v685, %v686
      %v689 = vsel %vm554, %v681, %v688
      %v690 = vrot.slane %v685, 4
      %s715 = scalar_lea.vmem [#allocation2], 12
      %vm716 = vcmask 519168
      %vm717 = vsmask.f32 7938
      %vm718 = vmand %vm716, %vm717
      %v719 = vld [vmem:[%s715] sm:$0xf]
      %v720 = vsel %vm718, %v561, %v719
      %721 = vst [vmem:[%s715] sm:$0xf] %v720
      %722 = vst.msk [vmem:[%s715 + $0x4] sm:$0xf] %vm456, %v570
      %vm723 = vcmask 516096
      %vm724 = vmand %vm723, %vm552
      %v725 = vld [vmem:[%s715 + $0x8] sm:$0x1]
      %v726 = vsel %vm724, %v571, %v725
      %727 = vst [vmem:[%s715 + $0x8] sm:$0x1] %v726
      %v728 = vld [vmem:[%s715 + $0xc] sm:$0xf]
      %v729 = vsel %vm718, %v578, %v728
      %730 = vst [vmem:[%s715 + $0xc] sm:$0xf] %v729
      %731 = vst.msk [vmem:[%s715 + $0x10] sm:$0xf] %vm456, %v587
      %v732 = vld [vmem:[%s715 + $0x14] sm:$0x1]
      %v733 = vsel %vm724, %v588, %v732
      %734 = vst [vmem:[%s715 + $0x14] sm:$0x1] %v733
      %v735 = vld [vmem:[%s715 + $0x18] sm:$0xf]
      %v736 = vsel %vm718, %v595, %v735
      %737 = vst [vmem:[%s715 + $0x18] sm:$0xf] %v736
      %738 = vst.msk [vmem:[%s715 + $0x1c] sm:$0xf] %vm456, %v604
      %v739 = vld [vmem:[%s715 + $0x20] sm:$0x1]
      %v740 = vsel %vm724, %v605, %v739
      %741 = vst [vmem:[%s715 + $0x20] sm:$0x1] %v740
      %v742 = vld [vmem:[%s715 + $0x24] sm:$0xf]
      %v743 = vsel %vm718, %v612, %v742
      %744 = vst [vmem:[%s715 + $0x24] sm:$0xf] %v743
      %745 = vst.msk [vmem:[%s715 + $0x28] sm:$0xf] %vm456, %v621
      %v746 = vld [vmem:[%s715 + $0x2c] sm:$0x1]
      %v747 = vsel %vm724, %v622, %v746
      %748 = vst [vmem:[%s715 + $0x2c] sm:$0x1] %v747
      %v749 = vld [vmem:[%s715 + $0x30] sm:$0xf]
      %v750 = vsel %vm718, %v629, %v749
      %751 = vst [vmem:[%s715 + $0x30] sm:$0xf] %v750
      %752 = vst.msk [vmem:[%s715 + $0x34] sm:$0xf] %vm456, %v638
      %v753 = vld [vmem:[%s715 + $0x38] sm:$0x1]
      %v754 = vsel %vm724, %v639, %v753
      %755 = vst [vmem:[%s715 + $0x38] sm:$0x1] %v754
      %v756 = vld [vmem:[%s715 + $0x3c] sm:$0xf]
      %v757 = vsel %vm718, %v646, %v756
      %758 = vst [vmem:[%s715 + $0x3c] sm:$0xf] %v757
      %759 = vst.msk [vmem:[%s715 + $0x40] sm:$0xf] %vm456, %v655
      %v760 = vld [vmem:[%s715 + $0x44] sm:$0x1]
      %v761 = vsel %vm724, %v656, %v760
      %762 = vst [vmem:[%s715 + $0x44] sm:$0x1] %v761
      %v763 = vld [vmem:[%s715 + $0x48] sm:$0xf]
      %v764 = vsel %vm718, %v663, %v763
      %765 = vst [vmem:[%s715 + $0x48] sm:$0xf] %v764
      %766 = vst.msk [vmem:[%s715 + $0x4c] sm:$0xf] %vm456, %v672
      %v767 = vld [vmem:[%s715 + $0x50] sm:$0x1]
      %v768 = vsel %vm724, %v673, %v767
      %769 = vst [vmem:[%s715 + $0x50] sm:$0x1] %v768
      %v770 = vld [vmem:[%s715 + $0x54] sm:$0xf]
      %v771 = vsel %vm718, %v680, %v770
      %772 = vst [vmem:[%s715 + $0x54] sm:$0xf] %v771
      %773 = vst.msk [vmem:[%s715 + $0x58] sm:$0xf] %vm456, %v689
      %v774 = vld [vmem:[%s715 + $0x5c] sm:$0x1]
      %v775 = vsel %vm724, %v690, %v774
      %776 = vst [vmem:[%s715 + $0x5c] sm:$0x1] %v775
      %p777 = scmp.gt.s32.totalorder %s22, 0
      // Predicated region
      $region45: #{cnnf_forward.7} parent=43 // pred_check
        %p778 = pneg %p777
      $region46: #{cnnf_forward.7} parent=43 // pred_check_branch
        %780 = sbr.rel (%p778) target = $region48
      $region47: #{cnnf_forward.7} parent=43 // pred_region
        %s781 = scalar_lea.vmem %s411, 112
        %v782 = vld [vmem:[%s781] sm:$0xff]
        %v783 = vld [vmem:[%s781 + $0x8] sm:$0xff]
        %v784 = vpack.c.bf16 %v783, %v782
        %v786 = vunpack.c.l.b16 %v784
        %v787 = vunpack.c.h.b16 %v784
        %v788 = vpack.c.b16 %v786, %v786
        %v789 = vpack.c.b16 %v787, %v787
        %v791 = vshrl.u32 %v788, 16
        %v793 = vrot.slane %v791, 7
        %v794 = vshll.u32 %v788, 16
        %v796 = vor.u32 %v793, %v794
        %v797 = vrot.slane %v793, 4
        %v799 = vshrl.u32 %v789, 16
        %v801 = vrot.slane %v799, 7
        %v802 = vshll.u32 %v789, 16
        %v804 = vor.u32 %v801, %v802
        %v805 = vsel %vm554, %v797, %v804
        %v806 = vrot.slane %v801, 4
        %v810 = vld [vmem:[#allocation2] sm:$0xf]
        %v811 = vsel %vm718, %v796, %v810
        %812 = vst [vmem:[#allocation2] sm:$0xf] %v811
        %813 = vst.msk [vmem:[#allocation2 + $0x4] sm:$0xf] %vm456, %v805
        %v814 = vld [vmem:[#allocation2 + $0x8] sm:$0x1]
        %v815 = vsel %vm724, %v806, %v814
        %816 = vst [vmem:[#allocation2 + $0x8] sm:$0x1] %v815
      $region48: #{cnnf_forward.7} parent=43 // pred_fallthru
        _
      %p817 = scmp.lt.s32.totalorder %s22, 1
      // Predicated region
      $region49: #{cnnf_forward.7} parent=43 // pred_check
        %p818 = pneg %p817
      $region50: #{cnnf_forward.7} parent=43 // pred_check_branch
        %820 = sbr.rel (%p818) target = $region52
      $region51: #{cnnf_forward.7} parent=43 // pred_region
        %v821 = vld [vmem:[%s428] sm:$0xff]
        %v822 = vld [vmem:[%s428 + $0x8] sm:$0xff]
        %v823 = vpack.c.bf16 %v822, %v821
        %v825 = vunpack.c.l.b16 %v823
        %v826 = vunpack.c.h.b16 %v823
        %v827 = vpack.c.b16 %v825, %v825
        %v828 = vpack.c.b16 %v826, %v826
        %v830 = vshrl.u32 %v827, 16
        %v832 = vrot.slane %v830, 7
        %v833 = vshll.u32 %v827, 16
        %v835 = vor.u32 %v832, %v833
        %v836 = vrot.slane %v832, 4
        %v838 = vshrl.u32 %v828, 16
        %v840 = vrot.slane %v838, 7
        %v841 = vshll.u32 %v828, 16
        %v843 = vor.u32 %v840, %v841
        %v844 = vsel %vm554, %v836, %v843
        %v845 = vrot.slane %v840, 4
        %s849 = scalar_lea.vmem [#allocation2], 108
        %v850 = vld [vmem:[%s849] sm:$0xf]
        %v851 = vsel %vm718, %v835, %v850
        %852 = vst [vmem:[%s849] sm:$0xf] %v851
        %853 = vst.msk [vmem:[%s849 + $0x4] sm:$0xf] %vm456, %v844
        %v854 = vld [vmem:[%s849 + $0x8] sm:$0x1]
        %v855 = vsel %vm724, %v845, %v854
        %856 = vst [vmem:[%s849 + $0x8] sm:$0x1] %v855
      $region52: #{cnnf_forward.7} parent=43 // pred_fallthru
        _
      %v857 = vld [vmem:[#allocation2] sm:$0xf]
      %v858 = vld [vmem:[#allocation2 + $0x4] sm:$0xf]
      %v859 = vld [vmem:[#allocation2 + $0xc] sm:$0xf]
      %v860 = vld [vmem:[#allocation2 + $0x10] sm:$0xf]
      %v861 = vld [vmem:[#allocation2 + $0x18] sm:$0xf]
      %v862 = vld [vmem:[#allocation2 + $0x1c] sm:$0xf]
      %v863 = vld [vmem:[#allocation2 + $0x24] sm:$0xf]
      %v864 = vld [vmem:[#allocation2 + $0x28] sm:$0xf]
      %v865 = vld [vmem:[#allocation2 + $0x30] sm:$0xf]
      %v866 = vld [vmem:[#allocation2 + $0x34] sm:$0xf]
      %v867 = vld [vmem:[#allocation2 + $0x3c] sm:$0xf]
      %v868 = vld [vmem:[#allocation2 + $0x40] sm:$0xf]
      %v869 = vld [vmem:[#allocation2 + $0x48] sm:$0xf]
      %v870 = vld [vmem:[#allocation2 + $0x4c] sm:$0xf]
      %v871 = vld [vmem:[#allocation2 + $0x54] sm:$0xf]
      %v872 = vld [vmem:[#allocation2 + $0x58] sm:$0xf]
      %873 = vst.msk [vmem:[#allocation3] sm:$0xf] %vm456, %v857
      %874 = vst.msk [vmem:[#allocation3 + $0x14] sm:$0xf] %vm456, %v858
      %875 = vst.msk [vmem:[#allocation3 + $0x28] sm:$0xf] %vm456, %v859
      %876 = vst.msk [vmem:[#allocation3 + $0x3c] sm:$0xf] %vm456, %v860
      %877 = vst.msk [vmem:[#allocation3 + $0x50] sm:$0xf] %vm456, %v861
      %878 = vst.msk [vmem:[#allocation3 + $0x64] sm:$0xf] %vm456, %v862
      %879 = vst.msk [vmem:[#allocation3 + $0x78] sm:$0xf] %vm456, %v863
      %880 = vst.msk [vmem:[#allocation3 + $0x8c] sm:$0xf] %vm456, %v864
      %881 = vst.msk [vmem:[#allocation3 + $0xa0] sm:$0xf] %vm456, %v865
      %882 = vst.msk [vmem:[#allocation3 + $0xb4] sm:$0xf] %vm456, %v866
      %883 = vst.msk [vmem:[#allocation3 + $0xc8] sm:$0xf] %vm456, %v867
      %884 = vst.msk [vmem:[#allocation3 + $0xdc] sm:$0xf] %vm456, %v868
      %885 = vst.msk [vmem:[#allocation3 + $0xf0] sm:$0xf] %vm456, %v869
      %886 = vst.msk [vmem:[#allocation3 + $0x104] sm:$0xf] %vm456, %v870
      %887 = vst.msk [vmem:[#allocation3 + $0x118] sm:$0xf] %vm456, %v871
      %888 = vst.msk [vmem:[#allocation3 + $0x12c] sm:$0xf] %vm456, %v872
      %v889 = vld [vmem:[#allocation2] sm:$0xf]
      %v890 = vld [vmem:[#allocation2 + $0x4] sm:$0xf]
      %v891 = vld [vmem:[#allocation2 + $0x8] sm:$0x1]
      %v892 = vld [vmem:[#allocation2 + $0xc] sm:$0xf]
      %v893 = vld [vmem:[#allocation2 + $0x10] sm:$0xf]
      %v894 = vld [vmem:[#allocation2 + $0x14] sm:$0x1]
      %v895 = vld [vmem:[#allocation2 + $0x18] sm:$0xf]
      %v896 = vld [vmem:[#allocation2 + $0x1c] sm:$0xf]
      %v897 = vld [vmem:[#allocation2 + $0x20] sm:$0x1]
      %v898 = vld [vmem:[#allocation2 + $0x24] sm:$0xf]
      %v899 = vld [vmem:[#allocation2 + $0x28] sm:$0xf]
      %v900 = vld [vmem:[#allocation2 + $0x2c] sm:$0x1]
      %v901 = vld [vmem:[#allocation2 + $0x30] sm:$0xf]
      %v902 = vld [vmem:[#allocation2 + $0x34] sm:$0xf]
      %v903 = vld [vmem:[#allocation2 + $0x38] sm:$0x1]
      %v904 = vld [vmem:[#allocation2 + $0x3c] sm:$0xf]
      %v905 = vld [vmem:[#allocation2 + $0x40] sm:$0xf]
      %v906 = vld [vmem:[#allocation2 + $0x44] sm:$0x1]
      %v907 = vld [vmem:[#allocation2 + $0x48] sm:$0xf]
      %v908 = vld [vmem:[#allocation2 + $0x4c] sm:$0xf]
      %v909 = vld [vmem:[#allocation2 + $0x50] sm:$0x1]
      %v910 = vld [vmem:[#allocation2 + $0x54] sm:$0xf]
      %v911 = vld [vmem:[#allocation2 + $0x58] sm:$0xf]
      %v912 = vld [vmem:[#allocation2 + $0x5c] sm:$0x1]
      %vm913 = vsmask.f32 3328
      %vm914 = vsmask.f32 7440
      %vm915 = vmor %vm913, %vm914
      %v917 = vshrl.u32 %v889, 16
      %v919 = vrot.slane %v917, 4
      %v920 = vshll.u32 %v889, 16
      %v922 = vrot.slane %v920, 5
      %v923 = vor.u32 %v919, %v922
      %v924 = vrot.slane %v923, 4
      %v926 = vshll.u32 %v890, 16
      %v928 = vrot.slane %v926, 5
      %v929 = vsel %vm915, %v924, %v928
      %v930 = vshrl.u32 %v890, 16
      %v932 = vrot.slane %v930, 4
      %v933 = vor.u32 %v932, %v928
      %v934 = vrot.slane %v933, 4
      %v936 = vshll.u32 %v891, 16
      %v938 = vrot.slane %v936, 5
      %v939 = vsel %vm915, %v934, %v938
      %v941 = vshrl.u32 %v892, 16
      %v943 = vrot.slane %v941, 4
      %v944 = vshll.u32 %v892, 16
      %v946 = vrot.slane %v944, 5
      %v947 = vor.u32 %v943, %v946
      %v948 = vrot.slane %v947, 4
      %v950 = vshll.u32 %v893, 16
      %v952 = vrot.slane %v950, 5
      %v953 = vsel %vm915, %v948, %v952
      %v954 = vshrl.u32 %v893, 16
      %v956 = vrot.slane %v954, 4
      %v957 = vor.u32 %v956, %v952
      %v958 = vrot.slane %v957, 4
      %v960 = vshll.u32 %v894, 16
      %v962 = vrot.slane %v960, 5
      %v963 = vsel %vm915, %v958, %v962
      %v965 = vshrl.u32 %v895, 16
      %v967 = vrot.slane %v965, 4
      %v968 = vshll.u32 %v895, 16
      %v970 = vrot.slane %v968, 5
      %v971 = vor.u32 %v967, %v970
      %v972 = vrot.slane %v971, 4
      %v974 = vshll.u32 %v896, 16
      %v976 = vrot.slane %v974, 5
      %v977 = vsel %vm915, %v972, %v976
      %v978 = vshrl.u32 %v896, 16
      %v980 = vrot.slane %v978, 4
      %v981 = vor.u32 %v980, %v976
      %v982 = vrot.slane %v981, 4
      %v984 = vshll.u32 %v897, 16
      %v986 = vrot.slane %v984, 5
      %v987 = vsel %vm915, %v982, %v986
      %v989 = vshrl.u32 %v898, 16
      %v991 = vrot.slane %v989, 4
      %v992 = vshll.u32 %v898, 16
      %v994 = vrot.slane %v992, 5
      %v995 = vor.u32 %v991, %v994
      %v996 = vrot.slane %v995, 4
      %v998 = vshll.u32 %v899, 16
      %v1000 = vrot.slane %v998, 5
      %v1001 = vsel %vm915, %v996, %v1000
      %v1002 = vshrl.u32 %v899, 16
      %v1004 = vrot.slane %v1002, 4
      %v1005 = vor.u32 %v1004, %v1000
      %v1006 = vrot.slane %v1005, 4
      %v1008 = vshll.u32 %v900, 16
      %v1010 = vrot.slane %v1008, 5
      %v1011 = vsel %vm915, %v1006, %v1010
      %v1013 = vshrl.u32 %v901, 16
      %v1015 = vrot.slane %v1013, 4
      %v1016 = vshll.u32 %v901, 16
      %v1018 = vrot.slane %v1016, 5
      %v1019 = vor.u32 %v1015, %v1018
      %v1020 = vrot.slane %v1019, 4
      %v1022 = vshll.u32 %v902, 16
      %v1024 = vrot.slane %v1022, 5
      %v1025 = vsel %vm915, %v1020, %v1024
      %v1026 = vshrl.u32 %v902, 16
      %v1028 = vrot.slane %v1026, 4
      %v1029 = vor.u32 %v1028, %v1024
      %v1030 = vrot.slane %v1029, 4
      %v1032 = vshll.u32 %v903, 16
      %v1034 = vrot.slane %v1032, 5
      %v1035 = vsel %vm915, %v1030, %v1034
      %v1037 = vshrl.u32 %v904, 16
      %v1039 = vrot.slane %v1037, 4
      %v1040 = vshll.u32 %v904, 16
      %v1042 = vrot.slane %v1040, 5
      %v1043 = vor.u32 %v1039, %v1042
      %v1044 = vrot.slane %v1043, 4
      %v1046 = vshll.u32 %v905, 16
      %v1048 = vrot.slane %v1046, 5
      %v1049 = vsel %vm915, %v1044, %v1048
      %v1050 = vshrl.u32 %v905, 16
      %v1052 = vrot.slane %v1050, 4
      %v1053 = vor.u32 %v1052, %v1048
      %v1054 = vrot.slane %v1053, 4
      %v1056 = vshll.u32 %v906, 16
      %v1058 = vrot.slane %v1056, 5
      %v1059 = vsel %vm915, %v1054, %v1058
      %v1061 = vshrl.u32 %v907, 16
      %v1063 = vrot.slane %v1061, 4
      %v1064 = vshll.u32 %v907, 16
      %v1066 = vrot.slane %v1064, 5
      %v1067 = vor.u32 %v1063, %v1066
      %v1068 = vrot.slane %v1067, 4
      %v1070 = vshll.u32 %v908, 16
      %v1072 = vrot.slane %v1070, 5
      %v1073 = vsel %vm915, %v1068, %v1072
      %v1074 = vshrl.u32 %v908, 16
      %v1076 = vrot.slane %v1074, 4
      %v1077 = vor.u32 %v1076, %v1072
      %v1078 = vrot.slane %v1077, 4
      %v1080 = vshll.u32 %v909, 16
      %v1082 = vrot.slane %v1080, 5
      %v1083 = vsel %vm915, %v1078, %v1082
      %v1085 = vshrl.u32 %v910, 16
      %v1087 = vrot.slane %v1085, 4
      %v1088 = vshll.u32 %v910, 16
      %v1090 = vrot.slane %v1088, 5
      %v1091 = vor.u32 %v1087, %v1090
      %v1092 = vrot.slane %v1091, 4
      %v1094 = vshll.u32 %v911, 16
      %v1096 = vrot.slane %v1094, 5
      %v1097 = vsel %vm915, %v1092, %v1096
      %v1098 = vshrl.u32 %v911, 16
      %v1100 = vrot.slane %v1098, 4
      %v1101 = vor.u32 %v1100, %v1096
      %v1102 = vrot.slane %v1101, 4
      %v1104 = vshll.u32 %v912, 16
      %v1106 = vrot.slane %v1104, 5
      %v1107 = vsel %vm915, %v1102, %v1106
      %1108 = vrot.lane.b32.xlu0 %v929, 64
      %v1109 = vpop.permute.xlu0 %1108
      %1110 = vrot.lane.b32.xlu0 %v939, 64
      %v1111 = vpop.permute.xlu0 %1110
      %1112 = vrot.lane.b32.xlu0 %v953, 64
      %v1113 = vpop.permute.xlu0 %1112
      %1114 = vrot.lane.b32.xlu0 %v963, 64
      %v1115 = vpop.permute.xlu0 %1114
      %1116 = vrot.lane.b32.xlu0 %v977, 64
      %v1117 = vpop.permute.xlu0 %1116
      %1118 = vrot.lane.b32.xlu0 %v987, 64
      %v1119 = vpop.permute.xlu0 %1118
      %1120 = vrot.lane.b32.xlu0 %v1001, 64
      %v1121 = vpop.permute.xlu0 %1120
      %1122 = vrot.lane.b32.xlu0 %v1011, 64
      %v1123 = vpop.permute.xlu0 %1122
      %1124 = vrot.lane.b32.xlu0 %v1025, 64
      %v1125 = vpop.permute.xlu0 %1124
      %1126 = vrot.lane.b32.xlu0 %v1035, 64
      %v1127 = vpop.permute.xlu0 %1126
      %1128 = vrot.lane.b32.xlu0 %v1049, 64
      %v1129 = vpop.permute.xlu0 %1128
      %1130 = vrot.lane.b32.xlu0 %v1059, 64
      %v1131 = vpop.permute.xlu0 %1130
      %1132 = vrot.lane.b32.xlu0 %v1073, 64
      %v1133 = vpop.permute.xlu0 %1132
      %1134 = vrot.lane.b32.xlu0 %v1083, 64
      %v1135 = vpop.permute.xlu0 %1134
      %1136 = vrot.lane.b32.xlu0 %v1097, 64
      %v1137 = vpop.permute.xlu0 %1136
      %1138 = vrot.lane.b32.xlu0 %v1107, 64
      %v1139 = vpop.permute.xlu0 %1138
      %vm1156 = vcmask 1043968
      %1157 = vst.msk [vmem:[#allocation3] sm:$0xf] %vm1156, %v1109
      %1158 = vst.msk [vmem:[#allocation3 + $0x14] sm:$0xf] %vm1156, %v1111
      %1159 = vst.msk [vmem:[#allocation3 + $0x28] sm:$0xf] %vm1156, %v1113
      %1160 = vst.msk [vmem:[#allocation3 + $0x3c] sm:$0xf] %vm1156, %v1115
      %1161 = vst.msk [vmem:[#allocation3 + $0x50] sm:$0xf] %vm1156, %v1117
      %1162 = vst.msk [vmem:[#allocation3 + $0x64] sm:$0xf] %vm1156, %v1119
      %1163 = vst.msk [vmem:[#allocation3 + $0x78] sm:$0xf] %vm1156, %v1121
      %1164 = vst.msk [vmem:[#allocation3 + $0x8c] sm:$0xf] %vm1156, %v1123
      %1165 = vst.msk [vmem:[#allocation3 + $0xa0] sm:$0xf] %vm1156, %v1125
      %1166 = vst.msk [vmem:[#allocation3 + $0xb4] sm:$0xf] %vm1156, %v1127
      %1167 = vst.msk [vmem:[#allocation3 + $0xc8] sm:$0xf] %vm1156, %v1129
      %1168 = vst.msk [vmem:[#allocation3 + $0xdc] sm:$0xf] %vm1156, %v1131
      %1169 = vst.msk [vmem:[#allocation3 + $0xf0] sm:$0xf] %vm1156, %v1133
      %1170 = vst.msk [vmem:[#allocation3 + $0x104] sm:$0xf] %vm1156, %v1135
      %1171 = vst.msk [vmem:[#allocation3 + $0x118] sm:$0xf] %vm1156, %v1137
      %1172 = vst.msk [vmem:[#allocation3 + $0x12c] sm:$0xf] %vm1156, %v1139
      %v1173 = vld [vmem:[#allocation2] sm:$0xe]
      %v1174 = vld [vmem:[#allocation2 + $0x4] sm:$0xf]
      %v1175 = vld [vmem:[#allocation2 + $0x8] sm:$0x1]
      %v1176 = vld [vmem:[#allocation2 + $0xc] sm:$0xe]
      %v1177 = vld [vmem:[#allocation2 + $0x10] sm:$0xf]
      %v1178 = vld [vmem:[#allocation2 + $0x14] sm:$0x1]
      %v1179 = vld [vmem:[#allocation2 + $0x18] sm:$0xe]
      %v1180 = vld [vmem:[#allocation2 + $0x1c] sm:$0xf]
      %v1181 = vld [vmem:[#allocation2 + $0x20] sm:$0x1]
      %v1182 = vld [vmem:[#allocation2 + $0x24] sm:$0xe]
      %v1183 = vld [vmem:[#allocation2 + $0x28] sm:$0xf]
      %v1184 = vld [vmem:[#allocation2 + $0x2c] sm:$0x1]
      %v1185 = vld [vmem:[#allocation2 + $0x30] sm:$0xe]
      %v1186 = vld [vmem:[#allocation2 + $0x34] sm:$0xf]
      %v1187 = vld [vmem:[#allocation2 + $0x38] sm:$0x1]
      %v1188 = vld [vmem:[#allocation2 + $0x3c] sm:$0xe]
      %v1189 = vld [vmem:[#allocation2 + $0x40] sm:$0xf]
      %v1190 = vld [vmem:[#allocation2 + $0x44] sm:$0x1]
      %v1191 = vld [vmem:[#allocation2 + $0x48] sm:$0xe]
      %v1192 = vld [vmem:[#allocation2 + $0x4c] sm:$0xf]
      %v1193 = vld [vmem:[#allocation2 + $0x50] sm:$0x1]
      %v1194 = vld [vmem:[#allocation2 + $0x54] sm:$0xe]
      %v1195 = vld [vmem:[#allocation2 + $0x58] sm:$0xf]
      %v1196 = vld [vmem:[#allocation2 + $0x5c] sm:$0x1]
      %vm1221 = vcmask 1042432
      %vm1222 = vcmask 1046532
      %vm1223 = vmor %vm1221, %vm1222
      %v1224 = vrot.slane %v1173, 5
      %v1225 = vrot.slane %v1224, 4
      %v1226 = vrot.slane %v1174, 5
      %v1227 = vsel %vm1223, %v1225, %v1226
      %v1228 = vrot.slane %v1226, 4
      %v1229 = vrot.slane %v1175, 5
      %v1230 = vsel %vm1223, %v1228, %v1229
      %v1231 = vrot.slane %v1176, 5
      %v1232 = vrot.slane %v1231, 4
      %v1233 = vrot.slane %v1177, 5
      %v1234 = vsel %vm1223, %v1232, %v1233
      %v1235 = vrot.slane %v1233, 4
      %v1236 = vrot.slane %v1178, 5
      %v1237 = vsel %vm1223, %v1235, %v1236
      %v1238 = vrot.slane %v1179, 5
      %v1239 = vrot.slane %v1238, 4
      %v1240 = vrot.slane %v1180, 5
      %v1241 = vsel %vm1223, %v1239, %v1240
      %v1242 = vrot.slane %v1240, 4
      %v1243 = vrot.slane %v1181, 5
      %v1244 = vsel %vm1223, %v1242, %v1243
      %v1245 = vrot.slane %v1182, 5
      %v1246 = vrot.slane %v1245, 4
      %v1247 = vrot.slane %v1183, 5
      %v1248 = vsel %vm1223, %v1246, %v1247
      %v1249 = vrot.slane %v1247, 4
      %v1250 = vrot.slane %v1184, 5
      %v1251 = vsel %vm1223, %v1249, %v1250
      %v1252 = vrot.slane %v1185, 5
      %v1253 = vrot.slane %v1252, 4
      %v1254 = vrot.slane %v1186, 5
      %v1255 = vsel %vm1223, %v1253, %v1254
      %v1256 = vrot.slane %v1254, 4
      %v1257 = vrot.slane %v1187, 5
      %v1258 = vsel %vm1223, %v1256, %v1257
      %v1259 = vrot.slane %v1188, 5
      %v1260 = vrot.slane %v1259, 4
      %v1261 = vrot.slane %v1189, 5
      %v1262 = vsel %vm1223, %v1260, %v1261
      %v1263 = vrot.slane %v1261, 4
      %v1264 = vrot.slane %v1190, 5
      %v1265 = vsel %vm1223, %v1263, %v1264
      %v1266 = vrot.slane %v1191, 5
      %v1267 = vrot.slane %v1266, 4
      %v1268 = vrot.slane %v1192, 5
      %v1269 = vsel %vm1223, %v1267, %v1268
      %v1270 = vrot.slane %v1268, 4
      %v1271 = vrot.slane %v1193, 5
      %v1272 = vsel %vm1223, %v1270, %v1271
      %v1273 = vrot.slane %v1194, 5
      %v1274 = vrot.slane %v1273, 4
      %v1275 = vrot.slane %v1195, 5
      %v1276 = vsel %vm1223, %v1274, %v1275
      %v1277 = vrot.slane %v1275, 4
      %v1278 = vrot.slane %v1196, 5
      %v1279 = vsel %vm1223, %v1277, %v1278
      %1296 = vst.msk [vmem:[#allocation3 + $0x4] sm:$0xf] %vm456, %v1227
      %1297 = vst.msk [vmem:[#allocation3 + $0x18] sm:$0xf] %vm456, %v1230
      %1298 = vst.msk [vmem:[#allocation3 + $0x2c] sm:$0xf] %vm456, %v1234
      %1299 = vst.msk [vmem:[#allocation3 + $0x40] sm:$0xf] %vm456, %v1237
      %1300 = vst.msk [vmem:[#allocation3 + $0x54] sm:$0xf] %vm456, %v1241
      %1301 = vst.msk [vmem:[#allocation3 + $0x68] sm:$0xf] %vm456, %v1244
      %1302 = vst.msk [vmem:[#allocation3 + $0x7c] sm:$0xf] %vm456, %v1248
      %1303 = vst.msk [vmem:[#allocation3 + $0x90] sm:$0xf] %vm456, %v1251
      %1304 = vst.msk [vmem:[#allocation3 + $0xa4] sm:$0xf] %vm456, %v1255
      %1305 = vst.msk [vmem:[#allocation3 + $0xb8] sm:$0xf] %vm456, %v1258
      %1306 = vst.msk [vmem:[#allocation3 + $0xcc] sm:$0xf] %vm456, %v1262
      %1307 = vst.msk [vmem:[#allocation3 + $0xe0] sm:$0xf] %vm456, %v1265
      %1308 = vst.msk [vmem:[#allocation3 + $0xf4] sm:$0xf] %vm456, %v1269
      %1309 = vst.msk [vmem:[#allocation3 + $0x108] sm:$0xf] %vm456, %v1272
      %1310 = vst.msk [vmem:[#allocation3 + $0x11c] sm:$0xf] %vm456, %v1276
      %1311 = vst.msk [vmem:[#allocation3 + $0x130] sm:$0xf] %vm456, %v1279
      %v1312 = vld [vmem:[%s715] sm:$0xf]
      %v1313 = vld [vmem:[%s715 + $0x4] sm:$0xf]
      %v1314 = vld [vmem:[%s715 + $0xc] sm:$0xf]
      %v1315 = vld [vmem:[%s715 + $0x10] sm:$0xf]
      %v1316 = vld [vmem:[%s715 + $0x18] sm:$0xf]
      %v1317 = vld [vmem:[%s715 + $0x1c] sm:$0xf]
      %v1318 = vld [vmem:[%s715 + $0x24] sm:$0xf]
      %v1319 = vld [vmem:[%s715 + $0x28] sm:$0xf]
      %v1320 = vld [vmem:[%s715 + $0x30] sm:$0xf]
      %v1321 = vld [vmem:[%s715 + $0x34] sm:$0xf]
      %v1322 = vld [vmem:[%s715 + $0x3c] sm:$0xf]
      %v1323 = vld [vmem:[%s715 + $0x40] sm:$0xf]
      %v1324 = vld [vmem:[%s715 + $0x48] sm:$0xf]
      %v1325 = vld [vmem:[%s715 + $0x4c] sm:$0xf]
      %v1326 = vld [vmem:[%s715 + $0x54] sm:$0xf]
      %v1327 = vld [vmem:[%s715 + $0x58] sm:$0xf]
      %1344 = vrot.lane.b32.xlu0 %v1312, 64
      %v1345 = vpop.permute.xlu0 %1344
      %1346 = vrot.lane.b32.xlu0 %v1313, 64
      %v1347 = vpop.permute.xlu0 %1346
      %1348 = vrot.lane.b32.xlu0 %v1314, 64
      %v1349 = vpop.permute.xlu0 %1348
      %1350 = vrot.lane.b32.xlu0 %v1315, 64
      %v1351 = vpop.permute.xlu0 %1350
      %1352 = vrot.lane.b32.xlu0 %v1316, 64
      %v1353 = vpop.permute.xlu0 %1352
      %1354 = vrot.lane.b32.xlu0 %v1317, 64
      %v1355 = vpop.permute.xlu0 %1354
      %1356 = vrot.lane.b32.xlu0 %v1318, 64
      %v1357 = vpop.permute.xlu0 %1356
      %1358 = vrot.lane.b32.xlu0 %v1319, 64
      %v1359 = vpop.permute.xlu0 %1358
      %1360 = vrot.lane.b32.xlu0 %v1320, 64
      %v1361 = vpop.permute.xlu0 %1360
      %1362 = vrot.lane.b32.xlu0 %v1321, 64
      %v1363 = vpop.permute.xlu0 %1362
      %1364 = vrot.lane.b32.xlu0 %v1322, 64
      %v1365 = vpop.permute.xlu0 %1364
      %1366 = vrot.lane.b32.xlu0 %v1323, 64
      %v1367 = vpop.permute.xlu0 %1366
      %1368 = vrot.lane.b32.xlu0 %v1324, 64
      %v1369 = vpop.permute.xlu0 %1368
      %1370 = vrot.lane.b32.xlu0 %v1325, 64
      %v1371 = vpop.permute.xlu0 %1370
      %1372 = vrot.lane.b32.xlu0 %v1326, 64
      %v1373 = vpop.permute.xlu0 %1372
      %1374 = vrot.lane.b32.xlu0 %v1327, 64
      %v1375 = vpop.permute.xlu0 %1374
      %1392 = vst.msk [vmem:[#allocation3 + $0x4] sm:$0xf] %vm1156, %v1345
      %1393 = vst.msk [vmem:[#allocation3 + $0x18] sm:$0xf] %vm1156, %v1347
      %1394 = vst.msk [vmem:[#allocation3 + $0x2c] sm:$0xf] %vm1156, %v1349
      %1395 = vst.msk [vmem:[#allocation3 + $0x40] sm:$0xf] %vm1156, %v1351
      %1396 = vst.msk [vmem:[#allocation3 + $0x54] sm:$0xf] %vm1156, %v1353
      %1397 = vst.msk [vmem:[#allocation3 + $0x68] sm:$0xf] %vm1156, %v1355
      %1398 = vst.msk [vmem:[#allocation3 + $0x7c] sm:$0xf] %vm1156, %v1357
      %1399 = vst.msk [vmem:[#allocation3 + $0x90] sm:$0xf] %vm1156, %v1359
      %1400 = vst.msk [vmem:[#allocation3 + $0xa4] sm:$0xf] %vm1156, %v1361
      %1401 = vst.msk [vmem:[#allocation3 + $0xb8] sm:$0xf] %vm1156, %v1363
      %1402 = vst.msk [vmem:[#allocation3 + $0xcc] sm:$0xf] %vm1156, %v1365
      %1403 = vst.msk [vmem:[#allocation3 + $0xe0] sm:$0xf] %vm1156, %v1367
      %1404 = vst.msk [vmem:[#allocation3 + $0xf4] sm:$0xf] %vm1156, %v1369
      %1405 = vst.msk [vmem:[#allocation3 + $0x108] sm:$0xf] %vm1156, %v1371
      %1406 = vst.msk [vmem:[#allocation3 + $0x11c] sm:$0xf] %vm1156, %v1373
      %1407 = vst.msk [vmem:[#allocation3 + $0x130] sm:$0xf] %vm1156, %v1375
      %v1408 = vld [vmem:[%s715] sm:$0xf]
      %v1409 = vld [vmem:[%s715 + $0x4] sm:$0xf]
      %v1410 = vld [vmem:[%s715 + $0x8] sm:$0x1]
      %v1411 = vld [vmem:[%s715 + $0xc] sm:$0xf]
      %v1412 = vld [vmem:[%s715 + $0x10] sm:$0xf]
      %v1413 = vld [vmem:[%s715 + $0x14] sm:$0x1]
      %v1414 = vld [vmem:[%s715 + $0x18] sm:$0xf]
      %v1415 = vld [vmem:[%s715 + $0x1c] sm:$0xf]
      %v1416 = vld [vmem:[%s715 + $0x20] sm:$0x1]
      %v1417 = vld [vmem:[%s715 + $0x24] sm:$0xf]
      %v1418 = vld [vmem:[%s715 + $0x28] sm:$0xf]
      %v1419 = vld [vmem:[%s715 + $0x2c] sm:$0x1]
      %v1420 = vld [vmem:[%s715 + $0x30] sm:$0xf]
      %v1421 = vld [vmem:[%s715 + $0x34] sm:$0xf]
      %v1422 = vld [vmem:[%s715 + $0x38] sm:$0x1]
      %v1423 = vld [vmem:[%s715 + $0x3c] sm:$0xf]
      %v1424 = vld [vmem:[%s715 + $0x40] sm:$0xf]
      %v1425 = vld [vmem:[%s715 + $0x44] sm:$0x1]
      %v1426 = vld [vmem:[%s715 + $0x48] sm:$0xf]
      %v1427 = vld [vmem:[%s715 + $0x4c] sm:$0xf]
      %v1428 = vld [vmem:[%s715 + $0x50] sm:$0x1]
      %v1429 = vld [vmem:[%s715 + $0x54] sm:$0xf]
      %v1430 = vld [vmem:[%s715 + $0x58] sm:$0xf]
      %v1431 = vld [vmem:[%s715 + $0x5c] sm:$0x1]
      %v1433 = vshrl.u32 %v1408, 16
      %v1435 = vrot.slane %v1433, 4
      %v1436 = vshll.u32 %v1408, 16
      %v1438 = vrot.slane %v1436, 5
      %v1439 = vor.u32 %v1435, %v1438
      %v1440 = vrot.slane %v1439, 4
      %v1442 = vshll.u32 %v1409, 16
      %v1444 = vrot.slane %v1442, 5
      %v1445 = vsel %vm915, %v1440, %v1444
      %v1446 = vshrl.u32 %v1409, 16
      %v1448 = vrot.slane %v1446, 4
      %v1449 = vor.u32 %v1448, %v1444
      %v1450 = vrot.slane %v1449, 4
      %v1452 = vshll.u32 %v1410, 16
      %v1454 = vrot.slane %v1452, 5
      %v1455 = vsel %vm915, %v1450, %v1454
      %v1457 = vshrl.u32 %v1411, 16
      %v1459 = vrot.slane %v1457, 4
      %v1460 = vshll.u32 %v1411, 16
      %v1462 = vrot.slane %v1460, 5
      %v1463 = vor.u32 %v1459, %v1462
      %v1464 = vrot.slane %v1463, 4
      %v1466 = vshll.u32 %v1412, 16
      %v1468 = vrot.slane %v1466, 5
      %v1469 = vsel %vm915, %v1464, %v1468
      %v1470 = vshrl.u32 %v1412, 16
      %v1472 = vrot.slane %v1470, 4
      %v1473 = vor.u32 %v1472, %v1468
      %v1474 = vrot.slane %v1473, 4
      %v1476 = vshll.u32 %v1413, 16
      %v1478 = vrot.slane %v1476, 5
      %v1479 = vsel %vm915, %v1474, %v1478
      %v1481 = vshrl.u32 %v1414, 16
      %v1483 = vrot.slane %v1481, 4
      %v1484 = vshll.u32 %v1414, 16
      %v1486 = vrot.slane %v1484, 5
      %v1487 = vor.u32 %v1483, %v1486
      %v1488 = vrot.slane %v1487, 4
      %v1490 = vshll.u32 %v1415, 16
      %v1492 = vrot.slane %v1490, 5
      %v1493 = vsel %vm915, %v1488, %v1492
      %v1494 = vshrl.u32 %v1415, 16
      %v1496 = vrot.slane %v1494, 4
      %v1497 = vor.u32 %v1496, %v1492
      %v1498 = vrot.slane %v1497, 4
      %v1500 = vshll.u32 %v1416, 16
      %v1502 = vrot.slane %v1500, 5
      %v1503 = vsel %vm915, %v1498, %v1502
      %v1505 = vshrl.u32 %v1417, 16
      %v1507 = vrot.slane %v1505, 4
      %v1508 = vshll.u32 %v1417, 16
      %v1510 = vrot.slane %v1508, 5
      %v1511 = vor.u32 %v1507, %v1510
      %v1512 = vrot.slane %v1511, 4
      %v1514 = vshll.u32 %v1418, 16
      %v1516 = vrot.slane %v1514, 5
      %v1517 = vsel %vm915, %v1512, %v1516
      %v1518 = vshrl.u32 %v1418, 16
      %v1520 = vrot.slane %v1518, 4
      %v1521 = vor.u32 %v1520, %v1516
      %v1522 = vrot.slane %v1521, 4
      %v1524 = vshll.u32 %v1419, 16
      %v1526 = vrot.slane %v1524, 5
      %v1527 = vsel %vm915, %v1522, %v1526
      %v1529 = vshrl.u32 %v1420, 16
      %v1531 = vrot.slane %v1529, 4
      %v1532 = vshll.u32 %v1420, 16
      %v1534 = vrot.slane %v1532, 5
      %v1535 = vor.u32 %v1531, %v1534
      %v1536 = vrot.slane %v1535, 4
      %v1538 = vshll.u32 %v1421, 16
      %v1540 = vrot.slane %v1538, 5
      %v1541 = vsel %vm915, %v1536, %v1540
      %v1542 = vshrl.u32 %v1421, 16
      %v1544 = vrot.slane %v1542, 4
      %v1545 = vor.u32 %v1544, %v1540
      %v1546 = vrot.slane %v1545, 4
      %v1548 = vshll.u32 %v1422, 16
      %v1550 = vrot.slane %v1548, 5
      %v1551 = vsel %vm915, %v1546, %v1550
      %v1553 = vshrl.u32 %v1423, 16
      %v1555 = vrot.slane %v1553, 4
      %v1556 = vshll.u32 %v1423, 16
      %v1558 = vrot.slane %v1556, 5
      %v1559 = vor.u32 %v1555, %v1558
      %v1560 = vrot.slane %v1559, 4
      %v1562 = vshll.u32 %v1424, 16
      %v1564 = vrot.slane %v1562, 5
      %v1565 = vsel %vm915, %v1560, %v1564
      %v1566 = vshrl.u32 %v1424, 16
      %v1568 = vrot.slane %v1566, 4
      %v1569 = vor.u32 %v1568, %v1564
      %v1570 = vrot.slane %v1569, 4
      %v1572 = vshll.u32 %v1425, 16
      %v1574 = vrot.slane %v1572, 5
      %v1575 = vsel %vm915, %v1570, %v1574
      %v1577 = vshrl.u32 %v1426, 16
      %v1579 = vrot.slane %v1577, 4
      %v1580 = vshll.u32 %v1426, 16
      %v1582 = vrot.slane %v1580, 5
      %v1583 = vor.u32 %v1579, %v1582
      %v1584 = vrot.slane %v1583, 4
      %v1586 = vshll.u32 %v1427, 16
      %v1588 = vrot.slane %v1586, 5
      %v1589 = vsel %vm915, %v1584, %v1588
      %v1590 = vshrl.u32 %v1427, 16
      %v1592 = vrot.slane %v1590, 4
      %v1593 = vor.u32 %v1592, %v1588
      %v1594 = vrot.slane %v1593, 4
      %v1596 = vshll.u32 %v1428, 16
      %v1598 = vrot.slane %v1596, 5
      %v1599 = vsel %vm915, %v1594, %v1598
      %v1601 = vshrl.u32 %v1429, 16
      %v1603 = vrot.slane %v1601, 4
      %v1604 = vshll.u32 %v1429, 16
      %v1606 = vrot.slane %v1604, 5
      %v1607 = vor.u32 %v1603, %v1606
      %v1608 = vrot.slane %v1607, 4
      %v1610 = vshll.u32 %v1430, 16
      %v1612 = vrot.slane %v1610, 5
      %v1613 = vsel %vm915, %v1608, %v1612
      %v1614 = vshrl.u32 %v1430, 16
      %v1616 = vrot.slane %v1614, 4
      %v1617 = vor.u32 %v1616, %v1612
      %v1618 = vrot.slane %v1617, 4
      %v1620 = vshll.u32 %v1431, 16
      %v1622 = vrot.slane %v1620, 5
      %v1623 = vsel %vm915, %v1618, %v1622
      %1640 = vst.msk [vmem:[#allocation3 + $0x8] sm:$0xf] %vm456, %v1445
      %1641 = vst.msk [vmem:[#allocation3 + $0x1c] sm:$0xf] %vm456, %v1455
      %1642 = vst.msk [vmem:[#allocation3 + $0x30] sm:$0xf] %vm456, %v1469
      %1643 = vst.msk [vmem:[#allocation3 + $0x44] sm:$0xf] %vm456, %v1479
      %1644 = vst.msk [vmem:[#allocation3 + $0x58] sm:$0xf] %vm456, %v1493
      %1645 = vst.msk [vmem:[#allocation3 + $0x6c] sm:$0xf] %vm456, %v1503
      %1646 = vst.msk [vmem:[#allocation3 + $0x80] sm:$0xf] %vm456, %v1517
      %1647 = vst.msk [vmem:[#allocation3 + $0x94] sm:$0xf] %vm456, %v1527
      %1648 = vst.msk [vmem:[#allocation3 + $0xa8] sm:$0xf] %vm456, %v1541
      %1649 = vst.msk [vmem:[#allocation3 + $0xbc] sm:$0xf] %vm456, %v1551
      %1650 = vst.msk [vmem:[#allocation3 + $0xd0] sm:$0xf] %vm456, %v1565
      %1651 = vst.msk [vmem:[#allocation3 + $0xe4] sm:$0xf] %vm456, %v1575
      %1652 = vst.msk [vmem:[#allocation3 + $0xf8] sm:$0xf] %vm456, %v1589
      %1653 = vst.msk [vmem:[#allocation3 + $0x10c] sm:$0xf] %vm456, %v1599
      %1654 = vst.msk [vmem:[#allocation3 + $0x120] sm:$0xf] %vm456, %v1613
      %1655 = vst.msk [vmem:[#allocation3 + $0x134] sm:$0xf] %vm456, %v1623
      %v1656 = vld [vmem:[%s715] sm:$0xe]
      %v1657 = vld [vmem:[%s715 + $0x4] sm:$0xf]
      %v1658 = vld [vmem:[%s715 + $0x8] sm:$0x1]
      %v1659 = vld [vmem:[%s715 + $0xc] sm:$0xe]
      %v1660 = vld [vmem:[%s715 + $0x10] sm:$0xf]
      %v1661 = vld [vmem:[%s715 + $0x14] sm:$0x1]
      %v1662 = vld [vmem:[%s715 + $0x18] sm:$0xe]
      %v1663 = vld [vmem:[%s715 + $0x1c] sm:$0xf]
      %v1664 = vld [vmem:[%s715 + $0x20] sm:$0x1]
      %v1665 = vld [vmem:[%s715 + $0x24] sm:$0xe]
      %v1666 = vld [vmem:[%s715 + $0x28] sm:$0xf]
      %v1667 = vld [vmem:[%s715 + $0x2c] sm:$0x1]
      %v1668 = vld [vmem:[%s715 + $0x30] sm:$0xe]
      %v1669 = vld [vmem:[%s715 + $0x34] sm:$0xf]
      %v1670 = vld [vmem:[%s715 + $0x38] sm:$0x1]
      %v1671 = vld [vmem:[%s715 + $0x3c] sm:$0xe]
      %v1672 = vld [vmem:[%s715 + $0x40] sm:$0xf]
      %v1673 = vld [vmem:[%s715 + $0x44] sm:$0x1]
      %v1674 = vld [vmem:[%s715 + $0x48] sm:$0xe]
      %v1675 = vld [vmem:[%s715 + $0x4c] sm:$0xf]
      %v1676 = vld [vmem:[%s715 + $0x50] sm:$0x1]
      %v1677 = vld [vmem:[%s715 + $0x54] sm:$0xe]
      %v1678 = vld [vmem:[%s715 + $0x58] sm:$0xf]
      %v1679 = vld [vmem:[%s715 + $0x5c] sm:$0x1]
      %v1704 = vrot.slane %v1656, 5
      %v1705 = vrot.slane %v1704, 4
      %v1706 = vrot.slane %v1657, 5
      %v1707 = vsel %vm1223, %v1705, %v1706
      %v1708 = vrot.slane %v1706, 4
      %v1709 = vrot.slane %v1658, 5
      %v1710 = vsel %vm1223, %v1708, %v1709
      %v1711 = vrot.slane %v1659, 5
      %v1712 = vrot.slane %v1711, 4
      %v1713 = vrot.slane %v1660, 5
      %v1714 = vsel %vm1223, %v1712, %v1713
      %v1715 = vrot.slane %v1713, 4
      %v1716 = vrot.slane %v1661, 5
      %v1717 = vsel %vm1223, %v1715, %v1716
      %v1718 = vrot.slane %v1662, 5
      %v1719 = vrot.slane %v1718, 4
      %v1720 = vrot.slane %v1663, 5
      %v1721 = vsel %vm1223, %v1719, %v1720
      %v1722 = vrot.slane %v1720, 4
      %v1723 = vrot.slane %v1664, 5
      %v1724 = vsel %vm1223, %v1722, %v1723
      %v1725 = vrot.slane %v1665, 5
      %v1726 = vrot.slane %v1725, 4
      %v1727 = vrot.slane %v1666, 5
      %v1728 = vsel %vm1223, %v1726, %v1727
      %v1729 = vrot.slane %v1727, 4
      %v1730 = vrot.slane %v1667, 5
      %v1731 = vsel %vm1223, %v1729, %v1730
      %v1732 = vrot.slane %v1668, 5
      %v1733 = vrot.slane %v1732, 4
      %v1734 = vrot.slane %v1669, 5
      %v1735 = vsel %vm1223, %v1733, %v1734
      %v1736 = vrot.slane %v1734, 4
      %v1737 = vrot.slane %v1670, 5
      %v1738 = vsel %vm1223, %v1736, %v1737
      %v1739 = vrot.slane %v1671, 5
      %v1740 = vrot.slane %v1739, 4
      %v1741 = vrot.slane %v1672, 5
      %v1742 = vsel %vm1223, %v1740, %v1741
      %v1743 = vrot.slane %v1741, 4
      %v1744 = vrot.slane %v1673, 5
      %v1745 = vsel %vm1223, %v1743, %v1744
      %v1746 = vrot.slane %v1674, 5
      %v1747 = vrot.slane %v1746, 4
      %v1748 = vrot.slane %v1675, 5
      %v1749 = vsel %vm1223, %v1747, %v1748
      %v1750 = vrot.slane %v1748, 4
      %v1751 = vrot.slane %v1676, 5
      %v1752 = vsel %vm1223, %v1750, %v1751
      %v1753 = vrot.slane %v1677, 5
      %v1754 = vrot.slane %v1753, 4
      %v1755 = vrot.slane %v1678, 5
      %v1756 = vsel %vm1223, %v1754, %v1755
      %v1757 = vrot.slane %v1755, 4
      %v1758 = vrot.slane %v1679, 5
      %v1759 = vsel %vm1223, %v1757, %v1758
      %1760 = vrot.lane.b32.xlu0 %v1707, 64
      %v1761 = vpop.permute.xlu0 %1760
      %1762 = vrot.lane.b32.xlu0 %v1710, 64
      %v1763 = vpop.permute.xlu0 %1762
      %1764 = vrot.lane.b32.xlu0 %v1714, 64
      %v1765 = vpop.permute.xlu0 %1764
      %1766 = vrot.lane.b32.xlu0 %v1717, 64
      %v1767 = vpop.permute.xlu0 %1766
      %1768 = vrot.lane.b32.xlu0 %v1721, 64
      %v1769 = vpop.permute.xlu0 %1768
      %1770 = vrot.lane.b32.xlu0 %v1724, 64
      %v1771 = vpop.permute.xlu0 %1770
      %1772 = vrot.lane.b32.xlu0 %v1728, 64
      %v1773 = vpop.permute.xlu0 %1772
      %1774 = vrot.lane.b32.xlu0 %v1731, 64
      %v1775 = vpop.permute.xlu0 %1774
      %1776 = vrot.lane.b32.xlu0 %v1735, 64
      %v1777 = vpop.permute.xlu0 %1776
      %1778 = vrot.lane.b32.xlu0 %v1738, 64
      %v1779 = vpop.permute.xlu0 %1778
      %1780 = vrot.lane.b32.xlu0 %v1742, 64
      %v1781 = vpop.permute.xlu0 %1780
      %1782 = vrot.lane.b32.xlu0 %v1745, 64
      %v1783 = vpop.permute.xlu0 %1782
      %1784 = vrot.lane.b32.xlu0 %v1749, 64
      %v1785 = vpop.permute.xlu0 %1784
      %1786 = vrot.lane.b32.xlu0 %v1752, 64
      %v1787 = vpop.permute.xlu0 %1786
      %1788 = vrot.lane.b32.xlu0 %v1756, 64
      %v1789 = vpop.permute.xlu0 %1788
      %1790 = vrot.lane.b32.xlu0 %v1759, 64
      %v1791 = vpop.permute.xlu0 %1790
      %1808 = vst.msk [vmem:[#allocation3 + $0x8] sm:$0xf] %vm1156, %v1761
      %1809 = vst.msk [vmem:[#allocation3 + $0x1c] sm:$0xf] %vm1156, %v1763
      %1810 = vst.msk [vmem:[#allocation3 + $0x30] sm:$0xf] %vm1156, %v1765
      %1811 = vst.msk [vmem:[#allocation3 + $0x44] sm:$0xf] %vm1156, %v1767
      %1812 = vst.msk [vmem:[#allocation3 + $0x58] sm:$0xf] %vm1156, %v1769
      %1813 = vst.msk [vmem:[#allocation3 + $0x6c] sm:$0xf] %vm1156, %v1771
      %1814 = vst.msk [vmem:[#allocation3 + $0x80] sm:$0xf] %vm1156, %v1773
      %1815 = vst.msk [vmem:[#allocation3 + $0x94] sm:$0xf] %vm1156, %v1775
      %1816 = vst.msk [vmem:[#allocation3 + $0xa8] sm:$0xf] %vm1156, %v1777
      %1817 = vst.msk [vmem:[#allocation3 + $0xbc] sm:$0xf] %vm1156, %v1779
      %1818 = vst.msk [vmem:[#allocation3 + $0xd0] sm:$0xf] %vm1156, %v1781
      %1819 = vst.msk [vmem:[#allocation3 + $0xe4] sm:$0xf] %vm1156, %v1783
      %1820 = vst.msk [vmem:[#allocation3 + $0xf8] sm:$0xf] %vm1156, %v1785
      %1821 = vst.msk [vmem:[#allocation3 + $0x10c] sm:$0xf] %vm1156, %v1787
      %1822 = vst.msk [vmem:[#allocation3 + $0x120] sm:$0xf] %vm1156, %v1789
      %1823 = vst.msk [vmem:[#allocation3 + $0x134] sm:$0xf] %vm1156, %v1791
      %s1824 = scalar_lea.vmem [#allocation2], 24
      %v1825 = vld [vmem:[%s1824] sm:$0xf]
      %v1826 = vld [vmem:[%s1824 + $0x4] sm:$0xf]
      %v1827 = vld [vmem:[%s1824 + $0xc] sm:$0xf]
      %v1828 = vld [vmem:[%s1824 + $0x10] sm:$0xf]
      %v1829 = vld [vmem:[%s1824 + $0x18] sm:$0xf]
      %v1830 = vld [vmem:[%s1824 + $0x1c] sm:$0xf]
      %v1831 = vld [vmem:[%s1824 + $0x24] sm:$0xf]
      %v1832 = vld [vmem:[%s1824 + $0x28] sm:$0xf]
      %v1833 = vld [vmem:[%s1824 + $0x30] sm:$0xf]
      %v1834 = vld [vmem:[%s1824 + $0x34] sm:$0xf]
      %v1835 = vld [vmem:[%s1824 + $0x3c] sm:$0xf]
      %v1836 = vld [vmem:[%s1824 + $0x40] sm:$0xf]
      %v1837 = vld [vmem:[%s1824 + $0x48] sm:$0xf]
      %v1838 = vld [vmem:[%s1824 + $0x4c] sm:$0xf]
      %v1839 = vld [vmem:[%s1824 + $0x54] sm:$0xf]
      %v1840 = vld [vmem:[%s1824 + $0x58] sm:$0xf]
      %1841 = vst.msk [vmem:[#allocation3 + $0xc] sm:$0xf] %vm456, %v1825
      %1842 = vst.msk [vmem:[#allocation3 + $0x20] sm:$0xf] %vm456, %v1826
      %1843 = vst.msk [vmem:[#allocation3 + $0x34] sm:$0xf] %vm456, %v1827
      %1844 = vst.msk [vmem:[#allocation3 + $0x48] sm:$0xf] %vm456, %v1828
      %1845 = vst.msk [vmem:[#allocation3 + $0x5c] sm:$0xf] %vm456, %v1829
      %1846 = vst.msk [vmem:[#allocation3 + $0x70] sm:$0xf] %vm456, %v1830
      %1847 = vst.msk [vmem:[#allocation3 + $0x84] sm:$0xf] %vm456, %v1831
      %1848 = vst.msk [vmem:[#allocation3 + $0x98] sm:$0xf] %vm456, %v1832
      %1849 = vst.msk [vmem:[#allocation3 + $0xac] sm:$0xf] %vm456, %v1833
      %1850 = vst.msk [vmem:[#allocation3 + $0xc0] sm:$0xf] %vm456, %v1834
      %1851 = vst.msk [vmem:[#allocation3 + $0xd4] sm:$0xf] %vm456, %v1835
      %1852 = vst.msk [vmem:[#allocation3 + $0xe8] sm:$0xf] %vm456, %v1836
      %1853 = vst.msk [vmem:[#allocation3 + $0xfc] sm:$0xf] %vm456, %v1837
      %1854 = vst.msk [vmem:[#allocation3 + $0x110] sm:$0xf] %vm456, %v1838
      %1855 = vst.msk [vmem:[#allocation3 + $0x124] sm:$0xf] %vm456, %v1839
      %1856 = vst.msk [vmem:[#allocation3 + $0x138] sm:$0xf] %vm456, %v1840
      %v1857 = vld [vmem:[%s1824] sm:$0xf]
      %v1858 = vld [vmem:[%s1824 + $0x4] sm:$0xf]
      %v1859 = vld [vmem:[%s1824 + $0x8] sm:$0x1]
      %v1860 = vld [vmem:[%s1824 + $0xc] sm:$0xf]
      %v1861 = vld [vmem:[%s1824 + $0x10] sm:$0xf]
      %v1862 = vld [vmem:[%s1824 + $0x14] sm:$0x1]
      %v1863 = vld [vmem:[%s1824 + $0x18] sm:$0xf]
      %v1864 = vld [vmem:[%s1824 + $0x1c] sm:$0xf]
      %v1865 = vld [vmem:[%s1824 + $0x20] sm:$0x1]
      %v1866 = vld [vmem:[%s1824 + $0x24] sm:$0xf]
      %v1867 = vld [vmem:[%s1824 + $0x28] sm:$0xf]
      %v1868 = vld [vmem:[%s1824 + $0x2c] sm:$0x1]
      %v1869 = vld [vmem:[%s1824 + $0x30] sm:$0xf]
      %v1870 = vld [vmem:[%s1824 + $0x34] sm:$0xf]
      %v1871 = vld [vmem:[%s1824 + $0x38] sm:$0x1]
      %v1872 = vld [vmem:[%s1824 + $0x3c] sm:$0xf]
      %v1873 = vld [vmem:[%s1824 + $0x40] sm:$0xf]
      %v1874 = vld [vmem:[%s1824 + $0x44] sm:$0x1]
      %v1875 = vld [vmem:[%s1824 + $0x48] sm:$0xf]
      %v1876 = vld [vmem:[%s1824 + $0x4c] sm:$0xf]
      %v1877 = vld [vmem:[%s1824 + $0x50] sm:$0x1]
      %v1878 = vld [vmem:[%s1824 + $0x54] sm:$0xf]
      %v1879 = vld [vmem:[%s1824 + $0x58] sm:$0xf]
      %v1880 = vld [vmem:[%s1824 + $0x5c] sm:$0x1]
      %v1882 = vshrl.u32 %v1857, 16
      %v1884 = vrot.slane %v1882, 4
      %v1885 = vshll.u32 %v1857, 16
      %v1887 = vrot.slane %v1885, 5
      %v1888 = vor.u32 %v1884, %v1887
      %v1889 = vrot.slane %v1888, 4
      %v1891 = vshll.u32 %v1858, 16
      %v1893 = vrot.slane %v1891, 5
      %v1894 = vsel %vm915, %v1889, %v1893
      %v1895 = vshrl.u32 %v1858, 16
      %v1897 = vrot.slane %v1895, 4
      %v1898 = vor.u32 %v1897, %v1893
      %v1899 = vrot.slane %v1898, 4
      %v1901 = vshll.u32 %v1859, 16
      %v1903 = vrot.slane %v1901, 5
      %v1904 = vsel %vm915, %v1899, %v1903
      %v1906 = vshrl.u32 %v1860, 16
      %v1908 = vrot.slane %v1906, 4
      %v1909 = vshll.u32 %v1860, 16
      %v1911 = vrot.slane %v1909, 5
      %v1912 = vor.u32 %v1908, %v1911
      %v1913 = vrot.slane %v1912, 4
      %v1915 = vshll.u32 %v1861, 16
      %v1917 = vrot.slane %v1915, 5
      %v1918 = vsel %vm915, %v1913, %v1917
      %v1919 = vshrl.u32 %v1861, 16
      %v1921 = vrot.slane %v1919, 4
      %v1922 = vor.u32 %v1921, %v1917
      %v1923 = vrot.slane %v1922, 4
      %v1925 = vshll.u32 %v1862, 16
      %v1927 = vrot.slane %v1925, 5
      %v1928 = vsel %vm915, %v1923, %v1927
      %v1930 = vshrl.u32 %v1863, 16
      %v1932 = vrot.slane %v1930, 4
      %v1933 = vshll.u32 %v1863, 16
      %v1935 = vrot.slane %v1933, 5
      %v1936 = vor.u32 %v1932, %v1935
      %v1937 = vrot.slane %v1936, 4
      %v1939 = vshll.u32 %v1864, 16
      %v1941 = vrot.slane %v1939, 5
      %v1942 = vsel %vm915, %v1937, %v1941
      %v1943 = vshrl.u32 %v1864, 16
      %v1945 = vrot.slane %v1943, 4
      %v1946 = vor.u32 %v1945, %v1941
      %v1947 = vrot.slane %v1946, 4
      %v1949 = vshll.u32 %v1865, 16
      %v1951 = vrot.slane %v1949, 5
      %v1952 = vsel %vm915, %v1947, %v1951
      %v1954 = vshrl.u32 %v1866, 16
      %v1956 = vrot.slane %v1954, 4
      %v1957 = vshll.u32 %v1866, 16
      %v1959 = vrot.slane %v1957, 5
      %v1960 = vor.u32 %v1956, %v1959
      %v1961 = vrot.slane %v1960, 4
      %v1963 = vshll.u32 %v1867, 16
      %v1965 = vrot.slane %v1963, 5
      %v1966 = vsel %vm915, %v1961, %v1965
      %v1967 = vshrl.u32 %v1867, 16
      %v1969 = vrot.slane %v1967, 4
      %v1970 = vor.u32 %v1969, %v1965
      %v1971 = vrot.slane %v1970, 4
      %v1973 = vshll.u32 %v1868, 16
      %v1975 = vrot.slane %v1973, 5
      %v1976 = vsel %vm915, %v1971, %v1975
      %v1978 = vshrl.u32 %v1869, 16
      %v1980 = vrot.slane %v1978, 4
      %v1981 = vshll.u32 %v1869, 16
      %v1983 = vrot.slane %v1981, 5
      %v1984 = vor.u32 %v1980, %v1983
      %v1985 = vrot.slane %v1984, 4
      %v1987 = vshll.u32 %v1870, 16
      %v1989 = vrot.slane %v1987, 5
      %v1990 = vsel %vm915, %v1985, %v1989
      %v1991 = vshrl.u32 %v1870, 16
      %v1993 = vrot.slane %v1991, 4
      %v1994 = vor.u32 %v1993, %v1989
      %v1995 = vrot.slane %v1994, 4
      %v1997 = vshll.u32 %v1871, 16
      %v1999 = vrot.slane %v1997, 5
      %v2000 = vsel %vm915, %v1995, %v1999
      %v2002 = vshrl.u32 %v1872, 16
      %v2004 = vrot.slane %v2002, 4
      %v2005 = vshll.u32 %v1872, 16
      %v2007 = vrot.slane %v2005, 5
      %v2008 = vor.u32 %v2004, %v2007
      %v2009 = vrot.slane %v2008, 4
      %v2011 = vshll.u32 %v1873, 16
      %v2013 = vrot.slane %v2011, 5
      %v2014 = vsel %vm915, %v2009, %v2013
      %v2015 = vshrl.u32 %v1873, 16
      %v2017 = vrot.slane %v2015, 4
      %v2018 = vor.u32 %v2017, %v2013
      %v2019 = vrot.slane %v2018, 4
      %v2021 = vshll.u32 %v1874, 16
      %v2023 = vrot.slane %v2021, 5
      %v2024 = vsel %vm915, %v2019, %v2023
      %v2026 = vshrl.u32 %v1875, 16
      %v2028 = vrot.slane %v2026, 4
      %v2029 = vshll.u32 %v1875, 16
      %v2031 = vrot.slane %v2029, 5
      %v2032 = vor.u32 %v2028, %v2031
      %v2033 = vrot.slane %v2032, 4
      %v2035 = vshll.u32 %v1876, 16
      %v2037 = vrot.slane %v2035, 5
      %v2038 = vsel %vm915, %v2033, %v2037
      %v2039 = vshrl.u32 %v1876, 16
      %v2041 = vrot.slane %v2039, 4
      %v2042 = vor.u32 %v2041, %v2037
      %v2043 = vrot.slane %v2042, 4
      %v2045 = vshll.u32 %v1877, 16
      %v2047 = vrot.slane %v2045, 5
      %v2048 = vsel %vm915, %v2043, %v2047
      %v2050 = vshrl.u32 %v1878, 16
      %v2052 = vrot.slane %v2050, 4
      %v2053 = vshll.u32 %v1878, 16
      %v2055 = vrot.slane %v2053, 5
      %v2056 = vor.u32 %v2052, %v2055
      %v2057 = vrot.slane %v2056, 4
      %v2059 = vshll.u32 %v1879, 16
      %v2061 = vrot.slane %v2059, 5
      %v2062 = vsel %vm915, %v2057, %v2061
      %v2063 = vshrl.u32 %v1879, 16
      %v2065 = vrot.slane %v2063, 4
      %v2066 = vor.u32 %v2065, %v2061
      %v2067 = vrot.slane %v2066, 4
      %v2069 = vshll.u32 %v1880, 16
      %v2071 = vrot.slane %v2069, 5
      %v2072 = vsel %vm915, %v2067, %v2071
      %2073 = vrot.lane.b32.xlu0 %v1894, 64
      %v2074 = vpop.permute.xlu0 %2073
      %2075 = vrot.lane.b32.xlu0 %v1904, 64
      %v2076 = vpop.permute.xlu0 %2075
      %2077 = vrot.lane.b32.xlu0 %v1918, 64
      %v2078 = vpop.permute.xlu0 %2077
      %2079 = vrot.lane.b32.xlu0 %v1928, 64
      %v2080 = vpop.permute.xlu0 %2079
      %2081 = vrot.lane.b32.xlu0 %v1942, 64
      %v2082 = vpop.permute.xlu0 %2081
      %2083 = vrot.lane.b32.xlu0 %v1952, 64
      %v2084 = vpop.permute.xlu0 %2083
      %2085 = vrot.lane.b32.xlu0 %v1966, 64
      %v2086 = vpop.permute.xlu0 %2085
      %2087 = vrot.lane.b32.xlu0 %v1976, 64
      %v2088 = vpop.permute.xlu0 %2087
      %2089 = vrot.lane.b32.xlu0 %v1990, 64
      %v2090 = vpop.permute.xlu0 %2089
      %2091 = vrot.lane.b32.xlu0 %v2000, 64
      %v2092 = vpop.permute.xlu0 %2091
      %2093 = vrot.lane.b32.xlu0 %v2014, 64
      %v2094 = vpop.permute.xlu0 %2093
      %2095 = vrot.lane.b32.xlu0 %v2024, 64
      %v2096 = vpop.permute.xlu0 %2095
      %2097 = vrot.lane.b32.xlu0 %v2038, 64
      %v2098 = vpop.permute.xlu0 %2097
      %2099 = vrot.lane.b32.xlu0 %v2048, 64
      %v2100 = vpop.permute.xlu0 %2099
      %2101 = vrot.lane.b32.xlu0 %v2062, 64
      %v2102 = vpop.permute.xlu0 %2101
      %2103 = vrot.lane.b32.xlu0 %v2072, 64
      %v2104 = vpop.permute.xlu0 %2103
      %2121 = vst.msk [vmem:[#allocation3 + $0xc] sm:$0xf] %vm1156, %v2074
      %2122 = vst.msk [vmem:[#allocation3 + $0x20] sm:$0xf] %vm1156, %v2076
      %2123 = vst.msk [vmem:[#allocation3 + $0x34] sm:$0xf] %vm1156, %v2078
      %2124 = vst.msk [vmem:[#allocation3 + $0x48] sm:$0xf] %vm1156, %v2080
      %2125 = vst.msk [vmem:[#allocation3 + $0x5c] sm:$0xf] %vm1156, %v2082
      %2126 = vst.msk [vmem:[#allocation3 + $0x70] sm:$0xf] %vm1156, %v2084
      %2127 = vst.msk [vmem:[#allocation3 + $0x84] sm:$0xf] %vm1156, %v2086
      %2128 = vst.msk [vmem:[#allocation3 + $0x98] sm:$0xf] %vm1156, %v2088
      %2129 = vst.msk [vmem:[#allocation3 + $0xac] sm:$0xf] %vm1156, %v2090
      %2130 = vst.msk [vmem:[#allocation3 + $0xc0] sm:$0xf] %vm1156, %v2092
      %2131 = vst.msk [vmem:[#allocation3 + $0xd4] sm:$0xf] %vm1156, %v2094
      %2132 = vst.msk [vmem:[#allocation3 + $0xe8] sm:$0xf] %vm1156, %v2096
      %2133 = vst.msk [vmem:[#allocation3 + $0xfc] sm:$0xf] %vm1156, %v2098
      %2134 = vst.msk [vmem:[#allocation3 + $0x110] sm:$0xf] %vm1156, %v2100
      %2135 = vst.msk [vmem:[#allocation3 + $0x124] sm:$0xf] %vm1156, %v2102
      %2136 = vst.msk [vmem:[#allocation3 + $0x138] sm:$0xf] %vm1156, %v2104
      %v2137 = vld [vmem:[%s1824] sm:$0xe]
      %v2138 = vld [vmem:[%s1824 + $0x4] sm:$0xf]
      %v2139 = vld [vmem:[%s1824 + $0x8] sm:$0x1]
      %v2140 = vld [vmem:[%s1824 + $0xc] sm:$0xe]
      %v2141 = vld [vmem:[%s1824 + $0x10] sm:$0xf]
      %v2142 = vld [vmem:[%s1824 + $0x14] sm:$0x1]
      %v2143 = vld [vmem:[%s1824 + $0x18] sm:$0xe]
      %v2144 = vld [vmem:[%s1824 + $0x1c] sm:$0xf]
      %v2145 = vld [vmem:[%s1824 + $0x20] sm:$0x1]
      %v2146 = vld [vmem:[%s1824 + $0x24] sm:$0xe]
      %v2147 = vld [vmem:[%s1824 + $0x28] sm:$0xf]
      %v2148 = vld [vmem:[%s1824 + $0x2c] sm:$0x1]
      %v2149 = vld [vmem:[%s1824 + $0x30] sm:$0xe]
      %v2150 = vld [vmem:[%s1824 + $0x34] sm:$0xf]
      %v2151 = vld [vmem:[%s1824 + $0x38] sm:$0x1]
      %v2152 = vld [vmem:[%s1824 + $0x3c] sm:$0xe]
      %v2153 = vld [vmem:[%s1824 + $0x40] sm:$0xf]
      %v2154 = vld [vmem:[%s1824 + $0x44] sm:$0x1]
      %v2155 = vld [vmem:[%s1824 + $0x48] sm:$0xe]
      %v2156 = vld [vmem:[%s1824 + $0x4c] sm:$0xf]
      %v2157 = vld [vmem:[%s1824 + $0x50] sm:$0x1]
      %v2158 = vld [vmem:[%s1824 + $0x54] sm:$0xe]
      %v2159 = vld [vmem:[%s1824 + $0x58] sm:$0xf]
      %v2160 = vld [vmem:[%s1824 + $0x5c] sm:$0x1]
      %v2185 = vrot.slane %v2137, 5
      %v2186 = vrot.slane %v2185, 4
      %v2187 = vrot.slane %v2138, 5
      %v2188 = vsel %vm1223, %v2186, %v2187
      %v2189 = vrot.slane %v2187, 4
      %v2190 = vrot.slane %v2139, 5
      %v2191 = vsel %vm1223, %v2189, %v2190
      %v2192 = vrot.slane %v2140, 5
      %v2193 = vrot.slane %v2192, 4
      %v2194 = vrot.slane %v2141, 5
      %v2195 = vsel %vm1223, %v2193, %v2194
      %v2196 = vrot.slane %v2194, 4
      %v2197 = vrot.slane %v2142, 5
      %v2198 = vsel %vm1223, %v2196, %v2197
      %v2199 = vrot.slane %v2143, 5
      %v2200 = vrot.slane %v2199, 4
      %v2201 = vrot.slane %v2144, 5
      %v2202 = vsel %vm1223, %v2200, %v2201
      %v2203 = vrot.slane %v2201, 4
      %v2204 = vrot.slane %v2145, 5
      %v2205 = vsel %vm1223, %v2203, %v2204
      %v2206 = vrot.slane %v2146, 5
      %v2207 = vrot.slane %v2206, 4
      %v2208 = vrot.slane %v2147, 5
      %v2209 = vsel %vm1223, %v2207, %v2208
      %v2210 = vrot.slane %v2208, 4
      %v2211 = vrot.slane %v2148, 5
      %v2212 = vsel %vm1223, %v2210, %v2211
      %v2213 = vrot.slane %v2149, 5
      %v2214 = vrot.slane %v2213, 4
      %v2215 = vrot.slane %v2150, 5
      %v2216 = vsel %vm1223, %v2214, %v2215
      %v2217 = vrot.slane %v2215, 4
      %v2218 = vrot.slane %v2151, 5
      %v2219 = vsel %vm1223, %v2217, %v2218
      %v2220 = vrot.slane %v2152, 5
      %v2221 = vrot.slane %v2220, 4
      %v2222 = vrot.slane %v2153, 5
      %v2223 = vsel %vm1223, %v2221, %v2222
      %v2224 = vrot.slane %v2222, 4
      %v2225 = vrot.slane %v2154, 5
      %v2226 = vsel %vm1223, %v2224, %v2225
      %v2227 = vrot.slane %v2155, 5
      %v2228 = vrot.slane %v2227, 4
      %v2229 = vrot.slane %v2156, 5
      %v2230 = vsel %vm1223, %v2228, %v2229
      %v2231 = vrot.slane %v2229, 4
      %v2232 = vrot.slane %v2157, 5
      %v2233 = vsel %vm1223, %v2231, %v2232
      %v2234 = vrot.slane %v2158, 5
      %v2235 = vrot.slane %v2234, 4
      %v2236 = vrot.slane %v2159, 5
      %v2237 = vsel %vm1223, %v2235, %v2236
      %v2238 = vrot.slane %v2236, 4
      %v2239 = vrot.slane %v2160, 5
      %v2240 = vsel %vm1223, %v2238, %v2239
      %2257 = vst.msk [vmem:[#allocation3 + $0x10] sm:$0xf] %vm456, %v2188
      %2258 = vst.msk [vmem:[#allocation3 + $0x24] sm:$0xf] %vm456, %v2191
      %2259 = vst.msk [vmem:[#allocation3 + $0x38] sm:$0xf] %vm456, %v2195
      %2260 = vst.msk [vmem:[#allocation3 + $0x4c] sm:$0xf] %vm456, %v2198
      %2261 = vst.msk [vmem:[#allocation3 + $0x60] sm:$0xf] %vm456, %v2202
      %2262 = vst.msk [vmem:[#allocation3 + $0x74] sm:$0xf] %vm456, %v2205
      %2263 = vst.msk [vmem:[#allocation3 + $0x88] sm:$0xf] %vm456, %v2209
      %2264 = vst.msk [vmem:[#allocation3 + $0x9c] sm:$0xf] %vm456, %v2212
      %2265 = vst.msk [vmem:[#allocation3 + $0xb0] sm:$0xf] %vm456, %v2216
      %2266 = vst.msk [vmem:[#allocation3 + $0xc4] sm:$0xf] %vm456, %v2219
      %2267 = vst.msk [vmem:[#allocation3 + $0xd8] sm:$0xf] %vm456, %v2223
      %2268 = vst.msk [vmem:[#allocation3 + $0xec] sm:$0xf] %vm456, %v2226
      %2269 = vst.msk [vmem:[#allocation3 + $0x100] sm:$0xf] %vm456, %v2230
      %2270 = vst.msk [vmem:[#allocation3 + $0x114] sm:$0xf] %vm456, %v2233
      %2271 = vst.msk [vmem:[#allocation3 + $0x128] sm:$0xf] %vm456, %v2237
      %2272 = vst.msk [vmem:[#allocation3 + $0x13c] sm:$0xf] %vm456, %v2240
      %v2273 = vld [vmem:[#allocation3] sm:$0xff]
      %v2274 = vld [vmem:[#allocation3 + $0x8] sm:$0xff]
      %v2275 = vld [vmem:[#allocation3 + $0x10] sm:$0xf]
      %v2276 = vld [vmem:[#allocation3 + $0x14] sm:$0xff]
      %v2277 = vld [vmem:[#allocation3 + $0x1c] sm:$0xff]
      %v2278 = vld [vmem:[#allocation3 + $0x24] sm:$0xf]
      %v2279 = vld [vmem:[#allocation3 + $0x28] sm:$0xff]
      %v2280 = vld [vmem:[#allocation3 + $0x30] sm:$0xff]
      %v2281 = vld [vmem:[#allocation3 + $0x38] sm:$0xf]
      %v2282 = vld [vmem:[#allocation3 + $0x3c] sm:$0xff]
      %v2283 = vld [vmem:[#allocation3 + $0x44] sm:$0xff]
      %v2284 = vld [vmem:[#allocation3 + $0x4c] sm:$0xf]
      %v2285 = vld [vmem:[#allocation3 + $0x50] sm:$0xff]
      %v2286 = vld [vmem:[#allocation3 + $0x58] sm:$0xff]
      %v2287 = vld [vmem:[#allocation3 + $0x60] sm:$0xf]
      %v2288 = vld [vmem:[#allocation3 + $0x64] sm:$0xff]
      %v2289 = vld [vmem:[#allocation3 + $0x6c] sm:$0xff]
      %v2290 = vld [vmem:[#allocation3 + $0x74] sm:$0xf]
      %v2291 = vld [vmem:[#allocation3 + $0x78] sm:$0xff]
      %v2292 = vld [vmem:[#allocation3 + $0x80] sm:$0xff]
      %v2293 = vld [vmem:[#allocation3 + $0x88] sm:$0xf]
      %v2294 = vld [vmem:[#allocation3 + $0x8c] sm:$0xff]
      %v2295 = vld [vmem:[#allocation3 + $0x94] sm:$0xff]
      %v2296 = vld [vmem:[#allocation3 + $0x9c] sm:$0xf]
      %v2297 = vld [vmem:[#allocation3 + $0xa0] sm:$0xff]
      %v2298 = vld [vmem:[#allocation3 + $0xa8] sm:$0xff]
      %v2299 = vld [vmem:[#allocation3 + $0xb0] sm:$0xf]
      %v2300 = vld [vmem:[#allocation3 + $0xb4] sm:$0xff]
      %v2301 = vld [vmem:[#allocation3 + $0xbc] sm:$0xff]
      %v2302 = vld [vmem:[#allocation3 + $0xc4] sm:$0xf]
      %v2303 = vld [vmem:[#allocation3 + $0xc8] sm:$0xff]
      %v2304 = vld [vmem:[#allocation3 + $0xd0] sm:$0xff]
      %v2305 = vld [vmem:[#allocation3 + $0xd8] sm:$0xf]
      %v2306 = vld [vmem:[#allocation3 + $0xdc] sm:$0xff]
      %v2307 = vld [vmem:[#allocation3 + $0xe4] sm:$0xff]
      %v2308 = vld [vmem:[#allocation3 + $0xec] sm:$0xf]
      %v2309 = vld [vmem:[#allocation3 + $0xf0] sm:$0xff]
      %v2310 = vld [vmem:[#allocation3 + $0xf8] sm:$0xff]
      %v2311 = vld [vmem:[#allocation3 + $0x100] sm:$0xf]
      %v2312 = vld [vmem:[#allocation3 + $0x104] sm:$0xff]
      %v2313 = vld [vmem:[#allocation3 + $0x10c] sm:$0xff]
      %v2314 = vld [vmem:[#allocation3 + $0x114] sm:$0xf]
      %v2315 = vld [vmem:[#allocation3 + $0x118] sm:$0xff]
      %v2316 = vld [vmem:[#allocation3 + $0x120] sm:$0xff]
      %v2317 = vld [vmem:[#allocation3 + $0x128] sm:$0xf]
      %v2318 = vld [vmem:[#allocation3 + $0x12c] sm:$0xff]
      %v2319 = vld [vmem:[#allocation3 + $0x134] sm:$0xff]
      %v2320 = vld [vmem:[#allocation3 + $0x13c] sm:$0xf]
      %v2321 = vld [vmem:[%s4] sm:$0xf]
      %v2322 = vld [vmem:[%s4 + $0x4] sm:$0xf]
      %v2323 = vld [vmem:[%s4 + $0x8] sm:$0xf]
      %v2324 = vld [vmem:[%s4 + $0xc] sm:$0xf]
      %v2325 = vld [vmem:[%s4 + $0x10] sm:$0xf]
      %v2326 = vld [vmem:[%s4 + $0x14] sm:$0xf]
      %v2327 = vld [vmem:[%s4 + $0x18] sm:$0xf]
      %v2328 = vld [vmem:[%s4 + $0x1c] sm:$0xf]
      %v2329 = vld [vmem:[%s4 + $0x20] sm:$0xf]
      %v2330 = vld [vmem:[%s4 + $0x24] sm:$0xf]
      %v2331 = vld [vmem:[%s4 + $0x28] sm:$0xf]
      %v2332 = vld [vmem:[%s4 + $0x2c] sm:$0xf]
      %v2333 = vld [vmem:[%s4 + $0x30] sm:$0xf]
      %v2334 = vld [vmem:[%s4 + $0x34] sm:$0xf]
      %v2335 = vld [vmem:[%s4 + $0x38] sm:$0xf]
      %v2336 = vld [vmem:[%s4 + $0x3c] sm:$0xf]
      %v2337 = vld [vmem:[%s4 + $0x40] sm:$0xf]
      %v2338 = vld [vmem:[%s4 + $0x44] sm:$0xf]
      %v2339 = vld [vmem:[%s4 + $0x48] sm:$0xf]
      %v2340 = vld [vmem:[%s4 + $0x4c] sm:$0xf]
      %v2341 = vld [vmem:[%s4 + $0x50] sm:$0xf]
      %v2342 = vld [vmem:[%s4 + $0x54] sm:$0xf]
      %v2343 = vld [vmem:[%s4 + $0x58] sm:$0xf]
      %v2344 = vld [vmem:[%s4 + $0x5c] sm:$0xf]
      %v2345 = vld [vmem:[%s4 + $0x60] sm:$0xf]
      %v2346 = vld [vmem:[%s4 + $0x64] sm:$0xf]
      %v2347 = vld [vmem:[%s4 + $0x68] sm:$0xf]
      %v2348 = vld [vmem:[%s4 + $0x6c] sm:$0xf]
      %v2349 = vld [vmem:[%s4 + $0x70] sm:$0xf]
      %v2350 = vld [vmem:[%s4 + $0x74] sm:$0xf]
      %v2351 = vld [vmem:[%s4 + $0x78] sm:$0xf]
      %v2352 = vld [vmem:[%s4 + $0x7c] sm:$0xf]
      %v2353 = vld [vmem:[%s4 + $0x80] sm:$0xf]
      %v2354 = vld [vmem:[%s4 + $0x84] sm:$0xf]
      %v2355 = vld [vmem:[%s4 + $0x88] sm:$0xf]
      %v2356 = vld [vmem:[%s4 + $0x8c] sm:$0xf]
      %v2357 = vld [vmem:[%s4 + $0x90] sm:$0xf]
      %v2358 = vld [vmem:[%s4 + $0x94] sm:$0xf]
      %v2359 = vld [vmem:[%s4 + $0x98] sm:$0xf]
      %v2360 = vld [vmem:[%s4 + $0x9c] sm:$0xf]
      %v2361 = vld [vmem:[%s4 + $0xa0] sm:$0xf]
      %v2362 = vld [vmem:[%s4 + $0xa4] sm:$0xf]
      %v2363 = vld [vmem:[%s4 + $0xa8] sm:$0xf]
      %v2364 = vld [vmem:[%s4 + $0xac] sm:$0xf]
      %v2365 = vld [vmem:[%s4 + $0xb0] sm:$0xf]
      %v2366 = vld [vmem:[%s4 + $0xb4] sm:$0xf]
      %v2367 = vld [vmem:[%s4 + $0xb8] sm:$0xf]
      %v2368 = vld [vmem:[%s4 + $0xbc] sm:$0xf]
      %v2369 = vld [vmem:[%s4 + $0xc0] sm:$0xf]
      %v2370 = vld [vmem:[%s4 + $0xc4] sm:$0xf]
      %v2371 = vld [vmem:[%s4 + $0xc8] sm:$0xf]
      %v2372 = vld [vmem:[%s4 + $0xcc] sm:$0xf]
      %v2373 = vld [vmem:[%s4 + $0xd0] sm:$0xf]
      %v2374 = vld [vmem:[%s4 + $0xd4] sm:$0xf]
      %v2375 = vld [vmem:[%s4 + $0xd8] sm:$0xf]
      %v2376 = vld [vmem:[%s4 + $0xdc] sm:$0xf]
      %v2377 = vld [vmem:[%s4 + $0xe0] sm:$0xf]
      %v2378 = vld [vmem:[%s4 + $0xe4] sm:$0xf]
      %v2379 = vld [vmem:[%s4 + $0xe8] sm:$0xf]
      %v2380 = vld [vmem:[%s4 + $0xec] sm:$0xf]
      %v2381 = vld [vmem:[%s4 + $0xf0] sm:$0xf]
      %v2382 = vld [vmem:[%s4 + $0xf4] sm:$0xf]
      %v2383 = vld [vmem:[%s4 + $0xf8] sm:$0xf]
      %v2384 = vld [vmem:[%s4 + $0xfc] sm:$0xf]
      %v2385 = vld [vmem:[%s4 + $0x100] sm:$0xf]
      %v2386 = vld [vmem:[%s4 + $0x104] sm:$0xf]
      %v2387 = vld [vmem:[%s4 + $0x108] sm:$0xf]
      %v2388 = vld [vmem:[%s4 + $0x10c] sm:$0xf]
      %v2389 = vld [vmem:[%s4 + $0x110] sm:$0xf]
      %v2390 = vld [vmem:[%s4 + $0x114] sm:$0xf]
      %v2391 = vld [vmem:[%s4 + $0x118] sm:$0xf]
      %v2392 = vld [vmem:[%s4 + $0x11c] sm:$0xf]
      %v2393 = vld [vmem:[%s5] sm:$0x1]
      %v2395 = vlaneseq
      %v2396 = vshrl.u32 %v2395, 7
      %v2397 = vsub.s32 0, %v2396
      %v2398 = vrot.slane %v2393, %v2397
      %v2448 = vunpack.c.l.b16 %v2273
      %v2449 = vunpack.c.h.b16 %v2273
      %v2450 = vunpack.c.l.b16 %v2274
      %v2451 = vunpack.c.h.b16 %v2274
      %v2452 = vunpack.c.l.b16 %v2275
      %v2453 = vunpack.c.l.b16 %v2276
      %v2454 = vunpack.c.h.b16 %v2276
      %v2455 = vunpack.c.l.b16 %v2277
      %v2456 = vunpack.c.h.b16 %v2277
      %v2457 = vunpack.c.l.b16 %v2278
      %v2458 = vunpack.c.l.b16 %v2279
      %v2459 = vunpack.c.h.b16 %v2279
      %v2460 = vunpack.c.l.b16 %v2280
      %v2461 = vunpack.c.h.b16 %v2280
      %v2462 = vunpack.c.l.b16 %v2281
      %v2463 = vunpack.c.l.b16 %v2282
      %v2464 = vunpack.c.h.b16 %v2282
      %v2465 = vunpack.c.l.b16 %v2283
      %v2466 = vunpack.c.h.b16 %v2283
      %v2467 = vunpack.c.l.b16 %v2284
      %v2468 = vunpack.c.l.b16 %v2285
      %v2469 = vunpack.c.h.b16 %v2285
      %v2470 = vunpack.c.l.b16 %v2286
      %v2471 = vunpack.c.h.b16 %v2286
      %v2472 = vunpack.c.l.b16 %v2287
      %v2473 = vunpack.c.l.b16 %v2288
      %v2474 = vunpack.c.h.b16 %v2288
      %v2475 = vunpack.c.l.b16 %v2289
      %v2476 = vunpack.c.h.b16 %v2289
      %v2477 = vunpack.c.l.b16 %v2290
      %v2478 = vunpack.c.l.b16 %v2291
      %v2479 = vunpack.c.h.b16 %v2291
      %v2480 = vunpack.c.l.b16 %v2292
      %v2481 = vunpack.c.h.b16 %v2292
      %v2482 = vunpack.c.l.b16 %v2293
      %v2483 = vunpack.c.l.b16 %v2294
      %v2484 = vunpack.c.h.b16 %v2294
      %v2485 = vunpack.c.l.b16 %v2295
      %v2486 = vunpack.c.h.b16 %v2295
      %v2487 = vunpack.c.l.b16 %v2296
      %v2488 = vunpack.c.l.b16 %v2297
      %v2489 = vunpack.c.h.b16 %v2297
      %v2490 = vunpack.c.l.b16 %v2298
      %v2491 = vunpack.c.h.b16 %v2298
      %v2492 = vunpack.c.l.b16 %v2299
      %v2493 = vunpack.c.l.b16 %v2300
      %v2494 = vunpack.c.h.b16 %v2300
      %v2495 = vunpack.c.l.b16 %v2301
      %v2496 = vunpack.c.h.b16 %v2301
      %v2497 = vunpack.c.l.b16 %v2302
      %v2498 = vunpack.c.l.b16 %v2303
      %v2499 = vunpack.c.h.b16 %v2303
      %v2500 = vunpack.c.l.b16 %v2304
      %v2501 = vunpack.c.h.b16 %v2304
      %v2502 = vunpack.c.l.b16 %v2305
      %v2503 = vunpack.c.l.b16 %v2306
      %v2504 = vunpack.c.h.b16 %v2306
      %v2505 = vunpack.c.l.b16 %v2307
      %v2506 = vunpack.c.h.b16 %v2307
      %v2507 = vunpack.c.l.b16 %v2308
      %v2508 = vunpack.c.l.b16 %v2309
      %v2509 = vunpack.c.h.b16 %v2309
      %v2510 = vunpack.c.l.b16 %v2310
      %v2511 = vunpack.c.h.b16 %v2310
      %v2512 = vunpack.c.l.b16 %v2311
      %v2513 = vunpack.c.l.b16 %v2312
      %v2514 = vunpack.c.h.b16 %v2312
      %v2515 = vunpack.c.l.b16 %v2313
      %v2516 = vunpack.c.h.b16 %v2313
      %v2517 = vunpack.c.l.b16 %v2314
      %v2518 = vunpack.c.l.b16 %v2315
      %v2519 = vunpack.c.h.b16 %v2315
      %v2520 = vunpack.c.l.b16 %v2316
      %v2521 = vunpack.c.h.b16 %v2316
      %v2522 = vunpack.c.l.b16 %v2317
      %v2523 = vunpack.c.l.b16 %v2318
      %v2524 = vunpack.c.h.b16 %v2318
      %v2525 = vunpack.c.l.b16 %v2319
      %v2526 = vunpack.c.h.b16 %v2319
      %v2527 = vunpack.c.l.b16 %v2320
      %v2528 = vpack.c.b16 %v2453, %v2448
      %v2529 = vpack.c.b16 %v2454, %v2449
      %v2530 = vpack.c.b16 %v2455, %v2450
      %v2531 = vpack.c.b16 %v2456, %v2451
      %v2532 = vpack.c.b16 %v2457, %v2452
      %v2533 = vpack.c.b16 %v2463, %v2458
      %v2534 = vpack.c.b16 %v2464, %v2459
      %v2535 = vpack.c.b16 %v2465, %v2460
      %v2536 = vpack.c.b16 %v2466, %v2461
      %v2537 = vpack.c.b16 %v2467, %v2462
      %v2538 = vpack.c.b16 %v2473, %v2468
      %v2539 = vpack.c.b16 %v2474, %v2469
      %v2540 = vpack.c.b16 %v2475, %v2470
      %v2541 = vpack.c.b16 %v2476, %v2471
      %v2542 = vpack.c.b16 %v2477, %v2472
      %v2543 = vpack.c.b16 %v2483, %v2478
      %v2544 = vpack.c.b16 %v2484, %v2479
      %v2545 = vpack.c.b16 %v2485, %v2480
      %v2546 = vpack.c.b16 %v2486, %v2481
      %v2547 = vpack.c.b16 %v2487, %v2482
      %v2548 = vpack.c.b16 %v2493, %v2488
      %v2549 = vpack.c.b16 %v2494, %v2489
      %v2550 = vpack.c.b16 %v2495, %v2490
      %v2551 = vpack.c.b16 %v2496, %v2491
      %v2552 = vpack.c.b16 %v2497, %v2492
      %v2553 = vpack.c.b16 %v2503, %v2498
      %v2554 = vpack.c.b16 %v2504, %v2499
      %v2555 = vpack.c.b16 %v2505, %v2500
      %v2556 = vpack.c.b16 %v2506, %v2501
      %v2557 = vpack.c.b16 %v2507, %v2502
      %v2558 = vpack.c.b16 %v2513, %v2508
      %v2559 = vpack.c.b16 %v2514, %v2509
      %v2560 = vpack.c.b16 %v2515, %v2510
      %v2561 = vpack.c.b16 %v2516, %v2511
      %v2562 = vpack.c.b16 %v2517, %v2512
      %v2563 = vpack.c.b16 %v2523, %v2518
      %v2564 = vpack.c.b16 %v2524, %v2519
      %v2565 = vpack.c.b16 %v2525, %v2520
      %v2566 = vpack.c.b16 %v2526, %v2521
      %v2567 = vpack.c.b16 %v2527, %v2522
      %v2672 = vunpack.c.l.b16 %v2321
      %v2673 = vunpack.c.l.b16 %v2322
      %v2674 = vunpack.c.l.b16 %v2323
      %v2675 = vunpack.c.l.b16 %v2324
      %v2676 = vunpack.c.l.b16 %v2325
      %v2677 = vunpack.c.l.b16 %v2326
      %v2678 = vunpack.c.l.b16 %v2327
      %v2679 = vunpack.c.l.b16 %v2328
      %v2680 = vunpack.c.l.b16 %v2329
      %v2681 = vunpack.c.l.b16 %v2330
      %v2682 = vunpack.c.l.b16 %v2331
      %v2683 = vunpack.c.l.b16 %v2332
      %v2684 = vunpack.c.l.b16 %v2333
      %v2685 = vunpack.c.l.b16 %v2334
      %v2686 = vunpack.c.l.b16 %v2335
      %v2687 = vunpack.c.l.b16 %v2336
      %v2688 = vunpack.c.l.b16 %v2337
      %v2689 = vunpack.c.l.b16 %v2338
      %v2690 = vunpack.c.l.b16 %v2339
      %v2691 = vunpack.c.l.b16 %v2340
      %v2692 = vunpack.c.l.b16 %v2341
      %v2693 = vunpack.c.l.b16 %v2342
      %v2694 = vunpack.c.l.b16 %v2343
      %v2695 = vunpack.c.l.b16 %v2344
      %v2696 = vunpack.c.l.b16 %v2345
      %v2697 = vunpack.c.l.b16 %v2346
      %v2698 = vunpack.c.l.b16 %v2347
      %v2699 = vunpack.c.l.b16 %v2348
      %v2700 = vunpack.c.l.b16 %v2349
      %v2701 = vunpack.c.l.b16 %v2350
      %v2702 = vunpack.c.l.b16 %v2351
      %v2703 = vunpack.c.l.b16 %v2352
      %v2704 = vunpack.c.l.b16 %v2353
      %v2705 = vunpack.c.l.b16 %v2354
      %v2706 = vunpack.c.l.b16 %v2355
      %v2707 = vunpack.c.l.b16 %v2356
      %v2708 = vunpack.c.l.b16 %v2357
      %v2709 = vunpack.c.l.b16 %v2358
      %v2710 = vunpack.c.l.b16 %v2359
      %v2711 = vunpack.c.l.b16 %v2360
      %v2712 = vunpack.c.l.b16 %v2361
      %v2713 = vunpack.c.l.b16 %v2362
      %v2714 = vunpack.c.l.b16 %v2363
      %v2715 = vunpack.c.l.b16 %v2364
      %v2716 = vunpack.c.l.b16 %v2365
      %v2717 = vunpack.c.l.b16 %v2366
      %v2718 = vunpack.c.l.b16 %v2367
      %v2719 = vunpack.c.l.b16 %v2368
      %v2720 = vunpack.c.l.b16 %v2369
      %v2721 = vunpack.c.l.b16 %v2370
      %v2722 = vunpack.c.l.b16 %v2371
      %v2723 = vunpack.c.l.b16 %v2372
      %v2724 = vunpack.c.l.b16 %v2373
      %v2725 = vunpack.c.l.b16 %v2374
      %v2726 = vunpack.c.l.b16 %v2375
      %v2727 = vunpack.c.l.b16 %v2376
      %v2728 = vunpack.c.l.b16 %v2377
      %v2729 = vunpack.c.l.b16 %v2378
      %v2730 = vunpack.c.l.b16 %v2379
      %v2731 = vunpack.c.l.b16 %v2380
      %v2732 = vunpack.c.l.b16 %v2381
      %v2733 = vunpack.c.l.b16 %v2382
      %v2734 = vunpack.c.l.b16 %v2383
      %v2735 = vunpack.c.l.b16 %v2384
      %v2736 = vunpack.c.l.b16 %v2385
      %v2737 = vunpack.c.l.b16 %v2386
      %v2738 = vunpack.c.l.b16 %v2387
      %v2739 = vunpack.c.l.b16 %v2388
      %v2740 = vunpack.c.l.b16 %v2389
      %v2741 = vunpack.c.l.b16 %v2390
      %v2742 = vunpack.c.l.b16 %v2391
      %v2743 = vunpack.c.l.b16 %v2392
      %v2744 = vpack.c.b16 %v2673, %v2672
      %v2745 = vpack.c.b16 %v2675, %v2674
      %v2746 = vpack.c.b16 %v2677, %v2676
      %v2747 = vpack.c.b16 %v2679, %v2678
      %v2748 = vpack.c.b16 %v2681, %v2680
      %v2749 = vpack.c.b16 %v2683, %v2682
      %v2750 = vpack.c.b16 %v2685, %v2684
      %v2751 = vpack.c.b16 %v2687, %v2686
      %v2752 = vpack.c.b16 %v2689, %v2688
      %v2753 = vpack.c.b16 %v2691, %v2690
      %v2754 = vpack.c.b16 %v2693, %v2692
      %v2755 = vpack.c.b16 %v2695, %v2694
      %v2756 = vpack.c.b16 %v2697, %v2696
      %v2757 = vpack.c.b16 %v2699, %v2698
      %v2758 = vpack.c.b16 %v2701, %v2700
      %v2759 = vpack.c.b16 %v2703, %v2702
      %v2760 = vpack.c.b16 %v2705, %v2704
      %v2761 = vpack.c.b16 %v2707, %v2706
      %v2762 = vpack.c.b16 %v2709, %v2708
      %v2763 = vpack.c.b16 %v2711, %v2710
      %v2764 = vpack.c.b16 %v2713, %v2712
      %v2765 = vpack.c.b16 %v2715, %v2714
      %v2766 = vpack.c.b16 %v2717, %v2716
      %v2767 = vpack.c.b16 %v2719, %v2718
      %v2768 = vpack.c.b16 %v2721, %v2720
      %v2769 = vpack.c.b16 %v2723, %v2722
      %v2770 = vpack.c.b16 %v2725, %v2724
      %v2771 = vpack.c.b16 %v2727, %v2726
      %v2772 = vpack.c.b16 %v2729, %v2728
      %v2773 = vpack.c.b16 %v2731, %v2730
      %v2774 = vpack.c.b16 %v2733, %v2732
      %v2775 = vpack.c.b16 %v2735, %v2734
      %v2776 = vpack.c.b16 %v2737, %v2736
      %v2777 = vpack.c.b16 %v2739, %v2738
      %v2778 = vpack.c.b16 %v2741, %v2740
      %v2779 = vpack.c.b16 %v2743, %v2742
      %vm2816 = vcmask 523264
      %v2818 = vsel %vm2816, %v2532, 0
      %v2821 = vsel %vm2816, %v2537, 0
      %v2824 = vsel %vm2816, %v2542, 0
      %v2827 = vsel %vm2816, %v2547, 0
      %v2830 = vsel %vm2816, %v2552, 0
      %v2833 = vsel %vm2816, %v2557, 0
      %v2836 = vsel %vm2816, %v2562, 0
      %v2839 = vsel %vm2816, %v2567, 0
      %2841 = vmatprep.subr.bf16.mxu0 0
      %2842 = vmatpush1.bf16.msra.mxu0 %v2751
      %2843 = vmatprep.subr.bf16.mxu0 0
      %2844 = vmatpush1.bf16.msra.mxu0 %v2750
      %2845 = vmatprep.subr.bf16.mxu0 0
      %2846 = vmatpush1.bf16.msra.mxu0 %v2749
      %2847 = vmatprep.subr.bf16.mxu0 0
      %2848 = vmatpush1.bf16.msra.mxu0 %v2748
      %2849 = vmatprep.subr.bf16.mxu0 0
      %2850 = vmatpush1.bf16.msra.mxu0 %v2747
      %2851 = vmatprep.subr.bf16.mxu0 0
      %2852 = vmatpush1.bf16.msra.mxu0 %v2746
      %2853 = vmatprep.subr.bf16.mxu0 0
      %2854 = vmatpush1.bf16.msra.mxu0 %v2745
      %2855 = vmatprep.subr.bf16.mxu0 0
      %2856 = vmatpush1.bf16.msra.mxu0 %v2744
      %2857 = vmatprep.subr.bf16.mxu0 0
      %2858 = vmatpush2.bf16.msra.mxu0 %v2759
      %2859 = vmatprep.subr.bf16.mxu0 0
      %2860 = vmatpush2.bf16.msra.mxu0 %v2758
      %2861 = vmatprep.subr.bf16.mxu0 0
      %2862 = vmatpush2.bf16.msra.mxu0 %v2757
      %2863 = vmatprep.subr.bf16.mxu0 0
      %2864 = vmatpush2.bf16.msra.mxu0 %v2756
      %2865 = vmatprep.subr.bf16.mxu0 0
      %2866 = vmatpush2.bf16.msra.mxu0 %v2755
      %2867 = vmatprep.subr.bf16.mxu0 0
      %2868 = vmatpush2.bf16.msra.mxu0 %v2754
      %2869 = vmatprep.subr.bf16.mxu0 0
      %2870 = vmatpush2.bf16.msra.mxu0 %v2753
      %2871 = vmatprep.subr.bf16.mxu0 0
      %2872 = vmatpush2.bf16.msra.mxu0 %v2752
      %2873 = vmatprep.mubr.bf16.mxu0 %v2529
      %2874 = vmatmul.mubr.bf16.gmra.mxu0 %v2528
      %v2875 = vpop.f32.mrf.mxu0
      %v2876 = vadd.f32 %v2398, %v2875
      %v2877 = vpop.f32.mrf.mxu0
      %v2878 = vpop.f32.mrf.mxu0
      %v2879 = vadd.f32 %v2398, %v2878
      %v2880 = vpop.f32.mrf.mxu0
      %2881 = vmatprep.mubr.bf16.mxu0 %v2534
      %2882 = vmatmul.mubr.bf16.gmra.mxu0 %v2533
      %v2883 = vpop.f32.mrf.mxu0
      %v2884 = vadd.f32 %v2398, %v2883
      %v2885 = vpop.f32.mrf.mxu0
      %v2886 = vpop.f32.mrf.mxu0
      %v2887 = vadd.f32 %v2398, %v2886
      %v2888 = vpop.f32.mrf.mxu0
      %2889 = vmatprep.mubr.bf16.mxu0 %v2539
      %2890 = vmatmul.mubr.bf16.gmra.mxu0 %v2538
      %v2891 = vpop.f32.mrf.mxu0
      %v2892 = vadd.f32 %v2398, %v2891
      %v2893 = vpop.f32.mrf.mxu0
      %v2894 = vpop.f32.mrf.mxu0
      %v2895 = vadd.f32 %v2398, %v2894
      %v2896 = vpop.f32.mrf.mxu0
      %2897 = vmatprep.mubr.bf16.mxu0 %v2544
      %2898 = vmatmul.mubr.bf16.gmra.mxu0 %v2543
      %v2899 = vpop.f32.mrf.mxu0
      %v2900 = vadd.f32 %v2398, %v2899
      %v2901 = vpop.f32.mrf.mxu0
      %v2902 = vpop.f32.mrf.mxu0
      %v2903 = vadd.f32 %v2398, %v2902
      %v2904 = vpop.f32.mrf.mxu0
      %2905 = vmatprep.mubr.bf16.mxu0 %v2549
      %2906 = vmatmul.mubr.bf16.gmra.mxu0 %v2548
      %v2907 = vpop.f32.mrf.mxu0
      %v2908 = vadd.f32 %v2398, %v2907
      %v2909 = vpop.f32.mrf.mxu0
      %v2910 = vpop.f32.mrf.mxu0
      %v2911 = vadd.f32 %v2398, %v2910
      %v2912 = vpop.f32.mrf.mxu0
      %2913 = vmatprep.mubr.bf16.mxu0 %v2554
      %2914 = vmatmul.mubr.bf16.gmra.mxu0 %v2553
      %v2915 = vpop.f32.mrf.mxu0
      %v2916 = vadd.f32 %v2398, %v2915
      %v2917 = vpop.f32.mrf.mxu0
      %v2918 = vpop.f32.mrf.mxu0
      %v2919 = vadd.f32 %v2398, %v2918
      %v2920 = vpop.f32.mrf.mxu0
      %2921 = vmatprep.mubr.bf16.mxu0 %v2559
      %2922 = vmatmul.mubr.bf16.gmra.mxu0 %v2558
      %v2923 = vpop.f32.mrf.mxu0
      %v2924 = vadd.f32 %v2398, %v2923
      %v2925 = vpop.f32.mrf.mxu0
      %v2926 = vpop.f32.mrf.mxu0
      %v2927 = vadd.f32 %v2398, %v2926
      %v2928 = vpop.f32.mrf.mxu0
      %2929 = vmatprep.mubr.bf16.mxu0 %v2564
      %2930 = vmatmul.mubr.bf16.gmra.mxu0 %v2563
      %v2931 = vpop.f32.mrf.mxu0
      %v2932 = vadd.f32 %v2398, %v2931
      %v2933 = vpop.f32.mrf.mxu0
      %v2934 = vpop.f32.mrf.mxu0
      %v2935 = vadd.f32 %v2398, %v2934
      %v2936 = vpop.f32.mrf.mxu0
      %2937 = vdwg.mxu0
      %2938 = vmatprep.subr.bf16.mxu0 0
      %2939 = vmatpush1.bf16.msra.mxu0 %v2767
      %2940 = vmatprep.subr.bf16.mxu0 0
      %2941 = vmatpush1.bf16.msra.mxu0 %v2766
      %2942 = vmatprep.subr.bf16.mxu0 0
      %2943 = vmatpush1.bf16.msra.mxu0 %v2765
      %2944 = vmatprep.subr.bf16.mxu0 0
      %2945 = vmatpush1.bf16.msra.mxu0 %v2764
      %2946 = vmatprep.subr.bf16.mxu0 0
      %2947 = vmatpush1.bf16.msra.mxu0 %v2763
      %2948 = vmatprep.subr.bf16.mxu0 0
      %2949 = vmatpush1.bf16.msra.mxu0 %v2762
      %2950 = vmatprep.subr.bf16.mxu0 0
      %2951 = vmatpush1.bf16.msra.mxu0 %v2761
      %2952 = vmatprep.subr.bf16.mxu0 0
      %2953 = vmatpush1.bf16.msra.mxu0 %v2760
      %2954 = vmatprep.subr.bf16.mxu0 0
      %2955 = vmatpush2.bf16.msra.mxu0 %v2775
      %2956 = vmatprep.subr.bf16.mxu0 0
      %2957 = vmatpush2.bf16.msra.mxu0 %v2774
      %2958 = vmatprep.subr.bf16.mxu0 0
      %2959 = vmatpush2.bf16.msra.mxu0 %v2773
      %2960 = vmatprep.subr.bf16.mxu0 0
      %2961 = vmatpush2.bf16.msra.mxu0 %v2772
      %2962 = vmatprep.subr.bf16.mxu0 0
      %2963 = vmatpush2.bf16.msra.mxu0 %v2771
      %2964 = vmatprep.subr.bf16.mxu0 0
      %2965 = vmatpush2.bf16.msra.mxu0 %v2770
      %2966 = vmatprep.subr.bf16.mxu0 0
      %2967 = vmatpush2.bf16.msra.mxu0 %v2769
      %2968 = vmatprep.subr.bf16.mxu0 0
      %2969 = vmatpush2.bf16.msra.mxu0 %v2768
      %2970 = vmatprep.mubr.bf16.mxu0 %v2531
      %2971 = vmatmul.mubr.bf16.gmra.mxu0 %v2530
      %v2972 = vpop.f32.mrf.mxu0
      %v2973 = vadd.f32 %v2876, %v2972
      %v2974 = vpop.f32.mrf.mxu0
      %v2975 = vpop.f32.mrf.mxu0
      %v2976 = vadd.f32 %v2879, %v2975
      %v2977 = vpop.f32.mrf.mxu0
      %2978 = vmatprep.mubr.bf16.mxu0 %v2536
      %2979 = vmatmul.mubr.bf16.gmra.mxu0 %v2535
      %v2980 = vpop.f32.mrf.mxu0
      %v2981 = vadd.f32 %v2884, %v2980
      %v2982 = vpop.f32.mrf.mxu0
      %v2983 = vpop.f32.mrf.mxu0
      %v2984 = vadd.f32 %v2887, %v2983
      %v2985 = vpop.f32.mrf.mxu0
      %2986 = vmatprep.mubr.bf16.mxu0 %v2541
      %2987 = vmatmul.mubr.bf16.gmra.mxu0 %v2540
      %v2988 = vpop.f32.mrf.mxu0
      %v2989 = vadd.f32 %v2892, %v2988
      %v2990 = vpop.f32.mrf.mxu0
      %v2991 = vpop.f32.mrf.mxu0
      %v2992 = vadd.f32 %v2895, %v2991
      %v2993 = vpop.f32.mrf.mxu0
      %2994 = vmatprep.mubr.bf16.mxu0 %v2546
      %2995 = vmatmul.mubr.bf16.gmra.mxu0 %v2545
      %v2996 = vpop.f32.mrf.mxu0
      %v2997 = vadd.f32 %v2900, %v2996
      %v2998 = vpop.f32.mrf.mxu0
      %v2999 = vpop.f32.mrf.mxu0
      %v3000 = vadd.f32 %v2903, %v2999
      %v3001 = vpop.f32.mrf.mxu0
      %3002 = vmatprep.mubr.bf16.mxu0 %v2551
      %3003 = vmatmul.mubr.bf16.gmra.mxu0 %v2550
      %v3004 = vpop.f32.mrf.mxu0
      %v3005 = vadd.f32 %v2908, %v3004
      %v3006 = vpop.f32.mrf.mxu0
      %v3007 = vpop.f32.mrf.mxu0
      %v3008 = vadd.f32 %v2911, %v3007
      %v3009 = vpop.f32.mrf.mxu0
      %3010 = vmatprep.mubr.bf16.mxu0 %v2556
      %3011 = vmatmul.mubr.bf16.gmra.mxu0 %v2555
      %v3012 = vpop.f32.mrf.mxu0
      %v3013 = vadd.f32 %v2916, %v3012
      %v3014 = vpop.f32.mrf.mxu0
      %v3015 = vpop.f32.mrf.mxu0
      %v3016 = vadd.f32 %v2919, %v3015
      %v3017 = vpop.f32.mrf.mxu0
      %3018 = vmatprep.mubr.bf16.mxu0 %v2561
      %3019 = vmatmul.mubr.bf16.gmra.mxu0 %v2560
      %v3020 = vpop.f32.mrf.mxu0
      %v3021 = vadd.f32 %v2924, %v3020
      %v3022 = vpop.f32.mrf.mxu0
      %v3023 = vpop.f32.mrf.mxu0
      %v3024 = vadd.f32 %v2927, %v3023
      %v3025 = vpop.f32.mrf.mxu0
      %3026 = vmatprep.mubr.bf16.mxu0 %v2566
      %3027 = vmatmul.mubr.bf16.gmra.mxu0 %v2565
      %v3028 = vpop.f32.mrf.mxu0
      %v3029 = vadd.f32 %v2932, %v3028
      %v3030 = vpop.f32.mrf.mxu0
      %v3031 = vpop.f32.mrf.mxu0
      %v3032 = vadd.f32 %v2935, %v3031
      %v3033 = vpop.f32.mrf.mxu0
      %3034 = vdwg.mxu0
      %3035 = vmatprep.subr.bf16.mxu0 0
      %3036 = vmatpush1.bf16.msra.mxu0 0
      %3037 = vmatprep.subr.bf16.mxu0 0
      %3038 = vmatpush1.bf16.msra.mxu0 0
      %3039 = vmatprep.subr.bf16.mxu0 0
      %3040 = vmatpush1.bf16.msra.mxu0 0
      %3041 = vmatprep.subr.bf16.mxu0 0
      %3042 = vmatpush1.bf16.msra.mxu0 0
      %3043 = vmatprep.subr.bf16.mxu0 0
      %3044 = vmatpush1.bf16.msra.mxu0 %v2779
      %3045 = vmatprep.subr.bf16.mxu0 0
      %3046 = vmatpush1.bf16.msra.mxu0 %v2778
      %3047 = vmatprep.subr.bf16.mxu0 0
      %3048 = vmatpush1.bf16.msra.mxu0 %v2777
      %3049 = vmatprep.subr.bf16.mxu0 0
      %3050 = vmatpush1.bf16.msra.mxu0 %v2776
      %3051 = vmatprep.subr.bf16.mxu0 0
      %3052 = vmatpush2.bf16.msra.mxu0 0
      %3053 = vmatprep.subr.bf16.mxu0 0
      %3054 = vmatpush2.bf16.msra.mxu0 0
      %3055 = vmatprep.subr.bf16.mxu0 0
      %3056 = vmatpush2.bf16.msra.mxu0 0
      %3057 = vmatprep.subr.bf16.mxu0 0
      %3058 = vmatpush2.bf16.msra.mxu0 0
      %3059 = vmatprep.subr.bf16.mxu0 0
      %3060 = vmatpush2.bf16.msra.mxu0 0
      %3061 = vmatprep.subr.bf16.mxu0 0
      %3062 = vmatpush2.bf16.msra.mxu0 0
      %3063 = vmatprep.subr.bf16.mxu0 0
      %3064 = vmatpush2.bf16.msra.mxu0 0
      %3065 = vmatprep.subr.bf16.mxu0 0
      %3066 = vmatpush2.bf16.msra.mxu0 0
      %3067 = vmatprep.mubr.bf16.mxu0 0
      %3068 = vmatmul.mubr.bf16.gmra.mxu0 %v2818
      %v3069 = vpop.f32.mrf.mxu0
      %v3070 = vadd.f32 %v2973, %v3069
      %v3071 = vpop.f32.mrf.mxu0
      %v3072 = vpop.f32.mrf.mxu0
      %v3073 = vadd.f32 %v2976, %v3072
      %v3074 = vpop.f32.mrf.mxu0
      %3075 = vmatprep.mubr.bf16.mxu0 0
      %3076 = vmatmul.mubr.bf16.gmra.mxu0 %v2821
      %v3077 = vpop.f32.mrf.mxu0
      %v3078 = vadd.f32 %v2981, %v3077
      %v3079 = vpop.f32.mrf.mxu0
      %v3080 = vpop.f32.mrf.mxu0
      %v3081 = vadd.f32 %v2984, %v3080
      %v3082 = vpop.f32.mrf.mxu0
      %3083 = vmatprep.mubr.bf16.mxu0 0
      %3084 = vmatmul.mubr.bf16.gmra.mxu0 %v2824
      %v3085 = vpop.f32.mrf.mxu0
      %v3086 = vadd.f32 %v2989, %v3085
      %v3087 = vpop.f32.mrf.mxu0
      %v3088 = vpop.f32.mrf.mxu0
      %v3089 = vadd.f32 %v2992, %v3088
      %v3090 = vpop.f32.mrf.mxu0
      %3091 = vmatprep.mubr.bf16.mxu0 0
      %3092 = vmatmul.mubr.bf16.gmra.mxu0 %v2827
      %v3093 = vpop.f32.mrf.mxu0
      %v3094 = vadd.f32 %v2997, %v3093
      %v3095 = vpop.f32.mrf.mxu0
      %v3096 = vpop.f32.mrf.mxu0
      %v3097 = vadd.f32 %v3000, %v3096
      %v3098 = vpop.f32.mrf.mxu0
      %3099 = vmatprep.mubr.bf16.mxu0 0
      %3100 = vmatmul.mubr.bf16.gmra.mxu0 %v2830
      %v3101 = vpop.f32.mrf.mxu0
      %v3102 = vadd.f32 %v3005, %v3101
      %v3103 = vpop.f32.mrf.mxu0
      %v3104 = vpop.f32.mrf.mxu0
      %v3105 = vadd.f32 %v3008, %v3104
      %v3106 = vpop.f32.mrf.mxu0
      %3107 = vmatprep.mubr.bf16.mxu0 0
      %3108 = vmatmul.mubr.bf16.gmra.mxu0 %v2833
      %v3109 = vpop.f32.mrf.mxu0
      %v3110 = vadd.f32 %v3013, %v3109
      %v3111 = vpop.f32.mrf.mxu0
      %v3112 = vpop.f32.mrf.mxu0
      %v3113 = vadd.f32 %v3016, %v3112
      %v3114 = vpop.f32.mrf.mxu0
      %3115 = vmatprep.mubr.bf16.mxu0 0
      %3116 = vmatmul.mubr.bf16.gmra.mxu0 %v2836
      %v3117 = vpop.f32.mrf.mxu0
      %v3118 = vadd.f32 %v3021, %v3117
      %v3119 = vpop.f32.mrf.mxu0
      %v3120 = vpop.f32.mrf.mxu0
      %v3121 = vadd.f32 %v3024, %v3120
      %v3122 = vpop.f32.mrf.mxu0
      %3123 = vmatprep.mubr.bf16.mxu0 0
      %3124 = vmatmul.mubr.bf16.gmra.mxu0 %v2839
      %v3125 = vpop.f32.mrf.mxu0
      %v3126 = vadd.f32 %v3029, %v3125
      %v3127 = vpop.f32.mrf.mxu0
      %v3128 = vpop.f32.mrf.mxu0
      %v3129 = vadd.f32 %v3032, %v3128
      %v3130 = vpop.f32.mrf.mxu0
      %3131 = vdwg.mxu0
      %vm3132 = vcmp.ge.f32.partialorder %v3070, 0.0
      %vm3133 = vcmp.ge.f32.partialorder %v3073, 0.0
      %vm3134 = vcmp.ge.f32.partialorder %v3078, 0.0
      %vm3135 = vcmp.ge.f32.partialorder %v3081, 0.0
      %vm3136 = vcmp.ge.f32.partialorder %v3086, 0.0
      %vm3137 = vcmp.ge.f32.partialorder %v3089, 0.0
      %vm3138 = vcmp.ge.f32.partialorder %v3094, 0.0
      %vm3139 = vcmp.ge.f32.partialorder %v3097, 0.0
      %vm3140 = vcmp.ge.f32.partialorder %v3102, 0.0
      %vm3141 = vcmp.ge.f32.partialorder %v3105, 0.0
      %vm3142 = vcmp.ge.f32.partialorder %v3110, 0.0
      %vm3143 = vcmp.ge.f32.partialorder %v3113, 0.0
      %vm3144 = vcmp.ge.f32.partialorder %v3118, 0.0
      %vm3145 = vcmp.ge.f32.partialorder %v3121, 0.0
      %vm3146 = vcmp.ge.f32.partialorder %v3126, 0.0
      %vm3147 = vcmp.ge.f32.partialorder %v3129, 0.0
      %v3148 = vmul.f32 %v3070, 0.2
      %v3149 = vmul.f32 %v3073, 0.2
      %v3150 = vmul.f32 %v3078, 0.2
      %v3151 = vmul.f32 %v3081, 0.2
      %v3152 = vmul.f32 %v3086, 0.2
      %v3153 = vmul.f32 %v3089, 0.2
      %v3154 = vmul.f32 %v3094, 0.2
      %v3155 = vmul.f32 %v3097, 0.2
      %v3156 = vmul.f32 %v3102, 0.2
      %v3157 = vmul.f32 %v3105, 0.2
      %v3158 = vmul.f32 %v3110, 0.2
      %v3159 = vmul.f32 %v3113, 0.2
      %v3160 = vmul.f32 %v3118, 0.2
      %v3161 = vmul.f32 %v3121, 0.2
      %v3162 = vmul.f32 %v3126, 0.2
      %v3163 = vmul.f32 %v3129, 0.2
      %v3164 = vsel %vm3132, %v3070, %v3148
      %v3165 = vsel %vm3133, %v3073, %v3149
      %v3166 = vsel %vm3134, %v3078, %v3150
      %v3167 = vsel %vm3135, %v3081, %v3151
      %v3168 = vsel %vm3136, %v3086, %v3152
      %v3169 = vsel %vm3137, %v3089, %v3153
      %v3170 = vsel %vm3138, %v3094, %v3154
      %v3171 = vsel %vm3139, %v3097, %v3155
      %v3172 = vsel %vm3140, %v3102, %v3156
      %v3173 = vsel %vm3141, %v3105, %v3157
      %v3174 = vsel %vm3142, %v3110, %v3158
      %v3175 = vsel %vm3143, %v3113, %v3159
      %v3176 = vsel %vm3144, %v3118, %v3160
      %v3177 = vsel %vm3145, %v3121, %v3161
      %v3178 = vsel %vm3146, %v3126, %v3162
      %v3179 = vsel %vm3147, %v3129, %v3163
      %3180 = vst.msk [vmem:[%s453] sm:$0xff] %vm2816, %v3164
      %3181 = vst.msk [vmem:[%s453 + $0x8] sm:$0xff] %vm2816, %v3165
      %3182 = vst.msk [vmem:[%s453 + $0x10] sm:$0xff] %vm2816, %v3166
      %3183 = vst.msk [vmem:[%s453 + $0x18] sm:$0xff] %vm2816, %v3167
      %3184 = vst.msk [vmem:[%s453 + $0x20] sm:$0xff] %vm2816, %v3168
      %3185 = vst.msk [vmem:[%s453 + $0x28] sm:$0xff] %vm2816, %v3169
      %3186 = vst.msk [vmem:[%s453 + $0x30] sm:$0xff] %vm2816, %v3170
      %3187 = vst.msk [vmem:[%s453 + $0x38] sm:$0xff] %vm2816, %v3171
      %3188 = vst.msk [vmem:[%s453 + $0x40] sm:$0xff] %vm2816, %v3172
      %3189 = vst.msk [vmem:[%s453 + $0x48] sm:$0xff] %vm2816, %v3173
      %3190 = vst.msk [vmem:[%s453 + $0x50] sm:$0xff] %vm2816, %v3174
      %3191 = vst.msk [vmem:[%s453 + $0x58] sm:$0xff] %vm2816, %v3175
      %3192 = vst.msk [vmem:[%s453 + $0x60] sm:$0xff] %vm2816, %v3176
      %3193 = vst.msk [vmem:[%s453 + $0x68] sm:$0xff] %vm2816, %v3177
      %3194 = vst.msk [vmem:[%s453 + $0x70] sm:$0xff] %vm2816, %v3178
      %3195 = vst.msk [vmem:[%s453 + $0x78] sm:$0xff] %vm2816, %v3179
      %v3196 = vld [vmem:[%s442] sm:$0xff]
      %v3197 = vld [vmem:[%s442 + $0x8] sm:$0xff]
      %v3198 = vld [vmem:[%s442 + $0x10] sm:$0xff]
      %v3199 = vld [vmem:[%s442 + $0x18] sm:$0xff]
      %v3200 = vld [vmem:[%s442 + $0x20] sm:$0xff]
      %v3201 = vld [vmem:[%s442 + $0x28] sm:$0xff]
      %v3202 = vld [vmem:[%s442 + $0x30] sm:$0xff]
      %v3203 = vld [vmem:[%s442 + $0x38] sm:$0xff]
      %v3204 = vld [vmem:[%s442 + $0x40] sm:$0xff]
      %v3205 = vld [vmem:[%s442 + $0x48] sm:$0xff]
      %v3206 = vld [vmem:[%s442 + $0x50] sm:$0xff]
      %v3207 = vld [vmem:[%s442 + $0x58] sm:$0xff]
      %v3208 = vld [vmem:[%s442 + $0x60] sm:$0xff]
      %v3209 = vld [vmem:[%s442 + $0x68] sm:$0xff]
      %v3210 = vld [vmem:[%s442 + $0x70] sm:$0xff]
      %v3211 = vld [vmem:[%s442 + $0x78] sm:$0xff]
      %3228 = vrot.lane.b32.xlu0 %v3196, 60
      %v3229 = vpop.permute.xlu0 %3228
      %3230 = vrot.lane.b32.xlu0 %v3197, 60
      %v3231 = vpop.permute.xlu0 %3230
      %3232 = vrot.lane.b32.xlu0 %v3198, 60
      %v3233 = vpop.permute.xlu0 %3232
      %3234 = vrot.lane.b32.xlu0 %v3199, 60
      %v3235 = vpop.permute.xlu0 %3234
      %3236 = vrot.lane.b32.xlu0 %v3200, 60
      %v3237 = vpop.permute.xlu0 %3236
      %3238 = vrot.lane.b32.xlu0 %v3201, 60
      %v3239 = vpop.permute.xlu0 %3238
      %3240 = vrot.lane.b32.xlu0 %v3202, 60
      %v3241 = vpop.permute.xlu0 %3240
      %3242 = vrot.lane.b32.xlu0 %v3203, 60
      %v3243 = vpop.permute.xlu0 %3242
      %3244 = vrot.lane.b32.xlu0 %v3204, 60
      %v3245 = vpop.permute.xlu0 %3244
      %3246 = vrot.lane.b32.xlu0 %v3205, 60
      %v3247 = vpop.permute.xlu0 %3246
      %3248 = vrot.lane.b32.xlu0 %v3206, 60
      %v3249 = vpop.permute.xlu0 %3248
      %3250 = vrot.lane.b32.xlu0 %v3207, 60
      %v3251 = vpop.permute.xlu0 %3250
      %3252 = vrot.lane.b32.xlu0 %v3208, 60
      %v3253 = vpop.permute.xlu0 %3252
      %3254 = vrot.lane.b32.xlu0 %v3209, 60
      %v3255 = vpop.permute.xlu0 %3254
      %3256 = vrot.lane.b32.xlu0 %v3210, 60
      %v3257 = vpop.permute.xlu0 %3256
      %3258 = vrot.lane.b32.xlu0 %v3211, 60
      %v3259 = vpop.permute.xlu0 %3258
      %vm3276 = vcmask 523744
      %3277 = vst.msk [vmem:[%s453] sm:$0xff] %vm3276, %v3229
      %3278 = vst.msk [vmem:[%s453 + $0x8] sm:$0xff] %vm3276, %v3231
      %3279 = vst.msk [vmem:[%s453 + $0x10] sm:$0xff] %vm3276, %v3233
      %3280 = vst.msk [vmem:[%s453 + $0x18] sm:$0xff] %vm3276, %v3235
      %3281 = vst.msk [vmem:[%s453 + $0x20] sm:$0xff] %vm3276, %v3237
      %3282 = vst.msk [vmem:[%s453 + $0x28] sm:$0xff] %vm3276, %v3239
      %3283 = vst.msk [vmem:[%s453 + $0x30] sm:$0xff] %vm3276, %v3241
      %3284 = vst.msk [vmem:[%s453 + $0x38] sm:$0xff] %vm3276, %v3243
      %3285 = vst.msk [vmem:[%s453 + $0x40] sm:$0xff] %vm3276, %v3245
      %3286 = vst.msk [vmem:[%s453 + $0x48] sm:$0xff] %vm3276, %v3247
      %3287 = vst.msk [vmem:[%s453 + $0x50] sm:$0xff] %vm3276, %v3249
      %3288 = vst.msk [vmem:[%s453 + $0x58] sm:$0xff] %vm3276, %v3251
      %3289 = vst.msk [vmem:[%s453 + $0x60] sm:$0xff] %vm3276, %v3253
      %3290 = vst.msk [vmem:[%s453 + $0x68] sm:$0xff] %vm3276, %v3255
      %3291 = vst.msk [vmem:[%s453 + $0x70] sm:$0xff] %vm3276, %v3257
      %3292 = vst.msk [vmem:[%s453 + $0x78] sm:$0xff] %vm3276, %v3259
      %s3293 = smul.u32 8, %s22
      %p3294 = scmp.lt.s32.totalorder %s21, 1
      %s3295 = scalar_select %p3294, %s21, 1
      %p3296 = scmp.lt.s32.totalorder %s3293, 15
      %s3297 = scalar_select %p3296, %s3293, 15
      %s3298 = smul.addr %s3297, 2
      %s3299 = smul.addr %s3295, 32
      %s3300 = sadd.s32 %s3298, %s3299
      %s3301 = smul.addr %s3300, 8
      %s3302 = scalar_lea.vmem %s6, %s3301
      // Predicated region
      $region53: #{cnnf_forward.7} parent=43 // pred_check
        %p3303 = pneg %p215
      $region54: #{cnnf_forward.7} parent=43 // pred_check_branch
        %3305 = sbr.rel (%p3303) target = $region56
      $region55: #{cnnf_forward.7} parent=43 // pred_region
        %s3306 = smul.u32 8, %s22
      $region56: #{cnnf_forward.7} parent=43 // pred_fallthru
        _
    $region44: #{cnnf_forward.7} parent=5 // pred_fallthru
      _
    %p3307 = scmp.le.s32.totalorder 2, %s12
    // Predicated region
    $region57: #{cnnf_forward.7} parent=5 // pred_check
      %p3308 = pneg %p3307
    $region58: #{cnnf_forward.7} parent=5 // pred_check_branch
      %3310 = sbr.rel (%p3308) target = $region60
    $region59: #{cnnf_forward.7} parent=5 // pred_region
      %s3311 = ssub.s32 %s12, 2
      // Predicated region
      $region61: #{cnnf_forward.7} parent=59 // pred_check
        %p3312 = pneg %p221
      $region62: #{cnnf_forward.7} parent=59 // pred_check_branch
        %3314 = sbr.rel (%p3312) target = $region64
      $region63: #{cnnf_forward.7} parent=59 // pred_region
        %s3315 = smul.u32 8, %s24
        %p3316 = scmp.lt.s32.totalorder %s23, 1
        %s3317 = scalar_select %p3316, %s23, 1
        %p3318 = scmp.lt.s32.totalorder %s3315, 15
        %s3319 = scalar_select %p3318, %s3315, 15
        %s3320 = smul.addr %s3319, 2
        %s3321 = smul.addr %s3317, 32
        %s3322 = sadd.s32 %s3320, %s3321
        %s3323 = smul.addr %s3322, 8
        %s3324 = scalar_lea.vmem %s6, %s3323
      $region64: #{cnnf_forward.7} parent=59 // pred_fallthru
        _
    $region60: #{cnnf_forward.7} parent=5 // pred_fallthru
      _
  $region6: #{cnnf_forward.7} parent=0 // loop_footer
    %s16 = sadd.s32 1, %s12
  $region7: #{cnnf_forward.7} parent=0 // loop_footer_branch
    %11 = sbr.rel target = $region3
  $region8: #{cnnf_forward.7} parent=0 // loop_exit
    _

</llo_original>
